<compile_context>
chip_gen: v7x
topology: tpu7x:2x2x1
jax: 0.10.0
libtpu: 0.0.40
codegen_flags: <defaults>
</compile_context>

<pallas_src>
import jax
import jax.numpy as jnp
import numpy as np
from jax import lax
from jax.experimental import pallas as pl
from jax.experimental.pallas import tpu as pltpu

# ---------------------------------------------------------------------------
# model dims
# ---------------------------------------------------------------------------
BATCH = 2
C_IN = 3            # RGB input, as resnet expects
H = W = 16
H_DIM = 128         # backbone feature width; 128 = full lane width (stand-in for resnet18's 512)
N_CLASSES = 1
PAD_L = 8           # sublane-aligned interior offset along W inside the padded scratch
                    # (left zero border sits at column PAD_L-1, right border at PAD_L+W)

# TODO(synk): the full timm resnet18 graph (7x7 stem, 4 strided stages) is an external
# library graph; a single basic block at fixed resolution is the representative backbone.


# ---------------------------------------------------------------------------
# fused forward kernel (single pallas_call, everything VMEM-resident)
# ---------------------------------------------------------------------------
def fused_forward_kernel(
    x_ref,                        # (B*H*W, 9*C_IN) f32 : stem im2col patches
    ws_ref, ss_ref, bs_ref,       # stem : (27, C) f32, (1, C), (1, C)
    w1_ref, s1_ref, b1_ref,       # block conv1 : (9*C, C) bf16, (1, C), (1, C)
    w2_ref, s2_ref, b2_ref,       # block conv2 : (9*C, C) bf16, (1, C), (1, C)
    hw_ref, hb_ref,               # head : (1, C) f32, (1, 1) f32
    o_ref,                        # (B, N_CLASSES) f32
    pad_a, pad_b, patches,        # VMEM scratch
):
    B = pad_a.shape[0]
    C = pad_a.shape[3]
    n = B * H * W

    def store_padded(dst, act_flat):
        # In-kernel zero padding: memset the scratch, then write the interior at a
        # sublane-aligned offset (W offset PAD_L=8, lane offset 0) -> unmasked stores.
        dst[...] = jnp.zeros_like(dst)
        dst[:, 1:1 + H, PAD_L:PAD_L + W, :] = act_flat.reshape(B, H, W, C)

    def conv3x3_bn(src_pad, w_ref, s_ref, b_ref):
        # im2col: 9 shifted (B,H,W,C) windows written to lane-aligned 128-wide slabs
        # of the bf16 patch scratch, then ONE K=9*C MXU matmul (f32 accumulation).
        for t in range(9):
            dy, dx = divmod(t, 3)
            off = PAD_L - 1 + dx
            tap = src_pad[:, dy:dy + H, off:off + W, :]
            patches[:, t * C:(t + 1) * C] = tap.reshape(n, C).astype(jnp.bfloat16)
        y = jnp.dot(patches[...], w_ref[...], preferred_element_type=jnp.float32)
        return y * s_ref[...] + b_ref[...]          # BN folded to scale/bias (eval)

    # ---- stem conv3x3 + BN + ReLU : single K=27 matmul (Cin=3 special case) ----
    h = jnp.dot(x_ref[...], ws_ref[...], preferred_element_type=jnp.float32)
    h = jnp.maximum(h * ss_ref[...] + bs_ref[...], 0.0)            # (n, C) f32
    store_padded(pad_a, h)

    # ---- basic block: conv-BN-ReLU, conv-BN, + residual, ReLU ------------------
    y = jnp.maximum(conv3x3_bn(pad_a, w1_ref, s1_ref, b1_ref), 0.0)
    store_padded(pad_b, y)

    res = pad_a[:, 1:1 + H, PAD_L:PAD_L + W, :].reshape(n, C)      # == h (f32, from VMEM)
    z = jnp.maximum(conv3x3_bn(pad_b, w2_ref, s2_ref, b2_ref) + res, 0.0)

    # ---- global average pool + Linear(h_dim, n_classes=1) head -----------------
    # Head folded into a VPU multiply + cross-lane reduce (no degenerate 1-lane matmul).
    feat = jnp.mean(z.reshape(B, H * W, C), axis=1)                # (B, C)
    o_ref[...] = (jnp.sum(feat * hw_ref[...], axis=-1, keepdims=True)
                  + hb_ref[...])


# ---------------------------------------------------------------------------
# wrapper (single pallas_call; wrapper work is layout plumbing only)
# ---------------------------------------------------------------------------
def _vmem():
    return pl.BlockSpec(memory_space=pltpu.MemorySpace.VMEM)


@jax.jit
def model_forward(params, x_nchw):
    x = jnp.transpose(x_nchw, (0, 2, 3, 1)).astype(jnp.float32)    # NCHW -> NHWC
    # Stem im2col built here (pure data rearrangement on the tiny input, no arithmetic)
    # so the Cin=3 stem becomes one K=27 MXU matmul inside the fused kernel.
    xp = jnp.pad(x, ((0, 0), (1, 1), (1, 1), (0, 0)))
    taps = [xp[:, dy:dy + H, dx:dx + W, :] for dy in range(3) for dx in range(3)]
    x_im2col = jnp.stack(taps, axis=3).reshape(BATCH * H * W, 9 * C_IN)

    # weight packing into im2col (dy, dx, cin) row order; block-conv operands in bf16
    ws = params["stem_w"].reshape(9 * C_IN, H_DIM)
    w1 = params["b1_w1"].reshape(9 * H_DIM, H_DIM).astype(jnp.bfloat16)
    w2 = params["b1_w2"].reshape(9 * H_DIM, H_DIM).astype(jnp.bfloat16)
    hw = params["head_w"].T                                        # (1, H_DIM)

    n = BATCH * H * W
    wp = PAD_L + W + 1   # padded W extent (interior sublane-aligned at PAD_L)
    return pl.pallas_call(
        fused_forward_kernel,
        out_shape=jax.ShapeDtypeStruct((BATCH, N_CLASSES), jnp.float32),
        in_specs=[_vmem()] * 12,
        out_specs=_vmem(),
        scratch_shapes=[
            pltpu.VMEM((BATCH, H + 2, wp, H_DIM), jnp.float32),    # padded h (stem out)
            pltpu.VMEM((BATCH, H + 2, wp, H_DIM), jnp.float32),    # padded y (conv1 out)
            pltpu.VMEM((n, 9 * H_DIM), jnp.bfloat16),              # im2col patch matrix
        ],
    )(x_im2col, ws, params["stem_s"], params["stem_b"],
      w1, params["b1_s1"], params["b1_b1"],
      w2, params["b1_s2"], params["b1_b2"],
      hw, params["head_b"])


# ---------------------------------------------------------------------------
# parameters (deterministic synthetic init; BN folded into scale/bias)
# ---------------------------------------------------------------------------
def init_params(key):
    ks = jax.random.split(key, 8)

    def conv_w(k, cin, cout):
        std = np.sqrt(2.0 / (9 * cin))
        return jax.random.normal(k, (3, 3, cin, cout), jnp.float32) * std

    return {
        "stem_w": conv_w(ks[0], C_IN, H_DIM),
        "stem_s": 1.0 + 0.01 * jax.random.normal(ks[1], (1, H_DIM), jnp.float32),
        "stem_b": 0.01 * jax.random.normal(ks[2], (1, H_DIM), jnp.float32),
        "b1_w1": conv_w(ks[3], H_DIM, H_DIM),
        "b1_s1": jnp.ones((1, H_DIM), jnp.float32),
        "b1_b1": jnp.zeros((1, H_DIM), jnp.float32),
        "b1_w2": conv_w(ks[4], H_DIM, H_DIM),
        "b1_s2": jnp.ones((1, H_DIM), jnp.float32),
        "b1_b2": jnp.zeros((1, H_DIM), jnp.float32),
        "head_w": (jax.random.normal(ks[5], (H_DIM, N_CLASSES), jnp.float32)
                   * np.sqrt(1.0 / H_DIM)),
        "head_b": jnp.zeros((1, N_CLASSES), jnp.float32),
    }


# ---------------------------------------------------------------------------
# pure-JAX reference (same bf16 matmul-operand precision as the kernel)
# ---------------------------------------------------------------------------
def reference_forward(params, x_nchw):
    x = jnp.transpose(x_nchw, (0, 2, 3, 1)).astype(jnp.float32)
    dn = ("NHWC", "HWIO", "NHWC")

    def conv_f32(xi, w):
        return lax.conv_general_dilated(xi, w, (1, 1), "SAME", dimension_numbers=dn,
                                        preferred_element_type=jnp.float32)

    def conv_bf16(xi, w):
        return lax.conv_general_dilated(xi.astype(jnp.bfloat16),
                                        w.astype(jnp.bfloat16),
                                        (1, 1), "SAME", dimension_numbers=dn,
                                        preferred_element_type=jnp.float32)

    h = jnp.maximum(conv_f32(x, params["stem_w"]) * params["stem_s"]
                    + params["stem_b"], 0.0)
    y = jnp.maximum(conv_bf16(h, params["b1_w1"]) * params["b1_s1"]
                    + params["b1_b1"], 0.0)
    z = jnp.maximum(conv_bf16(y, params["b1_w2"]) * params["b1_s2"]
                    + params["b1_b2"] + h, 0.0)
    feat = jnp.mean(z, axis=(1, 2))
    return feat @ params["head_w"] + params["head_b"]


if __name__ == "__main__":
    key = jax.random.PRNGKey(0)
    pkey, xkey = jax.random.split(key)
    params = init_params(pkey)
    x = jax.random.normal(xkey, (BATCH, C_IN, H, W), jnp.float32)

    out = jax.block_until_ready(model_forward(params, x))

    ref = reference_forward(params, x)
    np.testing.assert_allclose(np.asarray(out), np.asarray(ref),
                               rtol=1e-2, atol=1e-2)
    assert out.shape == (BATCH, N_CLASSES)
    print("KERNEL_OK")
</pallas_src>

<mosaic_0001>
module attributes {stable_mosaic.version = 11 : i64} {
  func.func @fused_forward_kernel(%arg0: memref<512x27xf32, #tpu.memory_space<vmem>>, %arg1: memref<27x128xf32, #tpu.memory_space<vmem>>, %arg2: memref<1x128xf32, #tpu.memory_space<vmem>>, %arg3: memref<1x128xf32, #tpu.memory_space<vmem>>, %arg4: memref<1152x128xbf16, #tpu.memory_space<vmem>>, %arg5: memref<1x128xf32, #tpu.memory_space<vmem>>, %arg6: memref<1x128xf32, #tpu.memory_space<vmem>>, %arg7: memref<1152x128xbf16, #tpu.memory_space<vmem>>, %arg8: memref<1x128xf32, #tpu.memory_space<vmem>>, %arg9: memref<1x128xf32, #tpu.memory_space<vmem>>, %arg10: memref<1x128xf32, #tpu.memory_space<vmem>>, %arg11: memref<1x1xf32, #tpu.memory_space<vmem>>, %arg12: memref<2x1xf32, #tpu.memory_space<vmem>>, %arg13: memref<2x18x25x128xf32, #tpu.memory_space<vmem>>, %arg14: memref<2x18x25x128xf32, #tpu.memory_space<vmem>>, %arg15: memref<512x1152xbf16, #tpu.memory_space<vmem>>) attributes {dimension_semantics = [], scalar_prefetch = 0 : i64, scratch_operands = 3 : i64, tpu.core_type = #tpu.core_type<tc>} {
    %c0 = arith.constant 0 : index
    %c0_0 = arith.constant 0 : index
    %0 = vector.load %arg0[%c0, %c0_0] : memref<512x27xf32, #tpu.memory_space<vmem>>, vector<512x27xf32>
    %c0_1 = arith.constant 0 : index
    %c0_2 = arith.constant 0 : index
    %1 = vector.load %arg1[%c0_1, %c0_2] : memref<27x128xf32, #tpu.memory_space<vmem>>, vector<27x128xf32>
    %cst = arith.constant dense<0.000000e+00> : vector<512x128xf32>
    %2 = tpu.matmul %0, %1, %cst {dimension_numbers = #tpu.dot_dimension_numbers<[1], [0], [0], [1], [0, 0, 1, 1], [], []>} : vector<512x27xf32>, vector<27x128xf32>, vector<512x128xf32> -> vector<512x128xf32>
    %c0_3 = arith.constant 0 : index
    %c0_4 = arith.constant 0 : index
    %3 = vector.load %arg2[%c0_3, %c0_4] : memref<1x128xf32, #tpu.memory_space<vmem>>, vector<1x128xf32>
    %4 = vector.broadcast %3 : vector<1x128xf32> to vector<512x128xf32>
    %5 = arith.mulf %2, %4 : vector<512x128xf32>
    %c0_5 = arith.constant 0 : index
    %c0_6 = arith.constant 0 : index
    %6 = vector.load %arg3[%c0_5, %c0_6] : memref<1x128xf32, #tpu.memory_space<vmem>>, vector<1x128xf32>
    %7 = vector.broadcast %6 : vector<1x128xf32> to vector<512x128xf32>
    %8 = arith.addf %5, %7 : vector<512x128xf32>
    %cst_7 = arith.constant 0.000000e+00 : f32
    %9 = vector.broadcast %cst_7 : f32 to vector<512x128xf32>
    %10 = arith.maximumf %8, %9 : vector<512x128xf32>
    %cst_8 = arith.constant 0.000000e+00 : f32
    %11 = vector.broadcast %cst_8 : f32 to vector<2x18x25x128xf32>
    %c0_9 = arith.constant 0 : index
    %c0_10 = arith.constant 0 : index
    %c0_11 = arith.constant 0 : index
    %c0_12 = arith.constant 0 : index
    %12 = vector.load %arg13[%c0_9, %c0_10, %c0_11, %c0_12] : memref<2x18x25x128xf32, #tpu.memory_space<vmem>>, vector<2x18x25x128xf32>
    tpu.vector_store %arg13[%c0_9, %c0_10, %c0_11, %c0_12], %11 {strides = array<i32>} : memref<2x18x25x128xf32, #tpu.memory_space<vmem>>, vector<2x18x25x128xf32>,
    %13 = vector.shape_cast %10 : vector<512x128xf32> to vector<2x16x16x128xf32>
    %c0_13 = arith.constant 0 : index
    %c1 = arith.constant 1 : index
    %c8 = arith.constant 8 : index
    %c0_14 = arith.constant 0 : index
    %14 = vector.load %arg13[%c0_13, %c1, %c8, %c0_14] : memref<2x18x25x128xf32, #tpu.memory_space<vmem>>, vector<2x16x16x128xf32>
    tpu.vector_store %arg13[%c0_13, %c1, %c8, %c0_14], %13 {strides = array<i32>} : memref<2x18x25x128xf32, #tpu.memory_space<vmem>>, vector<2x16x16x128xf32>,
    %c0_15 = arith.constant 0 : index
    %c0_16 = arith.constant 0 : index
    %c7 = arith.constant 7 : index
    %c0_17 = arith.constant 0 : index
    %15 = vector.load %arg13[%c0_15, %c0_16, %c7, %c0_17] : memref<2x18x25x128xf32, #tpu.memory_space<vmem>>, vector<2x16x16x128xf32>
    %16 = vector.shape_cast %15 : vector<2x16x16x128xf32> to vector<512x128xf32>
    %17 = arith.truncf %16 : vector<512x128xf32> to vector<512x128xbf16>
    %c0_18 = arith.constant 0 : index
    %c0_19 = arith.constant 0 : index
    %18 = vector.load %arg15[%c0_18, %c0_19] : memref<512x1152xbf16, #tpu.memory_space<vmem>>, vector<512x128xbf16>
    tpu.vector_store %arg15[%c0_18, %c0_19], %17 {strides = array<i32>} : memref<512x1152xbf16, #tpu.memory_space<vmem>>, vector<512x128xbf16>,
    %c0_20 = arith.constant 0 : index
    %c0_21 = arith.constant 0 : index
    %c8_22 = arith.constant 8 : index
    %c0_23 = arith.constant 0 : index
    %19 = vector.load %arg13[%c0_20, %c0_21, %c8_22, %c0_23] : memref<2x18x25x128xf32, #tpu.memory_space<vmem>>, vector<2x16x16x128xf32>
    %20 = vector.shape_cast %19 : vector<2x16x16x128xf32> to vector<512x128xf32>
    %21 = arith.truncf %20 : vector<512x128xf32> to vector<512x128xbf16>
    %c0_24 = arith.constant 0 : index
    %c128 = arith.constant 128 : index
    %22 = vector.load %arg15[%c0_24, %c128] : memref<512x1152xbf16, #tpu.memory_space<vmem>>, vector<512x128xbf16>
    tpu.vector_store %arg15[%c0_24, %c128], %21 {strides = array<i32>} : memref<512x1152xbf16, #tpu.memory_space<vmem>>, vector<512x128xbf16>,
    %c0_25 = arith.constant 0 : index
    %c0_26 = arith.constant 0 : index
    %c9 = arith.constant 9 : index
    %c0_27 = arith.constant 0 : index
    %23 = vector.load %arg13[%c0_25, %c0_26, %c9, %c0_27] : memref<2x18x25x128xf32, #tpu.memory_space<vmem>>, vector<2x16x16x128xf32>
    %24 = vector.shape_cast %23 : vector<2x16x16x128xf32> to vector<512x128xf32>
    %25 = arith.truncf %24 : vector<512x128xf32> to vector<512x128xbf16>
    %c0_28 = arith.constant 0 : index
    %c256 = arith.constant 256 : index
    %26 = vector.load %arg15[%c0_28, %c256] : memref<512x1152xbf16, #tpu.memory_space<vmem>>, vector<512x128xbf16>
    tpu.vector_store %arg15[%c0_28, %c256], %25 {strides = array<i32>} : memref<512x1152xbf16, #tpu.memory_space<vmem>>, vector<512x128xbf16>,
    %c0_29 = arith.constant 0 : index
    %c1_30 = arith.constant 1 : index
    %c7_31 = arith.constant 7 : index
    %c0_32 = arith.constant 0 : index
    %27 = vector.load %arg13[%c0_29, %c1_30, %c7_31, %c0_32] : memref<2x18x25x128xf32, #tpu.memory_space<vmem>>, vector<2x16x16x128xf32>
    %28 = vector.shape_cast %27 : vector<2x16x16x128xf32> to vector<512x128xf32>
    %29 = arith.truncf %28 : vector<512x128xf32> to vector<512x128xbf16>
    %c0_33 = arith.constant 0 : index
    %c384 = arith.constant 384 : index
    %30 = vector.load %arg15[%c0_33, %c384] : memref<512x1152xbf16, #tpu.memory_space<vmem>>, vector<512x128xbf16>
    tpu.vector_store %arg15[%c0_33, %c384], %29 {strides = array<i32>} : memref<512x1152xbf16, #tpu.memory_space<vmem>>, vector<512x128xbf16>,
    %c0_34 = arith.constant 0 : index
    %c1_35 = arith.constant 1 : index
    %c8_36 = arith.constant 8 : index
    %c0_37 = arith.constant 0 : index
    %31 = vector.load %arg13[%c0_34, %c1_35, %c8_36, %c0_37] : memref<2x18x25x128xf32, #tpu.memory_space<vmem>>, vector<2x16x16x128xf32>
    %32 = vector.shape_cast %31 : vector<2x16x16x128xf32> to vector<512x128xf32>
    %33 = arith.truncf %32 : vector<512x128xf32> to vector<512x128xbf16>
    %c0_38 = arith.constant 0 : index
    %c512 = arith.constant 512 : index
    %34 = vector.load %arg15[%c0_38, %c512] : memref<512x1152xbf16, #tpu.memory_space<vmem>>, vector<512x128xbf16>
    tpu.vector_store %arg15[%c0_38, %c512], %33 {strides = array<i32>} : memref<512x1152xbf16, #tpu.memory_space<vmem>>, vector<512x128xbf16>,
    %c0_39 = arith.constant 0 : index
    %c1_40 = arith.constant 1 : index
    %c9_41 = arith.constant 9 : index
    %c0_42 = arith.constant 0 : index
    %35 = vector.load %arg13[%c0_39, %c1_40, %c9_41, %c0_42] : memref<2x18x25x128xf32, #tpu.memory_space<vmem>>, vector<2x16x16x128xf32>
    %36 = vector.shape_cast %35 : vector<2x16x16x128xf32> to vector<512x128xf32>
    %37 = arith.truncf %36 : vector<512x128xf32> to vector<512x128xbf16>
    %c0_43 = arith.constant 0 : index
    %c640 = arith.constant 640 : index
    %38 = vector.load %arg15[%c0_43, %c640] : memref<512x1152xbf16, #tpu.memory_space<vmem>>, vector<512x128xbf16>
    tpu.vector_store %arg15[%c0_43, %c640], %37 {strides = array<i32>} : memref<512x1152xbf16, #tpu.memory_space<vmem>>, vector<512x128xbf16>,
    %c0_44 = arith.constant 0 : index
    %c2 = arith.constant 2 : index
    %c7_45 = arith.constant 7 : index
    %c0_46 = arith.constant 0 : index
    %39 = vector.load %arg13[%c0_44, %c2, %c7_45, %c0_46] : memref<2x18x25x128xf32, #tpu.memory_space<vmem>>, vector<2x16x16x128xf32>
    %40 = vector.shape_cast %39 : vector<2x16x16x128xf32> to vector<512x128xf32>
    %41 = arith.truncf %40 : vector<512x128xf32> to vector<512x128xbf16>
    %c0_47 = arith.constant 0 : index
    %c768 = arith.constant 768 : index
    %42 = vector.load %arg15[%c0_47, %c768] : memref<512x1152xbf16, #tpu.memory_space<vmem>>, vector<512x128xbf16>
    tpu.vector_store %arg15[%c0_47, %c768], %41 {strides = array<i32>} : memref<512x1152xbf16, #tpu.memory_space<vmem>>, vector<512x128xbf16>,
    %c0_48 = arith.constant 0 : index
    %c2_49 = arith.constant 2 : index
    %c8_50 = arith.constant 8 : index
    %c0_51 = arith.constant 0 : index
    %43 = vector.load %arg13[%c0_48, %c2_49, %c8_50, %c0_51] : memref<2x18x25x128xf32, #tpu.memory_space<vmem>>, vector<2x16x16x128xf32>
    %44 = vector.shape_cast %43 : vector<2x16x16x128xf32> to vector<512x128xf32>
    %45 = arith.truncf %44 : vector<512x128xf32> to vector<512x128xbf16>
    %c0_52 = arith.constant 0 : index
    %c896 = arith.constant 896 : index
    %46 = vector.load %arg15[%c0_52, %c896] : memref<512x1152xbf16, #tpu.memory_space<vmem>>, vector<512x128xbf16>
    tpu.vector_store %arg15[%c0_52, %c896], %45 {strides = array<i32>} : memref<512x1152xbf16, #tpu.memory_space<vmem>>, vector<512x128xbf16>,
    %c0_53 = arith.constant 0 : index
    %c2_54 = arith.constant 2 : index
    %c9_55 = arith.constant 9 : index
    %c0_56 = arith.constant 0 : index
    %47 = vector.load %arg13[%c0_53, %c2_54, %c9_55, %c0_56] : memref<2x18x25x128xf32, #tpu.memory_space<vmem>>, vector<2x16x16x128xf32>
    %48 = vector.shape_cast %47 : vector<2x16x16x128xf32> to vector<512x128xf32>
    %49 = arith.truncf %48 : vector<512x128xf32> to vector<512x128xbf16>
    %c0_57 = arith.constant 0 : index
    %c1024 = arith.constant 1024 : index
    %50 = vector.load %arg15[%c0_57, %c1024] : memref<512x1152xbf16, #tpu.memory_space<vmem>>, vector<512x128xbf16>
    tpu.vector_store %arg15[%c0_57, %c1024], %49 {strides = array<i32>} : memref<512x1152xbf16, #tpu.memory_space<vmem>>, vector<512x128xbf16>,
    %c0_58 = arith.constant 0 : index
    %c0_59 = arith.constant 0 : index
    %51 = vector.load %arg15[%c0_58, %c0_59] : memref<512x1152xbf16, #tpu.memory_space<vmem>>, vector<512x1152xbf16>
    %c0_60 = arith.constant 0 : index
    %c0_61 = arith.constant 0 : index
    %52 = vector.load %arg4[%c0_60, %c0_61] : memref<1152x128xbf16, #tpu.memory_space<vmem>>, vector<1152x128xbf16>
    %cst_62 = arith.constant dense<0.000000e+00> : vector<512x128xf32>
    %53 = tpu.matmul %51, %52, %cst_62 {dimension_numbers = #tpu.dot_dimension_numbers<[1], [0], [0], [1], [0, 0, 1, 1], [], []>} : vector<512x1152xbf16>, vector<1152x128xbf16>, vector<512x128xf32> -> vector<512x128xf32>
    %c0_63 = arith.constant 0 : index
    %c0_64 = arith.constant 0 : index
    %54 = vector.load %arg5[%c0_63, %c0_64] : memref<1x128xf32, #tpu.memory_space<vmem>>, vector<1x128xf32>
    %55 = vector.broadcast %54 : vector<1x128xf32> to vector<512x128xf32>
    %56 = arith.mulf %53, %55 : vector<512x128xf32>
    %c0_65 = arith.constant 0 : index
    %c0_66 = arith.constant 0 : index
    %57 = vector.load %arg6[%c0_65, %c0_66] : memref<1x128xf32, #tpu.memory_space<vmem>>, vector<1x128xf32>
    %58 = vector.broadcast %57 : vector<1x128xf32> to vector<512x128xf32>
    %59 = arith.addf %56, %58 : vector<512x128xf32>
    %cst_67 = arith.constant 0.000000e+00 : f32
    %60 = vector.broadcast %cst_67 : f32 to vector<512x128xf32>
    %61 = arith.maximumf %59, %60 : vector<512x128xf32>
    %cst_68 = arith.constant 0.000000e+00 : f32
    %62 = vector.broadcast %cst_68 : f32 to vector<2x18x25x128xf32>
    %c0_69 = arith.constant 0 : index
    %c0_70 = arith.constant 0 : index
    %c0_71 = arith.constant 0 : index
    %c0_72 = arith.constant 0 : index
    %63 = vector.load %arg14[%c0_69, %c0_70, %c0_71, %c0_72] : memref<2x18x25x128xf32, #tpu.memory_space<vmem>>, vector<2x18x25x128xf32>
    tpu.vector_store %arg14[%c0_69, %c0_70, %c0_71, %c0_72], %62 {strides = array<i32>} : memref<2x18x25x128xf32, #tpu.memory_space<vmem>>, vector<2x18x25x128xf32>,
    %64 = vector.shape_cast %61 : vector<512x128xf32> to vector<2x16x16x128xf32>
    %c0_73 = arith.constant 0 : index
    %c1_74 = arith.constant 1 : index
    %c8_75 = arith.constant 8 : index
    %c0_76 = arith.constant 0 : index
    %65 = vector.load %arg14[%c0_73, %c1_74, %c8_75, %c0_76] : memref<2x18x25x128xf32, #tpu.memory_space<vmem>>, vector<2x16x16x128xf32>
    tpu.vector_store %arg14[%c0_73, %c1_74, %c8_75, %c0_76], %64 {strides = array<i32>} : memref<2x18x25x128xf32, #tpu.memory_space<vmem>>, vector<2x16x16x128xf32>,
    %c0_77 = arith.constant 0 : index
    %c1_78 = arith.constant 1 : index
    %c8_79 = arith.constant 8 : index
    %c0_80 = arith.constant 0 : index
    %66 = vector.load %arg13[%c0_77, %c1_78, %c8_79, %c0_80] : memref<2x18x25x128xf32, #tpu.memory_space<vmem>>, vector<2x16x16x128xf32>
    %67 = vector.shape_cast %66 : vector<2x16x16x128xf32> to vector<512x128xf32>
    %c0_81 = arith.constant 0 : index
    %c0_82 = arith.constant 0 : index
    %c7_83 = arith.constant 7 : index
    %c0_84 = arith.constant 0 : index
    %68 = vector.load %arg14[%c0_81, %c0_82, %c7_83, %c0_84] : memref<2x18x25x128xf32, #tpu.memory_space<vmem>>, vector<2x16x16x128xf32>
    %69 = vector.shape_cast %68 : vector<2x16x16x128xf32> to vector<512x128xf32>
    %70 = arith.truncf %69 : vector<512x128xf32> to vector<512x128xbf16>
    %c0_85 = arith.constant 0 : index
    %c0_86 = arith.constant 0 : index
    %71 = vector.load %arg15[%c0_85, %c0_86] : memref<512x1152xbf16, #tpu.memory_space<vmem>>, vector<512x128xbf16>
    tpu.vector_store %arg15[%c0_85, %c0_86], %70 {strides = array<i32>} : memref<512x1152xbf16, #tpu.memory_space<vmem>>, vector<512x128xbf16>,
    %c0_87 = arith.constant 0 : index
    %c0_88 = arith.constant 0 : index
    %c8_89 = arith.constant 8 : index
    %c0_90 = arith.constant 0 : index
    %72 = vector.load %arg14[%c0_87, %c0_88, %c8_89, %c0_90] : memref<2x18x25x128xf32, #tpu.memory_space<vmem>>, vector<2x16x16x128xf32>
    %73 = vector.shape_cast %72 : vector<2x16x16x128xf32> to vector<512x128xf32>
    %74 = arith.truncf %73 : vector<512x128xf32> to vector<512x128xbf16>
    %c0_91 = arith.constant 0 : index
    %c128_92 = arith.constant 128 : index
    %75 = vector.load %arg15[%c0_91, %c128_92] : memref<512x1152xbf16, #tpu.memory_space<vmem>>, vector<512x128xbf16>
    tpu.vector_store %arg15[%c0_91, %c128_92], %74 {strides = array<i32>} : memref<512x1152xbf16, #tpu.memory_space<vmem>>, vector<512x128xbf16>,
    %c0_93 = arith.constant 0 : index
    %c0_94 = arith.constant 0 : index
    %c9_95 = arith.constant 9 : index
    %c0_96 = arith.constant 0 : index
    %76 = vector.load %arg14[%c0_93, %c0_94, %c9_95, %c0_96] : memref<2x18x25x128xf32, #tpu.memory_space<vmem>>, vector<2x16x16x128xf32>
    %77 = vector.shape_cast %76 : vector<2x16x16x128xf32> to vector<512x128xf32>
    %78 = arith.truncf %77 : vector<512x128xf32> to vector<512x128xbf16>
    %c0_97 = arith.constant 0 : index
    %c256_98 = arith.constant 256 : index
    %79 = vector.load %arg15[%c0_97, %c256_98] : memref<512x1152xbf16, #tpu.memory_space<vmem>>, vector<512x128xbf16>
    tpu.vector_store %arg15[%c0_97, %c256_98], %78 {strides = array<i32>} : memref<512x1152xbf16, #tpu.memory_space<vmem>>, vector<512x128xbf16>,
    %c0_99 = arith.constant 0 : index
    %c1_100 = arith.constant 1 : index
    %c7_101 = arith.constant 7 : index
    %c0_102 = arith.constant 0 : index
    %80 = vector.load %arg14[%c0_99, %c1_100, %c7_101, %c0_102] : memref<2x18x25x128xf32, #tpu.memory_space<vmem>>, vector<2x16x16x128xf32>
    %81 = vector.shape_cast %80 : vector<2x16x16x128xf32> to vector<512x128xf32>
    %82 = arith.truncf %81 : vector<512x128xf32> to vector<512x128xbf16>
    %c0_103 = arith.constant 0 : index
    %c384_104 = arith.constant 384 : index
    %83 = vector.load %arg15[%c0_103, %c384_104] : memref<512x1152xbf16, #tpu.memory_space<vmem>>, vector<512x128xbf16>
    tpu.vector_store %arg15[%c0_103, %c384_104], %82 {strides = array<i32>} : memref<512x1152xbf16, #tpu.memory_space<vmem>>, vector<512x128xbf16>,
    %c0_105 = arith.constant 0 : index
    %c1_106 = arith.constant 1 : index
    %c8_107 = arith.constant 8 : index
    %c0_108 = arith.constant 0 : index
    %84 = vector.load %arg14[%c0_105, %c1_106, %c8_107, %c0_108] : memref<2x18x25x128xf32, #tpu.memory_space<vmem>>, vector<2x16x16x128xf32>
    %85 = vector.shape_cast %84 : vector<2x16x16x128xf32> to vector<512x128xf32>
    %86 = arith.truncf %85 : vector<512x128xf32> to vector<512x128xbf16>
    %c0_109 = arith.constant 0 : index
    %c512_110 = arith.constant 512 : index
    %87 = vector.load %arg15[%c0_109, %c512_110] : memref<512x1152xbf16, #tpu.memory_space<vmem>>, vector<512x128xbf16>
    tpu.vector_store %arg15[%c0_109, %c512_110], %86 {strides = array<i32>} : memref<512x1152xbf16, #tpu.memory_space<vmem>>, vector<512x128xbf16>,
    %c0_111 = arith.constant 0 : index
    %c1_112 = arith.constant 1 : index
    %c9_113 = arith.constant 9 : index
    %c0_114 = arith.constant 0 : index
    %88 = vector.load %arg14[%c0_111, %c1_112, %c9_113, %c0_114] : memref<2x18x25x128xf32, #tpu.memory_space<vmem>>, vector<2x16x16x128xf32>
    %89 = vector.shape_cast %88 : vector<2x16x16x128xf32> to vector<512x128xf32>
    %90 = arith.truncf %89 : vector<512x128xf32> to vector<512x128xbf16>
    %c0_115 = arith.constant 0 : index
    %c640_116 = arith.constant 640 : index
    %91 = vector.load %arg15[%c0_115, %c640_116] : memref<512x1152xbf16, #tpu.memory_space<vmem>>, vector<512x128xbf16>
    tpu.vector_store %arg15[%c0_115, %c640_116], %90 {strides = array<i32>} : memref<512x1152xbf16, #tpu.memory_space<vmem>>, vector<512x128xbf16>,
    %c0_117 = arith.constant 0 : index
    %c2_118 = arith.constant 2 : index
    %c7_119 = arith.constant 7 : index
    %c0_120 = arith.constant 0 : index
    %92 = vector.load %arg14[%c0_117, %c2_118, %c7_119, %c0_120] : memref<2x18x25x128xf32, #tpu.memory_space<vmem>>, vector<2x16x16x128xf32>
    %93 = vector.shape_cast %92 : vector<2x16x16x128xf32> to vector<512x128xf32>
    %94 = arith.truncf %93 : vector<512x128xf32> to vector<512x128xbf16>
    %c0_121 = arith.constant 0 : index
    %c768_122 = arith.constant 768 : index
    %95 = vector.load %arg15[%c0_121, %c768_122] : memref<512x1152xbf16, #tpu.memory_space<vmem>>, vector<512x128xbf16>
    tpu.vector_store %arg15[%c0_121, %c768_122], %94 {strides = array<i32>} : memref<512x1152xbf16, #tpu.memory_space<vmem>>, vector<512x128xbf16>,
    %c0_123 = arith.constant 0 : index
    %c2_124 = arith.constant 2 : index
    %c8_125 = arith.constant 8 : index
    %c0_126 = arith.constant 0 : index
    %96 = vector.load %arg14[%c0_123, %c2_124, %c8_125, %c0_126] : memref<2x18x25x128xf32, #tpu.memory_space<vmem>>, vector<2x16x16x128xf32>
    %97 = vector.shape_cast %96 : vector<2x16x16x128xf32> to vector<512x128xf32>
    %98 = arith.truncf %97 : vector<512x128xf32> to vector<512x128xbf16>
    %c0_127 = arith.constant 0 : index
    %c896_128 = arith.constant 896 : index
    %99 = vector.load %arg15[%c0_127, %c896_128] : memref<512x1152xbf16, #tpu.memory_space<vmem>>, vector<512x128xbf16>
    tpu.vector_store %arg15[%c0_127, %c896_128], %98 {strides = array<i32>} : memref<512x1152xbf16, #tpu.memory_space<vmem>>, vector<512x128xbf16>,
    %c0_129 = arith.constant 0 : index
    %c2_130 = arith.constant 2 : index
    %c9_131 = arith.constant 9 : index
    %c0_132 = arith.constant 0 : index
    %100 = vector.load %arg14[%c0_129, %c2_130, %c9_131, %c0_132] : memref<2x18x25x128xf32, #tpu.memory_space<vmem>>, vector<2x16x16x128xf32>
    %101 = vector.shape_cast %100 : vector<2x16x16x128xf32> to vector<512x128xf32>
    %102 = arith.truncf %101 : vector<512x128xf32> to vector<512x128xbf16>
    %c0_133 = arith.constant 0 : index
    %c1024_134 = arith.constant 1024 : index
    %103 = vector.load %arg15[%c0_133, %c1024_134] : memref<512x1152xbf16, #tpu.memory_space<vmem>>, vector<512x128xbf16>
    tpu.vector_store %arg15[%c0_133, %c1024_134], %102 {strides = array<i32>} : memref<512x1152xbf16, #tpu.memory_space<vmem>>, vector<512x128xbf16>,
    %c0_135 = arith.constant 0 : index
    %c0_136 = arith.constant 0 : index
    %104 = vector.load %arg15[%c0_135, %c0_136] : memref<512x1152xbf16, #tpu.memory_space<vmem>>, vector<512x1152xbf16>
    %c0_137 = arith.constant 0 : index
    %c0_138 = arith.constant 0 : index
    %105 = vector.load %arg7[%c0_137, %c0_138] : memref<1152x128xbf16, #tpu.memory_space<vmem>>, vector<1152x128xbf16>
    %cst_139 = arith.constant dense<0.000000e+00> : vector<512x128xf32>
    %106 = tpu.matmul %104, %105, %cst_139 {dimension_numbers = #tpu.dot_dimension_numbers<[1], [0], [0], [1], [0, 0, 1, 1], [], []>} : vector<512x1152xbf16>, vector<1152x128xbf16>, vector<512x128xf32> -> vector<512x128xf32>
    %c0_140 = arith.constant 0 : index
    %c0_141 = arith.constant 0 : index
    %107 = vector.load %arg8[%c0_140, %c0_141] : memref<1x128xf32, #tpu.memory_space<vmem>>, vector<1x128xf32>
    %108 = vector.broadcast %107 : vector<1x128xf32> to vector<512x128xf32>
    %109 = arith.mulf %106, %108 : vector<512x128xf32>
    %c0_142 = arith.constant 0 : index
    %c0_143 = arith.constant 0 : index
    %110 = vector.load %arg9[%c0_142, %c0_143] : memref<1x128xf32, #tpu.memory_space<vmem>>, vector<1x128xf32>
    %111 = vector.broadcast %110 : vector<1x128xf32> to vector<512x128xf32>
    %112 = arith.addf %109, %111 : vector<512x128xf32>
    %113 = arith.addf %112, %67 : vector<512x128xf32>
    %cst_144 = arith.constant 0.000000e+00 : f32
    %114 = vector.broadcast %cst_144 : f32 to vector<512x128xf32>
    %115 = arith.maximumf %113, %114 : vector<512x128xf32>
    %116 = vector.shape_cast %115 : vector<512x128xf32> to vector<2x256x128xf32>
    %cst_145 = arith.constant dense<0.000000e+00> : vector<2x128xf32>
    %117 = vector.multi_reduction <add>, %116, %cst_145 [1] : vector<2x256x128xf32> to vector<2x128xf32>
    %cst_146 = arith.constant 2.560000e+02 : f32
    %118 = vector.broadcast %cst_146 : f32 to vector<2x128xf32>
    %119 = arith.divf %117, %118 : vector<2x128xf32>
    %c0_147 = arith.constant 0 : index
    %c0_148 = arith.constant 0 : index
    %120 = vector.load %arg10[%c0_147, %c0_148] : memref<1x128xf32, #tpu.memory_space<vmem>>, vector<1x128xf32>
    %121 = vector.broadcast %120 : vector<1x128xf32> to vector<2x128xf32>
    %122 = arith.mulf %119, %121 : vector<2x128xf32>
    %cst_149 = arith.constant dense<0.000000e+00> : vector<2xf32>
    %123 = vector.multi_reduction <add>, %122, %cst_149 [1] : vector<2x128xf32> to vector<2xf32>
    %124 = vector.shape_cast %123 : vector<2xf32> to vector<2x1xf32>
    %c0_150 = arith.constant 0 : index
    %c0_151 = arith.constant 0 : index
    %125 = vector.load %arg11[%c0_150, %c0_151] : memref<1x1xf32, #tpu.memory_space<vmem>>, vector<1x1xf32>
    %126 = vector.broadcast %125 : vector<1x1xf32> to vector<2x1xf32>
    %127 = arith.addf %124, %126 : vector<2x1xf32>
    %c0_152 = arith.constant 0 : index
    %c0_153 = arith.constant 0 : index
    %128 = vector.load %arg12[%c0_152, %c0_153] : memref<2x1xf32, #tpu.memory_space<vmem>>, vector<2x1xf32>
    tpu.vector_store %arg12[%c0_152, %c0_153], %127 {strides = array<i32>} : memref<2x1xf32, #tpu.memory_space<vmem>>, vector<2x1xf32>,
    return
  }
}

</mosaic_0001>

<llo_original>
// kernel: model_forward.1
$region0: #{model_forward.1}
  #allocation0 [shape = 'u32[]', space=smem, size = 0x4, offset = 0x4, fixed_abs, tag = 'smem constant byte address 0x4 - core index']
  #allocation1 [shape = 'u32[144,128]{1,0:T(1,128)}', space=vmem, size = 0x12000, scoped, tag = 'internal scratch']
  #allocation2 [shape = 'f32[2,18,25,128]{3,2,1,0:T(8,128)}', space=vmem, size = 0x90000, scoped, tag = 'scratch operand']
  #allocation3 [shape = 'f32[2,18,25,128]{3,2,1,0:T(8,128)}', space=vmem, size = 0x90000, scoped, tag = 'scratch operand']
  #allocation4 [shape = 'bf16[512,1152]{1,0:T(16,128)(2,1)}', space=vmem, size = 0x120000, scoped, tag = 'scratch operand']
  #allocation5 [shape = 'f32[1,1]{1,0:T(1,128)S(1)}', space=vmem, size = 0x200, scoped, tag = 'scoped memory for model_forward.1']
  %s0 = inlined_call_operand.vmem [shape: f32[512,27], index: 0, kind: input, shape index: {}]
  %s1 = inlined_call_operand.vmem [shape: f32[27,128], index: 1, kind: input, shape index: {}]
  %s2 = inlined_call_operand.vmem [shape: f32[1,128], index: 2, kind: input, shape index: {}]
  %s3 = inlined_call_operand.vmem [shape: f32[1,128], index: 3, kind: input, shape index: {}]
  %s4 = inlined_call_operand.vmem [shape: bf16[1152,128], index: 4, kind: input, shape index: {}]
  %s5 = inlined_call_operand.vmem [shape: f32[1,128], index: 5, kind: input, shape index: {}]
  %s6 = inlined_call_operand.vmem [shape: f32[1,128], index: 6, kind: input, shape index: {}]
  %s7 = inlined_call_operand.vmem [shape: bf16[1152,128], index: 7, kind: input, shape index: {}]
  %s8 = inlined_call_operand.vmem [shape: f32[1,128], index: 8, kind: input, shape index: {}]
  %s9 = inlined_call_operand.vmem [shape: f32[1,128], index: 9, kind: input, shape index: {}]
  %s10 = inlined_call_operand.vmem [shape: f32[1,128], index: 10, kind: input, shape index: {}]
  %s11 = inlined_call_operand.<no memory space> [shape: f32[1,1], index: 11, kind: input, shape index: {}]
  %s12 = inlined_call_operand.vmem [shape: f32[2,1], index: 12, kind: output, shape index: {}]
  %s13 = sld [smem:[#allocation0]]
  $region58: #{model_forward.1} parent=0
    _
  %s15 = ssub.s32 1, %s13
  %s16 = scalar_select 0, %s15, %s13
  %v17 = vstv %s11
  %18 = vst [vmem:[#allocation5] sm:$0x1] %v17
  // Predicated region
  $region2: #{model_forward.1} parent=0 // pred_check
    _
  $region3: #{model_forward.1} parent=0 // pred_check_branch
    %20 = sbr.rel (0) target = $region5
  $region4: #{model_forward.1} parent=0 // pred_region
    _
  $region5: #{model_forward.1} parent=0 // pred_fallthru
    _
  // Predicated region
  $region6: #{model_forward.1} parent=0 // pred_check
    _
  $region7: #{model_forward.1} parent=0 // pred_check_branch
    %22 = sbr.rel (0) target = $region9
  $region8: #{model_forward.1} parent=0 // pred_region
    _
  $region9: #{model_forward.1} parent=0 // pred_fallthru
    _
  // Predicated region
  $region10: #{model_forward.1} parent=0 // pred_check
    _
  $region11: #{model_forward.1} parent=0 // pred_check_branch
    %24 = sbr.rel (0) target = $region13
  $region12: #{model_forward.1} parent=0 // pred_region
    _
  $region13: #{model_forward.1} parent=0 // pred_fallthru
    _
  // Predicated region
  $region14: #{model_forward.1} parent=0 // pred_check
    _
  $region15: #{model_forward.1} parent=0 // pred_check_branch
    %26 = sbr.rel (0) target = $region17
  $region16: #{model_forward.1} parent=0 // pred_region
    _
  $region17: #{model_forward.1} parent=0 // pred_fallthru
    _
  // Predicated region
  $region18: #{model_forward.1} parent=0 // pred_check
    _
  $region19: #{model_forward.1} parent=0 // pred_check_branch
    %28 = sbr.rel (0) target = $region21
  $region20: #{model_forward.1} parent=0 // pred_region
    _
  $region21: #{model_forward.1} parent=0 // pred_fallthru
    _
  // Predicated region
  $region22: #{model_forward.1} parent=0 // pred_check
    _
  $region23: #{model_forward.1} parent=0 // pred_check_branch
    %30 = sbr.rel (0) target = $region25
  $region24: #{model_forward.1} parent=0 // pred_region
    _
  $region25: #{model_forward.1} parent=0 // pred_fallthru
    _
  // Predicated region
  $region26: #{model_forward.1} parent=0 // pred_check
    _
  $region27: #{model_forward.1} parent=0 // pred_check_branch
    %32 = sbr.rel (0) target = $region29
  $region28: #{model_forward.1} parent=0 // pred_region
    _
  $region29: #{model_forward.1} parent=0 // pred_fallthru
    _
  // Predicated region
  $region30: #{model_forward.1} parent=0 // pred_check
    _
  $region31: #{model_forward.1} parent=0 // pred_check_branch
    %34 = sbr.rel (0) target = $region33
  $region32: #{model_forward.1} parent=0 // pred_region
    _
  $region33: #{model_forward.1} parent=0 // pred_fallthru
    _
  // Predicated region
  $region34: #{model_forward.1} parent=0 // pred_check
    _
  $region35: #{model_forward.1} parent=0 // pred_check_branch
    %36 = sbr.rel (0) target = $region37
  $region36: #{model_forward.1} parent=0 // pred_region
    _
  $region37: #{model_forward.1} parent=0 // pred_fallthru
    _
  // Predicated region
  $region38: #{model_forward.1} parent=0 // pred_check
    _
  $region39: #{model_forward.1} parent=0 // pred_check_branch
    %38 = sbr.rel (0) target = $region41
  $region40: #{model_forward.1} parent=0 // pred_region
    _
  $region41: #{model_forward.1} parent=0 // pred_fallthru
    _
  // Predicated region
  $region42: #{model_forward.1} parent=0 // pred_check
    _
  $region43: #{model_forward.1} parent=0 // pred_check_branch
    %40 = sbr.rel (0) target = $region45
  $region44: #{model_forward.1} parent=0 // pred_region
    _
  $region45: #{model_forward.1} parent=0 // pred_fallthru
    _
  // Predicated region
  $region46: #{model_forward.1} parent=0 // pred_check
    _
  $region47: #{model_forward.1} parent=0 // pred_check_branch
    %42 = sbr.rel (0) target = $region49
  $region48: #{model_forward.1} parent=0 // pred_region
    _
  $region49: #{model_forward.1} parent=0 // pred_fallthru
    _
  %v44 = vld [vmem:[%s0] sm:$0xff]
  %v45 = vld [vmem:[%s0 + $0x8] sm:$0xff]
  %v46 = vld [vmem:[%s0 + $0x10] sm:$0xff]
  %v47 = vld [vmem:[%s0 + $0x18] sm:$0xff]
  %v48 = vld [vmem:[%s0 + $0x20] sm:$0xff]
  %v49 = vld [vmem:[%s0 + $0x28] sm:$0xff]
  %v50 = vld [vmem:[%s0 + $0x30] sm:$0xff]
  %v51 = vld [vmem:[%s0 + $0x38] sm:$0xff]
  %v52 = vld [vmem:[%s0 + $0x40] sm:$0xff]
  %v53 = vld [vmem:[%s0 + $0x48] sm:$0xff]
  %v54 = vld [vmem:[%s0 + $0x50] sm:$0xff]
  %v55 = vld [vmem:[%s0 + $0x58] sm:$0xff]
  %v56 = vld [vmem:[%s0 + $0x60] sm:$0xff]
  %v57 = vld [vmem:[%s0 + $0x68] sm:$0xff]
  %v58 = vld [vmem:[%s0 + $0x70] sm:$0xff]
  %v59 = vld [vmem:[%s0 + $0x78] sm:$0xff]
  %v60 = vld [vmem:[%s0 + $0x80] sm:$0xff]
  %v61 = vld [vmem:[%s0 + $0x88] sm:$0xff]
  %v62 = vld [vmem:[%s0 + $0x90] sm:$0xff]
  %v63 = vld [vmem:[%s0 + $0x98] sm:$0xff]
  %v64 = vld [vmem:[%s0 + $0xa0] sm:$0xff]
  %v65 = vld [vmem:[%s0 + $0xa8] sm:$0xff]
  %v66 = vld [vmem:[%s0 + $0xb0] sm:$0xff]
  %v67 = vld [vmem:[%s0 + $0xb8] sm:$0xff]
  %v68 = vld [vmem:[%s0 + $0xc0] sm:$0xff]
  %v69 = vld [vmem:[%s0 + $0xc8] sm:$0xff]
  %v70 = vld [vmem:[%s0 + $0xd0] sm:$0xff]
  %v71 = vld [vmem:[%s0 + $0xd8] sm:$0xff]
  %v72 = vld [vmem:[%s0 + $0xe0] sm:$0xff]
  %v73 = vld [vmem:[%s0 + $0xe8] sm:$0xff]
  %v74 = vld [vmem:[%s0 + $0xf0] sm:$0xff]
  %v75 = vld [vmem:[%s0 + $0xf8] sm:$0xff]
  %v76 = vld [vmem:[%s0 + $0x100] sm:$0xff]
  %v77 = vld [vmem:[%s0 + $0x108] sm:$0xff]
  %v78 = vld [vmem:[%s0 + $0x110] sm:$0xff]
  %v79 = vld [vmem:[%s0 + $0x118] sm:$0xff]
  %v80 = vld [vmem:[%s0 + $0x120] sm:$0xff]
  %v81 = vld [vmem:[%s0 + $0x128] sm:$0xff]
  %v82 = vld [vmem:[%s0 + $0x130] sm:$0xff]
  %v83 = vld [vmem:[%s0 + $0x138] sm:$0xff]
  %v84 = vld [vmem:[%s0 + $0x140] sm:$0xff]
  %v85 = vld [vmem:[%s0 + $0x148] sm:$0xff]
  %v86 = vld [vmem:[%s0 + $0x150] sm:$0xff]
  %v87 = vld [vmem:[%s0 + $0x158] sm:$0xff]
  %v88 = vld [vmem:[%s0 + $0x160] sm:$0xff]
  %v89 = vld [vmem:[%s0 + $0x168] sm:$0xff]
  %v90 = vld [vmem:[%s0 + $0x170] sm:$0xff]
  %v91 = vld [vmem:[%s0 + $0x178] sm:$0xff]
  %v92 = vld [vmem:[%s0 + $0x180] sm:$0xff]
  %v93 = vld [vmem:[%s0 + $0x188] sm:$0xff]
  %v94 = vld [vmem:[%s0 + $0x190] sm:$0xff]
  %v95 = vld [vmem:[%s0 + $0x198] sm:$0xff]
  %v96 = vld [vmem:[%s0 + $0x1a0] sm:$0xff]
  %v97 = vld [vmem:[%s0 + $0x1a8] sm:$0xff]
  %v98 = vld [vmem:[%s0 + $0x1b0] sm:$0xff]
  %v99 = vld [vmem:[%s0 + $0x1b8] sm:$0xff]
  %v100 = vld [vmem:[%s0 + $0x1c0] sm:$0xff]
  %v101 = vld [vmem:[%s0 + $0x1c8] sm:$0xff]
  %v102 = vld [vmem:[%s0 + $0x1d0] sm:$0xff]
  %v103 = vld [vmem:[%s0 + $0x1d8] sm:$0xff]
  %v104 = vld [vmem:[%s0 + $0x1e0] sm:$0xff]
  %v105 = vld [vmem:[%s0 + $0x1e8] sm:$0xff]
  %v106 = vld [vmem:[%s0 + $0x1f0] sm:$0xff]
  %v107 = vld [vmem:[%s0 + $0x1f8] sm:$0xff]
  %v108 = vld [vmem:[%s1] sm:$0xff]
  %v109 = vld [vmem:[%s1 + $0x8] sm:$0xff]
  %v110 = vld [vmem:[%s1 + $0x10] sm:$0xff]
  %v111 = vld [vmem:[%s1 + $0x18] sm:$0x7]
  %vm112 = vcmask 220160
  %v114 = vsel %vm112, %v44, 0
  %v117 = vsel %vm112, %v45, 0
  %v120 = vsel %vm112, %v46, 0
  %v123 = vsel %vm112, %v47, 0
  %v126 = vsel %vm112, %v48, 0
  %v129 = vsel %vm112, %v49, 0
  %v132 = vsel %vm112, %v50, 0
  %v135 = vsel %vm112, %v51, 0
  %v138 = vsel %vm112, %v52, 0
  %v141 = vsel %vm112, %v53, 0
  %v144 = vsel %vm112, %v54, 0
  %v147 = vsel %vm112, %v55, 0
  %v150 = vsel %vm112, %v56, 0
  %v153 = vsel %vm112, %v57, 0
  %v156 = vsel %vm112, %v58, 0
  %v159 = vsel %vm112, %v59, 0
  %v162 = vsel %vm112, %v60, 0
  %v165 = vsel %vm112, %v61, 0
  %v168 = vsel %vm112, %v62, 0
  %v171 = vsel %vm112, %v63, 0
  %v174 = vsel %vm112, %v64, 0
  %v177 = vsel %vm112, %v65, 0
  %v180 = vsel %vm112, %v66, 0
  %v183 = vsel %vm112, %v67, 0
  %v186 = vsel %vm112, %v68, 0
  %v189 = vsel %vm112, %v69, 0
  %v192 = vsel %vm112, %v70, 0
  %v195 = vsel %vm112, %v71, 0
  %v198 = vsel %vm112, %v72, 0
  %v201 = vsel %vm112, %v73, 0
  %v204 = vsel %vm112, %v74, 0
  %v207 = vsel %vm112, %v75, 0
  %v210 = vsel %vm112, %v76, 0
  %v213 = vsel %vm112, %v77, 0
  %v216 = vsel %vm112, %v78, 0
  %v219 = vsel %vm112, %v79, 0
  %v222 = vsel %vm112, %v80, 0
  %v225 = vsel %vm112, %v81, 0
  %v228 = vsel %vm112, %v82, 0
  %v231 = vsel %vm112, %v83, 0
  %v234 = vsel %vm112, %v84, 0
  %v237 = vsel %vm112, %v85, 0
  %v240 = vsel %vm112, %v86, 0
  %v243 = vsel %vm112, %v87, 0
  %v246 = vsel %vm112, %v88, 0
  %v249 = vsel %vm112, %v89, 0
  %v252 = vsel %vm112, %v90, 0
  %v255 = vsel %vm112, %v91, 0
  %v258 = vsel %vm112, %v92, 0
  %v261 = vsel %vm112, %v93, 0
  %v264 = vsel %vm112, %v94, 0
  %v267 = vsel %vm112, %v95, 0
  %v270 = vsel %vm112, %v96, 0
  %v273 = vsel %vm112, %v97, 0
  %v276 = vsel %vm112, %v98, 0
  %v279 = vsel %vm112, %v99, 0
  %v282 = vsel %vm112, %v100, 0
  %v285 = vsel %vm112, %v101, 0
  %v288 = vsel %vm112, %v102, 0
  %v291 = vsel %vm112, %v103, 0
  %v294 = vsel %vm112, %v104, 0
  %v297 = vsel %vm112, %v105, 0
  %v300 = vsel %vm112, %v106, 0
  %v303 = vsel %vm112, %v107, 0
  %vm305 = vcmask 1042432
  %v307 = vsel %vm305, %v111, 0
  %309 = vmatprep.subr.mxu0 0.0
  %310 = vmatpush1.msra.mxu0 %v108
  %311 = vmatprep.subr.mxu0 0.0
  %312 = vmatpush1.msra.mxu0 %v109
  %313 = vmatprep.subr.mxu0 0.0
  %314 = vmatpush1.msra.mxu0 %v110
  %315 = vmatprep.subr.mxu0 0.0
  %316 = vmatpush1.msra.mxu0 %v307
  %317 = vmatprep.subr.mxu0 0.0
  %318 = vmatpush1.msra.mxu0 0.0
  %319 = vmatprep.subr.mxu0 0.0
  %320 = vmatpush1.msra.mxu0 0.0
  %321 = vmatprep.subr.mxu0 0.0
  %322 = vmatpush1.msra.mxu0 0.0
  %323 = vmatprep.subr.mxu0 0.0
  %324 = vmatpush1.msra.mxu0 0.0
  %325 = vmatprep.subr.mxu0 0.0
  %326 = vmatpush1.msra.mxu0 0.0
  %327 = vmatprep.subr.mxu0 0.0
  %328 = vmatpush1.msra.mxu0 0.0
  %329 = vmatprep.subr.mxu0 0.0
  %330 = vmatpush1.msra.mxu0 0.0
  %331 = vmatprep.subr.mxu0 0.0
  %332 = vmatpush1.msra.mxu0 0.0
  %333 = vmatprep.subr.mxu0 0.0
  %334 = vmatpush1.msra.mxu0 0.0
  %335 = vmatprep.subr.mxu0 0.0
  %336 = vmatpush1.msra.mxu0 0.0
  %337 = vmatprep.subr.mxu0 0.0
  %338 = vmatpush1.msra.mxu0 0.0
  %339 = vmatprep.subr.mxu0 0.0
  %340 = vmatpush1.msra.mxu0 0.0
  %341 = vmatprep.subr.mxu0 0.0
  %342 = vmatpush1.msra.mxu0 0.0
  %343 = vmatprep.subr.mxu0 0.0
  %344 = vmatpush1.msra.mxu0 0.0
  %345 = vmatprep.subr.mxu0 0.0
  %346 = vmatpush1.msra.mxu0 0.0
  %347 = vmatprep.subr.mxu0 0.0
  %348 = vmatpush1.msra.mxu0 0.0
  %349 = vmatprep.subr.mxu0 0.0
  %350 = vmatpush1.msra.mxu0 0.0
  %351 = vmatprep.subr.mxu0 0.0
  %352 = vmatpush1.msra.mxu0 0.0
  %353 = vmatprep.subr.mxu0 0.0
  %354 = vmatpush1.msra.mxu0 0.0
  %355 = vmatprep.subr.mxu0 0.0
  %356 = vmatpush1.msra.mxu0 0.0
  %357 = vmatprep.subr.mxu0 0.0
  %358 = vmatpush1.msra.mxu0 0.0
  %359 = vmatprep.subr.mxu0 0.0
  %360 = vmatpush1.msra.mxu0 0.0
  %361 = vmatprep.subr.mxu0 0.0
  %362 = vmatpush1.msra.mxu0 0.0
  %363 = vmatprep.subr.mxu0 0.0
  %364 = vmatpush1.msra.mxu0 0.0
  %365 = vmatprep.subr.mxu0 0.0
  %366 = vmatpush1.msra.mxu0 0.0
  %367 = vmatprep.subr.mxu0 0.0
  %368 = vmatpush1.msra.mxu0 0.0
  %369 = vmatprep.subr.mxu0 0.0
  %370 = vmatpush1.msra.mxu0 0.0
  %371 = vmatprep.subr.mxu0 0.0
  %372 = vmatpush1.msra.mxu0 0.0
  %373 = vmatprep.mubr.f32.mxu0 0.0
  %374 = vmatmul.mubr.f32.gmra.mrb[0].mxu0 %v114
  %v375 = vpop.f32.mrb[0].mxu0
  %v376 = vadd.f32 0.0, %v375
  %v377 = vpop.f32.mrb[0].mxu0
  %378 = vmatprep.mubr.f32.mxu0 0.0
  %379 = vmatmul.mubr.f32.gmra.mrb[0].mxu0 %v117
  %v380 = vpop.f32.mrb[0].mxu0
  %v381 = vadd.f32 0.0, %v380
  %v382 = vpop.f32.mrb[0].mxu0
  %383 = vmatprep.mubr.f32.mxu0 0.0
  %384 = vmatmul.mubr.f32.gmra.mrb[0].mxu0 %v120
  %v385 = vpop.f32.mrb[0].mxu0
  %v386 = vadd.f32 0.0, %v385
  %v387 = vpop.f32.mrb[0].mxu0
  %388 = vmatprep.mubr.f32.mxu0 0.0
  %389 = vmatmul.mubr.f32.gmra.mrb[0].mxu0 %v123
  %v390 = vpop.f32.mrb[0].mxu0
  %v391 = vadd.f32 0.0, %v390
  %v392 = vpop.f32.mrb[0].mxu0
  %393 = vmatprep.mubr.f32.mxu0 0.0
  %394 = vmatmul.mubr.f32.gmra.mrb[0].mxu0 %v126
  %v395 = vpop.f32.mrb[0].mxu0
  %v396 = vadd.f32 0.0, %v395
  %v397 = vpop.f32.mrb[0].mxu0
  %398 = vmatprep.mubr.f32.mxu0 0.0
  %399 = vmatmul.mubr.f32.gmra.mrb[0].mxu0 %v129
  %v400 = vpop.f32.mrb[0].mxu0
  %v401 = vadd.f32 0.0, %v400
  %v402 = vpop.f32.mrb[0].mxu0
  %403 = vmatprep.mubr.f32.mxu0 0.0
  %404 = vmatmul.mubr.f32.gmra.mrb[0].mxu0 %v132
  %v405 = vpop.f32.mrb[0].mxu0
  %v406 = vadd.f32 0.0, %v405
  %v407 = vpop.f32.mrb[0].mxu0
  %408 = vmatprep.mubr.f32.mxu0 0.0
  %409 = vmatmul.mubr.f32.gmra.mrb[0].mxu0 %v135
  %v410 = vpop.f32.mrb[0].mxu0
  %v411 = vadd.f32 0.0, %v410
  %v412 = vpop.f32.mrb[0].mxu0
  %413 = vmatprep.mubr.f32.mxu0 0.0
  %414 = vmatmul.mubr.f32.gmra.mrb[0].mxu0 %v138
  %v415 = vpop.f32.mrb[0].mxu0
  %v416 = vadd.f32 0.0, %v415
  %v417 = vpop.f32.mrb[0].mxu0
  %418 = vmatprep.mubr.f32.mxu0 0.0
  %419 = vmatmul.mubr.f32.gmra.mrb[0].mxu0 %v141
  %v420 = vpop.f32.mrb[0].mxu0
  %v421 = vadd.f32 0.0, %v420
  %v422 = vpop.f32.mrb[0].mxu0
  %423 = vmatprep.mubr.f32.mxu0 0.0
  %424 = vmatmul.mubr.f32.gmra.mrb[0].mxu0 %v144
  %v425 = vpop.f32.mrb[0].mxu0
  %v426 = vadd.f32 0.0, %v425
  %v427 = vpop.f32.mrb[0].mxu0
  %428 = vmatprep.mubr.f32.mxu0 0.0
  %429 = vmatmul.mubr.f32.gmra.mrb[0].mxu0 %v147
  %v430 = vpop.f32.mrb[0].mxu0
  %v431 = vadd.f32 0.0, %v430
  %v432 = vpop.f32.mrb[0].mxu0
  %433 = vmatprep.mubr.f32.mxu0 0.0
  %434 = vmatmul.mubr.f32.gmra.mrb[0].mxu0 %v150
  %v435 = vpop.f32.mrb[0].mxu0
  %v436 = vadd.f32 0.0, %v435
  %v437 = vpop.f32.mrb[0].mxu0
  %438 = vmatprep.mubr.f32.mxu0 0.0
  %439 = vmatmul.mubr.f32.gmra.mrb[0].mxu0 %v153
  %v440 = vpop.f32.mrb[0].mxu0
  %v441 = vadd.f32 0.0, %v440
  %v442 = vpop.f32.mrb[0].mxu0
  %443 = vmatprep.mubr.f32.mxu0 0.0
  %444 = vmatmul.mubr.f32.gmra.mrb[0].mxu0 %v156
  %v445 = vpop.f32.mrb[0].mxu0
  %v446 = vadd.f32 0.0, %v445
  %v447 = vpop.f32.mrb[0].mxu0
  %448 = vmatprep.mubr.f32.mxu0 0.0
  %449 = vmatmul.mubr.f32.gmra.mrb[0].mxu0 %v159
  %v450 = vpop.f32.mrb[0].mxu0
  %v451 = vadd.f32 0.0, %v450
  %v452 = vpop.f32.mrb[0].mxu0
  %453 = vmatprep.mubr.f32.mxu0 0.0
  %454 = vmatmul.mubr.f32.gmra.mrb[0].mxu0 %v162
  %v455 = vpop.f32.mrb[0].mxu0
  %v456 = vadd.f32 0.0, %v455
  %v457 = vpop.f32.mrb[0].mxu0
  %458 = vmatprep.mubr.f32.mxu0 0.0
  %459 = vmatmul.mubr.f32.gmra.mrb[0].mxu0 %v165
  %v460 = vpop.f32.mrb[0].mxu0
  %v461 = vadd.f32 0.0, %v460
  %v462 = vpop.f32.mrb[0].mxu0
  %463 = vmatprep.mubr.f32.mxu0 0.0
  %464 = vmatmul.mubr.f32.gmra.mrb[0].mxu0 %v168
  %v465 = vpop.f32.mrb[0].mxu0
  %v466 = vadd.f32 0.0, %v465
  %v467 = vpop.f32.mrb[0].mxu0
  %468 = vmatprep.mubr.f32.mxu0 0.0
  %469 = vmatmul.mubr.f32.gmra.mrb[0].mxu0 %v171
  %v470 = vpop.f32.mrb[0].mxu0
  %v471 = vadd.f32 0.0, %v470
  %v472 = vpop.f32.mrb[0].mxu0
  %473 = vmatprep.mubr.f32.mxu0 0.0
  %474 = vmatmul.mubr.f32.gmra.mrb[0].mxu0 %v174
  %v475 = vpop.f32.mrb[0].mxu0
  %v476 = vadd.f32 0.0, %v475
  %v477 = vpop.f32.mrb[0].mxu0
  %478 = vmatprep.mubr.f32.mxu0 0.0
  %479 = vmatmul.mubr.f32.gmra.mrb[0].mxu0 %v177
  %v480 = vpop.f32.mrb[0].mxu0
  %v481 = vadd.f32 0.0, %v480
  %v482 = vpop.f32.mrb[0].mxu0
  %483 = vmatprep.mubr.f32.mxu0 0.0
  %484 = vmatmul.mubr.f32.gmra.mrb[0].mxu0 %v180
  %v485 = vpop.f32.mrb[0].mxu0
  %v486 = vadd.f32 0.0, %v485
  %v487 = vpop.f32.mrb[0].mxu0
  %488 = vmatprep.mubr.f32.mxu0 0.0
  %489 = vmatmul.mubr.f32.gmra.mrb[0].mxu0 %v183
  %v490 = vpop.f32.mrb[0].mxu0
  %v491 = vadd.f32 0.0, %v490
  %v492 = vpop.f32.mrb[0].mxu0
  %493 = vmatprep.mubr.f32.mxu0 0.0
  %494 = vmatmul.mubr.f32.gmra.mrb[0].mxu0 %v186
  %v495 = vpop.f32.mrb[0].mxu0
  %v496 = vadd.f32 0.0, %v495
  %v497 = vpop.f32.mrb[0].mxu0
  %498 = vmatprep.mubr.f32.mxu0 0.0
  %499 = vmatmul.mubr.f32.gmra.mrb[0].mxu0 %v189
  %v500 = vpop.f32.mrb[0].mxu0
  %v501 = vadd.f32 0.0, %v500
  %v502 = vpop.f32.mrb[0].mxu0
  %503 = vmatprep.mubr.f32.mxu0 0.0
  %504 = vmatmul.mubr.f32.gmra.mrb[0].mxu0 %v192
  %v505 = vpop.f32.mrb[0].mxu0
  %v506 = vadd.f32 0.0, %v505
  %v507 = vpop.f32.mrb[0].mxu0
  %508 = vmatprep.mubr.f32.mxu0 0.0
  %509 = vmatmul.mubr.f32.gmra.mrb[0].mxu0 %v195
  %v510 = vpop.f32.mrb[0].mxu0
  %v511 = vadd.f32 0.0, %v510
  %v512 = vpop.f32.mrb[0].mxu0
  %513 = vmatprep.mubr.f32.mxu0 0.0
  %514 = vmatmul.mubr.f32.gmra.mrb[0].mxu0 %v198
  %v515 = vpop.f32.mrb[0].mxu0
  %v516 = vadd.f32 0.0, %v515
  %v517 = vpop.f32.mrb[0].mxu0
  %518 = vmatprep.mubr.f32.mxu0 0.0
  %519 = vmatmul.mubr.f32.gmra.mrb[0].mxu0 %v201
  %v520 = vpop.f32.mrb[0].mxu0
  %v521 = vadd.f32 0.0, %v520
  %v522 = vpop.f32.mrb[0].mxu0
  %523 = vmatprep.mubr.f32.mxu0 0.0
  %524 = vmatmul.mubr.f32.gmra.mrb[0].mxu0 %v204
  %v525 = vpop.f32.mrb[0].mxu0
  %v526 = vadd.f32 0.0, %v525
  %v527 = vpop.f32.mrb[0].mxu0
  %528 = vmatprep.mubr.f32.mxu0 0.0
  %529 = vmatmul.mubr.f32.gmra.mrb[0].mxu0 %v207
  %v530 = vpop.f32.mrb[0].mxu0
  %v531 = vadd.f32 0.0, %v530
  %v532 = vpop.f32.mrb[0].mxu0
  %533 = vmatprep.mubr.f32.mxu0 0.0
  %534 = vmatmul.mubr.f32.gmra.mrb[0].mxu0 %v210
  %v535 = vpop.f32.mrb[0].mxu0
  %v536 = vadd.f32 0.0, %v535
  %v537 = vpop.f32.mrb[0].mxu0
  %538 = vmatprep.mubr.f32.mxu0 0.0
  %539 = vmatmul.mubr.f32.gmra.mrb[0].mxu0 %v213
  %v540 = vpop.f32.mrb[0].mxu0
  %v541 = vadd.f32 0.0, %v540
  %v542 = vpop.f32.mrb[0].mxu0
  %543 = vmatprep.mubr.f32.mxu0 0.0
  %544 = vmatmul.mubr.f32.gmra.mrb[0].mxu0 %v216
  %v545 = vpop.f32.mrb[0].mxu0
  %v546 = vadd.f32 0.0, %v545
  %v547 = vpop.f32.mrb[0].mxu0
  %548 = vmatprep.mubr.f32.mxu0 0.0
  %549 = vmatmul.mubr.f32.gmra.mrb[0].mxu0 %v219
  %v550 = vpop.f32.mrb[0].mxu0
  %v551 = vadd.f32 0.0, %v550
  %v552 = vpop.f32.mrb[0].mxu0
  %553 = vmatprep.mubr.f32.mxu0 0.0
  %554 = vmatmul.mubr.f32.gmra.mrb[0].mxu0 %v222
  %v555 = vpop.f32.mrb[0].mxu0
  %v556 = vadd.f32 0.0, %v555
  %v557 = vpop.f32.mrb[0].mxu0
  %558 = vmatprep.mubr.f32.mxu0 0.0
  %559 = vmatmul.mubr.f32.gmra.mrb[0].mxu0 %v225
  %v560 = vpop.f32.mrb[0].mxu0
  %v561 = vadd.f32 0.0, %v560
  %v562 = vpop.f32.mrb[0].mxu0
  %563 = vmatprep.mubr.f32.mxu0 0.0
  %564 = vmatmul.mubr.f32.gmra.mrb[0].mxu0 %v228
  %v565 = vpop.f32.mrb[0].mxu0
  %v566 = vadd.f32 0.0, %v565
  %v567 = vpop.f32.mrb[0].mxu0
  %568 = vmatprep.mubr.f32.mxu0 0.0
  %569 = vmatmul.mubr.f32.gmra.mrb[0].mxu0 %v231
  %v570 = vpop.f32.mrb[0].mxu0
  %v571 = vadd.f32 0.0, %v570
  %v572 = vpop.f32.mrb[0].mxu0
  %573 = vmatprep.mubr.f32.mxu0 0.0
  %574 = vmatmul.mubr.f32.gmra.mrb[0].mxu0 %v234
  %v575 = vpop.f32.mrb[0].mxu0
  %v576 = vadd.f32 0.0, %v575
  %v577 = vpop.f32.mrb[0].mxu0
  %578 = vmatprep.mubr.f32.mxu0 0.0
  %579 = vmatmul.mubr.f32.gmra.mrb[0].mxu0 %v237
  %v580 = vpop.f32.mrb[0].mxu0
  %v581 = vadd.f32 0.0, %v580
  %v582 = vpop.f32.mrb[0].mxu0
  %583 = vmatprep.mubr.f32.mxu0 0.0
  %584 = vmatmul.mubr.f32.gmra.mrb[0].mxu0 %v240
  %v585 = vpop.f32.mrb[0].mxu0
  %v586 = vadd.f32 0.0, %v585
  %v587 = vpop.f32.mrb[0].mxu0
  %588 = vmatprep.mubr.f32.mxu0 0.0
  %589 = vmatmul.mubr.f32.gmra.mrb[0].mxu0 %v243
  %v590 = vpop.f32.mrb[0].mxu0
  %v591 = vadd.f32 0.0, %v590
  %v592 = vpop.f32.mrb[0].mxu0
  %593 = vmatprep.mubr.f32.mxu0 0.0
  %594 = vmatmul.mubr.f32.gmra.mrb[0].mxu0 %v246
  %v595 = vpop.f32.mrb[0].mxu0
  %v596 = vadd.f32 0.0, %v595
  %v597 = vpop.f32.mrb[0].mxu0
  %598 = vmatprep.mubr.f32.mxu0 0.0
  %599 = vmatmul.mubr.f32.gmra.mrb[0].mxu0 %v249
  %v600 = vpop.f32.mrb[0].mxu0
  %v601 = vadd.f32 0.0, %v600
  %v602 = vpop.f32.mrb[0].mxu0
  %603 = vmatprep.mubr.f32.mxu0 0.0
  %604 = vmatmul.mubr.f32.gmra.mrb[0].mxu0 %v252
  %v605 = vpop.f32.mrb[0].mxu0
  %v606 = vadd.f32 0.0, %v605
  %v607 = vpop.f32.mrb[0].mxu0
  %608 = vmatprep.mubr.f32.mxu0 0.0
  %609 = vmatmul.mubr.f32.gmra.mrb[0].mxu0 %v255
  %v610 = vpop.f32.mrb[0].mxu0
  %v611 = vadd.f32 0.0, %v610
  %v612 = vpop.f32.mrb[0].mxu0
  %613 = vmatprep.mubr.f32.mxu0 0.0
  %614 = vmatmul.mubr.f32.gmra.mrb[0].mxu0 %v258
  %v615 = vpop.f32.mrb[0].mxu0
  %v616 = vadd.f32 0.0, %v615
  %v617 = vpop.f32.mrb[0].mxu0
  %618 = vmatprep.mubr.f32.mxu0 0.0
  %619 = vmatmul.mubr.f32.gmra.mrb[0].mxu0 %v261
  %v620 = vpop.f32.mrb[0].mxu0
  %v621 = vadd.f32 0.0, %v620
  %v622 = vpop.f32.mrb[0].mxu0
  %623 = vmatprep.mubr.f32.mxu0 0.0
  %624 = vmatmul.mubr.f32.gmra.mrb[0].mxu0 %v264
  %v625 = vpop.f32.mrb[0].mxu0
  %v626 = vadd.f32 0.0, %v625
  %v627 = vpop.f32.mrb[0].mxu0
  %628 = vmatprep.mubr.f32.mxu0 0.0
  %629 = vmatmul.mubr.f32.gmra.mrb[0].mxu0 %v267
  %v630 = vpop.f32.mrb[0].mxu0
  %v631 = vadd.f32 0.0, %v630
  %v632 = vpop.f32.mrb[0].mxu0
  %633 = vmatprep.mubr.f32.mxu0 0.0
  %634 = vmatmul.mubr.f32.gmra.mrb[0].mxu0 %v270
  %v635 = vpop.f32.mrb[0].mxu0
  %v636 = vadd.f32 0.0, %v635
  %v637 = vpop.f32.mrb[0].mxu0
  %638 = vmatprep.mubr.f32.mxu0 0.0
  %639 = vmatmul.mubr.f32.gmra.mrb[0].mxu0 %v273
  %v640 = vpop.f32.mrb[0].mxu0
  %v641 = vadd.f32 0.0, %v640
  %v642 = vpop.f32.mrb[0].mxu0
  %643 = vmatprep.mubr.f32.mxu0 0.0
  %644 = vmatmul.mubr.f32.gmra.mrb[0].mxu0 %v276
  %v645 = vpop.f32.mrb[0].mxu0
  %v646 = vadd.f32 0.0, %v645
  %v647 = vpop.f32.mrb[0].mxu0
  %648 = vmatprep.mubr.f32.mxu0 0.0
  %649 = vmatmul.mubr.f32.gmra.mrb[0].mxu0 %v279
  %v650 = vpop.f32.mrb[0].mxu0
  %v651 = vadd.f32 0.0, %v650
  %v652 = vpop.f32.mrb[0].mxu0
  %653 = vmatprep.mubr.f32.mxu0 0.0
  %654 = vmatmul.mubr.f32.gmra.mrb[0].mxu0 %v282
  %v655 = vpop.f32.mrb[0].mxu0
  %v656 = vadd.f32 0.0, %v655
  %v657 = vpop.f32.mrb[0].mxu0
  %658 = vmatprep.mubr.f32.mxu0 0.0
  %659 = vmatmul.mubr.f32.gmra.mrb[0].mxu0 %v285
  %v660 = vpop.f32.mrb[0].mxu0
  %v661 = vadd.f32 0.0, %v660
  %v662 = vpop.f32.mrb[0].mxu0
  %663 = vmatprep.mubr.f32.mxu0 0.0
  %664 = vmatmul.mubr.f32.gmra.mrb[0].mxu0 %v288
  %v665 = vpop.f32.mrb[0].mxu0
  %v666 = vadd.f32 0.0, %v665
  %v667 = vpop.f32.mrb[0].mxu0
  %668 = vmatprep.mubr.f32.mxu0 0.0
  %669 = vmatmul.mubr.f32.gmra.mrb[0].mxu0 %v291
  %v670 = vpop.f32.mrb[0].mxu0
  %v671 = vadd.f32 0.0, %v670
  %v672 = vpop.f32.mrb[0].mxu0
  %673 = vmatprep.mubr.f32.mxu0 0.0
  %674 = vmatmul.mubr.f32.gmra.mrb[0].mxu0 %v294
  %v675 = vpop.f32.mrb[0].mxu0
  %v676 = vadd.f32 0.0, %v675
  %v677 = vpop.f32.mrb[0].mxu0
  %678 = vmatprep.mubr.f32.mxu0 0.0
  %679 = vmatmul.mubr.f32.gmra.mrb[0].mxu0 %v297
  %v680 = vpop.f32.mrb[0].mxu0
  %v681 = vadd.f32 0.0, %v680
  %v682 = vpop.f32.mrb[0].mxu0
  %683 = vmatprep.mubr.f32.mxu0 0.0
  %684 = vmatmul.mubr.f32.gmra.mrb[0].mxu0 %v300
  %v685 = vpop.f32.mrb[0].mxu0
  %v686 = vadd.f32 0.0, %v685
  %v687 = vpop.f32.mrb[0].mxu0
  %688 = vmatprep.mubr.f32.mxu0 0.0
  %689 = vmatmul.mubr.f32.gmra.mrb[0].mxu0 %v303
  %v690 = vpop.f32.mrb[0].mxu0
  %v691 = vadd.f32 0.0, %v690
  %v692 = vpop.f32.mrb[0].mxu0
  %693 = vdwg.mxu0
  %v694 = vld [vmem:[%s2] sm:$0x1]
  %v696 = vlaneseq
  %v697 = vshrl.u32 %v696, 7
  %v698 = vsub.s32 0, %v697
  %v699 = vrot.slane %v694, %v698
  %v701 = vmul.f32 %v376, %v699
  %v702 = vmul.f32 %v381, %v699
  %v703 = vmul.f32 %v386, %v699
  %v704 = vmul.f32 %v391, %v699
  %v705 = vmul.f32 %v396, %v699
  %v706 = vmul.f32 %v401, %v699
  %v707 = vmul.f32 %v406, %v699
  %v708 = vmul.f32 %v411, %v699
  %v709 = vmul.f32 %v416, %v699
  %v710 = vmul.f32 %v421, %v699
  %v711 = vmul.f32 %v426, %v699
  %v712 = vmul.f32 %v431, %v699
  %v713 = vmul.f32 %v436, %v699
  %v714 = vmul.f32 %v441, %v699
  %v715 = vmul.f32 %v446, %v699
  %v716 = vmul.f32 %v451, %v699
  %v717 = vmul.f32 %v456, %v699
  %v718 = vmul.f32 %v461, %v699
  %v719 = vmul.f32 %v466, %v699
  %v720 = vmul.f32 %v471, %v699
  %v721 = vmul.f32 %v476, %v699
  %v722 = vmul.f32 %v481, %v699
  %v723 = vmul.f32 %v486, %v699
  %v724 = vmul.f32 %v491, %v699
  %v725 = vmul.f32 %v496, %v699
  %v726 = vmul.f32 %v501, %v699
  %v727 = vmul.f32 %v506, %v699
  %v728 = vmul.f32 %v511, %v699
  %v729 = vmul.f32 %v516, %v699
  %v730 = vmul.f32 %v521, %v699
  %v731 = vmul.f32 %v526, %v699
  %v732 = vmul.f32 %v531, %v699
  %v733 = vmul.f32 %v536, %v699
  %v734 = vmul.f32 %v541, %v699
  %v735 = vmul.f32 %v546, %v699
  %v736 = vmul.f32 %v551, %v699
  %v737 = vmul.f32 %v556, %v699
  %v738 = vmul.f32 %v561, %v699
  %v739 = vmul.f32 %v566, %v699
  %v740 = vmul.f32 %v571, %v699
  %v741 = vmul.f32 %v576, %v699
  %v742 = vmul.f32 %v581, %v699
  %v743 = vmul.f32 %v586, %v699
  %v744 = vmul.f32 %v591, %v699
  %v745 = vmul.f32 %v596, %v699
  %v746 = vmul.f32 %v601, %v699
  %v747 = vmul.f32 %v606, %v699
  %v748 = vmul.f32 %v611, %v699
  %v749 = vmul.f32 %v616, %v699
  %v750 = vmul.f32 %v621, %v699
  %v751 = vmul.f32 %v626, %v699
  %v752 = vmul.f32 %v631, %v699
  %v753 = vmul.f32 %v636, %v699
  %v754 = vmul.f32 %v641, %v699
  %v755 = vmul.f32 %v646, %v699
  %v756 = vmul.f32 %v651, %v699
  %v757 = vmul.f32 %v656, %v699
  %v758 = vmul.f32 %v661, %v699
  %v759 = vmul.f32 %v666, %v699
  %v760 = vmul.f32 %v671, %v699
  %v761 = vmul.f32 %v676, %v699
  %v762 = vmul.f32 %v681, %v699
  %v763 = vmul.f32 %v686, %v699
  %v764 = vmul.f32 %v691, %v699
  %v765 = vld [vmem:[%s3] sm:$0x1]
  %v767 = vlaneseq
  %v768 = vshrl.u32 %v767, 7
  %v769 = vsub.s32 0, %v768
  %v770 = vrot.slane %v765, %v769
  %v772 = vadd.f32 %v701, %v770
  %v773 = vadd.f32 %v702, %v770
  %v774 = vadd.f32 %v703, %v770
  %v775 = vadd.f32 %v704, %v770
  %v776 = vadd.f32 %v705, %v770
  %v777 = vadd.f32 %v706, %v770
  %v778 = vadd.f32 %v707, %v770
  %v779 = vadd.f32 %v708, %v770
  %v780 = vadd.f32 %v709, %v770
  %v781 = vadd.f32 %v710, %v770
  %v782 = vadd.f32 %v711, %v770
  %v783 = vadd.f32 %v712, %v770
  %v784 = vadd.f32 %v713, %v770
  %v785 = vadd.f32 %v714, %v770
  %v786 = vadd.f32 %v715, %v770
  %v787 = vadd.f32 %v716, %v770
  %v788 = vadd.f32 %v717, %v770
  %v789 = vadd.f32 %v718, %v770
  %v790 = vadd.f32 %v719, %v770
  %v791 = vadd.f32 %v720, %v770
  %v792 = vadd.f32 %v721, %v770
  %v793 = vadd.f32 %v722, %v770
  %v794 = vadd.f32 %v723, %v770
  %v795 = vadd.f32 %v724, %v770
  %v796 = vadd.f32 %v725, %v770
  %v797 = vadd.f32 %v726, %v770
  %v798 = vadd.f32 %v727, %v770
  %v799 = vadd.f32 %v728, %v770
  %v800 = vadd.f32 %v729, %v770
  %v801 = vadd.f32 %v730, %v770
  %v802 = vadd.f32 %v731, %v770
  %v803 = vadd.f32 %v732, %v770
  %v804 = vadd.f32 %v733, %v770
  %v805 = vadd.f32 %v734, %v770
  %v806 = vadd.f32 %v735, %v770
  %v807 = vadd.f32 %v736, %v770
  %v808 = vadd.f32 %v737, %v770
  %v809 = vadd.f32 %v738, %v770
  %v810 = vadd.f32 %v739, %v770
  %v811 = vadd.f32 %v740, %v770
  %v812 = vadd.f32 %v741, %v770
  %v813 = vadd.f32 %v742, %v770
  %v814 = vadd.f32 %v743, %v770
  %v815 = vadd.f32 %v744, %v770
  %v816 = vadd.f32 %v745, %v770
  %v817 = vadd.f32 %v746, %v770
  %v818 = vadd.f32 %v747, %v770
  %v819 = vadd.f32 %v748, %v770
  %v820 = vadd.f32 %v749, %v770
  %v821 = vadd.f32 %v750, %v770
  %v822 = vadd.f32 %v751, %v770
  %v823 = vadd.f32 %v752, %v770
  %v824 = vadd.f32 %v753, %v770
  %v825 = vadd.f32 %v754, %v770
  %v826 = vadd.f32 %v755, %v770
  %v827 = vadd.f32 %v756, %v770
  %v828 = vadd.f32 %v757, %v770
  %v829 = vadd.f32 %v758, %v770
  %v830 = vadd.f32 %v759, %v770
  %v831 = vadd.f32 %v760, %v770
  %v832 = vadd.f32 %v761, %v770
  %v833 = vadd.f32 %v762, %v770
  %v834 = vadd.f32 %v763, %v770
  %v835 = vadd.f32 %v764, %v770
  %v836 = vmax.f32 %v772, 0.0
  %v837 = vmax.f32 %v773, 0.0
  %v838 = vmax.f32 %v774, 0.0
  %v839 = vmax.f32 %v775, 0.0
  %v840 = vmax.f32 %v776, 0.0
  %v841 = vmax.f32 %v777, 0.0
  %v842 = vmax.f32 %v778, 0.0
  %v843 = vmax.f32 %v779, 0.0
  %v844 = vmax.f32 %v780, 0.0
  %v845 = vmax.f32 %v781, 0.0
  %v846 = vmax.f32 %v782, 0.0
  %v847 = vmax.f32 %v783, 0.0
  %v848 = vmax.f32 %v784, 0.0
  %v849 = vmax.f32 %v785, 0.0
  %v850 = vmax.f32 %v786, 0.0
  %v851 = vmax.f32 %v787, 0.0
  %v852 = vmax.f32 %v788, 0.0
  %v853 = vmax.f32 %v789, 0.0
  %v854 = vmax.f32 %v790, 0.0
  %v855 = vmax.f32 %v791, 0.0
  %v856 = vmax.f32 %v792, 0.0
  %v857 = vmax.f32 %v793, 0.0
  %v858 = vmax.f32 %v794, 0.0
  %v859 = vmax.f32 %v795, 0.0
  %v860 = vmax.f32 %v796, 0.0
  %v861 = vmax.f32 %v797, 0.0
  %v862 = vmax.f32 %v798, 0.0
  %v863 = vmax.f32 %v799, 0.0
  %v864 = vmax.f32 %v800, 0.0
  %v865 = vmax.f32 %v801, 0.0
  %v866 = vmax.f32 %v802, 0.0
  %v867 = vmax.f32 %v803, 0.0
  %v868 = vmax.f32 %v804, 0.0
  %v869 = vmax.f32 %v805, 0.0
  %v870 = vmax.f32 %v806, 0.0
  %v871 = vmax.f32 %v807, 0.0
  %v872 = vmax.f32 %v808, 0.0
  %v873 = vmax.f32 %v809, 0.0
  %v874 = vmax.f32 %v810, 0.0
  %v875 = vmax.f32 %v811, 0.0
  %v876 = vmax.f32 %v812, 0.0
  %v877 = vmax.f32 %v813, 0.0
  %v878 = vmax.f32 %v814, 0.0
  %v879 = vmax.f32 %v815, 0.0
  %v880 = vmax.f32 %v816, 0.0
  %v881 = vmax.f32 %v817, 0.0
  %v882 = vmax.f32 %v818, 0.0
  %v883 = vmax.f32 %v819, 0.0
  %v884 = vmax.f32 %v820, 0.0
  %v885 = vmax.f32 %v821, 0.0
  %v886 = vmax.f32 %v822, 0.0
  %v887 = vmax.f32 %v823, 0.0
  %v888 = vmax.f32 %v824, 0.0
  %v889 = vmax.f32 %v825, 0.0
  %v890 = vmax.f32 %v826, 0.0
  %v891 = vmax.f32 %v827, 0.0
  %v892 = vmax.f32 %v828, 0.0
  %v893 = vmax.f32 %v829, 0.0
  %v894 = vmax.f32 %v830, 0.0
  %v895 = vmax.f32 %v831, 0.0
  %v896 = vmax.f32 %v832, 0.0
  %v897 = vmax.f32 %v833, 0.0
  %v898 = vmax.f32 %v834, 0.0
  %v899 = vmax.f32 %v835, 0.0
  %900 = vst [vmem:[#allocation2] sm:$0xff] 0.0
  %901 = vst [vmem:[#allocation2 + $0x8] sm:$0xff] 0.0
  %902 = vst [vmem:[#allocation2 + $0x10] sm:$0xff] 0.0
  %903 = vst [vmem:[#allocation2 + $0x18] sm:$0x1] 0.0
  %904 = vst [vmem:[#allocation2 + $0x20] sm:$0xff] 0.0
  %905 = vst [vmem:[#allocation2 + $0x28] sm:$0xff] 0.0
  %906 = vst [vmem:[#allocation2 + $0x30] sm:$0xff] 0.0
  %907 = vst [vmem:[#allocation2 + $0x38] sm:$0x1] 0.0
  %908 = vst [vmem:[#allocation2 + $0x40] sm:$0xff] 0.0
  %909 = vst [vmem:[#allocation2 + $0x48] sm:$0xff] 0.0
  %910 = vst [vmem:[#allocation2 + $0x50] sm:$0xff] 0.0
  %911 = vst [vmem:[#allocation2 + $0x58] sm:$0x1] 0.0
  %912 = vst [vmem:[#allocation2 + $0x60] sm:$0xff] 0.0
  %913 = vst [vmem:[#allocation2 + $0x68] sm:$0xff] 0.0
  %914 = vst [vmem:[#allocation2 + $0x70] sm:$0xff] 0.0
  %915 = vst [vmem:[#allocation2 + $0x78] sm:$0x1] 0.0
  %916 = vst [vmem:[#allocation2 + $0x80] sm:$0xff] 0.0
  %917 = vst [vmem:[#allocation2 + $0x88] sm:$0xff] 0.0
  %918 = vst [vmem:[#allocation2 + $0x90] sm:$0xff] 0.0
  %919 = vst [vmem:[#allocation2 + $0x98] sm:$0x1] 0.0
  %920 = vst [vmem:[#allocation2 + $0xa0] sm:$0xff] 0.0
  %921 = vst [vmem:[#allocation2 + $0xa8] sm:$0xff] 0.0
  %922 = vst [vmem:[#allocation2 + $0xb0] sm:$0xff] 0.0
  %923 = vst [vmem:[#allocation2 + $0xb8] sm:$0x1] 0.0
  %924 = vst [vmem:[#allocation2 + $0xc0] sm:$0xff] 0.0
  %925 = vst [vmem:[#allocation2 + $0xc8] sm:$0xff] 0.0
  %926 = vst [vmem:[#allocation2 + $0xd0] sm:$0xff] 0.0
  %927 = vst [vmem:[#allocation2 + $0xd8] sm:$0x1] 0.0
  %928 = vst [vmem:[#allocation2 + $0xe0] sm:$0xff] 0.0
  %929 = vst [vmem:[#allocation2 + $0xe8] sm:$0xff] 0.0
  %930 = vst [vmem:[#allocation2 + $0xf0] sm:$0xff] 0.0
  %931 = vst [vmem:[#allocation2 + $0xf8] sm:$0x1] 0.0
  %932 = vst [vmem:[#allocation2 + $0x100] sm:$0xff] 0.0
  %933 = vst [vmem:[#allocation2 + $0x108] sm:$0xff] 0.0
  %934 = vst [vmem:[#allocation2 + $0x110] sm:$0xff] 0.0
  %935 = vst [vmem:[#allocation2 + $0x118] sm:$0x1] 0.0
  %936 = vst [vmem:[#allocation2 + $0x120] sm:$0xff] 0.0
  %937 = vst [vmem:[#allocation2 + $0x128] sm:$0xff] 0.0
  %938 = vst [vmem:[#allocation2 + $0x130] sm:$0xff] 0.0
  %939 = vst [vmem:[#allocation2 + $0x138] sm:$0x1] 0.0
  %940 = vst [vmem:[#allocation2 + $0x140] sm:$0xff] 0.0
  %941 = vst [vmem:[#allocation2 + $0x148] sm:$0xff] 0.0
  %942 = vst [vmem:[#allocation2 + $0x150] sm:$0xff] 0.0
  %943 = vst [vmem:[#allocation2 + $0x158] sm:$0x1] 0.0
  %944 = vst [vmem:[#allocation2 + $0x160] sm:$0xff] 0.0
  %945 = vst [vmem:[#allocation2 + $0x168] sm:$0xff] 0.0
  %946 = vst [vmem:[#allocation2 + $0x170] sm:$0xff] 0.0
  %947 = vst [vmem:[#allocation2 + $0x178] sm:$0x1] 0.0
  %948 = vst [vmem:[#allocation2 + $0x180] sm:$0xff] 0.0
  %949 = vst [vmem:[#allocation2 + $0x188] sm:$0xff] 0.0
  %950 = vst [vmem:[#allocation2 + $0x190] sm:$0xff] 0.0
  %951 = vst [vmem:[#allocation2 + $0x198] sm:$0x1] 0.0
  %952 = vst [vmem:[#allocation2 + $0x1a0] sm:$0xff] 0.0
  %953 = vst [vmem:[#allocation2 + $0x1a8] sm:$0xff] 0.0
  %954 = vst [vmem:[#allocation2 + $0x1b0] sm:$0xff] 0.0
  %955 = vst [vmem:[#allocation2 + $0x1b8] sm:$0x1] 0.0
  %956 = vst [vmem:[#allocation2 + $0x1c0] sm:$0xff] 0.0
  %957 = vst [vmem:[#allocation2 + $0x1c8] sm:$0xff] 0.0
  %958 = vst [vmem:[#allocation2 + $0x1d0] sm:$0xff] 0.0
  %959 = vst [vmem:[#allocation2 + $0x1d8] sm:$0x1] 0.0
  %960 = vst [vmem:[#allocation2 + $0x1e0] sm:$0xff] 0.0
  %961 = vst [vmem:[#allocation2 + $0x1e8] sm:$0xff] 0.0
  %962 = vst [vmem:[#allocation2 + $0x1f0] sm:$0xff] 0.0
  %963 = vst [vmem:[#allocation2 + $0x1f8] sm:$0x1] 0.0
  %964 = vst [vmem:[#allocation2 + $0x200] sm:$0xff] 0.0
  %965 = vst [vmem:[#allocation2 + $0x208] sm:$0xff] 0.0
  %966 = vst [vmem:[#allocation2 + $0x210] sm:$0xff] 0.0
  %967 = vst [vmem:[#allocation2 + $0x218] sm:$0x1] 0.0
  %968 = vst [vmem:[#allocation2 + $0x220] sm:$0xff] 0.0
  %969 = vst [vmem:[#allocation2 + $0x228] sm:$0xff] 0.0
  %970 = vst [vmem:[#allocation2 + $0x230] sm:$0xff] 0.0
  %971 = vst [vmem:[#allocation2 + $0x238] sm:$0x1] 0.0
  %972 = vst [vmem:[#allocation2 + $0x240] sm:$0xff] 0.0
  %973 = vst [vmem:[#allocation2 + $0x248] sm:$0xff] 0.0
  %974 = vst [vmem:[#allocation2 + $0x250] sm:$0xff] 0.0
  %975 = vst [vmem:[#allocation2 + $0x258] sm:$0x1] 0.0
  %976 = vst [vmem:[#allocation2 + $0x260] sm:$0xff] 0.0
  %977 = vst [vmem:[#allocation2 + $0x268] sm:$0xff] 0.0
  %978 = vst [vmem:[#allocation2 + $0x270] sm:$0xff] 0.0
  %979 = vst [vmem:[#allocation2 + $0x278] sm:$0x1] 0.0
  %980 = vst [vmem:[#allocation2 + $0x280] sm:$0xff] 0.0
  %981 = vst [vmem:[#allocation2 + $0x288] sm:$0xff] 0.0
  %982 = vst [vmem:[#allocation2 + $0x290] sm:$0xff] 0.0
  %983 = vst [vmem:[#allocation2 + $0x298] sm:$0x1] 0.0
  %984 = vst [vmem:[#allocation2 + $0x2a0] sm:$0xff] 0.0
  %985 = vst [vmem:[#allocation2 + $0x2a8] sm:$0xff] 0.0
  %986 = vst [vmem:[#allocation2 + $0x2b0] sm:$0xff] 0.0
  %987 = vst [vmem:[#allocation2 + $0x2b8] sm:$0x1] 0.0
  %988 = vst [vmem:[#allocation2 + $0x2c0] sm:$0xff] 0.0
  %989 = vst [vmem:[#allocation2 + $0x2c8] sm:$0xff] 0.0
  %990 = vst [vmem:[#allocation2 + $0x2d0] sm:$0xff] 0.0
  %991 = vst [vmem:[#allocation2 + $0x2d8] sm:$0x1] 0.0
  %992 = vst [vmem:[#allocation2 + $0x2e0] sm:$0xff] 0.0
  %993 = vst [vmem:[#allocation2 + $0x2e8] sm:$0xff] 0.0
  %994 = vst [vmem:[#allocation2 + $0x2f0] sm:$0xff] 0.0
  %995 = vst [vmem:[#allocation2 + $0x2f8] sm:$0x1] 0.0
  %996 = vst [vmem:[#allocation2 + $0x300] sm:$0xff] 0.0
  %997 = vst [vmem:[#allocation2 + $0x308] sm:$0xff] 0.0
  %998 = vst [vmem:[#allocation2 + $0x310] sm:$0xff] 0.0
  %999 = vst [vmem:[#allocation2 + $0x318] sm:$0x1] 0.0
  %1000 = vst [vmem:[#allocation2 + $0x320] sm:$0xff] 0.0
  %1001 = vst [vmem:[#allocation2 + $0x328] sm:$0xff] 0.0
  %1002 = vst [vmem:[#allocation2 + $0x330] sm:$0xff] 0.0
  %1003 = vst [vmem:[#allocation2 + $0x338] sm:$0x1] 0.0
  %1004 = vst [vmem:[#allocation2 + $0x340] sm:$0xff] 0.0
  %1005 = vst [vmem:[#allocation2 + $0x348] sm:$0xff] 0.0
  %1006 = vst [vmem:[#allocation2 + $0x350] sm:$0xff] 0.0
  %1007 = vst [vmem:[#allocation2 + $0x358] sm:$0x1] 0.0
  %1008 = vst [vmem:[#allocation2 + $0x360] sm:$0xff] 0.0
  %1009 = vst [vmem:[#allocation2 + $0x368] sm:$0xff] 0.0
  %1010 = vst [vmem:[#allocation2 + $0x370] sm:$0xff] 0.0
  %1011 = vst [vmem:[#allocation2 + $0x378] sm:$0x1] 0.0
  %1012 = vst [vmem:[#allocation2 + $0x380] sm:$0xff] 0.0
  %1013 = vst [vmem:[#allocation2 + $0x388] sm:$0xff] 0.0
  %1014 = vst [vmem:[#allocation2 + $0x390] sm:$0xff] 0.0
  %1015 = vst [vmem:[#allocation2 + $0x398] sm:$0x1] 0.0
  %1016 = vst [vmem:[#allocation2 + $0x3a0] sm:$0xff] 0.0
  %1017 = vst [vmem:[#allocation2 + $0x3a8] sm:$0xff] 0.0
  %1018 = vst [vmem:[#allocation2 + $0x3b0] sm:$0xff] 0.0
  %1019 = vst [vmem:[#allocation2 + $0x3b8] sm:$0x1] 0.0
  %1020 = vst [vmem:[#allocation2 + $0x3c0] sm:$0xff] 0.0
  %1021 = vst [vmem:[#allocation2 + $0x3c8] sm:$0xff] 0.0
  %1022 = vst [vmem:[#allocation2 + $0x3d0] sm:$0xff] 0.0
  %1023 = vst [vmem:[#allocation2 + $0x3d8] sm:$0x1] 0.0
  %1024 = vst [vmem:[#allocation2 + $0x3e0] sm:$0xff] 0.0
  %1025 = vst [vmem:[#allocation2 + $0x3e8] sm:$0xff] 0.0
  %1026 = vst [vmem:[#allocation2 + $0x3f0] sm:$0xff] 0.0
  %1027 = vst [vmem:[#allocation2 + $0x3f8] sm:$0x1] 0.0
  %1028 = vst [vmem:[#allocation2 + $0x400] sm:$0xff] 0.0
  %1029 = vst [vmem:[#allocation2 + $0x408] sm:$0xff] 0.0
  %1030 = vst [vmem:[#allocation2 + $0x410] sm:$0xff] 0.0
  %1031 = vst [vmem:[#allocation2 + $0x418] sm:$0x1] 0.0
  %1032 = vst [vmem:[#allocation2 + $0x420] sm:$0xff] 0.0
  %1033 = vst [vmem:[#allocation2 + $0x428] sm:$0xff] 0.0
  %1034 = vst [vmem:[#allocation2 + $0x430] sm:$0xff] 0.0
  %1035 = vst [vmem:[#allocation2 + $0x438] sm:$0x1] 0.0
  %1036 = vst [vmem:[#allocation2 + $0x440] sm:$0xff] 0.0
  %1037 = vst [vmem:[#allocation2 + $0x448] sm:$0xff] 0.0
  %1038 = vst [vmem:[#allocation2 + $0x450] sm:$0xff] 0.0
  %1039 = vst [vmem:[#allocation2 + $0x458] sm:$0x1] 0.0
  %1040 = vst [vmem:[#allocation2 + $0x460] sm:$0xff] 0.0
  %1041 = vst [vmem:[#allocation2 + $0x468] sm:$0xff] 0.0
  %1042 = vst [vmem:[#allocation2 + $0x470] sm:$0xff] 0.0
  %1043 = vst [vmem:[#allocation2 + $0x478] sm:$0x1] 0.0
  %s1044 = scalar_lea.vmem [#allocation2], 32
  %1045 = vst [vmem:[%s1044 + $0x8] sm:$0xff] %v836
  %1046 = vst [vmem:[%s1044 + $0x10] sm:$0xff] %v837
  %1047 = vst [vmem:[%s1044 + $0x28] sm:$0xff] %v838
  %1048 = vst [vmem:[%s1044 + $0x30] sm:$0xff] %v839
  %1049 = vst [vmem:[%s1044 + $0x48] sm:$0xff] %v840
  %1050 = vst [vmem:[%s1044 + $0x50] sm:$0xff] %v841
  %1051 = vst [vmem:[%s1044 + $0x68] sm:$0xff] %v842
  %1052 = vst [vmem:[%s1044 + $0x70] sm:$0xff] %v843
  %1053 = vst [vmem:[%s1044 + $0x88] sm:$0xff] %v844
  %1054 = vst [vmem:[%s1044 + $0x90] sm:$0xff] %v845
  %1055 = vst [vmem:[%s1044 + $0xa8] sm:$0xff] %v846
  %1056 = vst [vmem:[%s1044 + $0xb0] sm:$0xff] %v847
  %1057 = vst [vmem:[%s1044 + $0xc8] sm:$0xff] %v848
  %1058 = vst [vmem:[%s1044 + $0xd0] sm:$0xff] %v849
  %1059 = vst [vmem:[%s1044 + $0xe8] sm:$0xff] %v850
  %1060 = vst [vmem:[%s1044 + $0xf0] sm:$0xff] %v851
  %1061 = vst [vmem:[%s1044 + $0x108] sm:$0xff] %v852
  %1062 = vst [vmem:[%s1044 + $0x110] sm:$0xff] %v853
  %1063 = vst [vmem:[%s1044 + $0x128] sm:$0xff] %v854
  %1064 = vst [vmem:[%s1044 + $0x130] sm:$0xff] %v855
  %1065 = vst [vmem:[%s1044 + $0x148] sm:$0xff] %v856
  %1066 = vst [vmem:[%s1044 + $0x150] sm:$0xff] %v857
  %1067 = vst [vmem:[%s1044 + $0x168] sm:$0xff] %v858
  %1068 = vst [vmem:[%s1044 + $0x170] sm:$0xff] %v859
  %1069 = vst [vmem:[%s1044 + $0x188] sm:$0xff] %v860
  %1070 = vst [vmem:[%s1044 + $0x190] sm:$0xff] %v861
  %1071 = vst [vmem:[%s1044 + $0x1a8] sm:$0xff] %v862
  %1072 = vst [vmem:[%s1044 + $0x1b0] sm:$0xff] %v863
  %1073 = vst [vmem:[%s1044 + $0x1c8] sm:$0xff] %v864
  %1074 = vst [vmem:[%s1044 + $0x1d0] sm:$0xff] %v865
  %1075 = vst [vmem:[%s1044 + $0x1e8] sm:$0xff] %v866
  %1076 = vst [vmem:[%s1044 + $0x1f0] sm:$0xff] %v867
  %1077 = vst [vmem:[%s1044 + $0x248] sm:$0xff] %v868
  %1078 = vst [vmem:[%s1044 + $0x250] sm:$0xff] %v869
  %1079 = vst [vmem:[%s1044 + $0x268] sm:$0xff] %v870
  %1080 = vst [vmem:[%s1044 + $0x270] sm:$0xff] %v871
  %1081 = vst [vmem:[%s1044 + $0x288] sm:$0xff] %v872
  %1082 = vst [vmem:[%s1044 + $0x290] sm:$0xff] %v873
  %1083 = vst [vmem:[%s1044 + $0x2a8] sm:$0xff] %v874
  %1084 = vst [vmem:[%s1044 + $0x2b0] sm:$0xff] %v875
  %1085 = vst [vmem:[%s1044 + $0x2c8] sm:$0xff] %v876
  %1086 = vst [vmem:[%s1044 + $0x2d0] sm:$0xff] %v877
  %1087 = vst [vmem:[%s1044 + $0x2e8] sm:$0xff] %v878
  %1088 = vst [vmem:[%s1044 + $0x2f0] sm:$0xff] %v879
  %1089 = vst [vmem:[%s1044 + $0x308] sm:$0xff] %v880
  %1090 = vst [vmem:[%s1044 + $0x310] sm:$0xff] %v881
  %1091 = vst [vmem:[%s1044 + $0x328] sm:$0xff] %v882
  %1092 = vst [vmem:[%s1044 + $0x330] sm:$0xff] %v883
  %1093 = vst [vmem:[%s1044 + $0x348] sm:$0xff] %v884
  %1094 = vst [vmem:[%s1044 + $0x350] sm:$0xff] %v885
  %1095 = vst [vmem:[%s1044 + $0x368] sm:$0xff] %v886
  %1096 = vst [vmem:[%s1044 + $0x370] sm:$0xff] %v887
  %1097 = vst [vmem:[%s1044 + $0x388] sm:$0xff] %v888
  %1098 = vst [vmem:[%s1044 + $0x390] sm:$0xff] %v889
  %1099 = vst [vmem:[%s1044 + $0x3a8] sm:$0xff] %v890
  %1100 = vst [vmem:[%s1044 + $0x3b0] sm:$0xff] %v891
  %1101 = vst [vmem:[%s1044 + $0x3c8] sm:$0xff] %v892
  %1102 = vst [vmem:[%s1044 + $0x3d0] sm:$0xff] %v893
  %1103 = vst [vmem:[%s1044 + $0x3e8] sm:$0xff] %v894
  %1104 = vst [vmem:[%s1044 + $0x3f0] sm:$0xff] %v895
  %1105 = vst [vmem:[%s1044 + $0x408] sm:$0xff] %v896
  %1106 = vst [vmem:[%s1044 + $0x410] sm:$0xff] %v897
  %1107 = vst [vmem:[%s1044 + $0x428] sm:$0xff] %v898
  %1108 = vst [vmem:[%s1044 + $0x430] sm:$0xff] %v899
  %v1109 = vld [vmem:[#allocation2 + $0x7] sm:$0xff]
  %v1110 = vld [vmem:[#allocation2 + $0xf] sm:$0xff]
  %v1111 = vld [vmem:[#allocation2 + $0x27] sm:$0xff]
  %v1112 = vld [vmem:[#allocation2 + $0x2f] sm:$0xff]
  %v1113 = vld [vmem:[#allocation2 + $0x47] sm:$0xff]
  %v1114 = vld [vmem:[#allocation2 + $0x4f] sm:$0xff]
  %v1115 = vld [vmem:[#allocation2 + $0x67] sm:$0xff]
  %v1116 = vld [vmem:[#allocation2 + $0x6f] sm:$0xff]
  %v1117 = vld [vmem:[#allocation2 + $0x87] sm:$0xff]
  %v1118 = vld [vmem:[#allocation2 + $0x8f] sm:$0xff]
  %v1119 = vld [vmem:[#allocation2 + $0xa7] sm:$0xff]
  %v1120 = vld [vmem:[#allocation2 + $0xaf] sm:$0xff]
  %v1121 = vld [vmem:[#allocation2 + $0xc7] sm:$0xff]
  %v1122 = vld [vmem:[#allocation2 + $0xcf] sm:$0xff]
  %v1123 = vld [vmem:[#allocation2 + $0xe7] sm:$0xff]
  %v1124 = vld [vmem:[#allocation2 + $0xef] sm:$0xff]
  %v1125 = vld [vmem:[#allocation2 + $0x107] sm:$0xff]
  %v1126 = vld [vmem:[#allocation2 + $0x10f] sm:$0xff]
  %v1127 = vld [vmem:[#allocation2 + $0x127] sm:$0xff]
  %v1128 = vld [vmem:[#allocation2 + $0x12f] sm:$0xff]
  %v1129 = vld [vmem:[#allocation2 + $0x147] sm:$0xff]
  %v1130 = vld [vmem:[#allocation2 + $0x14f] sm:$0xff]
  %v1131 = vld [vmem:[#allocation2 + $0x167] sm:$0xff]
  %v1132 = vld [vmem:[#allocation2 + $0x16f] sm:$0xff]
  %v1133 = vld [vmem:[#allocation2 + $0x187] sm:$0xff]
  %v1134 = vld [vmem:[#allocation2 + $0x18f] sm:$0xff]
  %v1135 = vld [vmem:[#allocation2 + $0x1a7] sm:$0xff]
  %v1136 = vld [vmem:[#allocation2 + $0x1af] sm:$0xff]
  %v1137 = vld [vmem:[#allocation2 + $0x1c7] sm:$0xff]
  %v1138 = vld [vmem:[#allocation2 + $0x1cf] sm:$0xff]
  %v1139 = vld [vmem:[#allocation2 + $0x1e7] sm:$0xff]
  %v1140 = vld [vmem:[#allocation2 + $0x1ef] sm:$0xff]
  %v1141 = vld [vmem:[#allocation2 + $0x247] sm:$0xff]
  %v1142 = vld [vmem:[#allocation2 + $0x24f] sm:$0xff]
  %v1143 = vld [vmem:[#allocation2 + $0x267] sm:$0xff]
  %v1144 = vld [vmem:[#allocation2 + $0x26f] sm:$0xff]
  %v1145 = vld [vmem:[#allocation2 + $0x287] sm:$0xff]
  %v1146 = vld [vmem:[#allocation2 + $0x28f] sm:$0xff]
  %v1147 = vld [vmem:[#allocation2 + $0x2a7] sm:$0xff]
  %v1148 = vld [vmem:[#allocation2 + $0x2af] sm:$0xff]
  %v1149 = vld [vmem:[#allocation2 + $0x2c7] sm:$0xff]
  %v1150 = vld [vmem:[#allocation2 + $0x2cf] sm:$0xff]
  %v1151 = vld [vmem:[#allocation2 + $0x2e7] sm:$0xff]
  %v1152 = vld [vmem:[#allocation2 + $0x2ef] sm:$0xff]
  %v1153 = vld [vmem:[#allocation2 + $0x307] sm:$0xff]
  %v1154 = vld [vmem:[#allocation2 + $0x30f] sm:$0xff]
  %v1155 = vld [vmem:[#allocation2 + $0x327] sm:$0xff]
  %v1156 = vld [vmem:[#allocation2 + $0x32f] sm:$0xff]
  %v1157 = vld [vmem:[#allocation2 + $0x347] sm:$0xff]
  %v1158 = vld [vmem:[#allocation2 + $0x34f] sm:$0xff]
  %v1159 = vld [vmem:[#allocation2 + $0x367] sm:$0xff]
  %v1160 = vld [vmem:[#allocation2 + $0x36f] sm:$0xff]
  %v1161 = vld [vmem:[#allocation2 + $0x387] sm:$0xff]
  %v1162 = vld [vmem:[#allocation2 + $0x38f] sm:$0xff]
  %v1163 = vld [vmem:[#allocation2 + $0x3a7] sm:$0xff]
  %v1164 = vld [vmem:[#allocation2 + $0x3af] sm:$0xff]
  %v1165 = vld [vmem:[#allocation2 + $0x3c7] sm:$0xff]
  %v1166 = vld [vmem:[#allocation2 + $0x3cf] sm:$0xff]
  %v1167 = vld [vmem:[#allocation2 + $0x3e7] sm:$0xff]
  %v1168 = vld [vmem:[#allocation2 + $0x3ef] sm:$0xff]
  %v1169 = vld [vmem:[#allocation2 + $0x407] sm:$0xff]
  %v1170 = vld [vmem:[#allocation2 + $0x40f] sm:$0xff]
  %v1171 = vld [vmem:[#allocation2 + $0x427] sm:$0xff]
  %v1172 = vld [vmem:[#allocation2 + $0x42f] sm:$0xff]
  %v1173 = vpack.c.bf16 %v1110, %v1109
  %v1174 = vpack.c.bf16 %v1112, %v1111
  %v1175 = vpack.c.bf16 %v1114, %v1113
  %v1176 = vpack.c.bf16 %v1116, %v1115
  %v1177 = vpack.c.bf16 %v1118, %v1117
  %v1178 = vpack.c.bf16 %v1120, %v1119
  %v1179 = vpack.c.bf16 %v1122, %v1121
  %v1180 = vpack.c.bf16 %v1124, %v1123
  %v1181 = vpack.c.bf16 %v1126, %v1125
  %v1182 = vpack.c.bf16 %v1128, %v1127
  %v1183 = vpack.c.bf16 %v1130, %v1129
  %v1184 = vpack.c.bf16 %v1132, %v1131
  %v1185 = vpack.c.bf16 %v1134, %v1133
  %v1186 = vpack.c.bf16 %v1136, %v1135
  %v1187 = vpack.c.bf16 %v1138, %v1137
  %v1188 = vpack.c.bf16 %v1140, %v1139
  %v1189 = vpack.c.bf16 %v1142, %v1141
  %v1190 = vpack.c.bf16 %v1144, %v1143
  %v1191 = vpack.c.bf16 %v1146, %v1145
  %v1192 = vpack.c.bf16 %v1148, %v1147
  %v1193 = vpack.c.bf16 %v1150, %v1149
  %v1194 = vpack.c.bf16 %v1152, %v1151
  %v1195 = vpack.c.bf16 %v1154, %v1153
  %v1196 = vpack.c.bf16 %v1156, %v1155
  %v1197 = vpack.c.bf16 %v1158, %v1157
  %v1198 = vpack.c.bf16 %v1160, %v1159
  %v1199 = vpack.c.bf16 %v1162, %v1161
  %v1200 = vpack.c.bf16 %v1164, %v1163
  %v1201 = vpack.c.bf16 %v1166, %v1165
  %v1202 = vpack.c.bf16 %v1168, %v1167
  %v1203 = vpack.c.bf16 %v1170, %v1169
  %v1204 = vpack.c.bf16 %v1172, %v1171
  %1205 = vst [vmem:[#allocation4] sm:$0xff] %v1173
  %1206 = vst [vmem:[#allocation4 + $0x48] sm:$0xff] %v1174
  %1207 = vst [vmem:[#allocation4 + $0x90] sm:$0xff] %v1175
  %1208 = vst [vmem:[#allocation4 + $0xd8] sm:$0xff] %v1176
  %1209 = vst [vmem:[#allocation4 + $0x120] sm:$0xff] %v1177
  %1210 = vst [vmem:[#allocation4 + $0x168] sm:$0xff] %v1178
  %1211 = vst [vmem:[#allocation4 + $0x1b0] sm:$0xff] %v1179
  %1212 = vst [vmem:[#allocation4 + $0x1f8] sm:$0xff] %v1180
  %1213 = vst [vmem:[#allocation4 + $0x240] sm:$0xff] %v1181
  %1214 = vst [vmem:[#allocation4 + $0x288] sm:$0xff] %v1182
  %1215 = vst [vmem:[#allocation4 + $0x2d0] sm:$0xff] %v1183
  %1216 = vst [vmem:[#allocation4 + $0x318] sm:$0xff] %v1184
  %1217 = vst [vmem:[#allocation4 + $0x360] sm:$0xff] %v1185
  %1218 = vst [vmem:[#allocation4 + $0x3a8] sm:$0xff] %v1186
  %1219 = vst [vmem:[#allocation4 + $0x3f0] sm:$0xff] %v1187
  %1220 = vst [vmem:[#allocation4 + $0x438] sm:$0xff] %v1188
  %1221 = vst [vmem:[#allocation4 + $0x480] sm:$0xff] %v1189
  %1222 = vst [vmem:[#allocation4 + $0x4c8] sm:$0xff] %v1190
  %1223 = vst [vmem:[#allocation4 + $0x510] sm:$0xff] %v1191
  %1224 = vst [vmem:[#allocation4 + $0x558] sm:$0xff] %v1192
  %1225 = vst [vmem:[#allocation4 + $0x5a0] sm:$0xff] %v1193
  %1226 = vst [vmem:[#allocation4 + $0x5e8] sm:$0xff] %v1194
  %1227 = vst [vmem:[#allocation4 + $0x630] sm:$0xff] %v1195
  %1228 = vst [vmem:[#allocation4 + $0x678] sm:$0xff] %v1196
  %1229 = vst [vmem:[#allocation4 + $0x6c0] sm:$0xff] %v1197
  %1230 = vst [vmem:[#allocation4 + $0x708] sm:$0xff] %v1198
  %1231 = vst [vmem:[#allocation4 + $0x750] sm:$0xff] %v1199
  %1232 = vst [vmem:[#allocation4 + $0x798] sm:$0xff] %v1200
  %1233 = vst [vmem:[#allocation4 + $0x7e0] sm:$0xff] %v1201
  %1234 = vst [vmem:[#allocation4 + $0x828] sm:$0xff] %v1202
  %1235 = vst [vmem:[#allocation4 + $0x870] sm:$0xff] %v1203
  %1236 = vst [vmem:[#allocation4 + $0x8b8] sm:$0xff] %v1204
  %v1237 = vld [vmem:[#allocation2 + $0x8] sm:$0xff]
  %v1238 = vld [vmem:[#allocation2 + $0x10] sm:$0xff]
  %v1239 = vld [vmem:[#allocation2 + $0x28] sm:$0xff]
  %v1240 = vld [vmem:[#allocation2 + $0x30] sm:$0xff]
  %v1241 = vld [vmem:[#allocation2 + $0x48] sm:$0xff]
  %v1242 = vld [vmem:[#allocation2 + $0x50] sm:$0xff]
  %v1243 = vld [vmem:[#allocation2 + $0x68] sm:$0xff]
  %v1244 = vld [vmem:[#allocation2 + $0x70] sm:$0xff]
  %v1245 = vld [vmem:[#allocation2 + $0x88] sm:$0xff]
  %v1246 = vld [vmem:[#allocation2 + $0x90] sm:$0xff]
  %v1247 = vld [vmem:[#allocation2 + $0xa8] sm:$0xff]
  %v1248 = vld [vmem:[#allocation2 + $0xb0] sm:$0xff]
  %v1249 = vld [vmem:[#allocation2 + $0xc8] sm:$0xff]
  %v1250 = vld [vmem:[#allocation2 + $0xd0] sm:$0xff]
  %v1251 = vld [vmem:[#allocation2 + $0xe8] sm:$0xff]
  %v1252 = vld [vmem:[#allocation2 + $0xf0] sm:$0xff]
  %v1253 = vld [vmem:[#allocation2 + $0x108] sm:$0xff]
  %v1254 = vld [vmem:[#allocation2 + $0x110] sm:$0xff]
  %v1255 = vld [vmem:[#allocation2 + $0x128] sm:$0xff]
  %v1256 = vld [vmem:[#allocation2 + $0x130] sm:$0xff]
  %v1257 = vld [vmem:[#allocation2 + $0x148] sm:$0xff]
  %v1258 = vld [vmem:[#allocation2 + $0x150] sm:$0xff]
  %v1259 = vld [vmem:[#allocation2 + $0x168] sm:$0xff]
  %v1260 = vld [vmem:[#allocation2 + $0x170] sm:$0xff]
  %v1261 = vld [vmem:[#allocation2 + $0x188] sm:$0xff]
  %v1262 = vld [vmem:[#allocation2 + $0x190] sm:$0xff]
  %v1263 = vld [vmem:[#allocation2 + $0x1a8] sm:$0xff]
  %v1264 = vld [vmem:[#allocation2 + $0x1b0] sm:$0xff]
  %v1265 = vld [vmem:[#allocation2 + $0x1c8] sm:$0xff]
  %v1266 = vld [vmem:[#allocation2 + $0x1d0] sm:$0xff]
  %v1267 = vld [vmem:[#allocation2 + $0x1e8] sm:$0xff]
  %v1268 = vld [vmem:[#allocation2 + $0x1f0] sm:$0xff]
  %v1269 = vld [vmem:[#allocation2 + $0x248] sm:$0xff]
  %v1270 = vld [vmem:[#allocation2 + $0x250] sm:$0xff]
  %v1271 = vld [vmem:[#allocation2 + $0x268] sm:$0xff]
  %v1272 = vld [vmem:[#allocation2 + $0x270] sm:$0xff]
  %v1273 = vld [vmem:[#allocation2 + $0x288] sm:$0xff]
  %v1274 = vld [vmem:[#allocation2 + $0x290] sm:$0xff]
  %v1275 = vld [vmem:[#allocation2 + $0x2a8] sm:$0xff]
  %v1276 = vld [vmem:[#allocation2 + $0x2b0] sm:$0xff]
  %v1277 = vld [vmem:[#allocation2 + $0x2c8] sm:$0xff]
  %v1278 = vld [vmem:[#allocation2 + $0x2d0] sm:$0xff]
  %v1279 = vld [vmem:[#allocation2 + $0x2e8] sm:$0xff]
  %v1280 = vld [vmem:[#allocation2 + $0x2f0] sm:$0xff]
  %v1281 = vld [vmem:[#allocation2 + $0x308] sm:$0xff]
  %v1282 = vld [vmem:[#allocation2 + $0x310] sm:$0xff]
  %v1283 = vld [vmem:[#allocation2 + $0x328] sm:$0xff]
  %v1284 = vld [vmem:[#allocation2 + $0x330] sm:$0xff]
  %v1285 = vld [vmem:[#allocation2 + $0x348] sm:$0xff]
  %v1286 = vld [vmem:[#allocation2 + $0x350] sm:$0xff]
  %v1287 = vld [vmem:[#allocation2 + $0x368] sm:$0xff]
  %v1288 = vld [vmem:[#allocation2 + $0x370] sm:$0xff]
  %v1289 = vld [vmem:[#allocation2 + $0x388] sm:$0xff]
  %v1290 = vld [vmem:[#allocation2 + $0x390] sm:$0xff]
  %v1291 = vld [vmem:[#allocation2 + $0x3a8] sm:$0xff]
  %v1292 = vld [vmem:[#allocation2 + $0x3b0] sm:$0xff]
  %v1293 = vld [vmem:[#allocation2 + $0x3c8] sm:$0xff]
  %v1294 = vld [vmem:[#allocation2 + $0x3d0] sm:$0xff]
  %v1295 = vld [vmem:[#allocation2 + $0x3e8] sm:$0xff]
  %v1296 = vld [vmem:[#allocation2 + $0x3f0] sm:$0xff]
  %v1297 = vld [vmem:[#allocation2 + $0x408] sm:$0xff]
  %v1298 = vld [vmem:[#allocation2 + $0x410] sm:$0xff]
  %v1299 = vld [vmem:[#allocation2 + $0x428] sm:$0xff]
  %v1300 = vld [vmem:[#allocation2 + $0x430] sm:$0xff]
  %v1301 = vpack.c.bf16 %v1238, %v1237
  %v1302 = vpack.c.bf16 %v1240, %v1239
  %v1303 = vpack.c.bf16 %v1242, %v1241
  %v1304 = vpack.c.bf16 %v1244, %v1243
  %v1305 = vpack.c.bf16 %v1246, %v1245
  %v1306 = vpack.c.bf16 %v1248, %v1247
  %v1307 = vpack.c.bf16 %v1250, %v1249
  %v1308 = vpack.c.bf16 %v1252, %v1251
  %v1309 = vpack.c.bf16 %v1254, %v1253
  %v1310 = vpack.c.bf16 %v1256, %v1255
  %v1311 = vpack.c.bf16 %v1258, %v1257
  %v1312 = vpack.c.bf16 %v1260, %v1259
  %v1313 = vpack.c.bf16 %v1262, %v1261
  %v1314 = vpack.c.bf16 %v1264, %v1263
  %v1315 = vpack.c.bf16 %v1266, %v1265
  %v1316 = vpack.c.bf16 %v1268, %v1267
  %v1317 = vpack.c.bf16 %v1270, %v1269
  %v1318 = vpack.c.bf16 %v1272, %v1271
  %v1319 = vpack.c.bf16 %v1274, %v1273
  %v1320 = vpack.c.bf16 %v1276, %v1275
  %v1321 = vpack.c.bf16 %v1278, %v1277
  %v1322 = vpack.c.bf16 %v1280, %v1279
  %v1323 = vpack.c.bf16 %v1282, %v1281
  %v1324 = vpack.c.bf16 %v1284, %v1283
  %v1325 = vpack.c.bf16 %v1286, %v1285
  %v1326 = vpack.c.bf16 %v1288, %v1287
  %v1327 = vpack.c.bf16 %v1290, %v1289
  %v1328 = vpack.c.bf16 %v1292, %v1291
  %v1329 = vpack.c.bf16 %v1294, %v1293
  %v1330 = vpack.c.bf16 %v1296, %v1295
  %v1331 = vpack.c.bf16 %v1298, %v1297
  %v1332 = vpack.c.bf16 %v1300, %v1299
  %1333 = vst [vmem:[#allocation4 + $0x8] sm:$0xff] %v1301
  %1334 = vst [vmem:[#allocation4 + $0x50] sm:$0xff] %v1302
  %1335 = vst [vmem:[#allocation4 + $0x98] sm:$0xff] %v1303
  %1336 = vst [vmem:[#allocation4 + $0xe0] sm:$0xff] %v1304
  %1337 = vst [vmem:[#allocation4 + $0x128] sm:$0xff] %v1305
  %1338 = vst [vmem:[#allocation4 + $0x170] sm:$0xff] %v1306
  %1339 = vst [vmem:[#allocation4 + $0x1b8] sm:$0xff] %v1307
  %1340 = vst [vmem:[#allocation4 + $0x200] sm:$0xff] %v1308
  %1341 = vst [vmem:[#allocation4 + $0x248] sm:$0xff] %v1309
  %1342 = vst [vmem:[#allocation4 + $0x290] sm:$0xff] %v1310
  %1343 = vst [vmem:[#allocation4 + $0x2d8] sm:$0xff] %v1311
  %1344 = vst [vmem:[#allocation4 + $0x320] sm:$0xff] %v1312
  %1345 = vst [vmem:[#allocation4 + $0x368] sm:$0xff] %v1313
  %1346 = vst [vmem:[#allocation4 + $0x3b0] sm:$0xff] %v1314
  %1347 = vst [vmem:[#allocation4 + $0x3f8] sm:$0xff] %v1315
  %1348 = vst [vmem:[#allocation4 + $0x440] sm:$0xff] %v1316
  %1349 = vst [vmem:[#allocation4 + $0x488] sm:$0xff] %v1317
  %1350 = vst [vmem:[#allocation4 + $0x4d0] sm:$0xff] %v1318
  %1351 = vst [vmem:[#allocation4 + $0x518] sm:$0xff] %v1319
  %1352 = vst [vmem:[#allocation4 + $0x560] sm:$0xff] %v1320
  %1353 = vst [vmem:[#allocation4 + $0x5a8] sm:$0xff] %v1321
  %1354 = vst [vmem:[#allocation4 + $0x5f0] sm:$0xff] %v1322
  %1355 = vst [vmem:[#allocation4 + $0x638] sm:$0xff] %v1323
  %1356 = vst [vmem:[#allocation4 + $0x680] sm:$0xff] %v1324
  %1357 = vst [vmem:[#allocation4 + $0x6c8] sm:$0xff] %v1325
  %1358 = vst [vmem:[#allocation4 + $0x710] sm:$0xff] %v1326
  %1359 = vst [vmem:[#allocation4 + $0x758] sm:$0xff] %v1327
  %1360 = vst [vmem:[#allocation4 + $0x7a0] sm:$0xff] %v1328
  %1361 = vst [vmem:[#allocation4 + $0x7e8] sm:$0xff] %v1329
  %1362 = vst [vmem:[#allocation4 + $0x830] sm:$0xff] %v1330
  %1363 = vst [vmem:[#allocation4 + $0x878] sm:$0xff] %v1331
  %1364 = vst [vmem:[#allocation4 + $0x8c0] sm:$0xff] %v1332
  %v1365 = vld [vmem:[#allocation2 + $0x9] sm:$0xff]
  %v1366 = vld [vmem:[#allocation2 + $0x11] sm:$0xff]
  %v1367 = vld [vmem:[#allocation2 + $0x29] sm:$0xff]
  %v1368 = vld [vmem:[#allocation2 + $0x31] sm:$0xff]
  %v1369 = vld [vmem:[#allocation2 + $0x49] sm:$0xff]
  %v1370 = vld [vmem:[#allocation2 + $0x51] sm:$0xff]
  %v1371 = vld [vmem:[#allocation2 + $0x69] sm:$0xff]
  %v1372 = vld [vmem:[#allocation2 + $0x71] sm:$0xff]
  %v1373 = vld [vmem:[#allocation2 + $0x89] sm:$0xff]
  %v1374 = vld [vmem:[#allocation2 + $0x91] sm:$0xff]
  %v1375 = vld [vmem:[#allocation2 + $0xa9] sm:$0xff]
  %v1376 = vld [vmem:[#allocation2 + $0xb1] sm:$0xff]
  %v1377 = vld [vmem:[#allocation2 + $0xc9] sm:$0xff]
  %v1378 = vld [vmem:[#allocation2 + $0xd1] sm:$0xff]
  %v1379 = vld [vmem:[#allocation2 + $0xe9] sm:$0xff]
  %v1380 = vld [vmem:[#allocation2 + $0xf1] sm:$0xff]
  %v1381 = vld [vmem:[#allocation2 + $0x109] sm:$0xff]
  %v1382 = vld [vmem:[#allocation2 + $0x111] sm:$0xff]
  %v1383 = vld [vmem:[#allocation2 + $0x129] sm:$0xff]
  %v1384 = vld [vmem:[#allocation2 + $0x131] sm:$0xff]
  %v1385 = vld [vmem:[#allocation2 + $0x149] sm:$0xff]
  %v1386 = vld [vmem:[#allocation2 + $0x151] sm:$0xff]
  %v1387 = vld [vmem:[#allocation2 + $0x169] sm:$0xff]
  %v1388 = vld [vmem:[#allocation2 + $0x171] sm:$0xff]
  %v1389 = vld [vmem:[#allocation2 + $0x189] sm:$0xff]
  %v1390 = vld [vmem:[#allocation2 + $0x191] sm:$0xff]
  %v1391 = vld [vmem:[#allocation2 + $0x1a9] sm:$0xff]
  %v1392 = vld [vmem:[#allocation2 + $0x1b1] sm:$0xff]
  %v1393 = vld [vmem:[#allocation2 + $0x1c9] sm:$0xff]
  %v1394 = vld [vmem:[#allocation2 + $0x1d1] sm:$0xff]
  %v1395 = vld [vmem:[#allocation2 + $0x1e9] sm:$0xff]
  %v1396 = vld [vmem:[#allocation2 + $0x1f1] sm:$0xff]
  %v1397 = vld [vmem:[#allocation2 + $0x249] sm:$0xff]
  %v1398 = vld [vmem:[#allocation2 + $0x251] sm:$0xff]
  %v1399 = vld [vmem:[#allocation2 + $0x269] sm:$0xff]
  %v1400 = vld [vmem:[#allocation2 + $0x271] sm:$0xff]
  %v1401 = vld [vmem:[#allocation2 + $0x289] sm:$0xff]
  %v1402 = vld [vmem:[#allocation2 + $0x291] sm:$0xff]
  %v1403 = vld [vmem:[#allocation2 + $0x2a9] sm:$0xff]
  %v1404 = vld [vmem:[#allocation2 + $0x2b1] sm:$0xff]
  %v1405 = vld [vmem:[#allocation2 + $0x2c9] sm:$0xff]
  %v1406 = vld [vmem:[#allocation2 + $0x2d1] sm:$0xff]
  %v1407 = vld [vmem:[#allocation2 + $0x2e9] sm:$0xff]
  %v1408 = vld [vmem:[#allocation2 + $0x2f1] sm:$0xff]
  %v1409 = vld [vmem:[#allocation2 + $0x309] sm:$0xff]
  %v1410 = vld [vmem:[#allocation2 + $0x311] sm:$0xff]
  %v1411 = vld [vmem:[#allocation2 + $0x329] sm:$0xff]
  %v1412 = vld [vmem:[#allocation2 + $0x331] sm:$0xff]
  %v1413 = vld [vmem:[#allocation2 + $0x349] sm:$0xff]
  %v1414 = vld [vmem:[#allocation2 + $0x351] sm:$0xff]
  %v1415 = vld [vmem:[#allocation2 + $0x369] sm:$0xff]
  %v1416 = vld [vmem:[#allocation2 + $0x371] sm:$0xff]
  %v1417 = vld [vmem:[#allocation2 + $0x389] sm:$0xff]
  %v1418 = vld [vmem:[#allocation2 + $0x391] sm:$0xff]
  %v1419 = vld [vmem:[#allocation2 + $0x3a9] sm:$0xff]
  %v1420 = vld [vmem:[#allocation2 + $0x3b1] sm:$0xff]
  %v1421 = vld [vmem:[#allocation2 + $0x3c9] sm:$0xff]
  %v1422 = vld [vmem:[#allocation2 + $0x3d1] sm:$0xff]
  %v1423 = vld [vmem:[#allocation2 + $0x3e9] sm:$0xff]
  %v1424 = vld [vmem:[#allocation2 + $0x3f1] sm:$0xff]
  %v1425 = vld [vmem:[#allocation2 + $0x409] sm:$0xff]
  %v1426 = vld [vmem:[#allocation2 + $0x411] sm:$0xff]
  %v1427 = vld [vmem:[#allocation2 + $0x429] sm:$0xff]
  %v1428 = vld [vmem:[#allocation2 + $0x431] sm:$0xff]
  %v1429 = vpack.c.bf16 %v1366, %v1365
  %v1430 = vpack.c.bf16 %v1368, %v1367
  %v1431 = vpack.c.bf16 %v1370, %v1369
  %v1432 = vpack.c.bf16 %v1372, %v1371
  %v1433 = vpack.c.bf16 %v1374, %v1373
  %v1434 = vpack.c.bf16 %v1376, %v1375
  %v1435 = vpack.c.bf16 %v1378, %v1377
  %v1436 = vpack.c.bf16 %v1380, %v1379
  %v1437 = vpack.c.bf16 %v1382, %v1381
  %v1438 = vpack.c.bf16 %v1384, %v1383
  %v1439 = vpack.c.bf16 %v1386, %v1385
  %v1440 = vpack.c.bf16 %v1388, %v1387
  %v1441 = vpack.c.bf16 %v1390, %v1389
  %v1442 = vpack.c.bf16 %v1392, %v1391
  %v1443 = vpack.c.bf16 %v1394, %v1393
  %v1444 = vpack.c.bf16 %v1396, %v1395
  %v1445 = vpack.c.bf16 %v1398, %v1397
  %v1446 = vpack.c.bf16 %v1400, %v1399
  %v1447 = vpack.c.bf16 %v1402, %v1401
  %v1448 = vpack.c.bf16 %v1404, %v1403
  %v1449 = vpack.c.bf16 %v1406, %v1405
  %v1450 = vpack.c.bf16 %v1408, %v1407
  %v1451 = vpack.c.bf16 %v1410, %v1409
  %v1452 = vpack.c.bf16 %v1412, %v1411
  %v1453 = vpack.c.bf16 %v1414, %v1413
  %v1454 = vpack.c.bf16 %v1416, %v1415
  %v1455 = vpack.c.bf16 %v1418, %v1417
  %v1456 = vpack.c.bf16 %v1420, %v1419
  %v1457 = vpack.c.bf16 %v1422, %v1421
  %v1458 = vpack.c.bf16 %v1424, %v1423
  %v1459 = vpack.c.bf16 %v1426, %v1425
  %v1460 = vpack.c.bf16 %v1428, %v1427
  %1461 = vst [vmem:[#allocation4 + $0x10] sm:$0xff] %v1429
  %1462 = vst [vmem:[#allocation4 + $0x58] sm:$0xff] %v1430
  %1463 = vst [vmem:[#allocation4 + $0xa0] sm:$0xff] %v1431
  %1464 = vst [vmem:[#allocation4 + $0xe8] sm:$0xff] %v1432
  %1465 = vst [vmem:[#allocation4 + $0x130] sm:$0xff] %v1433
  %1466 = vst [vmem:[#allocation4 + $0x178] sm:$0xff] %v1434
  %1467 = vst [vmem:[#allocation4 + $0x1c0] sm:$0xff] %v1435
  %1468 = vst [vmem:[#allocation4 + $0x208] sm:$0xff] %v1436
  %1469 = vst [vmem:[#allocation4 + $0x250] sm:$0xff] %v1437
  %1470 = vst [vmem:[#allocation4 + $0x298] sm:$0xff] %v1438
  %1471 = vst [vmem:[#allocation4 + $0x2e0] sm:$0xff] %v1439
  %1472 = vst [vmem:[#allocation4 + $0x328] sm:$0xff] %v1440
  %1473 = vst [vmem:[#allocation4 + $0x370] sm:$0xff] %v1441
  %1474 = vst [vmem:[#allocation4 + $0x3b8] sm:$0xff] %v1442
  %1475 = vst [vmem:[#allocation4 + $0x400] sm:$0xff] %v1443
  %1476 = vst [vmem:[#allocation4 + $0x448] sm:$0xff] %v1444
  %1477 = vst [vmem:[#allocation4 + $0x490] sm:$0xff] %v1445
  %1478 = vst [vmem:[#allocation4 + $0x4d8] sm:$0xff] %v1446
  %1479 = vst [vmem:[#allocation4 + $0x520] sm:$0xff] %v1447
  %1480 = vst [vmem:[#allocation4 + $0x568] sm:$0xff] %v1448
  %1481 = vst [vmem:[#allocation4 + $0x5b0] sm:$0xff] %v1449
  %1482 = vst [vmem:[#allocation4 + $0x5f8] sm:$0xff] %v1450
  %1483 = vst [vmem:[#allocation4 + $0x640] sm:$0xff] %v1451
  %1484 = vst [vmem:[#allocation4 + $0x688] sm:$0xff] %v1452
  %1485 = vst [vmem:[#allocation4 + $0x6d0] sm:$0xff] %v1453
  %1486 = vst [vmem:[#allocation4 + $0x718] sm:$0xff] %v1454
  %1487 = vst [vmem:[#allocation4 + $0x760] sm:$0xff] %v1455
  %1488 = vst [vmem:[#allocation4 + $0x7a8] sm:$0xff] %v1456
  %1489 = vst [vmem:[#allocation4 + $0x7f0] sm:$0xff] %v1457
  %1490 = vst [vmem:[#allocation4 + $0x838] sm:$0xff] %v1458
  %1491 = vst [vmem:[#allocation4 + $0x880] sm:$0xff] %v1459
  %1492 = vst [vmem:[#allocation4 + $0x8c8] sm:$0xff] %v1460
  %v1493 = vld [vmem:[%s1044 + $0x7] sm:$0xff]
  %v1494 = vld [vmem:[%s1044 + $0xf] sm:$0xff]
  %v1495 = vld [vmem:[%s1044 + $0x27] sm:$0xff]
  %v1496 = vld [vmem:[%s1044 + $0x2f] sm:$0xff]
  %v1497 = vld [vmem:[%s1044 + $0x47] sm:$0xff]
  %v1498 = vld [vmem:[%s1044 + $0x4f] sm:$0xff]
  %v1499 = vld [vmem:[%s1044 + $0x67] sm:$0xff]
  %v1500 = vld [vmem:[%s1044 + $0x6f] sm:$0xff]
  %v1501 = vld [vmem:[%s1044 + $0x87] sm:$0xff]
  %v1502 = vld [vmem:[%s1044 + $0x8f] sm:$0xff]
  %v1503 = vld [vmem:[%s1044 + $0xa7] sm:$0xff]
  %v1504 = vld [vmem:[%s1044 + $0xaf] sm:$0xff]
  %v1505 = vld [vmem:[%s1044 + $0xc7] sm:$0xff]
  %v1506 = vld [vmem:[%s1044 + $0xcf] sm:$0xff]
  %v1507 = vld [vmem:[%s1044 + $0xe7] sm:$0xff]
  %v1508 = vld [vmem:[%s1044 + $0xef] sm:$0xff]
  %v1509 = vld [vmem:[%s1044 + $0x107] sm:$0xff]
  %v1510 = vld [vmem:[%s1044 + $0x10f] sm:$0xff]
  %v1511 = vld [vmem:[%s1044 + $0x127] sm:$0xff]
  %v1512 = vld [vmem:[%s1044 + $0x12f] sm:$0xff]
  %v1513 = vld [vmem:[%s1044 + $0x147] sm:$0xff]
  %v1514 = vld [vmem:[%s1044 + $0x14f] sm:$0xff]
  %v1515 = vld [vmem:[%s1044 + $0x167] sm:$0xff]
  %v1516 = vld [vmem:[%s1044 + $0x16f] sm:$0xff]
  %v1517 = vld [vmem:[%s1044 + $0x187] sm:$0xff]
  %v1518 = vld [vmem:[%s1044 + $0x18f] sm:$0xff]
  %v1519 = vld [vmem:[%s1044 + $0x1a7] sm:$0xff]
  %v1520 = vld [vmem:[%s1044 + $0x1af] sm:$0xff]
  %v1521 = vld [vmem:[%s1044 + $0x1c7] sm:$0xff]
  %v1522 = vld [vmem:[%s1044 + $0x1cf] sm:$0xff]
  %v1523 = vld [vmem:[%s1044 + $0x1e7] sm:$0xff]
  %v1524 = vld [vmem:[%s1044 + $0x1ef] sm:$0xff]
  %v1525 = vld [vmem:[%s1044 + $0x247] sm:$0xff]
  %v1526 = vld [vmem:[%s1044 + $0x24f] sm:$0xff]
  %v1527 = vld [vmem:[%s1044 + $0x267] sm:$0xff]
  %v1528 = vld [vmem:[%s1044 + $0x26f] sm:$0xff]
  %v1529 = vld [vmem:[%s1044 + $0x287] sm:$0xff]
  %v1530 = vld [vmem:[%s1044 + $0x28f] sm:$0xff]
  %v1531 = vld [vmem:[%s1044 + $0x2a7] sm:$0xff]
  %v1532 = vld [vmem:[%s1044 + $0x2af] sm:$0xff]
  %v1533 = vld [vmem:[%s1044 + $0x2c7] sm:$0xff]
  %v1534 = vld [vmem:[%s1044 + $0x2cf] sm:$0xff]
  %v1535 = vld [vmem:[%s1044 + $0x2e7] sm:$0xff]
  %v1536 = vld [vmem:[%s1044 + $0x2ef] sm:$0xff]
  %v1537 = vld [vmem:[%s1044 + $0x307] sm:$0xff]
  %v1538 = vld [vmem:[%s1044 + $0x30f] sm:$0xff]
  %v1539 = vld [vmem:[%s1044 + $0x327] sm:$0xff]
  %v1540 = vld [vmem:[%s1044 + $0x32f] sm:$0xff]
  %v1541 = vld [vmem:[%s1044 + $0x347] sm:$0xff]
  %v1542 = vld [vmem:[%s1044 + $0x34f] sm:$0xff]
  %v1543 = vld [vmem:[%s1044 + $0x367] sm:$0xff]
  %v1544 = vld [vmem:[%s1044 + $0x36f] sm:$0xff]
  %v1545 = vld [vmem:[%s1044 + $0x387] sm:$0xff]
  %v1546 = vld [vmem:[%s1044 + $0x38f] sm:$0xff]
  %v1547 = vld [vmem:[%s1044 + $0x3a7] sm:$0xff]
  %v1548 = vld [vmem:[%s1044 + $0x3af] sm:$0xff]
  %v1549 = vld [vmem:[%s1044 + $0x3c7] sm:$0xff]
  %v1550 = vld [vmem:[%s1044 + $0x3cf] sm:$0xff]
  %v1551 = vld [vmem:[%s1044 + $0x3e7] sm:$0xff]
  %v1552 = vld [vmem:[%s1044 + $0x3ef] sm:$0xff]
  %v1553 = vld [vmem:[%s1044 + $0x407] sm:$0xff]
  %v1554 = vld [vmem:[%s1044 + $0x40f] sm:$0xff]
  %v1555 = vld [vmem:[%s1044 + $0x427] sm:$0xff]
  %v1556 = vld [vmem:[%s1044 + $0x42f] sm:$0xff]
  %v1557 = vpack.c.bf16 %v1494, %v1493
  %v1558 = vpack.c.bf16 %v1496, %v1495
  %v1559 = vpack.c.bf16 %v1498, %v1497
  %v1560 = vpack.c.bf16 %v1500, %v1499
  %v1561 = vpack.c.bf16 %v1502, %v1501
  %v1562 = vpack.c.bf16 %v1504, %v1503
  %v1563 = vpack.c.bf16 %v1506, %v1505
  %v1564 = vpack.c.bf16 %v1508, %v1507
  %v1565 = vpack.c.bf16 %v1510, %v1509
  %v1566 = vpack.c.bf16 %v1512, %v1511
  %v1567 = vpack.c.bf16 %v1514, %v1513
  %v1568 = vpack.c.bf16 %v1516, %v1515
  %v1569 = vpack.c.bf16 %v1518, %v1517
  %v1570 = vpack.c.bf16 %v1520, %v1519
  %v1571 = vpack.c.bf16 %v1522, %v1521
  %v1572 = vpack.c.bf16 %v1524, %v1523
  %v1573 = vpack.c.bf16 %v1526, %v1525
  %v1574 = vpack.c.bf16 %v1528, %v1527
  %v1575 = vpack.c.bf16 %v1530, %v1529
  %v1576 = vpack.c.bf16 %v1532, %v1531
  %v1577 = vpack.c.bf16 %v1534, %v1533
  %v1578 = vpack.c.bf16 %v1536, %v1535
  %v1579 = vpack.c.bf16 %v1538, %v1537
  %v1580 = vpack.c.bf16 %v1540, %v1539
  %v1581 = vpack.c.bf16 %v1542, %v1541
  %v1582 = vpack.c.bf16 %v1544, %v1543
  %v1583 = vpack.c.bf16 %v1546, %v1545
  %v1584 = vpack.c.bf16 %v1548, %v1547
  %v1585 = vpack.c.bf16 %v1550, %v1549
  %v1586 = vpack.c.bf16 %v1552, %v1551
  %v1587 = vpack.c.bf16 %v1554, %v1553
  %v1588 = vpack.c.bf16 %v1556, %v1555
  %1589 = vst [vmem:[#allocation4 + $0x18] sm:$0xff] %v1557
  %1590 = vst [vmem:[#allocation4 + $0x60] sm:$0xff] %v1558
  %1591 = vst [vmem:[#allocation4 + $0xa8] sm:$0xff] %v1559
  %1592 = vst [vmem:[#allocation4 + $0xf0] sm:$0xff] %v1560
  %1593 = vst [vmem:[#allocation4 + $0x138] sm:$0xff] %v1561
  %1594 = vst [vmem:[#allocation4 + $0x180] sm:$0xff] %v1562
  %1595 = vst [vmem:[#allocation4 + $0x1c8] sm:$0xff] %v1563
  %1596 = vst [vmem:[#allocation4 + $0x210] sm:$0xff] %v1564
  %1597 = vst [vmem:[#allocation4 + $0x258] sm:$0xff] %v1565
  %1598 = vst [vmem:[#allocation4 + $0x2a0] sm:$0xff] %v1566
  %1599 = vst [vmem:[#allocation4 + $0x2e8] sm:$0xff] %v1567
  %1600 = vst [vmem:[#allocation4 + $0x330] sm:$0xff] %v1568
  %1601 = vst [vmem:[#allocation4 + $0x378] sm:$0xff] %v1569
  %1602 = vst [vmem:[#allocation4 + $0x3c0] sm:$0xff] %v1570
  %1603 = vst [vmem:[#allocation4 + $0x408] sm:$0xff] %v1571
  %1604 = vst [vmem:[#allocation4 + $0x450] sm:$0xff] %v1572
  %1605 = vst [vmem:[#allocation4 + $0x498] sm:$0xff] %v1573
  %1606 = vst [vmem:[#allocation4 + $0x4e0] sm:$0xff] %v1574
  %1607 = vst [vmem:[#allocation4 + $0x528] sm:$0xff] %v1575
  %1608 = vst [vmem:[#allocation4 + $0x570] sm:$0xff] %v1576
  %1609 = vst [vmem:[#allocation4 + $0x5b8] sm:$0xff] %v1577
  %1610 = vst [vmem:[#allocation4 + $0x600] sm:$0xff] %v1578
  %1611 = vst [vmem:[#allocation4 + $0x648] sm:$0xff] %v1579
  %1612 = vst [vmem:[#allocation4 + $0x690] sm:$0xff] %v1580
  %1613 = vst [vmem:[#allocation4 + $0x6d8] sm:$0xff] %v1581
  %1614 = vst [vmem:[#allocation4 + $0x720] sm:$0xff] %v1582
  %1615 = vst [vmem:[#allocation4 + $0x768] sm:$0xff] %v1583
  %1616 = vst [vmem:[#allocation4 + $0x7b0] sm:$0xff] %v1584
  %1617 = vst [vmem:[#allocation4 + $0x7f8] sm:$0xff] %v1585
  %1618 = vst [vmem:[#allocation4 + $0x840] sm:$0xff] %v1586
  %1619 = vst [vmem:[#allocation4 + $0x888] sm:$0xff] %v1587
  %1620 = vst [vmem:[#allocation4 + $0x8d0] sm:$0xff] %v1588
  %v1621 = vld [vmem:[%s1044 + $0x8] sm:$0xff]
  %v1622 = vld [vmem:[%s1044 + $0x10] sm:$0xff]
  %v1623 = vld [vmem:[%s1044 + $0x28] sm:$0xff]
  %v1624 = vld [vmem:[%s1044 + $0x30] sm:$0xff]
  %v1625 = vld [vmem:[%s1044 + $0x48] sm:$0xff]
  %v1626 = vld [vmem:[%s1044 + $0x50] sm:$0xff]
  %v1627 = vld [vmem:[%s1044 + $0x68] sm:$0xff]
  %v1628 = vld [vmem:[%s1044 + $0x70] sm:$0xff]
  %v1629 = vld [vmem:[%s1044 + $0x88] sm:$0xff]
  %v1630 = vld [vmem:[%s1044 + $0x90] sm:$0xff]
  %v1631 = vld [vmem:[%s1044 + $0xa8] sm:$0xff]
  %v1632 = vld [vmem:[%s1044 + $0xb0] sm:$0xff]
  %v1633 = vld [vmem:[%s1044 + $0xc8] sm:$0xff]
  %v1634 = vld [vmem:[%s1044 + $0xd0] sm:$0xff]
  %v1635 = vld [vmem:[%s1044 + $0xe8] sm:$0xff]
  %v1636 = vld [vmem:[%s1044 + $0xf0] sm:$0xff]
  %v1637 = vld [vmem:[%s1044 + $0x108] sm:$0xff]
  %v1638 = vld [vmem:[%s1044 + $0x110] sm:$0xff]
  %v1639 = vld [vmem:[%s1044 + $0x128] sm:$0xff]
  %v1640 = vld [vmem:[%s1044 + $0x130] sm:$0xff]
  %v1641 = vld [vmem:[%s1044 + $0x148] sm:$0xff]
  %v1642 = vld [vmem:[%s1044 + $0x150] sm:$0xff]
  %v1643 = vld [vmem:[%s1044 + $0x168] sm:$0xff]
  %v1644 = vld [vmem:[%s1044 + $0x170] sm:$0xff]
  %v1645 = vld [vmem:[%s1044 + $0x188] sm:$0xff]
  %v1646 = vld [vmem:[%s1044 + $0x190] sm:$0xff]
  %v1647 = vld [vmem:[%s1044 + $0x1a8] sm:$0xff]
  %v1648 = vld [vmem:[%s1044 + $0x1b0] sm:$0xff]
  %v1649 = vld [vmem:[%s1044 + $0x1c8] sm:$0xff]
  %v1650 = vld [vmem:[%s1044 + $0x1d0] sm:$0xff]
  %v1651 = vld [vmem:[%s1044 + $0x1e8] sm:$0xff]
  %v1652 = vld [vmem:[%s1044 + $0x1f0] sm:$0xff]
  %v1653 = vld [vmem:[%s1044 + $0x248] sm:$0xff]
  %v1654 = vld [vmem:[%s1044 + $0x250] sm:$0xff]
  %v1655 = vld [vmem:[%s1044 + $0x268] sm:$0xff]
  %v1656 = vld [vmem:[%s1044 + $0x270] sm:$0xff]
  %v1657 = vld [vmem:[%s1044 + $0x288] sm:$0xff]
  %v1658 = vld [vmem:[%s1044 + $0x290] sm:$0xff]
  %v1659 = vld [vmem:[%s1044 + $0x2a8] sm:$0xff]
  %v1660 = vld [vmem:[%s1044 + $0x2b0] sm:$0xff]
  %v1661 = vld [vmem:[%s1044 + $0x2c8] sm:$0xff]
  %v1662 = vld [vmem:[%s1044 + $0x2d0] sm:$0xff]
  %v1663 = vld [vmem:[%s1044 + $0x2e8] sm:$0xff]
  %v1664 = vld [vmem:[%s1044 + $0x2f0] sm:$0xff]
  %v1665 = vld [vmem:[%s1044 + $0x308] sm:$0xff]
  %v1666 = vld [vmem:[%s1044 + $0x310] sm:$0xff]
  %v1667 = vld [vmem:[%s1044 + $0x328] sm:$0xff]
  %v1668 = vld [vmem:[%s1044 + $0x330] sm:$0xff]
  %v1669 = vld [vmem:[%s1044 + $0x348] sm:$0xff]
  %v1670 = vld [vmem:[%s1044 + $0x350] sm:$0xff]
  %v1671 = vld [vmem:[%s1044 + $0x368] sm:$0xff]
  %v1672 = vld [vmem:[%s1044 + $0x370] sm:$0xff]
  %v1673 = vld [vmem:[%s1044 + $0x388] sm:$0xff]
  %v1674 = vld [vmem:[%s1044 + $0x390] sm:$0xff]
  %v1675 = vld [vmem:[%s1044 + $0x3a8] sm:$0xff]
  %v1676 = vld [vmem:[%s1044 + $0x3b0] sm:$0xff]
  %v1677 = vld [vmem:[%s1044 + $0x3c8] sm:$0xff]
  %v1678 = vld [vmem:[%s1044 + $0x3d0] sm:$0xff]
  %v1679 = vld [vmem:[%s1044 + $0x3e8] sm:$0xff]
  %v1680 = vld [vmem:[%s1044 + $0x3f0] sm:$0xff]
  %v1681 = vld [vmem:[%s1044 + $0x408] sm:$0xff]
  %v1682 = vld [vmem:[%s1044 + $0x410] sm:$0xff]
  %v1683 = vld [vmem:[%s1044 + $0x428] sm:$0xff]
  %v1684 = vld [vmem:[%s1044 + $0x430] sm:$0xff]
  %v1685 = vpack.c.bf16 %v1622, %v1621
  %v1686 = vpack.c.bf16 %v1624, %v1623
  %v1687 = vpack.c.bf16 %v1626, %v1625
  %v1688 = vpack.c.bf16 %v1628, %v1627
  %v1689 = vpack.c.bf16 %v1630, %v1629
  %v1690 = vpack.c.bf16 %v1632, %v1631
  %v1691 = vpack.c.bf16 %v1634, %v1633
  %v1692 = vpack.c.bf16 %v1636, %v1635
  %v1693 = vpack.c.bf16 %v1638, %v1637
  %v1694 = vpack.c.bf16 %v1640, %v1639
  %v1695 = vpack.c.bf16 %v1642, %v1641
  %v1696 = vpack.c.bf16 %v1644, %v1643
  %v1697 = vpack.c.bf16 %v1646, %v1645
  %v1698 = vpack.c.bf16 %v1648, %v1647
  %v1699 = vpack.c.bf16 %v1650, %v1649
  %v1700 = vpack.c.bf16 %v1652, %v1651
  %v1701 = vpack.c.bf16 %v1654, %v1653
  %v1702 = vpack.c.bf16 %v1656, %v1655
  %v1703 = vpack.c.bf16 %v1658, %v1657
  %v1704 = vpack.c.bf16 %v1660, %v1659
  %v1705 = vpack.c.bf16 %v1662, %v1661
  %v1706 = vpack.c.bf16 %v1664, %v1663
  %v1707 = vpack.c.bf16 %v1666, %v1665
  %v1708 = vpack.c.bf16 %v1668, %v1667
  %v1709 = vpack.c.bf16 %v1670, %v1669
  %v1710 = vpack.c.bf16 %v1672, %v1671
  %v1711 = vpack.c.bf16 %v1674, %v1673
  %v1712 = vpack.c.bf16 %v1676, %v1675
  %v1713 = vpack.c.bf16 %v1678, %v1677
  %v1714 = vpack.c.bf16 %v1680, %v1679
  %v1715 = vpack.c.bf16 %v1682, %v1681
  %v1716 = vpack.c.bf16 %v1684, %v1683
  %1717 = vst [vmem:[#allocation4 + $0x20] sm:$0xff] %v1685
  %1718 = vst [vmem:[#allocation4 + $0x68] sm:$0xff] %v1686
  %1719 = vst [vmem:[#allocation4 + $0xb0] sm:$0xff] %v1687
  %1720 = vst [vmem:[#allocation4 + $0xf8] sm:$0xff] %v1688
  %1721 = vst [vmem:[#allocation4 + $0x140] sm:$0xff] %v1689
  %1722 = vst [vmem:[#allocation4 + $0x188] sm:$0xff] %v1690
  %1723 = vst [vmem:[#allocation4 + $0x1d0] sm:$0xff] %v1691
  %1724 = vst [vmem:[#allocation4 + $0x218] sm:$0xff] %v1692
  %1725 = vst [vmem:[#allocation4 + $0x260] sm:$0xff] %v1693
  %1726 = vst [vmem:[#allocation4 + $0x2a8] sm:$0xff] %v1694
  %1727 = vst [vmem:[#allocation4 + $0x2f0] sm:$0xff] %v1695
  %1728 = vst [vmem:[#allocation4 + $0x338] sm:$0xff] %v1696
  %1729 = vst [vmem:[#allocation4 + $0x380] sm:$0xff] %v1697
  %1730 = vst [vmem:[#allocation4 + $0x3c8] sm:$0xff] %v1698
  %1731 = vst [vmem:[#allocation4 + $0x410] sm:$0xff] %v1699
  %1732 = vst [vmem:[#allocation4 + $0x458] sm:$0xff] %v1700
  %1733 = vst [vmem:[#allocation4 + $0x4a0] sm:$0xff] %v1701
  %1734 = vst [vmem:[#allocation4 + $0x4e8] sm:$0xff] %v1702
  %1735 = vst [vmem:[#allocation4 + $0x530] sm:$0xff] %v1703
  %1736 = vst [vmem:[#allocation4 + $0x578] sm:$0xff] %v1704
  %1737 = vst [vmem:[#allocation4 + $0x5c0] sm:$0xff] %v1705
  %1738 = vst [vmem:[#allocation4 + $0x608] sm:$0xff] %v1706
  %1739 = vst [vmem:[#allocation4 + $0x650] sm:$0xff] %v1707
  %1740 = vst [vmem:[#allocation4 + $0x698] sm:$0xff] %v1708
  %1741 = vst [vmem:[#allocation4 + $0x6e0] sm:$0xff] %v1709
  %1742 = vst [vmem:[#allocation4 + $0x728] sm:$0xff] %v1710
  %1743 = vst [vmem:[#allocation4 + $0x770] sm:$0xff] %v1711
  %1744 = vst [vmem:[#allocation4 + $0x7b8] sm:$0xff] %v1712
  %1745 = vst [vmem:[#allocation4 + $0x800] sm:$0xff] %v1713
  %1746 = vst [vmem:[#allocation4 + $0x848] sm:$0xff] %v1714
  %1747 = vst [vmem:[#allocation4 + $0x890] sm:$0xff] %v1715
  %1748 = vst [vmem:[#allocation4 + $0x8d8] sm:$0xff] %v1716
  %v1749 = vld [vmem:[%s1044 + $0x9] sm:$0xff]
  %v1750 = vld [vmem:[%s1044 + $0x11] sm:$0xff]
  %v1751 = vld [vmem:[%s1044 + $0x29] sm:$0xff]
  %v1752 = vld [vmem:[%s1044 + $0x31] sm:$0xff]
  %v1753 = vld [vmem:[%s1044 + $0x49] sm:$0xff]
  %v1754 = vld [vmem:[%s1044 + $0x51] sm:$0xff]
  %v1755 = vld [vmem:[%s1044 + $0x69] sm:$0xff]
  %v1756 = vld [vmem:[%s1044 + $0x71] sm:$0xff]
  %v1757 = vld [vmem:[%s1044 + $0x89] sm:$0xff]
  %v1758 = vld [vmem:[%s1044 + $0x91] sm:$0xff]
  %v1759 = vld [vmem:[%s1044 + $0xa9] sm:$0xff]
  %v1760 = vld [vmem:[%s1044 + $0xb1] sm:$0xff]
  %v1761 = vld [vmem:[%s1044 + $0xc9] sm:$0xff]
  %v1762 = vld [vmem:[%s1044 + $0xd1] sm:$0xff]
  %v1763 = vld [vmem:[%s1044 + $0xe9] sm:$0xff]
  %v1764 = vld [vmem:[%s1044 + $0xf1] sm:$0xff]
  %v1765 = vld [vmem:[%s1044 + $0x109] sm:$0xff]
  %v1766 = vld [vmem:[%s1044 + $0x111] sm:$0xff]
  %v1767 = vld [vmem:[%s1044 + $0x129] sm:$0xff]
  %v1768 = vld [vmem:[%s1044 + $0x131] sm:$0xff]
  %v1769 = vld [vmem:[%s1044 + $0x149] sm:$0xff]
  %v1770 = vld [vmem:[%s1044 + $0x151] sm:$0xff]
  %v1771 = vld [vmem:[%s1044 + $0x169] sm:$0xff]
  %v1772 = vld [vmem:[%s1044 + $0x171] sm:$0xff]
  %v1773 = vld [vmem:[%s1044 + $0x189] sm:$0xff]
  %v1774 = vld [vmem:[%s1044 + $0x191] sm:$0xff]
  %v1775 = vld [vmem:[%s1044 + $0x1a9] sm:$0xff]
  %v1776 = vld [vmem:[%s1044 + $0x1b1] sm:$0xff]
  %v1777 = vld [vmem:[%s1044 + $0x1c9] sm:$0xff]
  %v1778 = vld [vmem:[%s1044 + $0x1d1] sm:$0xff]
  %v1779 = vld [vmem:[%s1044 + $0x1e9] sm:$0xff]
  %v1780 = vld [vmem:[%s1044 + $0x1f1] sm:$0xff]
  %v1781 = vld [vmem:[%s1044 + $0x249] sm:$0xff]
  %v1782 = vld [vmem:[%s1044 + $0x251] sm:$0xff]
  %v1783 = vld [vmem:[%s1044 + $0x269] sm:$0xff]
  %v1784 = vld [vmem:[%s1044 + $0x271] sm:$0xff]
  %v1785 = vld [vmem:[%s1044 + $0x289] sm:$0xff]
  %v1786 = vld [vmem:[%s1044 + $0x291] sm:$0xff]
  %v1787 = vld [vmem:[%s1044 + $0x2a9] sm:$0xff]
  %v1788 = vld [vmem:[%s1044 + $0x2b1] sm:$0xff]
  %v1789 = vld [vmem:[%s1044 + $0x2c9] sm:$0xff]
  %v1790 = vld [vmem:[%s1044 + $0x2d1] sm:$0xff]
  %v1791 = vld [vmem:[%s1044 + $0x2e9] sm:$0xff]
  %v1792 = vld [vmem:[%s1044 + $0x2f1] sm:$0xff]
  %v1793 = vld [vmem:[%s1044 + $0x309] sm:$0xff]
  %v1794 = vld [vmem:[%s1044 + $0x311] sm:$0xff]
  %v1795 = vld [vmem:[%s1044 + $0x329] sm:$0xff]
  %v1796 = vld [vmem:[%s1044 + $0x331] sm:$0xff]
  %v1797 = vld [vmem:[%s1044 + $0x349] sm:$0xff]
  %v1798 = vld [vmem:[%s1044 + $0x351] sm:$0xff]
  %v1799 = vld [vmem:[%s1044 + $0x369] sm:$0xff]
  %v1800 = vld [vmem:[%s1044 + $0x371] sm:$0xff]
  %v1801 = vld [vmem:[%s1044 + $0x389] sm:$0xff]
  %v1802 = vld [vmem:[%s1044 + $0x391] sm:$0xff]
  %v1803 = vld [vmem:[%s1044 + $0x3a9] sm:$0xff]
  %v1804 = vld [vmem:[%s1044 + $0x3b1] sm:$0xff]
  %v1805 = vld [vmem:[%s1044 + $0x3c9] sm:$0xff]
  %v1806 = vld [vmem:[%s1044 + $0x3d1] sm:$0xff]
  %v1807 = vld [vmem:[%s1044 + $0x3e9] sm:$0xff]
  %v1808 = vld [vmem:[%s1044 + $0x3f1] sm:$0xff]
  %v1809 = vld [vmem:[%s1044 + $0x409] sm:$0xff]
  %v1810 = vld [vmem:[%s1044 + $0x411] sm:$0xff]
  %v1811 = vld [vmem:[%s1044 + $0x429] sm:$0xff]
  %v1812 = vld [vmem:[%s1044 + $0x431] sm:$0xff]
  %v1813 = vpack.c.bf16 %v1750, %v1749
  %v1814 = vpack.c.bf16 %v1752, %v1751
  %v1815 = vpack.c.bf16 %v1754, %v1753
  %v1816 = vpack.c.bf16 %v1756, %v1755
  %v1817 = vpack.c.bf16 %v1758, %v1757
  %v1818 = vpack.c.bf16 %v1760, %v1759
  %v1819 = vpack.c.bf16 %v1762, %v1761
  %v1820 = vpack.c.bf16 %v1764, %v1763
  %v1821 = vpack.c.bf16 %v1766, %v1765
  %v1822 = vpack.c.bf16 %v1768, %v1767
  %v1823 = vpack.c.bf16 %v1770, %v1769
  %v1824 = vpack.c.bf16 %v1772, %v1771
  %v1825 = vpack.c.bf16 %v1774, %v1773
  %v1826 = vpack.c.bf16 %v1776, %v1775
  %v1827 = vpack.c.bf16 %v1778, %v1777
  %v1828 = vpack.c.bf16 %v1780, %v1779
  %v1829 = vpack.c.bf16 %v1782, %v1781
  %v1830 = vpack.c.bf16 %v1784, %v1783
  %v1831 = vpack.c.bf16 %v1786, %v1785
  %v1832 = vpack.c.bf16 %v1788, %v1787
  %v1833 = vpack.c.bf16 %v1790, %v1789
  %v1834 = vpack.c.bf16 %v1792, %v1791
  %v1835 = vpack.c.bf16 %v1794, %v1793
  %v1836 = vpack.c.bf16 %v1796, %v1795
  %v1837 = vpack.c.bf16 %v1798, %v1797
  %v1838 = vpack.c.bf16 %v1800, %v1799
  %v1839 = vpack.c.bf16 %v1802, %v1801
  %v1840 = vpack.c.bf16 %v1804, %v1803
  %v1841 = vpack.c.bf16 %v1806, %v1805
  %v1842 = vpack.c.bf16 %v1808, %v1807
  %v1843 = vpack.c.bf16 %v1810, %v1809
  %v1844 = vpack.c.bf16 %v1812, %v1811
  %1845 = vst [vmem:[#allocation4 + $0x28] sm:$0xff] %v1813
  %1846 = vst [vmem:[#allocation4 + $0x70] sm:$0xff] %v1814
  %1847 = vst [vmem:[#allocation4 + $0xb8] sm:$0xff] %v1815
  %1848 = vst [vmem:[#allocation4 + $0x100] sm:$0xff] %v1816
  %1849 = vst [vmem:[#allocation4 + $0x148] sm:$0xff] %v1817
  %1850 = vst [vmem:[#allocation4 + $0x190] sm:$0xff] %v1818
  %1851 = vst [vmem:[#allocation4 + $0x1d8] sm:$0xff] %v1819
  %1852 = vst [vmem:[#allocation4 + $0x220] sm:$0xff] %v1820
  %1853 = vst [vmem:[#allocation4 + $0x268] sm:$0xff] %v1821
  %1854 = vst [vmem:[#allocation4 + $0x2b0] sm:$0xff] %v1822
  %1855 = vst [vmem:[#allocation4 + $0x2f8] sm:$0xff] %v1823
  %1856 = vst [vmem:[#allocation4 + $0x340] sm:$0xff] %v1824
  %1857 = vst [vmem:[#allocation4 + $0x388] sm:$0xff] %v1825
  %1858 = vst [vmem:[#allocation4 + $0x3d0] sm:$0xff] %v1826
  %1859 = vst [vmem:[#allocation4 + $0x418] sm:$0xff] %v1827
  %1860 = vst [vmem:[#allocation4 + $0x460] sm:$0xff] %v1828
  %1861 = vst [vmem:[#allocation4 + $0x4a8] sm:$0xff] %v1829
  %1862 = vst [vmem:[#allocation4 + $0x4f0] sm:$0xff] %v1830
  %1863 = vst [vmem:[#allocation4 + $0x538] sm:$0xff] %v1831
  %1864 = vst [vmem:[#allocation4 + $0x580] sm:$0xff] %v1832
  %1865 = vst [vmem:[#allocation4 + $0x5c8] sm:$0xff] %v1833
  %1866 = vst [vmem:[#allocation4 + $0x610] sm:$0xff] %v1834
  %1867 = vst [vmem:[#allocation4 + $0x658] sm:$0xff] %v1835
  %1868 = vst [vmem:[#allocation4 + $0x6a0] sm:$0xff] %v1836
  %1869 = vst [vmem:[#allocation4 + $0x6e8] sm:$0xff] %v1837
  %1870 = vst [vmem:[#allocation4 + $0x730] sm:$0xff] %v1838
  %1871 = vst [vmem:[#allocation4 + $0x778] sm:$0xff] %v1839
  %1872 = vst [vmem:[#allocation4 + $0x7c0] sm:$0xff] %v1840
  %1873 = vst [vmem:[#allocation4 + $0x808] sm:$0xff] %v1841
  %1874 = vst [vmem:[#allocation4 + $0x850] sm:$0xff] %v1842
  %1875 = vst [vmem:[#allocation4 + $0x898] sm:$0xff] %v1843
  %1876 = vst [vmem:[#allocation4 + $0x8e0] sm:$0xff] %v1844
  %s1877 = scalar_lea.vmem [#allocation2], 64
  %v1878 = vld [vmem:[%s1877 + $0x7] sm:$0xff]
  %v1879 = vld [vmem:[%s1877 + $0xf] sm:$0xff]
  %v1880 = vld [vmem:[%s1877 + $0x27] sm:$0xff]
  %v1881 = vld [vmem:[%s1877 + $0x2f] sm:$0xff]
  %v1882 = vld [vmem:[%s1877 + $0x47] sm:$0xff]
  %v1883 = vld [vmem:[%s1877 + $0x4f] sm:$0xff]
  %v1884 = vld [vmem:[%s1877 + $0x67] sm:$0xff]
  %v1885 = vld [vmem:[%s1877 + $0x6f] sm:$0xff]
  %v1886 = vld [vmem:[%s1877 + $0x87] sm:$0xff]
  %v1887 = vld [vmem:[%s1877 + $0x8f] sm:$0xff]
  %v1888 = vld [vmem:[%s1877 + $0xa7] sm:$0xff]
  %v1889 = vld [vmem:[%s1877 + $0xaf] sm:$0xff]
  %v1890 = vld [vmem:[%s1877 + $0xc7] sm:$0xff]
  %v1891 = vld [vmem:[%s1877 + $0xcf] sm:$0xff]
  %v1892 = vld [vmem:[%s1877 + $0xe7] sm:$0xff]
  %v1893 = vld [vmem:[%s1877 + $0xef] sm:$0xff]
  %v1894 = vld [vmem:[%s1877 + $0x107] sm:$0xff]
  %v1895 = vld [vmem:[%s1877 + $0x10f] sm:$0xff]
  %v1896 = vld [vmem:[%s1877 + $0x127] sm:$0xff]
  %v1897 = vld [vmem:[%s1877 + $0x12f] sm:$0xff]
  %v1898 = vld [vmem:[%s1877 + $0x147] sm:$0xff]
  %v1899 = vld [vmem:[%s1877 + $0x14f] sm:$0xff]
  %v1900 = vld [vmem:[%s1877 + $0x167] sm:$0xff]
  %v1901 = vld [vmem:[%s1877 + $0x16f] sm:$0xff]
  %v1902 = vld [vmem:[%s1877 + $0x187] sm:$0xff]
  %v1903 = vld [vmem:[%s1877 + $0x18f] sm:$0xff]
  %v1904 = vld [vmem:[%s1877 + $0x1a7] sm:$0xff]
  %v1905 = vld [vmem:[%s1877 + $0x1af] sm:$0xff]
  %v1906 = vld [vmem:[%s1877 + $0x1c7] sm:$0xff]
  %v1907 = vld [vmem:[%s1877 + $0x1cf] sm:$0xff]
  %v1908 = vld [vmem:[%s1877 + $0x1e7] sm:$0xff]
  %v1909 = vld [vmem:[%s1877 + $0x1ef] sm:$0xff]
  %v1910 = vld [vmem:[%s1877 + $0x247] sm:$0xff]
  %v1911 = vld [vmem:[%s1877 + $0x24f] sm:$0xff]
  %v1912 = vld [vmem:[%s1877 + $0x267] sm:$0xff]
  %v1913 = vld [vmem:[%s1877 + $0x26f] sm:$0xff]
  %v1914 = vld [vmem:[%s1877 + $0x287] sm:$0xff]
  %v1915 = vld [vmem:[%s1877 + $0x28f] sm:$0xff]
  %v1916 = vld [vmem:[%s1877 + $0x2a7] sm:$0xff]
  %v1917 = vld [vmem:[%s1877 + $0x2af] sm:$0xff]
  %v1918 = vld [vmem:[%s1877 + $0x2c7] sm:$0xff]
  %v1919 = vld [vmem:[%s1877 + $0x2cf] sm:$0xff]
  %v1920 = vld [vmem:[%s1877 + $0x2e7] sm:$0xff]
  %v1921 = vld [vmem:[%s1877 + $0x2ef] sm:$0xff]
  %v1922 = vld [vmem:[%s1877 + $0x307] sm:$0xff]
  %v1923 = vld [vmem:[%s1877 + $0x30f] sm:$0xff]
  %v1924 = vld [vmem:[%s1877 + $0x327] sm:$0xff]
  %v1925 = vld [vmem:[%s1877 + $0x32f] sm:$0xff]
  %v1926 = vld [vmem:[%s1877 + $0x347] sm:$0xff]
  %v1927 = vld [vmem:[%s1877 + $0x34f] sm:$0xff]
  %v1928 = vld [vmem:[%s1877 + $0x367] sm:$0xff]
  %v1929 = vld [vmem:[%s1877 + $0x36f] sm:$0xff]
  %v1930 = vld [vmem:[%s1877 + $0x387] sm:$0xff]
  %v1931 = vld [vmem:[%s1877 + $0x38f] sm:$0xff]
  %v1932 = vld [vmem:[%s1877 + $0x3a7] sm:$0xff]
  %v1933 = vld [vmem:[%s1877 + $0x3af] sm:$0xff]
  %v1934 = vld [vmem:[%s1877 + $0x3c7] sm:$0xff]
  %v1935 = vld [vmem:[%s1877 + $0x3cf] sm:$0xff]
  %v1936 = vld [vmem:[%s1877 + $0x3e7] sm:$0xff]
  %v1937 = vld [vmem:[%s1877 + $0x3ef] sm:$0xff]
  %v1938 = vld [vmem:[%s1877 + $0x407] sm:$0xff]
  %v1939 = vld [vmem:[%s1877 + $0x40f] sm:$0xff]
  %v1940 = vld [vmem:[%s1877 + $0x427] sm:$0xff]
  %v1941 = vld [vmem:[%s1877 + $0x42f] sm:$0xff]
  %v1942 = vpack.c.bf16 %v1879, %v1878
  %v1943 = vpack.c.bf16 %v1881, %v1880
  %v1944 = vpack.c.bf16 %v1883, %v1882
  %v1945 = vpack.c.bf16 %v1885, %v1884
  %v1946 = vpack.c.bf16 %v1887, %v1886
  %v1947 = vpack.c.bf16 %v1889, %v1888
  %v1948 = vpack.c.bf16 %v1891, %v1890
  %v1949 = vpack.c.bf16 %v1893, %v1892
  %v1950 = vpack.c.bf16 %v1895, %v1894
  %v1951 = vpack.c.bf16 %v1897, %v1896
  %v1952 = vpack.c.bf16 %v1899, %v1898
  %v1953 = vpack.c.bf16 %v1901, %v1900
  %v1954 = vpack.c.bf16 %v1903, %v1902
  %v1955 = vpack.c.bf16 %v1905, %v1904
  %v1956 = vpack.c.bf16 %v1907, %v1906
  %v1957 = vpack.c.bf16 %v1909, %v1908
  %v1958 = vpack.c.bf16 %v1911, %v1910
  %v1959 = vpack.c.bf16 %v1913, %v1912
  %v1960 = vpack.c.bf16 %v1915, %v1914
  %v1961 = vpack.c.bf16 %v1917, %v1916
  %v1962 = vpack.c.bf16 %v1919, %v1918
  %v1963 = vpack.c.bf16 %v1921, %v1920
  %v1964 = vpack.c.bf16 %v1923, %v1922
  %v1965 = vpack.c.bf16 %v1925, %v1924
  %v1966 = vpack.c.bf16 %v1927, %v1926
  %v1967 = vpack.c.bf16 %v1929, %v1928
  %v1968 = vpack.c.bf16 %v1931, %v1930
  %v1969 = vpack.c.bf16 %v1933, %v1932
  %v1970 = vpack.c.bf16 %v1935, %v1934
  %v1971 = vpack.c.bf16 %v1937, %v1936
  %v1972 = vpack.c.bf16 %v1939, %v1938
  %v1973 = vpack.c.bf16 %v1941, %v1940
  %1974 = vst [vmem:[#allocation4 + $0x30] sm:$0xff] %v1942
  %1975 = vst [vmem:[#allocation4 + $0x78] sm:$0xff] %v1943
  %1976 = vst [vmem:[#allocation4 + $0xc0] sm:$0xff] %v1944
  %1977 = vst [vmem:[#allocation4 + $0x108] sm:$0xff] %v1945
  %1978 = vst [vmem:[#allocation4 + $0x150] sm:$0xff] %v1946
  %1979 = vst [vmem:[#allocation4 + $0x198] sm:$0xff] %v1947
  %1980 = vst [vmem:[#allocation4 + $0x1e0] sm:$0xff] %v1948
  %1981 = vst [vmem:[#allocation4 + $0x228] sm:$0xff] %v1949
  %1982 = vst [vmem:[#allocation4 + $0x270] sm:$0xff] %v1950
  %1983 = vst [vmem:[#allocation4 + $0x2b8] sm:$0xff] %v1951
  %1984 = vst [vmem:[#allocation4 + $0x300] sm:$0xff] %v1952
  %1985 = vst [vmem:[#allocation4 + $0x348] sm:$0xff] %v1953
  %1986 = vst [vmem:[#allocation4 + $0x390] sm:$0xff] %v1954
  %1987 = vst [vmem:[#allocation4 + $0x3d8] sm:$0xff] %v1955
  %1988 = vst [vmem:[#allocation4 + $0x420] sm:$0xff] %v1956
  %1989 = vst [vmem:[#allocation4 + $0x468] sm:$0xff] %v1957
  %1990 = vst [vmem:[#allocation4 + $0x4b0] sm:$0xff] %v1958
  %1991 = vst [vmem:[#allocation4 + $0x4f8] sm:$0xff] %v1959
  %1992 = vst [vmem:[#allocation4 + $0x540] sm:$0xff] %v1960
  %1993 = vst [vmem:[#allocation4 + $0x588] sm:$0xff] %v1961
  %1994 = vst [vmem:[#allocation4 + $0x5d0] sm:$0xff] %v1962
  %1995 = vst [vmem:[#allocation4 + $0x618] sm:$0xff] %v1963
  %1996 = vst [vmem:[#allocation4 + $0x660] sm:$0xff] %v1964
  %1997 = vst [vmem:[#allocation4 + $0x6a8] sm:$0xff] %v1965
  %1998 = vst [vmem:[#allocation4 + $0x6f0] sm:$0xff] %v1966
  %1999 = vst [vmem:[#allocation4 + $0x738] sm:$0xff] %v1967
  %2000 = vst [vmem:[#allocation4 + $0x780] sm:$0xff] %v1968
  %2001 = vst [vmem:[#allocation4 + $0x7c8] sm:$0xff] %v1969
  %2002 = vst [vmem:[#allocation4 + $0x810] sm:$0xff] %v1970
  %2003 = vst [vmem:[#allocation4 + $0x858] sm:$0xff] %v1971
  %2004 = vst [vmem:[#allocation4 + $0x8a0] sm:$0xff] %v1972
  %2005 = vst [vmem:[#allocation4 + $0x8e8] sm:$0xff] %v1973
  %v2006 = vld [vmem:[%s1877 + $0x8] sm:$0xff]
  %v2007 = vld [vmem:[%s1877 + $0x10] sm:$0xff]
  %v2008 = vld [vmem:[%s1877 + $0x28] sm:$0xff]
  %v2009 = vld [vmem:[%s1877 + $0x30] sm:$0xff]
  %v2010 = vld [vmem:[%s1877 + $0x48] sm:$0xff]
  %v2011 = vld [vmem:[%s1877 + $0x50] sm:$0xff]
  %v2012 = vld [vmem:[%s1877 + $0x68] sm:$0xff]
  %v2013 = vld [vmem:[%s1877 + $0x70] sm:$0xff]
  %v2014 = vld [vmem:[%s1877 + $0x88] sm:$0xff]
  %v2015 = vld [vmem:[%s1877 + $0x90] sm:$0xff]
  %v2016 = vld [vmem:[%s1877 + $0xa8] sm:$0xff]
  %v2017 = vld [vmem:[%s1877 + $0xb0] sm:$0xff]
  %v2018 = vld [vmem:[%s1877 + $0xc8] sm:$0xff]
  %v2019 = vld [vmem:[%s1877 + $0xd0] sm:$0xff]
  %v2020 = vld [vmem:[%s1877 + $0xe8] sm:$0xff]
  %v2021 = vld [vmem:[%s1877 + $0xf0] sm:$0xff]
  %v2022 = vld [vmem:[%s1877 + $0x108] sm:$0xff]
  %v2023 = vld [vmem:[%s1877 + $0x110] sm:$0xff]
  %v2024 = vld [vmem:[%s1877 + $0x128] sm:$0xff]
  %v2025 = vld [vmem:[%s1877 + $0x130] sm:$0xff]
  %v2026 = vld [vmem:[%s1877 + $0x148] sm:$0xff]
  %v2027 = vld [vmem:[%s1877 + $0x150] sm:$0xff]
  %v2028 = vld [vmem:[%s1877 + $0x168] sm:$0xff]
  %v2029 = vld [vmem:[%s1877 + $0x170] sm:$0xff]
  %v2030 = vld [vmem:[%s1877 + $0x188] sm:$0xff]
  %v2031 = vld [vmem:[%s1877 + $0x190] sm:$0xff]
  %v2032 = vld [vmem:[%s1877 + $0x1a8] sm:$0xff]
  %v2033 = vld [vmem:[%s1877 + $0x1b0] sm:$0xff]
  %v2034 = vld [vmem:[%s1877 + $0x1c8] sm:$0xff]
  %v2035 = vld [vmem:[%s1877 + $0x1d0] sm:$0xff]
  %v2036 = vld [vmem:[%s1877 + $0x1e8] sm:$0xff]
  %v2037 = vld [vmem:[%s1877 + $0x1f0] sm:$0xff]
  %v2038 = vld [vmem:[%s1877 + $0x248] sm:$0xff]
  %v2039 = vld [vmem:[%s1877 + $0x250] sm:$0xff]
  %v2040 = vld [vmem:[%s1877 + $0x268] sm:$0xff]
  %v2041 = vld [vmem:[%s1877 + $0x270] sm:$0xff]
  %v2042 = vld [vmem:[%s1877 + $0x288] sm:$0xff]
  %v2043 = vld [vmem:[%s1877 + $0x290] sm:$0xff]
  %v2044 = vld [vmem:[%s1877 + $0x2a8] sm:$0xff]
  %v2045 = vld [vmem:[%s1877 + $0x2b0] sm:$0xff]
  %v2046 = vld [vmem:[%s1877 + $0x2c8] sm:$0xff]
  %v2047 = vld [vmem:[%s1877 + $0x2d0] sm:$0xff]
  %v2048 = vld [vmem:[%s1877 + $0x2e8] sm:$0xff]
  %v2049 = vld [vmem:[%s1877 + $0x2f0] sm:$0xff]
  %v2050 = vld [vmem:[%s1877 + $0x308] sm:$0xff]
  %v2051 = vld [vmem:[%s1877 + $0x310] sm:$0xff]
  %v2052 = vld [vmem:[%s1877 + $0x328] sm:$0xff]
  %v2053 = vld [vmem:[%s1877 + $0x330] sm:$0xff]
  %v2054 = vld [vmem:[%s1877 + $0x348] sm:$0xff]
  %v2055 = vld [vmem:[%s1877 + $0x350] sm:$0xff]
  %v2056 = vld [vmem:[%s1877 + $0x368] sm:$0xff]
  %v2057 = vld [vmem:[%s1877 + $0x370] sm:$0xff]
  %v2058 = vld [vmem:[%s1877 + $0x388] sm:$0xff]
  %v2059 = vld [vmem:[%s1877 + $0x390] sm:$0xff]
  %v2060 = vld [vmem:[%s1877 + $0x3a8] sm:$0xff]
  %v2061 = vld [vmem:[%s1877 + $0x3b0] sm:$0xff]
  %v2062 = vld [vmem:[%s1877 + $0x3c8] sm:$0xff]
  %v2063 = vld [vmem:[%s1877 + $0x3d0] sm:$0xff]
  %v2064 = vld [vmem:[%s1877 + $0x3e8] sm:$0xff]
  %v2065 = vld [vmem:[%s1877 + $0x3f0] sm:$0xff]
  %v2066 = vld [vmem:[%s1877 + $0x408] sm:$0xff]
  %v2067 = vld [vmem:[%s1877 + $0x410] sm:$0xff]
  %v2068 = vld [vmem:[%s1877 + $0x428] sm:$0xff]
  %v2069 = vld [vmem:[%s1877 + $0x430] sm:$0xff]
  %v2070 = vpack.c.bf16 %v2007, %v2006
  %v2071 = vpack.c.bf16 %v2009, %v2008
  %v2072 = vpack.c.bf16 %v2011, %v2010
  %v2073 = vpack.c.bf16 %v2013, %v2012
  %v2074 = vpack.c.bf16 %v2015, %v2014
  %v2075 = vpack.c.bf16 %v2017, %v2016
  %v2076 = vpack.c.bf16 %v2019, %v2018
  %v2077 = vpack.c.bf16 %v2021, %v2020
  %v2078 = vpack.c.bf16 %v2023, %v2022
  %v2079 = vpack.c.bf16 %v2025, %v2024
  %v2080 = vpack.c.bf16 %v2027, %v2026
  %v2081 = vpack.c.bf16 %v2029, %v2028
  %v2082 = vpack.c.bf16 %v2031, %v2030
  %v2083 = vpack.c.bf16 %v2033, %v2032
  %v2084 = vpack.c.bf16 %v2035, %v2034
  %v2085 = vpack.c.bf16 %v2037, %v2036
  %v2086 = vpack.c.bf16 %v2039, %v2038
  %v2087 = vpack.c.bf16 %v2041, %v2040
  %v2088 = vpack.c.bf16 %v2043, %v2042
  %v2089 = vpack.c.bf16 %v2045, %v2044
  %v2090 = vpack.c.bf16 %v2047, %v2046
  %v2091 = vpack.c.bf16 %v2049, %v2048
  %v2092 = vpack.c.bf16 %v2051, %v2050
  %v2093 = vpack.c.bf16 %v2053, %v2052
  %v2094 = vpack.c.bf16 %v2055, %v2054
  %v2095 = vpack.c.bf16 %v2057, %v2056
  %v2096 = vpack.c.bf16 %v2059, %v2058
  %v2097 = vpack.c.bf16 %v2061, %v2060
  %v2098 = vpack.c.bf16 %v2063, %v2062
  %v2099 = vpack.c.bf16 %v2065, %v2064
  %v2100 = vpack.c.bf16 %v2067, %v2066
  %v2101 = vpack.c.bf16 %v2069, %v2068
  %2102 = vst [vmem:[#allocation4 + $0x38] sm:$0xff] %v2070
  %2103 = vst [vmem:[#allocation4 + $0x80] sm:$0xff] %v2071
  %2104 = vst [vmem:[#allocation4 + $0xc8] sm:$0xff] %v2072
  %2105 = vst [vmem:[#allocation4 + $0x110] sm:$0xff] %v2073
  %2106 = vst [vmem:[#allocation4 + $0x158] sm:$0xff] %v2074
  %2107 = vst [vmem:[#allocation4 + $0x1a0] sm:$0xff] %v2075
  %2108 = vst [vmem:[#allocation4 + $0x1e8] sm:$0xff] %v2076
  %2109 = vst [vmem:[#allocation4 + $0x230] sm:$0xff] %v2077
  %2110 = vst [vmem:[#allocation4 + $0x278] sm:$0xff] %v2078
  %2111 = vst [vmem:[#allocation4 + $0x2c0] sm:$0xff] %v2079
  %2112 = vst [vmem:[#allocation4 + $0x308] sm:$0xff] %v2080
  %2113 = vst [vmem:[#allocation4 + $0x350] sm:$0xff] %v2081
  %2114 = vst [vmem:[#allocation4 + $0x398] sm:$0xff] %v2082
  %2115 = vst [vmem:[#allocation4 + $0x3e0] sm:$0xff] %v2083
  %2116 = vst [vmem:[#allocation4 + $0x428] sm:$0xff] %v2084
  %2117 = vst [vmem:[#allocation4 + $0x470] sm:$0xff] %v2085
  %2118 = vst [vmem:[#allocation4 + $0x4b8] sm:$0xff] %v2086
  %2119 = vst [vmem:[#allocation4 + $0x500] sm:$0xff] %v2087
  %2120 = vst [vmem:[#allocation4 + $0x548] sm:$0xff] %v2088
  %2121 = vst [vmem:[#allocation4 + $0x590] sm:$0xff] %v2089
  %2122 = vst [vmem:[#allocation4 + $0x5d8] sm:$0xff] %v2090
  %2123 = vst [vmem:[#allocation4 + $0x620] sm:$0xff] %v2091
  %2124 = vst [vmem:[#allocation4 + $0x668] sm:$0xff] %v2092
  %2125 = vst [vmem:[#allocation4 + $0x6b0] sm:$0xff] %v2093
  %2126 = vst [vmem:[#allocation4 + $0x6f8] sm:$0xff] %v2094
  %2127 = vst [vmem:[#allocation4 + $0x740] sm:$0xff] %v2095
  %2128 = vst [vmem:[#allocation4 + $0x788] sm:$0xff] %v2096
  %2129 = vst [vmem:[#allocation4 + $0x7d0] sm:$0xff] %v2097
  %2130 = vst [vmem:[#allocation4 + $0x818] sm:$0xff] %v2098
  %2131 = vst [vmem:[#allocation4 + $0x860] sm:$0xff] %v2099
  %2132 = vst [vmem:[#allocation4 + $0x8a8] sm:$0xff] %v2100
  %2133 = vst [vmem:[#allocation4 + $0x8f0] sm:$0xff] %v2101
  %v2134 = vld [vmem:[%s1877 + $0x9] sm:$0xff]
  %v2135 = vld [vmem:[%s1877 + $0x11] sm:$0xff]
  %v2136 = vld [vmem:[%s1877 + $0x29] sm:$0xff]
  %v2137 = vld [vmem:[%s1877 + $0x31] sm:$0xff]
  %v2138 = vld [vmem:[%s1877 + $0x49] sm:$0xff]
  %v2139 = vld [vmem:[%s1877 + $0x51] sm:$0xff]
  %v2140 = vld [vmem:[%s1877 + $0x69] sm:$0xff]
  %v2141 = vld [vmem:[%s1877 + $0x71] sm:$0xff]
  %v2142 = vld [vmem:[%s1877 + $0x89] sm:$0xff]
  %v2143 = vld [vmem:[%s1877 + $0x91] sm:$0xff]
  %v2144 = vld [vmem:[%s1877 + $0xa9] sm:$0xff]
  %v2145 = vld [vmem:[%s1877 + $0xb1] sm:$0xff]
  %v2146 = vld [vmem:[%s1877 + $0xc9] sm:$0xff]
  %v2147 = vld [vmem:[%s1877 + $0xd1] sm:$0xff]
  %v2148 = vld [vmem:[%s1877 + $0xe9] sm:$0xff]
  %v2149 = vld [vmem:[%s1877 + $0xf1] sm:$0xff]
  %v2150 = vld [vmem:[%s1877 + $0x109] sm:$0xff]
  %v2151 = vld [vmem:[%s1877 + $0x111] sm:$0xff]
  %v2152 = vld [vmem:[%s1877 + $0x129] sm:$0xff]
  %v2153 = vld [vmem:[%s1877 + $0x131] sm:$0xff]
  %v2154 = vld [vmem:[%s1877 + $0x149] sm:$0xff]
  %v2155 = vld [vmem:[%s1877 + $0x151] sm:$0xff]
  %v2156 = vld [vmem:[%s1877 + $0x169] sm:$0xff]
  %v2157 = vld [vmem:[%s1877 + $0x171] sm:$0xff]
  %v2158 = vld [vmem:[%s1877 + $0x189] sm:$0xff]
  %v2159 = vld [vmem:[%s1877 + $0x191] sm:$0xff]
  %v2160 = vld [vmem:[%s1877 + $0x1a9] sm:$0xff]
  %v2161 = vld [vmem:[%s1877 + $0x1b1] sm:$0xff]
  %v2162 = vld [vmem:[%s1877 + $0x1c9] sm:$0xff]
  %v2163 = vld [vmem:[%s1877 + $0x1d1] sm:$0xff]
  %v2164 = vld [vmem:[%s1877 + $0x1e9] sm:$0xff]
  %v2165 = vld [vmem:[%s1877 + $0x1f1] sm:$0xff]
  %v2166 = vld [vmem:[%s1877 + $0x249] sm:$0xff]
  %v2167 = vld [vmem:[%s1877 + $0x251] sm:$0xff]
  %v2168 = vld [vmem:[%s1877 + $0x269] sm:$0xff]
  %v2169 = vld [vmem:[%s1877 + $0x271] sm:$0xff]
  %v2170 = vld [vmem:[%s1877 + $0x289] sm:$0xff]
  %v2171 = vld [vmem:[%s1877 + $0x291] sm:$0xff]
  %v2172 = vld [vmem:[%s1877 + $0x2a9] sm:$0xff]
  %v2173 = vld [vmem:[%s1877 + $0x2b1] sm:$0xff]
  %v2174 = vld [vmem:[%s1877 + $0x2c9] sm:$0xff]
  %v2175 = vld [vmem:[%s1877 + $0x2d1] sm:$0xff]
  %v2176 = vld [vmem:[%s1877 + $0x2e9] sm:$0xff]
  %v2177 = vld [vmem:[%s1877 + $0x2f1] sm:$0xff]
  %v2178 = vld [vmem:[%s1877 + $0x309] sm:$0xff]
  %v2179 = vld [vmem:[%s1877 + $0x311] sm:$0xff]
  %v2180 = vld [vmem:[%s1877 + $0x329] sm:$0xff]
  %v2181 = vld [vmem:[%s1877 + $0x331] sm:$0xff]
  %v2182 = vld [vmem:[%s1877 + $0x349] sm:$0xff]
  %v2183 = vld [vmem:[%s1877 + $0x351] sm:$0xff]
  %v2184 = vld [vmem:[%s1877 + $0x369] sm:$0xff]
  %v2185 = vld [vmem:[%s1877 + $0x371] sm:$0xff]
  %v2186 = vld [vmem:[%s1877 + $0x389] sm:$0xff]
  %v2187 = vld [vmem:[%s1877 + $0x391] sm:$0xff]
  %v2188 = vld [vmem:[%s1877 + $0x3a9] sm:$0xff]
  %v2189 = vld [vmem:[%s1877 + $0x3b1] sm:$0xff]
  %v2190 = vld [vmem:[%s1877 + $0x3c9] sm:$0xff]
  %v2191 = vld [vmem:[%s1877 + $0x3d1] sm:$0xff]
  %v2192 = vld [vmem:[%s1877 + $0x3e9] sm:$0xff]
  %v2193 = vld [vmem:[%s1877 + $0x3f1] sm:$0xff]
  %v2194 = vld [vmem:[%s1877 + $0x409] sm:$0xff]
  %v2195 = vld [vmem:[%s1877 + $0x411] sm:$0xff]
  %v2196 = vld [vmem:[%s1877 + $0x429] sm:$0xff]
  %v2197 = vld [vmem:[%s1877 + $0x431] sm:$0xff]
  %v2198 = vpack.c.bf16 %v2135, %v2134
  %v2199 = vpack.c.bf16 %v2137, %v2136
  %v2200 = vpack.c.bf16 %v2139, %v2138
  %v2201 = vpack.c.bf16 %v2141, %v2140
  %v2202 = vpack.c.bf16 %v2143, %v2142
  %v2203 = vpack.c.bf16 %v2145, %v2144
  %v2204 = vpack.c.bf16 %v2147, %v2146
  %v2205 = vpack.c.bf16 %v2149, %v2148
  %v2206 = vpack.c.bf16 %v2151, %v2150
  %v2207 = vpack.c.bf16 %v2153, %v2152
  %v2208 = vpack.c.bf16 %v2155, %v2154
  %v2209 = vpack.c.bf16 %v2157, %v2156
  %v2210 = vpack.c.bf16 %v2159, %v2158
  %v2211 = vpack.c.bf16 %v2161, %v2160
  %v2212 = vpack.c.bf16 %v2163, %v2162
  %v2213 = vpack.c.bf16 %v2165, %v2164
  %v2214 = vpack.c.bf16 %v2167, %v2166
  %v2215 = vpack.c.bf16 %v2169, %v2168
  %v2216 = vpack.c.bf16 %v2171, %v2170
  %v2217 = vpack.c.bf16 %v2173, %v2172
  %v2218 = vpack.c.bf16 %v2175, %v2174
  %v2219 = vpack.c.bf16 %v2177, %v2176
  %v2220 = vpack.c.bf16 %v2179, %v2178
  %v2221 = vpack.c.bf16 %v2181, %v2180
  %v2222 = vpack.c.bf16 %v2183, %v2182
  %v2223 = vpack.c.bf16 %v2185, %v2184
  %v2224 = vpack.c.bf16 %v2187, %v2186
  %v2225 = vpack.c.bf16 %v2189, %v2188
  %v2226 = vpack.c.bf16 %v2191, %v2190
  %v2227 = vpack.c.bf16 %v2193, %v2192
  %v2228 = vpack.c.bf16 %v2195, %v2194
  %v2229 = vpack.c.bf16 %v2197, %v2196
  %2230 = vst [vmem:[#allocation4 + $0x40] sm:$0xff] %v2198
  %2231 = vst [vmem:[#allocation4 + $0x88] sm:$0xff] %v2199
  %2232 = vst [vmem:[#allocation4 + $0xd0] sm:$0xff] %v2200
  %2233 = vst [vmem:[#allocation4 + $0x118] sm:$0xff] %v2201
  %2234 = vst [vmem:[#allocation4 + $0x160] sm:$0xff] %v2202
  %2235 = vst [vmem:[#allocation4 + $0x1a8] sm:$0xff] %v2203
  %2236 = vst [vmem:[#allocation4 + $0x1f0] sm:$0xff] %v2204
  %2237 = vst [vmem:[#allocation4 + $0x238] sm:$0xff] %v2205
  %2238 = vst [vmem:[#allocation4 + $0x280] sm:$0xff] %v2206
  %2239 = vst [vmem:[#allocation4 + $0x2c8] sm:$0xff] %v2207
  %2240 = vst [vmem:[#allocation4 + $0x310] sm:$0xff] %v2208
  %2241 = vst [vmem:[#allocation4 + $0x358] sm:$0xff] %v2209
  %2242 = vst [vmem:[#allocation4 + $0x3a0] sm:$0xff] %v2210
  %2243 = vst [vmem:[#allocation4 + $0x3e8] sm:$0xff] %v2211
  %2244 = vst [vmem:[#allocation4 + $0x430] sm:$0xff] %v2212
  %2245 = vst [vmem:[#allocation4 + $0x478] sm:$0xff] %v2213
  %2246 = vst [vmem:[#allocation4 + $0x4c0] sm:$0xff] %v2214
  %2247 = vst [vmem:[#allocation4 + $0x508] sm:$0xff] %v2215
  %2248 = vst [vmem:[#allocation4 + $0x550] sm:$0xff] %v2216
  %2249 = vst [vmem:[#allocation4 + $0x598] sm:$0xff] %v2217
  %2250 = vst [vmem:[#allocation4 + $0x5e0] sm:$0xff] %v2218
  %2251 = vst [vmem:[#allocation4 + $0x628] sm:$0xff] %v2219
  %2252 = vst [vmem:[#allocation4 + $0x670] sm:$0xff] %v2220
  %2253 = vst [vmem:[#allocation4 + $0x6b8] sm:$0xff] %v2221
  %2254 = vst [vmem:[#allocation4 + $0x700] sm:$0xff] %v2222
  %2255 = vst [vmem:[#allocation4 + $0x748] sm:$0xff] %v2223
  %2256 = vst [vmem:[#allocation4 + $0x790] sm:$0xff] %v2224
  %2257 = vst [vmem:[#allocation4 + $0x7d8] sm:$0xff] %v2225
  %2258 = vst [vmem:[#allocation4 + $0x820] sm:$0xff] %v2226
  %2259 = vst [vmem:[#allocation4 + $0x868] sm:$0xff] %v2227
  %2260 = vst [vmem:[#allocation4 + $0x8b0] sm:$0xff] %v2228
  %2261 = vst [vmem:[#allocation4 + $0x8f8] sm:$0xff] %v2229
  %v2262 = vld [vmem:[#allocation4] sm:$0xff]
  %v2263 = vld [vmem:[#allocation4 + $0x8] sm:$0xff]
  %v2264 = vld [vmem:[#allocation4 + $0x10] sm:$0xff]
  %v2265 = vld [vmem:[#allocation4 + $0x18] sm:$0xff]
  %v2266 = vld [vmem:[#allocation4 + $0x20] sm:$0xff]
  %v2267 = vld [vmem:[#allocation4 + $0x28] sm:$0xff]
  %v2268 = vld [vmem:[#allocation4 + $0x30] sm:$0xff]
  %v2269 = vld [vmem:[#allocation4 + $0x38] sm:$0xff]
  %v2270 = vld [vmem:[#allocation4 + $0x40] sm:$0xff]
  %v2271 = vld [vmem:[#allocation4 + $0x48] sm:$0xff]
  %v2272 = vld [vmem:[#allocation4 + $0x50] sm:$0xff]
  %v2273 = vld [vmem:[#allocation4 + $0x58] sm:$0xff]
  %v2274 = vld [vmem:[#allocation4 + $0x60] sm:$0xff]
  %v2275 = vld [vmem:[#allocation4 + $0x68] sm:$0xff]
  %v2276 = vld [vmem:[#allocation4 + $0x70] sm:$0xff]
  %v2277 = vld [vmem:[#allocation4 + $0x78] sm:$0xff]
  %v2278 = vld [vmem:[#allocation4 + $0x80] sm:$0xff]
  %v2279 = vld [vmem:[#allocation4 + $0x88] sm:$0xff]
  %v2280 = vld [vmem:[#allocation4 + $0x90] sm:$0xff]
  %v2281 = vld [vmem:[#allocation4 + $0x98] sm:$0xff]
  %v2282 = vld [vmem:[#allocation4 + $0xa0] sm:$0xff]
  %v2283 = vld [vmem:[#allocation4 + $0xa8] sm:$0xff]
  %v2284 = vld [vmem:[#allocation4 + $0xb0] sm:$0xff]
  %v2285 = vld [vmem:[#allocation4 + $0xb8] sm:$0xff]
  %v2286 = vld [vmem:[#allocation4 + $0xc0] sm:$0xff]
  %v2287 = vld [vmem:[#allocation4 + $0xc8] sm:$0xff]
  %v2288 = vld [vmem:[#allocation4 + $0xd0] sm:$0xff]
  %v2289 = vld [vmem:[#allocation4 + $0xd8] sm:$0xff]
  %v2290 = vld [vmem:[#allocation4 + $0xe0] sm:$0xff]
  %v2291 = vld [vmem:[#allocation4 + $0xe8] sm:$0xff]
  %v2292 = vld [vmem:[#allocation4 + $0xf0] sm:$0xff]
  %v2293 = vld [vmem:[#allocation4 + $0xf8] sm:$0xff]
  %v2294 = vld [vmem:[#allocation4 + $0x100] sm:$0xff]
  %v2295 = vld [vmem:[#allocation4 + $0x108] sm:$0xff]
  %v2296 = vld [vmem:[#allocation4 + $0x110] sm:$0xff]
  %v2297 = vld [vmem:[#allocation4 + $0x118] sm:$0xff]
  %v2298 = vld [vmem:[#allocation4 + $0x120] sm:$0xff]
  %v2299 = vld [vmem:[#allocation4 + $0x128] sm:$0xff]
  %v2300 = vld [vmem:[#allocation4 + $0x130] sm:$0xff]
  %v2301 = vld [vmem:[#allocation4 + $0x138] sm:$0xff]
  %v2302 = vld [vmem:[#allocation4 + $0x140] sm:$0xff]
  %v2303 = vld [vmem:[#allocation4 + $0x148] sm:$0xff]
  %v2304 = vld [vmem:[#allocation4 + $0x150] sm:$0xff]
  %v2305 = vld [vmem:[#allocation4 + $0x158] sm:$0xff]
  %v2306 = vld [vmem:[#allocation4 + $0x160] sm:$0xff]
  %v2307 = vld [vmem:[#allocation4 + $0x168] sm:$0xff]
  %v2308 = vld [vmem:[#allocation4 + $0x170] sm:$0xff]
  %v2309 = vld [vmem:[#allocation4 + $0x178] sm:$0xff]
  %v2310 = vld [vmem:[#allocation4 + $0x180] sm:$0xff]
  %v2311 = vld [vmem:[#allocation4 + $0x188] sm:$0xff]
  %v2312 = vld [vmem:[#allocation4 + $0x190] sm:$0xff]
  %v2313 = vld [vmem:[#allocation4 + $0x198] sm:$0xff]
  %v2314 = vld [vmem:[#allocation4 + $0x1a0] sm:$0xff]
  %v2315 = vld [vmem:[#allocation4 + $0x1a8] sm:$0xff]
  %v2316 = vld [vmem:[#allocation4 + $0x1b0] sm:$0xff]
  %v2317 = vld [vmem:[#allocation4 + $0x1b8] sm:$0xff]
  %v2318 = vld [vmem:[#allocation4 + $0x1c0] sm:$0xff]
  %v2319 = vld [vmem:[#allocation4 + $0x1c8] sm:$0xff]
  %v2320 = vld [vmem:[#allocation4 + $0x1d0] sm:$0xff]
  %v2321 = vld [vmem:[#allocation4 + $0x1d8] sm:$0xff]
  %v2322 = vld [vmem:[#allocation4 + $0x1e0] sm:$0xff]
  %v2323 = vld [vmem:[#allocation4 + $0x1e8] sm:$0xff]
  %v2324 = vld [vmem:[#allocation4 + $0x1f0] sm:$0xff]
  %v2325 = vld [vmem:[#allocation4 + $0x1f8] sm:$0xff]
  %v2326 = vld [vmem:[#allocation4 + $0x200] sm:$0xff]
  %v2327 = vld [vmem:[#allocation4 + $0x208] sm:$0xff]
  %v2328 = vld [vmem:[#allocation4 + $0x210] sm:$0xff]
  %v2329 = vld [vmem:[#allocation4 + $0x218] sm:$0xff]
  %v2330 = vld [vmem:[#allocation4 + $0x220] sm:$0xff]
  %v2331 = vld [vmem:[#allocation4 + $0x228] sm:$0xff]
  %v2332 = vld [vmem:[#allocation4 + $0x230] sm:$0xff]
  %v2333 = vld [vmem:[#allocation4 + $0x238] sm:$0xff]
  %v2334 = vld [vmem:[#allocation4 + $0x240] sm:$0xff]
  %v2335 = vld [vmem:[#allocation4 + $0x248] sm:$0xff]
  %v2336 = vld [vmem:[#allocation4 + $0x250] sm:$0xff]
  %v2337 = vld [vmem:[#allocation4 + $0x258] sm:$0xff]
  %v2338 = vld [vmem:[#allocation4 + $0x260] sm:$0xff]
  %v2339 = vld [vmem:[#allocation4 + $0x268] sm:$0xff]
  %v2340 = vld [vmem:[#allocation4 + $0x270] sm:$0xff]
  %v2341 = vld [vmem:[#allocation4 + $0x278] sm:$0xff]
  %v2342 = vld [vmem:[#allocation4 + $0x280] sm:$0xff]
  %v2343 = vld [vmem:[#allocation4 + $0x288] sm:$0xff]
  %v2344 = vld [vmem:[#allocation4 + $0x290] sm:$0xff]
  %v2345 = vld [vmem:[#allocation4 + $0x298] sm:$0xff]
  %v2346 = vld [vmem:[#allocation4 + $0x2a0] sm:$0xff]
  %v2347 = vld [vmem:[#allocation4 + $0x2a8] sm:$0xff]
  %v2348 = vld [vmem:[#allocation4 + $0x2b0] sm:$0xff]
  %v2349 = vld [vmem:[#allocation4 + $0x2b8] sm:$0xff]
  %v2350 = vld [vmem:[#allocation4 + $0x2c0] sm:$0xff]
  %v2351 = vld [vmem:[#allocation4 + $0x2c8] sm:$0xff]
  %v2352 = vld [vmem:[#allocation4 + $0x2d0] sm:$0xff]
  %v2353 = vld [vmem:[#allocation4 + $0x2d8] sm:$0xff]
  %v2354 = vld [vmem:[#allocation4 + $0x2e0] sm:$0xff]
  %v2355 = vld [vmem:[#allocation4 + $0x2e8] sm:$0xff]
  %v2356 = vld [vmem:[#allocation4 + $0x2f0] sm:$0xff]
  %v2357 = vld [vmem:[#allocation4 + $0x2f8] sm:$0xff]
  %v2358 = vld [vmem:[#allocation4 + $0x300] sm:$0xff]
  %v2359 = vld [vmem:[#allocation4 + $0x308] sm:$0xff]
  %v2360 = vld [vmem:[#allocation4 + $0x310] sm:$0xff]
  %v2361 = vld [vmem:[#allocation4 + $0x318] sm:$0xff]
  %v2362 = vld [vmem:[#allocation4 + $0x320] sm:$0xff]
  %v2363 = vld [vmem:[#allocation4 + $0x328] sm:$0xff]
  %v2364 = vld [vmem:[#allocation4 + $0x330] sm:$0xff]
  %v2365 = vld [vmem:[#allocation4 + $0x338] sm:$0xff]
  %v2366 = vld [vmem:[#allocation4 + $0x340] sm:$0xff]
  %v2367 = vld [vmem:[#allocation4 + $0x348] sm:$0xff]
  %v2368 = vld [vmem:[#allocation4 + $0x350] sm:$0xff]
  %v2369 = vld [vmem:[#allocation4 + $0x358] sm:$0xff]
  %v2370 = vld [vmem:[#allocation4 + $0x360] sm:$0xff]
  %v2371 = vld [vmem:[#allocation4 + $0x368] sm:$0xff]
  %v2372 = vld [vmem:[#allocation4 + $0x370] sm:$0xff]
  %v2373 = vld [vmem:[#allocation4 + $0x378] sm:$0xff]
  %v2374 = vld [vmem:[#allocation4 + $0x380] sm:$0xff]
  %v2375 = vld [vmem:[#allocation4 + $0x388] sm:$0xff]
  %v2376 = vld [vmem:[#allocation4 + $0x390] sm:$0xff]
  %v2377 = vld [vmem:[#allocation4 + $0x398] sm:$0xff]
  %v2378 = vld [vmem:[#allocation4 + $0x3a0] sm:$0xff]
  %v2379 = vld [vmem:[#allocation4 + $0x3a8] sm:$0xff]
  %v2380 = vld [vmem:[#allocation4 + $0x3b0] sm:$0xff]
  %v2381 = vld [vmem:[#allocation4 + $0x3b8] sm:$0xff]
  %v2382 = vld [vmem:[#allocation4 + $0x3c0] sm:$0xff]
  %v2383 = vld [vmem:[#allocation4 + $0x3c8] sm:$0xff]
  %v2384 = vld [vmem:[#allocation4 + $0x3d0] sm:$0xff]
  %v2385 = vld [vmem:[#allocation4 + $0x3d8] sm:$0xff]
  %v2386 = vld [vmem:[#allocation4 + $0x3e0] sm:$0xff]
  %v2387 = vld [vmem:[#allocation4 + $0x3e8] sm:$0xff]
  %v2388 = vld [vmem:[#allocation4 + $0x3f0] sm:$0xff]
  %v2389 = vld [vmem:[#allocation4 + $0x3f8] sm:$0xff]
  %v2390 = vld [vmem:[#allocation4 + $0x400] sm:$0xff]
  %v2391 = vld [vmem:[#allocation4 + $0x408] sm:$0xff]
  %v2392 = vld [vmem:[#allocation4 + $0x410] sm:$0xff]
  %v2393 = vld [vmem:[#allocation4 + $0x418] sm:$0xff]
  %v2394 = vld [vmem:[#allocation4 + $0x420] sm:$0xff]
  %v2395 = vld [vmem:[#allocation4 + $0x428] sm:$0xff]
  %v2396 = vld [vmem:[#allocation4 + $0x430] sm:$0xff]
  %v2397 = vld [vmem:[#allocation4 + $0x438] sm:$0xff]
  %v2398 = vld [vmem:[#allocation4 + $0x440] sm:$0xff]
  %v2399 = vld [vmem:[#allocation4 + $0x448] sm:$0xff]
  %v2400 = vld [vmem:[#allocation4 + $0x450] sm:$0xff]
  %v2401 = vld [vmem:[#allocation4 + $0x458] sm:$0xff]
  %v2402 = vld [vmem:[#allocation4 + $0x460] sm:$0xff]
  %v2403 = vld [vmem:[#allocation4 + $0x468] sm:$0xff]
  %v2404 = vld [vmem:[#allocation4 + $0x470] sm:$0xff]
  %v2405 = vld [vmem:[#allocation4 + $0x478] sm:$0xff]
  %v2406 = vld [vmem:[#allocation4 + $0x480] sm:$0xff]
  %v2407 = vld [vmem:[#allocation4 + $0x488] sm:$0xff]
  %v2408 = vld [vmem:[#allocation4 + $0x490] sm:$0xff]
  %v2409 = vld [vmem:[#allocation4 + $0x498] sm:$0xff]
  %v2410 = vld [vmem:[#allocation4 + $0x4a0] sm:$0xff]
  %v2411 = vld [vmem:[#allocation4 + $0x4a8] sm:$0xff]
  %v2412 = vld [vmem:[#allocation4 + $0x4b0] sm:$0xff]
  %v2413 = vld [vmem:[#allocation4 + $0x4b8] sm:$0xff]
  %v2414 = vld [vmem:[#allocation4 + $0x4c0] sm:$0xff]
  %v2415 = vld [vmem:[#allocation4 + $0x4c8] sm:$0xff]
  %v2416 = vld [vmem:[#allocation4 + $0x4d0] sm:$0xff]
  %v2417 = vld [vmem:[#allocation4 + $0x4d8] sm:$0xff]
  %v2418 = vld [vmem:[#allocation4 + $0x4e0] sm:$0xff]
  %v2419 = vld [vmem:[#allocation4 + $0x4e8] sm:$0xff]
  %v2420 = vld [vmem:[#allocation4 + $0x4f0] sm:$0xff]
  %v2421 = vld [vmem:[#allocation4 + $0x4f8] sm:$0xff]
  %v2422 = vld [vmem:[#allocation4 + $0x500] sm:$0xff]
  %v2423 = vld [vmem:[#allocation4 + $0x508] sm:$0xff]
  %v2424 = vld [vmem:[#allocation4 + $0x510] sm:$0xff]
  %v2425 = vld [vmem:[#allocation4 + $0x518] sm:$0xff]
  %v2426 = vld [vmem:[#allocation4 + $0x520] sm:$0xff]
  %v2427 = vld [vmem:[#allocation4 + $0x528] sm:$0xff]
  %v2428 = vld [vmem:[#allocation4 + $0x530] sm:$0xff]
  %v2429 = vld [vmem:[#allocation4 + $0x538] sm:$0xff]
  %v2430 = vld [vmem:[#allocation4 + $0x540] sm:$0xff]
  %v2431 = vld [vmem:[#allocation4 + $0x548] sm:$0xff]
  %v2432 = vld [vmem:[#allocation4 + $0x550] sm:$0xff]
  %v2433 = vld [vmem:[#allocation4 + $0x558] sm:$0xff]
  %v2434 = vld [vmem:[#allocation4 + $0x560] sm:$0xff]
  %v2435 = vld [vmem:[#allocation4 + $0x568] sm:$0xff]
  %v2436 = vld [vmem:[#allocation4 + $0x570] sm:$0xff]
  %v2437 = vld [vmem:[#allocation4 + $0x578] sm:$0xff]
  %v2438 = vld [vmem:[#allocation4 + $0x580] sm:$0xff]
  %v2439 = vld [vmem:[#allocation4 + $0x588] sm:$0xff]
  %v2440 = vld [vmem:[#allocation4 + $0x590] sm:$0xff]
  %v2441 = vld [vmem:[#allocation4 + $0x598] sm:$0xff]
  %v2442 = vld [vmem:[#allocation4 + $0x5a0] sm:$0xff]
  %v2443 = vld [vmem:[#allocation4 + $0x5a8] sm:$0xff]
  %v2444 = vld [vmem:[#allocation4 + $0x5b0] sm:$0xff]
  %v2445 = vld [vmem:[#allocation4 + $0x5b8] sm:$0xff]
  %v2446 = vld [vmem:[#allocation4 + $0x5c0] sm:$0xff]
  %v2447 = vld [vmem:[#allocation4 + $0x5c8] sm:$0xff]
  %v2448 = vld [vmem:[#allocation4 + $0x5d0] sm:$0xff]
  %v2449 = vld [vmem:[#allocation4 + $0x5d8] sm:$0xff]
  %v2450 = vld [vmem:[#allocation4 + $0x5e0] sm:$0xff]
  %v2451 = vld [vmem:[#allocation4 + $0x5e8] sm:$0xff]
  %v2452 = vld [vmem:[#allocation4 + $0x5f0] sm:$0xff]
  %v2453 = vld [vmem:[#allocation4 + $0x5f8] sm:$0xff]
  %v2454 = vld [vmem:[#allocation4 + $0x600] sm:$0xff]
  %v2455 = vld [vmem:[#allocation4 + $0x608] sm:$0xff]
  %v2456 = vld [vmem:[#allocation4 + $0x610] sm:$0xff]
  %v2457 = vld [vmem:[#allocation4 + $0x618] sm:$0xff]
  %v2458 = vld [vmem:[#allocation4 + $0x620] sm:$0xff]
  %v2459 = vld [vmem:[#allocation4 + $0x628] sm:$0xff]
  %v2460 = vld [vmem:[#allocation4 + $0x630] sm:$0xff]
  %v2461 = vld [vmem:[#allocation4 + $0x638] sm:$0xff]
  %v2462 = vld [vmem:[#allocation4 + $0x640] sm:$0xff]
  %v2463 = vld [vmem:[#allocation4 + $0x648] sm:$0xff]
  %v2464 = vld [vmem:[#allocation4 + $0x650] sm:$0xff]
  %v2465 = vld [vmem:[#allocation4 + $0x658] sm:$0xff]
  %v2466 = vld [vmem:[#allocation4 + $0x660] sm:$0xff]
  %v2467 = vld [vmem:[#allocation4 + $0x668] sm:$0xff]
  %v2468 = vld [vmem:[#allocation4 + $0x670] sm:$0xff]
  %v2469 = vld [vmem:[#allocation4 + $0x678] sm:$0xff]
  %v2470 = vld [vmem:[#allocation4 + $0x680] sm:$0xff]
  %v2471 = vld [vmem:[#allocation4 + $0x688] sm:$0xff]
  %v2472 = vld [vmem:[#allocation4 + $0x690] sm:$0xff]
  %v2473 = vld [vmem:[#allocation4 + $0x698] sm:$0xff]
  %v2474 = vld [vmem:[#allocation4 + $0x6a0] sm:$0xff]
  %v2475 = vld [vmem:[#allocation4 + $0x6a8] sm:$0xff]
  %v2476 = vld [vmem:[#allocation4 + $0x6b0] sm:$0xff]
  %v2477 = vld [vmem:[#allocation4 + $0x6b8] sm:$0xff]
  %v2478 = vld [vmem:[#allocation4 + $0x6c0] sm:$0xff]
  %v2479 = vld [vmem:[#allocation4 + $0x6c8] sm:$0xff]
  %v2480 = vld [vmem:[#allocation4 + $0x6d0] sm:$0xff]
  %v2481 = vld [vmem:[#allocation4 + $0x6d8] sm:$0xff]
  %v2482 = vld [vmem:[#allocation4 + $0x6e0] sm:$0xff]
  %v2483 = vld [vmem:[#allocation4 + $0x6e8] sm:$0xff]
  %v2484 = vld [vmem:[#allocation4 + $0x6f0] sm:$0xff]
  %v2485 = vld [vmem:[#allocation4 + $0x6f8] sm:$0xff]
  %v2486 = vld [vmem:[#allocation4 + $0x700] sm:$0xff]
  %v2487 = vld [vmem:[#allocation4 + $0x708] sm:$0xff]
  %v2488 = vld [vmem:[#allocation4 + $0x710] sm:$0xff]
  %v2489 = vld [vmem:[#allocation4 + $0x718] sm:$0xff]
  %v2490 = vld [vmem:[#allocation4 + $0x720] sm:$0xff]
  %v2491 = vld [vmem:[#allocation4 + $0x728] sm:$0xff]
  %v2492 = vld [vmem:[#allocation4 + $0x730] sm:$0xff]
  %v2493 = vld [vmem:[#allocation4 + $0x738] sm:$0xff]
  %v2494 = vld [vmem:[#allocation4 + $0x740] sm:$0xff]
  %v2495 = vld [vmem:[#allocation4 + $0x748] sm:$0xff]
  %v2496 = vld [vmem:[#allocation4 + $0x750] sm:$0xff]
  %v2497 = vld [vmem:[#allocation4 + $0x758] sm:$0xff]
  %v2498 = vld [vmem:[#allocation4 + $0x760] sm:$0xff]
  %v2499 = vld [vmem:[#allocation4 + $0x768] sm:$0xff]
  %v2500 = vld [vmem:[#allocation4 + $0x770] sm:$0xff]
  %v2501 = vld [vmem:[#allocation4 + $0x778] sm:$0xff]
  %v2502 = vld [vmem:[#allocation4 + $0x780] sm:$0xff]
  %v2503 = vld [vmem:[#allocation4 + $0x788] sm:$0xff]
  %v2504 = vld [vmem:[#allocation4 + $0x790] sm:$0xff]
  %v2505 = vld [vmem:[#allocation4 + $0x798] sm:$0xff]
  %v2506 = vld [vmem:[#allocation4 + $0x7a0] sm:$0xff]
  %v2507 = vld [vmem:[#allocation4 + $0x7a8] sm:$0xff]
  %v2508 = vld [vmem:[#allocation4 + $0x7b0] sm:$0xff]
  %v2509 = vld [vmem:[#allocation4 + $0x7b8] sm:$0xff]
  %v2510 = vld [vmem:[#allocation4 + $0x7c0] sm:$0xff]
  %v2511 = vld [vmem:[#allocation4 + $0x7c8] sm:$0xff]
  %v2512 = vld [vmem:[#allocation4 + $0x7d0] sm:$0xff]
  %v2513 = vld [vmem:[#allocation4 + $0x7d8] sm:$0xff]
  %v2514 = vld [vmem:[#allocation4 + $0x7e0] sm:$0xff]
  %v2515 = vld [vmem:[#allocation4 + $0x7e8] sm:$0xff]
  %v2516 = vld [vmem:[#allocation4 + $0x7f0] sm:$0xff]
  %v2517 = vld [vmem:[#allocation4 + $0x7f8] sm:$0xff]
  %v2518 = vld [vmem:[#allocation4 + $0x800] sm:$0xff]
  %v2519 = vld [vmem:[#allocation4 + $0x808] sm:$0xff]
  %v2520 = vld [vmem:[#allocation4 + $0x810] sm:$0xff]
  %v2521 = vld [vmem:[#allocation4 + $0x818] sm:$0xff]
  %v2522 = vld [vmem:[#allocation4 + $0x820] sm:$0xff]
  %v2523 = vld [vmem:[#allocation4 + $0x828] sm:$0xff]
  %v2524 = vld [vmem:[#allocation4 + $0x830] sm:$0xff]
  %v2525 = vld [vmem:[#allocation4 + $0x838] sm:$0xff]
  %v2526 = vld [vmem:[#allocation4 + $0x840] sm:$0xff]
  %v2527 = vld [vmem:[#allocation4 + $0x848] sm:$0xff]
  %v2528 = vld [vmem:[#allocation4 + $0x850] sm:$0xff]
  %v2529 = vld [vmem:[#allocation4 + $0x858] sm:$0xff]
  %v2530 = vld [vmem:[#allocation4 + $0x860] sm:$0xff]
  %v2531 = vld [vmem:[#allocation4 + $0x868] sm:$0xff]
  %v2532 = vld [vmem:[#allocation4 + $0x870] sm:$0xff]
  %v2533 = vld [vmem:[#allocation4 + $0x878] sm:$0xff]
  %v2534 = vld [vmem:[#allocation4 + $0x880] sm:$0xff]
  %v2535 = vld [vmem:[#allocation4 + $0x888] sm:$0xff]
  %v2536 = vld [vmem:[#allocation4 + $0x890] sm:$0xff]
  %v2537 = vld [vmem:[#allocation4 + $0x898] sm:$0xff]
  %v2538 = vld [vmem:[#allocation4 + $0x8a0] sm:$0xff]
  %v2539 = vld [vmem:[#allocation4 + $0x8a8] sm:$0xff]
  %v2540 = vld [vmem:[#allocation4 + $0x8b0] sm:$0xff]
  %v2541 = vld [vmem:[#allocation4 + $0x8b8] sm:$0xff]
  %v2542 = vld [vmem:[#allocation4 + $0x8c0] sm:$0xff]
  %v2543 = vld [vmem:[#allocation4 + $0x8c8] sm:$0xff]
  %v2544 = vld [vmem:[#allocation4 + $0x8d0] sm:$0xff]
  %v2545 = vld [vmem:[#allocation4 + $0x8d8] sm:$0xff]
  %v2546 = vld [vmem:[#allocation4 + $0x8e0] sm:$0xff]
  %v2547 = vld [vmem:[#allocation4 + $0x8e8] sm:$0xff]
  %v2548 = vld [vmem:[#allocation4 + $0x8f0] sm:$0xff]
  %v2549 = vld [vmem:[#allocation4 + $0x8f8] sm:$0xff]
  %v2550 = vld [vmem:[%s4] sm:$0xf]
  %v2551 = vld [vmem:[%s4 + $0x4] sm:$0xf]
  %v2552 = vld [vmem:[%s4 + $0x8] sm:$0xf]
  %v2553 = vld [vmem:[%s4 + $0xc] sm:$0xf]
  %v2554 = vld [vmem:[%s4 + $0x10] sm:$0xf]
  %v2555 = vld [vmem:[%s4 + $0x14] sm:$0xf]
  %v2556 = vld [vmem:[%s4 + $0x18] sm:$0xf]
  %v2557 = vld [vmem:[%s4 + $0x1c] sm:$0xf]
  %v2558 = vld [vmem:[%s4 + $0x20] sm:$0xf]
  %v2559 = vld [vmem:[%s4 + $0x24] sm:$0xf]
  %v2560 = vld [vmem:[%s4 + $0x28] sm:$0xf]
  %v2561 = vld [vmem:[%s4 + $0x2c] sm:$0xf]
  %v2562 = vld [vmem:[%s4 + $0x30] sm:$0xf]
  %v2563 = vld [vmem:[%s4 + $0x34] sm:$0xf]
  %v2564 = vld [vmem:[%s4 + $0x38] sm:$0xf]
  %v2565 = vld [vmem:[%s4 + $0x3c] sm:$0xf]
  %v2566 = vld [vmem:[%s4 + $0x40] sm:$0xf]
  %v2567 = vld [vmem:[%s4 + $0x44] sm:$0xf]
  %v2568 = vld [vmem:[%s4 + $0x48] sm:$0xf]
  %v2569 = vld [vmem:[%s4 + $0x4c] sm:$0xf]
  %v2570 = vld [vmem:[%s4 + $0x50] sm:$0xf]
  %v2571 = vld [vmem:[%s4 + $0x54] sm:$0xf]
  %v2572 = vld [vmem:[%s4 + $0x58] sm:$0xf]
  %v2573 = vld [vmem:[%s4 + $0x5c] sm:$0xf]
  %v2574 = vld [vmem:[%s4 + $0x60] sm:$0xf]
  %v2575 = vld [vmem:[%s4 + $0x64] sm:$0xf]
  %v2576 = vld [vmem:[%s4 + $0x68] sm:$0xf]
  %v2577 = vld [vmem:[%s4 + $0x6c] sm:$0xf]
  %v2578 = vld [vmem:[%s4 + $0x70] sm:$0xf]
  %v2579 = vld [vmem:[%s4 + $0x74] sm:$0xf]
  %v2580 = vld [vmem:[%s4 + $0x78] sm:$0xf]
  %v2581 = vld [vmem:[%s4 + $0x7c] sm:$0xf]
  %v2582 = vld [vmem:[%s4 + $0x80] sm:$0xf]
  %v2583 = vld [vmem:[%s4 + $0x84] sm:$0xf]
  %v2584 = vld [vmem:[%s4 + $0x88] sm:$0xf]
  %v2585 = vld [vmem:[%s4 + $0x8c] sm:$0xf]
  %v2586 = vld [vmem:[%s4 + $0x90] sm:$0xf]
  %v2587 = vld [vmem:[%s4 + $0x94] sm:$0xf]
  %v2588 = vld [vmem:[%s4 + $0x98] sm:$0xf]
  %v2589 = vld [vmem:[%s4 + $0x9c] sm:$0xf]
  %v2590 = vld [vmem:[%s4 + $0xa0] sm:$0xf]
  %v2591 = vld [vmem:[%s4 + $0xa4] sm:$0xf]
  %v2592 = vld [vmem:[%s4 + $0xa8] sm:$0xf]
  %v2593 = vld [vmem:[%s4 + $0xac] sm:$0xf]
  %v2594 = vld [vmem:[%s4 + $0xb0] sm:$0xf]
  %v2595 = vld [vmem:[%s4 + $0xb4] sm:$0xf]
  %v2596 = vld [vmem:[%s4 + $0xb8] sm:$0xf]
  %v2597 = vld [vmem:[%s4 + $0xbc] sm:$0xf]
  %v2598 = vld [vmem:[%s4 + $0xc0] sm:$0xf]
  %v2599 = vld [vmem:[%s4 + $0xc4] sm:$0xf]
  %v2600 = vld [vmem:[%s4 + $0xc8] sm:$0xf]
  %v2601 = vld [vmem:[%s4 + $0xcc] sm:$0xf]
  %v2602 = vld [vmem:[%s4 + $0xd0] sm:$0xf]
  %v2603 = vld [vmem:[%s4 + $0xd4] sm:$0xf]
  %v2604 = vld [vmem:[%s4 + $0xd8] sm:$0xf]
  %v2605 = vld [vmem:[%s4 + $0xdc] sm:$0xf]
  %v2606 = vld [vmem:[%s4 + $0xe0] sm:$0xf]
  %v2607 = vld [vmem:[%s4 + $0xe4] sm:$0xf]
  %v2608 = vld [vmem:[%s4 + $0xe8] sm:$0xf]
  %v2609 = vld [vmem:[%s4 + $0xec] sm:$0xf]
  %v2610 = vld [vmem:[%s4 + $0xf0] sm:$0xf]
  %v2611 = vld [vmem:[%s4 + $0xf4] sm:$0xf]
  %v2612 = vld [vmem:[%s4 + $0xf8] sm:$0xf]
  %v2613 = vld [vmem:[%s4 + $0xfc] sm:$0xf]
  %v2614 = vld [vmem:[%s4 + $0x100] sm:$0xf]
  %v2615 = vld [vmem:[%s4 + $0x104] sm:$0xf]
  %v2616 = vld [vmem:[%s4 + $0x108] sm:$0xf]
  %v2617 = vld [vmem:[%s4 + $0x10c] sm:$0xf]
  %v2618 = vld [vmem:[%s4 + $0x110] sm:$0xf]
  %v2619 = vld [vmem:[%s4 + $0x114] sm:$0xf]
  %v2620 = vld [vmem:[%s4 + $0x118] sm:$0xf]
  %v2621 = vld [vmem:[%s4 + $0x11c] sm:$0xf]
  %v2622 = vld [vmem:[%s4 + $0x120] sm:$0xf]
  %v2623 = vld [vmem:[%s4 + $0x124] sm:$0xf]
  %v2624 = vld [vmem:[%s4 + $0x128] sm:$0xf]
  %v2625 = vld [vmem:[%s4 + $0x12c] sm:$0xf]
  %v2626 = vld [vmem:[%s4 + $0x130] sm:$0xf]
  %v2627 = vld [vmem:[%s4 + $0x134] sm:$0xf]
  %v2628 = vld [vmem:[%s4 + $0x138] sm:$0xf]
  %v2629 = vld [vmem:[%s4 + $0x13c] sm:$0xf]
  %v2630 = vld [vmem:[%s4 + $0x140] sm:$0xf]
  %v2631 = vld [vmem:[%s4 + $0x144] sm:$0xf]
  %v2632 = vld [vmem:[%s4 + $0x148] sm:$0xf]
  %v2633 = vld [vmem:[%s4 + $0x14c] sm:$0xf]
  %v2634 = vld [vmem:[%s4 + $0x150] sm:$0xf]
  %v2635 = vld [vmem:[%s4 + $0x154] sm:$0xf]
  %v2636 = vld [vmem:[%s4 + $0x158] sm:$0xf]
  %v2637 = vld [vmem:[%s4 + $0x15c] sm:$0xf]
  %v2638 = vld [vmem:[%s4 + $0x160] sm:$0xf]
  %v2639 = vld [vmem:[%s4 + $0x164] sm:$0xf]
  %v2640 = vld [vmem:[%s4 + $0x168] sm:$0xf]
  %v2641 = vld [vmem:[%s4 + $0x16c] sm:$0xf]
  %v2642 = vld [vmem:[%s4 + $0x170] sm:$0xf]
  %v2643 = vld [vmem:[%s4 + $0x174] sm:$0xf]
  %v2644 = vld [vmem:[%s4 + $0x178] sm:$0xf]
  %v2645 = vld [vmem:[%s4 + $0x17c] sm:$0xf]
  %v2646 = vld [vmem:[%s4 + $0x180] sm:$0xf]
  %v2647 = vld [vmem:[%s4 + $0x184] sm:$0xf]
  %v2648 = vld [vmem:[%s4 + $0x188] sm:$0xf]
  %v2649 = vld [vmem:[%s4 + $0x18c] sm:$0xf]
  %v2650 = vld [vmem:[%s4 + $0x190] sm:$0xf]
  %v2651 = vld [vmem:[%s4 + $0x194] sm:$0xf]
  %v2652 = vld [vmem:[%s4 + $0x198] sm:$0xf]
  %v2653 = vld [vmem:[%s4 + $0x19c] sm:$0xf]
  %v2654 = vld [vmem:[%s4 + $0x1a0] sm:$0xf]
  %v2655 = vld [vmem:[%s4 + $0x1a4] sm:$0xf]
  %v2656 = vld [vmem:[%s4 + $0x1a8] sm:$0xf]
  %v2657 = vld [vmem:[%s4 + $0x1ac] sm:$0xf]
  %v2658 = vld [vmem:[%s4 + $0x1b0] sm:$0xf]
  %v2659 = vld [vmem:[%s4 + $0x1b4] sm:$0xf]
  %v2660 = vld [vmem:[%s4 + $0x1b8] sm:$0xf]
  %v2661 = vld [vmem:[%s4 + $0x1bc] sm:$0xf]
  %v2662 = vld [vmem:[%s4 + $0x1c0] sm:$0xf]
  %v2663 = vld [vmem:[%s4 + $0x1c4] sm:$0xf]
  %v2664 = vld [vmem:[%s4 + $0x1c8] sm:$0xf]
  %v2665 = vld [vmem:[%s4 + $0x1cc] sm:$0xf]
  %v2666 = vld [vmem:[%s4 + $0x1d0] sm:$0xf]
  %v2667 = vld [vmem:[%s4 + $0x1d4] sm:$0xf]
  %v2668 = vld [vmem:[%s4 + $0x1d8] sm:$0xf]
  %v2669 = vld [vmem:[%s4 + $0x1dc] sm:$0xf]
  %v2670 = vld [vmem:[%s4 + $0x1e0] sm:$0xf]
  %v2671 = vld [vmem:[%s4 + $0x1e4] sm:$0xf]
  %v2672 = vld [vmem:[%s4 + $0x1e8] sm:$0xf]
  %v2673 = vld [vmem:[%s4 + $0x1ec] sm:$0xf]
  %v2674 = vld [vmem:[%s4 + $0x1f0] sm:$0xf]
  %v2675 = vld [vmem:[%s4 + $0x1f4] sm:$0xf]
  %v2676 = vld [vmem:[%s4 + $0x1f8] sm:$0xf]
  %v2677 = vld [vmem:[%s4 + $0x1fc] sm:$0xf]
  %v2678 = vld [vmem:[%s4 + $0x200] sm:$0xf]
  %v2679 = vld [vmem:[%s4 + $0x204] sm:$0xf]
  %v2680 = vld [vmem:[%s4 + $0x208] sm:$0xf]
  %v2681 = vld [vmem:[%s4 + $0x20c] sm:$0xf]
  %v2682 = vld [vmem:[%s4 + $0x210] sm:$0xf]
  %v2683 = vld [vmem:[%s4 + $0x214] sm:$0xf]
  %v2684 = vld [vmem:[%s4 + $0x218] sm:$0xf]
  %v2685 = vld [vmem:[%s4 + $0x21c] sm:$0xf]
  %v2686 = vld [vmem:[%s4 + $0x220] sm:$0xf]
  %v2687 = vld [vmem:[%s4 + $0x224] sm:$0xf]
  %v2688 = vld [vmem:[%s4 + $0x228] sm:$0xf]
  %v2689 = vld [vmem:[%s4 + $0x22c] sm:$0xf]
  %v2690 = vld [vmem:[%s4 + $0x230] sm:$0xf]
  %v2691 = vld [vmem:[%s4 + $0x234] sm:$0xf]
  %v2692 = vld [vmem:[%s4 + $0x238] sm:$0xf]
  %v2693 = vld [vmem:[%s4 + $0x23c] sm:$0xf]
  %v2838 = vunpack.c.l.b16 %v2550
  %v2839 = vunpack.c.l.b16 %v2551
  %v2840 = vunpack.c.l.b16 %v2552
  %v2841 = vunpack.c.l.b16 %v2553
  %v2842 = vunpack.c.l.b16 %v2554
  %v2843 = vunpack.c.l.b16 %v2555
  %v2844 = vunpack.c.l.b16 %v2556
  %v2845 = vunpack.c.l.b16 %v2557
  %v2846 = vunpack.c.l.b16 %v2558
  %v2847 = vunpack.c.l.b16 %v2559
  %v2848 = vunpack.c.l.b16 %v2560
  %v2849 = vunpack.c.l.b16 %v2561
  %v2850 = vunpack.c.l.b16 %v2562
  %v2851 = vunpack.c.l.b16 %v2563
  %v2852 = vunpack.c.l.b16 %v2564
  %v2853 = vunpack.c.l.b16 %v2565
  %v2854 = vunpack.c.l.b16 %v2566
  %v2855 = vunpack.c.l.b16 %v2567
  %v2856 = vunpack.c.l.b16 %v2568
  %v2857 = vunpack.c.l.b16 %v2569
  %v2858 = vunpack.c.l.b16 %v2570
  %v2859 = vunpack.c.l.b16 %v2571
  %v2860 = vunpack.c.l.b16 %v2572
  %v2861 = vunpack.c.l.b16 %v2573
  %v2862 = vunpack.c.l.b16 %v2574
  %v2863 = vunpack.c.l.b16 %v2575
  %v2864 = vunpack.c.l.b16 %v2576
  %v2865 = vunpack.c.l.b16 %v2577
  %v2866 = vunpack.c.l.b16 %v2578
  %v2867 = vunpack.c.l.b16 %v2579
  %v2868 = vunpack.c.l.b16 %v2580
  %v2869 = vunpack.c.l.b16 %v2581
  %v2870 = vunpack.c.l.b16 %v2582
  %v2871 = vunpack.c.l.b16 %v2583
  %v2872 = vunpack.c.l.b16 %v2584
  %v2873 = vunpack.c.l.b16 %v2585
  %v2874 = vunpack.c.l.b16 %v2586
  %v2875 = vunpack.c.l.b16 %v2587
  %v2876 = vunpack.c.l.b16 %v2588
  %v2877 = vunpack.c.l.b16 %v2589
  %v2878 = vunpack.c.l.b16 %v2590
  %v2879 = vunpack.c.l.b16 %v2591
  %v2880 = vunpack.c.l.b16 %v2592
  %v2881 = vunpack.c.l.b16 %v2593
  %v2882 = vunpack.c.l.b16 %v2594
  %v2883 = vunpack.c.l.b16 %v2595
  %v2884 = vunpack.c.l.b16 %v2596
  %v2885 = vunpack.c.l.b16 %v2597
  %v2886 = vunpack.c.l.b16 %v2598
  %v2887 = vunpack.c.l.b16 %v2599
  %v2888 = vunpack.c.l.b16 %v2600
  %v2889 = vunpack.c.l.b16 %v2601
  %v2890 = vunpack.c.l.b16 %v2602
  %v2891 = vunpack.c.l.b16 %v2603
  %v2892 = vunpack.c.l.b16 %v2604
  %v2893 = vunpack.c.l.b16 %v2605
  %v2894 = vunpack.c.l.b16 %v2606
  %v2895 = vunpack.c.l.b16 %v2607
  %v2896 = vunpack.c.l.b16 %v2608
  %v2897 = vunpack.c.l.b16 %v2609
  %v2898 = vunpack.c.l.b16 %v2610
  %v2899 = vunpack.c.l.b16 %v2611
  %v2900 = vunpack.c.l.b16 %v2612
  %v2901 = vunpack.c.l.b16 %v2613
  %v2902 = vunpack.c.l.b16 %v2614
  %v2903 = vunpack.c.l.b16 %v2615
  %v2904 = vunpack.c.l.b16 %v2616
  %v2905 = vunpack.c.l.b16 %v2617
  %v2906 = vunpack.c.l.b16 %v2618
  %v2907 = vunpack.c.l.b16 %v2619
  %v2908 = vunpack.c.l.b16 %v2620
  %v2909 = vunpack.c.l.b16 %v2621
  %v2910 = vunpack.c.l.b16 %v2622
  %v2911 = vunpack.c.l.b16 %v2623
  %v2912 = vunpack.c.l.b16 %v2624
  %v2913 = vunpack.c.l.b16 %v2625
  %v2914 = vunpack.c.l.b16 %v2626
  %v2915 = vunpack.c.l.b16 %v2627
  %v2916 = vunpack.c.l.b16 %v2628
  %v2917 = vunpack.c.l.b16 %v2629
  %v2918 = vunpack.c.l.b16 %v2630
  %v2919 = vunpack.c.l.b16 %v2631
  %v2920 = vunpack.c.l.b16 %v2632
  %v2921 = vunpack.c.l.b16 %v2633
  %v2922 = vunpack.c.l.b16 %v2634
  %v2923 = vunpack.c.l.b16 %v2635
  %v2924 = vunpack.c.l.b16 %v2636
  %v2925 = vunpack.c.l.b16 %v2637
  %v2926 = vunpack.c.l.b16 %v2638
  %v2927 = vunpack.c.l.b16 %v2639
  %v2928 = vunpack.c.l.b16 %v2640
  %v2929 = vunpack.c.l.b16 %v2641
  %v2930 = vunpack.c.l.b16 %v2642
  %v2931 = vunpack.c.l.b16 %v2643
  %v2932 = vunpack.c.l.b16 %v2644
  %v2933 = vunpack.c.l.b16 %v2645
  %v2934 = vunpack.c.l.b16 %v2646
  %v2935 = vunpack.c.l.b16 %v2647
  %v2936 = vunpack.c.l.b16 %v2648
  %v2937 = vunpack.c.l.b16 %v2649
  %v2938 = vunpack.c.l.b16 %v2650
  %v2939 = vunpack.c.l.b16 %v2651
  %v2940 = vunpack.c.l.b16 %v2652
  %v2941 = vunpack.c.l.b16 %v2653
  %v2942 = vunpack.c.l.b16 %v2654
  %v2943 = vunpack.c.l.b16 %v2655
  %v2944 = vunpack.c.l.b16 %v2656
  %v2945 = vunpack.c.l.b16 %v2657
  %v2946 = vunpack.c.l.b16 %v2658
  %v2947 = vunpack.c.l.b16 %v2659
  %v2948 = vunpack.c.l.b16 %v2660
  %v2949 = vunpack.c.l.b16 %v2661
  %v2950 = vunpack.c.l.b16 %v2662
  %v2951 = vunpack.c.l.b16 %v2663
  %v2952 = vunpack.c.l.b16 %v2664
  %v2953 = vunpack.c.l.b16 %v2665
  %v2954 = vunpack.c.l.b16 %v2666
  %v2955 = vunpack.c.l.b16 %v2667
  %v2956 = vunpack.c.l.b16 %v2668
  %v2957 = vunpack.c.l.b16 %v2669
  %v2958 = vunpack.c.l.b16 %v2670
  %v2959 = vunpack.c.l.b16 %v2671
  %v2960 = vunpack.c.l.b16 %v2672
  %v2961 = vunpack.c.l.b16 %v2673
  %v2962 = vunpack.c.l.b16 %v2674
  %v2963 = vunpack.c.l.b16 %v2675
  %v2964 = vunpack.c.l.b16 %v2676
  %v2965 = vunpack.c.l.b16 %v2677
  %v2966 = vunpack.c.l.b16 %v2678
  %v2967 = vunpack.c.l.b16 %v2679
  %v2968 = vunpack.c.l.b16 %v2680
  %v2969 = vunpack.c.l.b16 %v2681
  %v2970 = vunpack.c.l.b16 %v2682
  %v2971 = vunpack.c.l.b16 %v2683
  %v2972 = vunpack.c.l.b16 %v2684
  %v2973 = vunpack.c.l.b16 %v2685
  %v2974 = vunpack.c.l.b16 %v2686
  %v2975 = vunpack.c.l.b16 %v2687
  %v2976 = vunpack.c.l.b16 %v2688
  %v2977 = vunpack.c.l.b16 %v2689
  %v2978 = vunpack.c.l.b16 %v2690
  %v2979 = vunpack.c.l.b16 %v2691
  %v2980 = vunpack.c.l.b16 %v2692
  %v2981 = vunpack.c.l.b16 %v2693
  %v2982 = vpack.c.b16 %v2839, %v2838
  %v2983 = vpack.c.b16 %v2841, %v2840
  %v2984 = vpack.c.b16 %v2843, %v2842
  %v2985 = vpack.c.b16 %v2845, %v2844
  %v2986 = vpack.c.b16 %v2847, %v2846
  %v2987 = vpack.c.b16 %v2849, %v2848
  %v2988 = vpack.c.b16 %v2851, %v2850
  %v2989 = vpack.c.b16 %v2853, %v2852
  %v2990 = vpack.c.b16 %v2855, %v2854
  %v2991 = vpack.c.b16 %v2857, %v2856
  %v2992 = vpack.c.b16 %v2859, %v2858
  %v2993 = vpack.c.b16 %v2861, %v2860
  %v2994 = vpack.c.b16 %v2863, %v2862
  %v2995 = vpack.c.b16 %v2865, %v2864
  %v2996 = vpack.c.b16 %v2867, %v2866
  %v2997 = vpack.c.b16 %v2869, %v2868
  %v2998 = vpack.c.b16 %v2871, %v2870
  %v2999 = vpack.c.b16 %v2873, %v2872
  %v3000 = vpack.c.b16 %v2875, %v2874
  %v3001 = vpack.c.b16 %v2877, %v2876
  %v3002 = vpack.c.b16 %v2879, %v2878
  %v3003 = vpack.c.b16 %v2881, %v2880
  %v3004 = vpack.c.b16 %v2883, %v2882
  %v3005 = vpack.c.b16 %v2885, %v2884
  %v3006 = vpack.c.b16 %v2887, %v2886
  %v3007 = vpack.c.b16 %v2889, %v2888
  %v3008 = vpack.c.b16 %v2891, %v2890
  %v3009 = vpack.c.b16 %v2893, %v2892
  %v3010 = vpack.c.b16 %v2895, %v2894
  %v3011 = vpack.c.b16 %v2897, %v2896
  %v3012 = vpack.c.b16 %v2899, %v2898
  %v3013 = vpack.c.b16 %v2901, %v2900
  %v3014 = vpack.c.b16 %v2903, %v2902
  %v3015 = vpack.c.b16 %v2905, %v2904
  %v3016 = vpack.c.b16 %v2907, %v2906
  %v3017 = vpack.c.b16 %v2909, %v2908
  %v3018 = vpack.c.b16 %v2911, %v2910
  %v3019 = vpack.c.b16 %v2913, %v2912
  %v3020 = vpack.c.b16 %v2915, %v2914
  %v3021 = vpack.c.b16 %v2917, %v2916
  %v3022 = vpack.c.b16 %v2919, %v2918
  %v3023 = vpack.c.b16 %v2921, %v2920
  %v3024 = vpack.c.b16 %v2923, %v2922
  %v3025 = vpack.c.b16 %v2925, %v2924
  %v3026 = vpack.c.b16 %v2927, %v2926
  %v3027 = vpack.c.b16 %v2929, %v2928
  %v3028 = vpack.c.b16 %v2931, %v2930
  %v3029 = vpack.c.b16 %v2933, %v2932
  %v3030 = vpack.c.b16 %v2935, %v2934
  %v3031 = vpack.c.b16 %v2937, %v2936
  %v3032 = vpack.c.b16 %v2939, %v2938
  %v3033 = vpack.c.b16 %v2941, %v2940
  %v3034 = vpack.c.b16 %v2943, %v2942
  %v3035 = vpack.c.b16 %v2945, %v2944
  %v3036 = vpack.c.b16 %v2947, %v2946
  %v3037 = vpack.c.b16 %v2949, %v2948
  %v3038 = vpack.c.b16 %v2951, %v2950
  %v3039 = vpack.c.b16 %v2953, %v2952
  %v3040 = vpack.c.b16 %v2955, %v2954
  %v3041 = vpack.c.b16 %v2957, %v2956
  %v3042 = vpack.c.b16 %v2959, %v2958
  %v3043 = vpack.c.b16 %v2961, %v2960
  %v3044 = vpack.c.b16 %v2963, %v2962
  %v3045 = vpack.c.b16 %v2965, %v2964
  %v3046 = vpack.c.b16 %v2967, %v2966
  %v3047 = vpack.c.b16 %v2969, %v2968
  %v3048 = vpack.c.b16 %v2971, %v2970
  %v3049 = vpack.c.b16 %v2973, %v2972
  %v3050 = vpack.c.b16 %v2975, %v2974
  %v3051 = vpack.c.b16 %v2977, %v2976
  %v3052 = vpack.c.b16 %v2979, %v2978
  %v3053 = vpack.c.b16 %v2981, %v2980
  %3126 = vmatprep.subr.bf16.mxu0 0
  %3127 = vmatpush1.bf16.msra.mxu0 %v2982
  %3128 = vmatprep.subr.bf16.mxu0 0
  %3129 = vmatpush1.bf16.msra.mxu0 %v2983
  %3130 = vmatprep.subr.bf16.mxu0 0
  %3131 = vmatpush1.bf16.msra.mxu0 %v2984
  %3132 = vmatprep.subr.bf16.mxu0 0
  %3133 = vmatpush1.bf16.msra.mxu0 %v2985
  %3134 = vmatprep.subr.bf16.mxu0 0
  %3135 = vmatpush1.bf16.msra.mxu0 %v2986
  %3136 = vmatprep.subr.bf16.mxu0 0
  %3137 = vmatpush1.bf16.msra.mxu0 %v2987
  %3138 = vmatprep.subr.bf16.mxu0 0
  %3139 = vmatpush1.bf16.msra.mxu0 %v2988
  %3140 = vmatprep.subr.bf16.mxu0 0
  %3141 = vmatpush1.bf16.msra.mxu0 %v2989
  %3142 = vmatprep.subr.bf16.mxu0 0
  %3143 = vmatpush1.bf16.msra.mxu0 %v2990
  %3144 = vmatprep.subr.bf16.mxu0 0
  %3145 = vmatpush1.bf16.msra.mxu0 %v2991
  %3146 = vmatprep.subr.bf16.mxu0 0
  %3147 = vmatpush1.bf16.msra.mxu0 %v2992
  %3148 = vmatprep.subr.bf16.mxu0 0
  %3149 = vmatpush1.bf16.msra.mxu0 %v2993
  %3150 = vmatprep.subr.bf16.mxu0 0
  %3151 = vmatpush1.bf16.msra.mxu0 %v2994
  %3152 = vmatprep.subr.bf16.mxu0 0
  %3153 = vmatpush1.bf16.msra.mxu0 %v2995
  %3154 = vmatprep.subr.bf16.mxu0 0
  %3155 = vmatpush1.bf16.msra.mxu0 %v2996
  %3156 = vmatprep.subr.bf16.mxu0 0
  %3157 = vmatpush1.bf16.msra.mxu0 %v2997
  %3158 = vmatprep.mubr.bf16.mxu0 %v2263
  %3159 = vmatmul.mubr.bf16.gmra.mrb[0].mxu0 %v2262
  %v3160 = vpop.f32.mrb[0].mxu0
  %v3161 = vadd.f32 0.0, %v3160
  %v3162 = vpop.f32.mrb[0].mxu0
  %v3163 = vpop.f32.mrb[0].mxu0
  %v3164 = vadd.f32 0.0, %v3163
  %v3165 = vpop.f32.mrb[0].mxu0
  %3166 = vmatprep.mubr.bf16.mxu0 %v2272
  %3167 = vmatmul.mubr.bf16.gmra.mrb[0].mxu0 %v2271
  %v3168 = vpop.f32.mrb[0].mxu0
  %v3169 = vadd.f32 0.0, %v3168
  %v3170 = vpop.f32.mrb[0].mxu0
  %v3171 = vpop.f32.mrb[0].mxu0
  %v3172 = vadd.f32 0.0, %v3171
  %v3173 = vpop.f32.mrb[0].mxu0
  %3174 = vmatprep.mubr.bf16.mxu0 %v2281
  %3175 = vmatmul.mubr.bf16.gmra.mrb[0].mxu0 %v2280
  %v3176 = vpop.f32.mrb[0].mxu0
  %v3177 = vadd.f32 0.0, %v3176
  %v3178 = vpop.f32.mrb[0].mxu0
  %v3179 = vpop.f32.mrb[0].mxu0
  %v3180 = vadd.f32 0.0, %v3179
  %v3181 = vpop.f32.mrb[0].mxu0
  %3182 = vmatprep.mubr.bf16.mxu0 %v2290
  %3183 = vmatmul.mubr.bf16.gmra.mrb[0].mxu0 %v2289
  %v3184 = vpop.f32.mrb[0].mxu0
  %v3185 = vadd.f32 0.0, %v3184
  %v3186 = vpop.f32.mrb[0].mxu0
  %v3187 = vpop.f32.mrb[0].mxu0
  %v3188 = vadd.f32 0.0, %v3187
  %v3189 = vpop.f32.mrb[0].mxu0
  %3190 = vmatprep.mubr.bf16.mxu0 %v2299
  %3191 = vmatmul.mubr.bf16.gmra.mrb[0].mxu0 %v2298
  %v3192 = vpop.f32.mrb[0].mxu0
  %v3193 = vadd.f32 0.0, %v3192
  %v3194 = vpop.f32.mrb[0].mxu0
  %v3195 = vpop.f32.mrb[0].mxu0
  %v3196 = vadd.f32 0.0, %v3195
  %v3197 = vpop.f32.mrb[0].mxu0
  %3198 = vmatprep.mubr.bf16.mxu0 %v2308
  %3199 = vmatmul.mubr.bf16.gmra.mrb[0].mxu0 %v2307
  %v3200 = vpop.f32.mrb[0].mxu0
  %v3201 = vadd.f32 0.0, %v3200
  %v3202 = vpop.f32.mrb[0].mxu0
  %v3203 = vpop.f32.mrb[0].mxu0
  %v3204 = vadd.f32 0.0, %v3203
  %v3205 = vpop.f32.mrb[0].mxu0
  %3206 = vmatprep.mubr.bf16.mxu0 %v2317
  %3207 = vmatmul.mubr.bf16.gmra.mrb[0].mxu0 %v2316
  %v3208 = vpop.f32.mrb[0].mxu0
  %v3209 = vadd.f32 0.0, %v3208
  %v3210 = vpop.f32.mrb[0].mxu0
  %v3211 = vpop.f32.mrb[0].mxu0
  %v3212 = vadd.f32 0.0, %v3211
  %v3213 = vpop.f32.mrb[0].mxu0
  %3214 = vmatprep.mubr.bf16.mxu0 %v2326
  %3215 = vmatmul.mubr.bf16.gmra.mrb[0].mxu0 %v2325
  %v3216 = vpop.f32.mrb[0].mxu0
  %v3217 = vadd.f32 0.0, %v3216
  %v3218 = vpop.f32.mrb[0].mxu0
  %v3219 = vpop.f32.mrb[0].mxu0
  %v3220 = vadd.f32 0.0, %v3219
  %v3221 = vpop.f32.mrb[0].mxu0
  %3222 = vmatprep.mubr.bf16.mxu0 %v2335
  %3223 = vmatmul.mubr.bf16.gmra.mrb[0].mxu0 %v2334
  %v3224 = vpop.f32.mrb[0].mxu0
  %v3225 = vadd.f32 0.0, %v3224
  %v3226 = vpop.f32.mrb[0].mxu0
  %v3227 = vpop.f32.mrb[0].mxu0
  %v3228 = vadd.f32 0.0, %v3227
  %v3229 = vpop.f32.mrb[0].mxu0
  %3230 = vmatprep.mubr.bf16.mxu0 %v2344
  %3231 = vmatmul.mubr.bf16.gmra.mrb[0].mxu0 %v2343
  %v3232 = vpop.f32.mrb[0].mxu0
  %v3233 = vadd.f32 0.0, %v3232
  %v3234 = vpop.f32.mrb[0].mxu0
  %v3235 = vpop.f32.mrb[0].mxu0
  %v3236 = vadd.f32 0.0, %v3235
  %v3237 = vpop.f32.mrb[0].mxu0
  %3238 = vmatprep.mubr.bf16.mxu0 %v2353
  %3239 = vmatmul.mubr.bf16.gmra.mrb[0].mxu0 %v2352
  %v3240 = vpop.f32.mrb[0].mxu0
  %v3241 = vadd.f32 0.0, %v3240
  %v3242 = vpop.f32.mrb[0].mxu0
  %v3243 = vpop.f32.mrb[0].mxu0
  %v3244 = vadd.f32 0.0, %v3243
  %v3245 = vpop.f32.mrb[0].mxu0
  %3246 = vmatprep.mubr.bf16.mxu0 %v2362
  %3247 = vmatmul.mubr.bf16.gmra.mrb[0].mxu0 %v2361
  %v3248 = vpop.f32.mrb[0].mxu0
  %v3249 = vadd.f32 0.0, %v3248
  %v3250 = vpop.f32.mrb[0].mxu0
  %v3251 = vpop.f32.mrb[0].mxu0
  %v3252 = vadd.f32 0.0, %v3251
  %v3253 = vpop.f32.mrb[0].mxu0
  %3254 = vmatprep.mubr.bf16.mxu0 %v2371
  %3255 = vmatmul.mubr.bf16.gmra.mrb[0].mxu0 %v2370
  %v3256 = vpop.f32.mrb[0].mxu0
  %v3257 = vadd.f32 0.0, %v3256
  %v3258 = vpop.f32.mrb[0].mxu0
  %v3259 = vpop.f32.mrb[0].mxu0
  %v3260 = vadd.f32 0.0, %v3259
  %v3261 = vpop.f32.mrb[0].mxu0
  %3262 = vmatprep.mubr.bf16.mxu0 %v2380
  %3263 = vmatmul.mubr.bf16.gmra.mrb[0].mxu0 %v2379
  %v3264 = vpop.f32.mrb[0].mxu0
  %v3265 = vadd.f32 0.0, %v3264
  %v3266 = vpop.f32.mrb[0].mxu0
  %v3267 = vpop.f32.mrb[0].mxu0
  %v3268 = vadd.f32 0.0, %v3267
  %v3269 = vpop.f32.mrb[0].mxu0
  %3270 = vmatprep.mubr.bf16.mxu0 %v2389
  %3271 = vmatmul.mubr.bf16.gmra.mrb[0].mxu0 %v2388
  %v3272 = vpop.f32.mrb[0].mxu0
  %v3273 = vadd.f32 0.0, %v3272
  %v3274 = vpop.f32.mrb[0].mxu0
  %v3275 = vpop.f32.mrb[0].mxu0
  %v3276 = vadd.f32 0.0, %v3275
  %v3277 = vpop.f32.mrb[0].mxu0
  %3278 = vmatprep.mubr.bf16.mxu0 %v2398
  %3279 = vmatmul.mubr.bf16.gmra.mrb[0].mxu0 %v2397
  %v3280 = vpop.f32.mrb[0].mxu0
  %v3281 = vadd.f32 0.0, %v3280
  %v3282 = vpop.f32.mrb[0].mxu0
  %v3283 = vpop.f32.mrb[0].mxu0
  %v3284 = vadd.f32 0.0, %v3283
  %v3285 = vpop.f32.mrb[0].mxu0
  %3286 = vmatprep.mubr.bf16.mxu0 %v2407
  %3287 = vmatmul.mubr.bf16.gmra.mrb[0].mxu0 %v2406
  %v3288 = vpop.f32.mrb[0].mxu0
  %v3289 = vadd.f32 0.0, %v3288
  %v3290 = vpop.f32.mrb[0].mxu0
  %v3291 = vpop.f32.mrb[0].mxu0
  %v3292 = vadd.f32 0.0, %v3291
  %v3293 = vpop.f32.mrb[0].mxu0
  %3294 = vmatprep.mubr.bf16.mxu0 %v2416
  %3295 = vmatmul.mubr.bf16.gmra.mrb[0].mxu0 %v2415
  %v3296 = vpop.f32.mrb[0].mxu0
  %v3297 = vadd.f32 0.0, %v3296
  %v3298 = vpop.f32.mrb[0].mxu0
  %v3299 = vpop.f32.mrb[0].mxu0
  %v3300 = vadd.f32 0.0, %v3299
  %v3301 = vpop.f32.mrb[0].mxu0
  %3302 = vmatprep.mubr.bf16.mxu0 %v2425
  %3303 = vmatmul.mubr.bf16.gmra.mrb[0].mxu0 %v2424
  %v3304 = vpop.f32.mrb[0].mxu0
  %v3305 = vadd.f32 0.0, %v3304
  %v3306 = vpop.f32.mrb[0].mxu0
  %v3307 = vpop.f32.mrb[0].mxu0
  %v3308 = vadd.f32 0.0, %v3307
  %v3309 = vpop.f32.mrb[0].mxu0
  %3310 = vmatprep.mubr.bf16.mxu0 %v2434
  %3311 = vmatmul.mubr.bf16.gmra.mrb[0].mxu0 %v2433
  %v3312 = vpop.f32.mrb[0].mxu0
  %v3313 = vadd.f32 0.0, %v3312
  %v3314 = vpop.f32.mrb[0].mxu0
  %v3315 = vpop.f32.mrb[0].mxu0
  %v3316 = vadd.f32 0.0, %v3315
  %v3317 = vpop.f32.mrb[0].mxu0
  %3318 = vmatprep.mubr.bf16.mxu0 %v2443
  %3319 = vmatmul.mubr.bf16.gmra.mrb[0].mxu0 %v2442
  %v3320 = vpop.f32.mrb[0].mxu0
  %v3321 = vadd.f32 0.0, %v3320
  %v3322 = vpop.f32.mrb[0].mxu0
  %v3323 = vpop.f32.mrb[0].mxu0
  %v3324 = vadd.f32 0.0, %v3323
  %v3325 = vpop.f32.mrb[0].mxu0
  %3326 = vmatprep.mubr.bf16.mxu0 %v2452
  %3327 = vmatmul.mubr.bf16.gmra.mrb[0].mxu0 %v2451
  %v3328 = vpop.f32.mrb[0].mxu0
  %v3329 = vadd.f32 0.0, %v3328
  %v3330 = vpop.f32.mrb[0].mxu0
  %v3331 = vpop.f32.mrb[0].mxu0
  %v3332 = vadd.f32 0.0, %v3331
  %v3333 = vpop.f32.mrb[0].mxu0
  %3334 = vmatprep.mubr.bf16.mxu0 %v2461
  %3335 = vmatmul.mubr.bf16.gmra.mrb[0].mxu0 %v2460
  %v3336 = vpop.f32.mrb[0].mxu0
  %v3337 = vadd.f32 0.0, %v3336
  %v3338 = vpop.f32.mrb[0].mxu0
  %v3339 = vpop.f32.mrb[0].mxu0
  %v3340 = vadd.f32 0.0, %v3339
  %v3341 = vpop.f32.mrb[0].mxu0
  %3342 = vmatprep.mubr.bf16.mxu0 %v2470
  %3343 = vmatmul.mubr.bf16.gmra.mrb[0].mxu0 %v2469
  %v3344 = vpop.f32.mrb[0].mxu0
  %v3345 = vadd.f32 0.0, %v3344
  %v3346 = vpop.f32.mrb[0].mxu0
  %v3347 = vpop.f32.mrb[0].mxu0
  %v3348 = vadd.f32 0.0, %v3347
  %v3349 = vpop.f32.mrb[0].mxu0
  %3350 = vmatprep.mubr.bf16.mxu0 %v2479
  %3351 = vmatmul.mubr.bf16.gmra.mrb[0].mxu0 %v2478
  %v3352 = vpop.f32.mrb[0].mxu0
  %v3353 = vadd.f32 0.0, %v3352
  %v3354 = vpop.f32.mrb[0].mxu0
  %v3355 = vpop.f32.mrb[0].mxu0
  %v3356 = vadd.f32 0.0, %v3355
  %v3357 = vpop.f32.mrb[0].mxu0
  %3358 = vmatprep.mubr.bf16.mxu0 %v2488
  %3359 = vmatmul.mubr.bf16.gmra.mrb[0].mxu0 %v2487
  %v3360 = vpop.f32.mrb[0].mxu0
  %v3361 = vadd.f32 0.0, %v3360
  %v3362 = vpop.f32.mrb[0].mxu0
  %v3363 = vpop.f32.mrb[0].mxu0
  %v3364 = vadd.f32 0.0, %v3363
  %v3365 = vpop.f32.mrb[0].mxu0
  %3366 = vmatprep.mubr.bf16.mxu0 %v2497
  %3367 = vmatmul.mubr.bf16.gmra.mrb[0].mxu0 %v2496
  %v3368 = vpop.f32.mrb[0].mxu0
  %v3369 = vadd.f32 0.0, %v3368
  %v3370 = vpop.f32.mrb[0].mxu0
  %v3371 = vpop.f32.mrb[0].mxu0
  %v3372 = vadd.f32 0.0, %v3371
  %v3373 = vpop.f32.mrb[0].mxu0
  %3374 = vmatprep.mubr.bf16.mxu0 %v2506
  %3375 = vmatmul.mubr.bf16.gmra.mrb[0].mxu0 %v2505
  %v3376 = vpop.f32.mrb[0].mxu0
  %v3377 = vadd.f32 0.0, %v3376
  %v3378 = vpop.f32.mrb[0].mxu0
  %v3379 = vpop.f32.mrb[0].mxu0
  %v3380 = vadd.f32 0.0, %v3379
  %v3381 = vpop.f32.mrb[0].mxu0
  %3382 = vmatprep.mubr.bf16.mxu0 %v2515
  %3383 = vmatmul.mubr.bf16.gmra.mrb[0].mxu0 %v2514
  %v3384 = vpop.f32.mrb[0].mxu0
  %v3385 = vadd.f32 0.0, %v3384
  %v3386 = vpop.f32.mrb[0].mxu0
  %v3387 = vpop.f32.mrb[0].mxu0
  %v3388 = vadd.f32 0.0, %v3387
  %v3389 = vpop.f32.mrb[0].mxu0
  %3390 = vmatprep.mubr.bf16.mxu0 %v2524
  %3391 = vmatmul.mubr.bf16.gmra.mrb[0].mxu0 %v2523
  %v3392 = vpop.f32.mrb[0].mxu0
  %v3393 = vadd.f32 0.0, %v3392
  %v3394 = vpop.f32.mrb[0].mxu0
  %v3395 = vpop.f32.mrb[0].mxu0
  %v3396 = vadd.f32 0.0, %v3395
  %v3397 = vpop.f32.mrb[0].mxu0
  %3398 = vmatprep.mubr.bf16.mxu0 %v2533
  %3399 = vmatmul.mubr.bf16.gmra.mrb[0].mxu0 %v2532
  %v3400 = vpop.f32.mrb[0].mxu0
  %v3401 = vadd.f32 0.0, %v3400
  %v3402 = vpop.f32.mrb[0].mxu0
  %v3403 = vpop.f32.mrb[0].mxu0
  %v3404 = vadd.f32 0.0, %v3403
  %v3405 = vpop.f32.mrb[0].mxu0
  %3406 = vmatprep.mubr.bf16.mxu0 %v2542
  %3407 = vmatmul.mubr.bf16.gmra.mrb[0].mxu0 %v2541
  %v3408 = vpop.f32.mrb[0].mxu0
  %v3409 = vadd.f32 0.0, %v3408
  %v3410 = vpop.f32.mrb[0].mxu0
  %v3411 = vpop.f32.mrb[0].mxu0
  %v3412 = vadd.f32 0.0, %v3411
  %v3413 = vpop.f32.mrb[0].mxu0
  %3414 = vdwg.mxu0
  %3415 = vmatprep.subr.bf16.mxu0 0
  %3416 = vmatpush1.bf16.msra.mxu0 %v2998
  %3417 = vmatprep.subr.bf16.mxu0 0
  %3418 = vmatpush1.bf16.msra.mxu0 %v2999
  %3419 = vmatprep.subr.bf16.mxu0 0
  %3420 = vmatpush1.bf16.msra.mxu0 %v3000
  %3421 = vmatprep.subr.bf16.mxu0 0
  %3422 = vmatpush1.bf16.msra.mxu0 %v3001
  %3423 = vmatprep.subr.bf16.mxu0 0
  %3424 = vmatpush1.bf16.msra.mxu0 %v3002
  %3425 = vmatprep.subr.bf16.mxu0 0
  %3426 = vmatpush1.bf16.msra.mxu0 %v3003
  %3427 = vmatprep.subr.bf16.mxu0 0
  %3428 = vmatpush1.bf16.msra.mxu0 %v3004
  %3429 = vmatprep.subr.bf16.mxu0 0
  %3430 = vmatpush1.bf16.msra.mxu0 %v3005
  %3431 = vmatprep.subr.bf16.mxu0 0
  %3432 = vmatpush1.bf16.msra.mxu0 %v3006
  %3433 = vmatprep.subr.bf16.mxu0 0
  %3434 = vmatpush1.bf16.msra.mxu0 %v3007
  %3435 = vmatprep.subr.bf16.mxu0 0
  %3436 = vmatpush1.bf16.msra.mxu0 %v3008
  %3437 = vmatprep.subr.bf16.mxu0 0
  %3438 = vmatpush1.bf16.msra.mxu0 %v3009
  %3439 = vmatprep.subr.bf16.mxu0 0
  %3440 = vmatpush1.bf16.msra.mxu0 %v3010
  %3441 = vmatprep.subr.bf16.mxu0 0
  %3442 = vmatpush1.bf16.msra.mxu0 %v3011
  %3443 = vmatprep.subr.bf16.mxu0 0
  %3444 = vmatpush1.bf16.msra.mxu0 %v3012
  %3445 = vmatprep.subr.bf16.mxu0 0
  %3446 = vmatpush1.bf16.msra.mxu0 %v3013
  %3447 = vmatprep.mubr.bf16.mxu0 %v2265
  %3448 = vmatmul.mubr.bf16.gmra.mrb[0].mxu0 %v2264
  %v3449 = vpop.f32.mrb[0].mxu0
  %v3450 = vadd.f32 %v3161, %v3449
  %v3451 = vpop.f32.mrb[0].mxu0
  %v3452 = vpop.f32.mrb[0].mxu0
  %v3453 = vadd.f32 %v3164, %v3452
  %v3454 = vpop.f32.mrb[0].mxu0
  %3455 = vmatprep.mubr.bf16.mxu0 %v2274
  %3456 = vmatmul.mubr.bf16.gmra.mrb[0].mxu0 %v2273
  %v3457 = vpop.f32.mrb[0].mxu0
  %v3458 = vadd.f32 %v3169, %v3457
  %v3459 = vpop.f32.mrb[0].mxu0
  %v3460 = vpop.f32.mrb[0].mxu0
  %v3461 = vadd.f32 %v3172, %v3460
  %v3462 = vpop.f32.mrb[0].mxu0
  %3463 = vmatprep.mubr.bf16.mxu0 %v2283
  %3464 = vmatmul.mubr.bf16.gmra.mrb[0].mxu0 %v2282
  %v3465 = vpop.f32.mrb[0].mxu0
  %v3466 = vadd.f32 %v3177, %v3465
  %v3467 = vpop.f32.mrb[0].mxu0
  %v3468 = vpop.f32.mrb[0].mxu0
  %v3469 = vadd.f32 %v3180, %v3468
  %v3470 = vpop.f32.mrb[0].mxu0
  %3471 = vmatprep.mubr.bf16.mxu0 %v2292
  %3472 = vmatmul.mubr.bf16.gmra.mrb[0].mxu0 %v2291
  %v3473 = vpop.f32.mrb[0].mxu0
  %v3474 = vadd.f32 %v3185, %v3473
  %v3475 = vpop.f32.mrb[0].mxu0
  %v3476 = vpop.f32.mrb[0].mxu0
  %v3477 = vadd.f32 %v3188, %v3476
  %v3478 = vpop.f32.mrb[0].mxu0
  %3479 = vmatprep.mubr.bf16.mxu0 %v2301
  %3480 = vmatmul.mubr.bf16.gmra.mrb[0].mxu0 %v2300
  %v3481 = vpop.f32.mrb[0].mxu0
  %v3482 = vadd.f32 %v3193, %v3481
  %v3483 = vpop.f32.mrb[0].mxu0
  %v3484 = vpop.f32.mrb[0].mxu0
  %v3485 = vadd.f32 %v3196, %v3484
  %v3486 = vpop.f32.mrb[0].mxu0
  %3487 = vmatprep.mubr.bf16.mxu0 %v2310
  %3488 = vmatmul.mubr.bf16.gmra.mrb[0].mxu0 %v2309
  %v3489 = vpop.f32.mrb[0].mxu0
  %v3490 = vadd.f32 %v3201, %v3489
  %v3491 = vpop.f32.mrb[0].mxu0
  %v3492 = vpop.f32.mrb[0].mxu0
  %v3493 = vadd.f32 %v3204, %v3492
  %v3494 = vpop.f32.mrb[0].mxu0
  %3495 = vmatprep.mubr.bf16.mxu0 %v2319
  %3496 = vmatmul.mubr.bf16.gmra.mrb[0].mxu0 %v2318
  %v3497 = vpop.f32.mrb[0].mxu0
  %v3498 = vadd.f32 %v3209, %v3497
  %v3499 = vpop.f32.mrb[0].mxu0
  %v3500 = vpop.f32.mrb[0].mxu0
  %v3501 = vadd.f32 %v3212, %v3500
  %v3502 = vpop.f32.mrb[0].mxu0
  %3503 = vmatprep.mubr.bf16.mxu0 %v2328
  %3504 = vmatmul.mubr.bf16.gmra.mrb[0].mxu0 %v2327
  %v3505 = vpop.f32.mrb[0].mxu0
  %v3506 = vadd.f32 %v3217, %v3505
  %v3507 = vpop.f32.mrb[0].mxu0
  %v3508 = vpop.f32.mrb[0].mxu0
  %v3509 = vadd.f32 %v3220, %v3508
  %v3510 = vpop.f32.mrb[0].mxu0
  %3511 = vmatprep.mubr.bf16.mxu0 %v2337
  %3512 = vmatmul.mubr.bf16.gmra.mrb[0].mxu0 %v2336
  %v3513 = vpop.f32.mrb[0].mxu0
  %v3514 = vadd.f32 %v3225, %v3513
  %v3515 = vpop.f32.mrb[0].mxu0
  %v3516 = vpop.f32.mrb[0].mxu0
  %v3517 = vadd.f32 %v3228, %v3516
  %v3518 = vpop.f32.mrb[0].mxu0
  %3519 = vmatprep.mubr.bf16.mxu0 %v2346
  %3520 = vmatmul.mubr.bf16.gmra.mrb[0].mxu0 %v2345
  %v3521 = vpop.f32.mrb[0].mxu0
  %v3522 = vadd.f32 %v3233, %v3521
  %v3523 = vpop.f32.mrb[0].mxu0
  %v3524 = vpop.f32.mrb[0].mxu0
  %v3525 = vadd.f32 %v3236, %v3524
  %v3526 = vpop.f32.mrb[0].mxu0
  %3527 = vmatprep.mubr.bf16.mxu0 %v2355
  %3528 = vmatmul.mubr.bf16.gmra.mrb[0].mxu0 %v2354
  %v3529 = vpop.f32.mrb[0].mxu0
  %v3530 = vadd.f32 %v3241, %v3529
  %v3531 = vpop.f32.mrb[0].mxu0
  %v3532 = vpop.f32.mrb[0].mxu0
  %v3533 = vadd.f32 %v3244, %v3532
  %v3534 = vpop.f32.mrb[0].mxu0
  %3535 = vmatprep.mubr.bf16.mxu0 %v2364
  %3536 = vmatmul.mubr.bf16.gmra.mrb[0].mxu0 %v2363
  %v3537 = vpop.f32.mrb[0].mxu0
  %v3538 = vadd.f32 %v3249, %v3537
  %v3539 = vpop.f32.mrb[0].mxu0
  %v3540 = vpop.f32.mrb[0].mxu0
  %v3541 = vadd.f32 %v3252, %v3540
  %v3542 = vpop.f32.mrb[0].mxu0
  %3543 = vmatprep.mubr.bf16.mxu0 %v2373
  %3544 = vmatmul.mubr.bf16.gmra.mrb[0].mxu0 %v2372
  %v3545 = vpop.f32.mrb[0].mxu0
  %v3546 = vadd.f32 %v3257, %v3545
  %v3547 = vpop.f32.mrb[0].mxu0
  %v3548 = vpop.f32.mrb[0].mxu0
  %v3549 = vadd.f32 %v3260, %v3548
  %v3550 = vpop.f32.mrb[0].mxu0
  %3551 = vmatprep.mubr.bf16.mxu0 %v2382
  %3552 = vmatmul.mubr.bf16.gmra.mrb[0].mxu0 %v2381
  %v3553 = vpop.f32.mrb[0].mxu0
  %v3554 = vadd.f32 %v3265, %v3553
  %v3555 = vpop.f32.mrb[0].mxu0
  %v3556 = vpop.f32.mrb[0].mxu0
  %v3557 = vadd.f32 %v3268, %v3556
  %v3558 = vpop.f32.mrb[0].mxu0
  %3559 = vmatprep.mubr.bf16.mxu0 %v2391
  %3560 = vmatmul.mubr.bf16.gmra.mrb[0].mxu0 %v2390
  %v3561 = vpop.f32.mrb[0].mxu0
  %v3562 = vadd.f32 %v3273, %v3561
  %v3563 = vpop.f32.mrb[0].mxu0
  %v3564 = vpop.f32.mrb[0].mxu0
  %v3565 = vadd.f32 %v3276, %v3564
  %v3566 = vpop.f32.mrb[0].mxu0
  %3567 = vmatprep.mubr.bf16.mxu0 %v2400
  %3568 = vmatmul.mubr.bf16.gmra.mrb[0].mxu0 %v2399
  %v3569 = vpop.f32.mrb[0].mxu0
  %v3570 = vadd.f32 %v3281, %v3569
  %v3571 = vpop.f32.mrb[0].mxu0
  %v3572 = vpop.f32.mrb[0].mxu0
  %v3573 = vadd.f32 %v3284, %v3572
  %v3574 = vpop.f32.mrb[0].mxu0
  %3575 = vmatprep.mubr.bf16.mxu0 %v2409
  %3576 = vmatmul.mubr.bf16.gmra.mrb[0].mxu0 %v2408
  %v3577 = vpop.f32.mrb[0].mxu0
  %v3578 = vadd.f32 %v3289, %v3577
  %v3579 = vpop.f32.mrb[0].mxu0
  %v3580 = vpop.f32.mrb[0].mxu0
  %v3581 = vadd.f32 %v3292, %v3580
  %v3582 = vpop.f32.mrb[0].mxu0
  %3583 = vmatprep.mubr.bf16.mxu0 %v2418
  %3584 = vmatmul.mubr.bf16.gmra.mrb[0].mxu0 %v2417
  %v3585 = vpop.f32.mrb[0].mxu0
  %v3586 = vadd.f32 %v3297, %v3585
  %v3587 = vpop.f32.mrb[0].mxu0
  %v3588 = vpop.f32.mrb[0].mxu0
  %v3589 = vadd.f32 %v3300, %v3588
  %v3590 = vpop.f32.mrb[0].mxu0
  %3591 = vmatprep.mubr.bf16.mxu0 %v2427
  %3592 = vmatmul.mubr.bf16.gmra.mrb[0].mxu0 %v2426
  %v3593 = vpop.f32.mrb[0].mxu0
  %v3594 = vadd.f32 %v3305, %v3593
  %v3595 = vpop.f32.mrb[0].mxu0
  %v3596 = vpop.f32.mrb[0].mxu0
  %v3597 = vadd.f32 %v3308, %v3596
  %v3598 = vpop.f32.mrb[0].mxu0
  %3599 = vmatprep.mubr.bf16.mxu0 %v2436
  %3600 = vmatmul.mubr.bf16.gmra.mrb[0].mxu0 %v2435
  %v3601 = vpop.f32.mrb[0].mxu0
  %v3602 = vadd.f32 %v3313, %v3601
  %v3603 = vpop.f32.mrb[0].mxu0
  %v3604 = vpop.f32.mrb[0].mxu0
  %v3605 = vadd.f32 %v3316, %v3604
  %v3606 = vpop.f32.mrb[0].mxu0
  %3607 = vmatprep.mubr.bf16.mxu0 %v2445
  %3608 = vmatmul.mubr.bf16.gmra.mrb[0].mxu0 %v2444
  %v3609 = vpop.f32.mrb[0].mxu0
  %v3610 = vadd.f32 %v3321, %v3609
  %v3611 = vpop.f32.mrb[0].mxu0
  %v3612 = vpop.f32.mrb[0].mxu0
  %v3613 = vadd.f32 %v3324, %v3612
  %v3614 = vpop.f32.mrb[0].mxu0
  %3615 = vmatprep.mubr.bf16.mxu0 %v2454
  %3616 = vmatmul.mubr.bf16.gmra.mrb[0].mxu0 %v2453
  %v3617 = vpop.f32.mrb[0].mxu0
  %v3618 = vadd.f32 %v3329, %v3617
  %v3619 = vpop.f32.mrb[0].mxu0
  %v3620 = vpop.f32.mrb[0].mxu0
  %v3621 = vadd.f32 %v3332, %v3620
  %v3622 = vpop.f32.mrb[0].mxu0
  %3623 = vmatprep.mubr.bf16.mxu0 %v2463
  %3624 = vmatmul.mubr.bf16.gmra.mrb[0].mxu0 %v2462
  %v3625 = vpop.f32.mrb[0].mxu0
  %v3626 = vadd.f32 %v3337, %v3625
  %v3627 = vpop.f32.mrb[0].mxu0
  %v3628 = vpop.f32.mrb[0].mxu0
  %v3629 = vadd.f32 %v3340, %v3628
  %v3630 = vpop.f32.mrb[0].mxu0
  %3631 = vmatprep.mubr.bf16.mxu0 %v2472
  %3632 = vmatmul.mubr.bf16.gmra.mrb[0].mxu0 %v2471
  %v3633 = vpop.f32.mrb[0].mxu0
  %v3634 = vadd.f32 %v3345, %v3633
  %v3635 = vpop.f32.mrb[0].mxu0
  %v3636 = vpop.f32.mrb[0].mxu0
  %v3637 = vadd.f32 %v3348, %v3636
  %v3638 = vpop.f32.mrb[0].mxu0
  %3639 = vmatprep.mubr.bf16.mxu0 %v2481
  %3640 = vmatmul.mubr.bf16.gmra.mrb[0].mxu0 %v2480
  %v3641 = vpop.f32.mrb[0].mxu0
  %v3642 = vadd.f32 %v3353, %v3641
  %v3643 = vpop.f32.mrb[0].mxu0
  %v3644 = vpop.f32.mrb[0].mxu0
  %v3645 = vadd.f32 %v3356, %v3644
  %v3646 = vpop.f32.mrb[0].mxu0
  %3647 = vmatprep.mubr.bf16.mxu0 %v2490
  %3648 = vmatmul.mubr.bf16.gmra.mrb[0].mxu0 %v2489
  %v3649 = vpop.f32.mrb[0].mxu0
  %v3650 = vadd.f32 %v3361, %v3649
  %v3651 = vpop.f32.mrb[0].mxu0
  %v3652 = vpop.f32.mrb[0].mxu0
  %v3653 = vadd.f32 %v3364, %v3652
  %v3654 = vpop.f32.mrb[0].mxu0
  %3655 = vmatprep.mubr.bf16.mxu0 %v2499
  %3656 = vmatmul.mubr.bf16.gmra.mrb[0].mxu0 %v2498
  %v3657 = vpop.f32.mrb[0].mxu0
  %v3658 = vadd.f32 %v3369, %v3657
  %v3659 = vpop.f32.mrb[0].mxu0
  %v3660 = vpop.f32.mrb[0].mxu0
  %v3661 = vadd.f32 %v3372, %v3660
  %v3662 = vpop.f32.mrb[0].mxu0
  %3663 = vmatprep.mubr.bf16.mxu0 %v2508
  %3664 = vmatmul.mubr.bf16.gmra.mrb[0].mxu0 %v2507
  %v3665 = vpop.f32.mrb[0].mxu0
  %v3666 = vadd.f32 %v3377, %v3665
  %v3667 = vpop.f32.mrb[0].mxu0
  %v3668 = vpop.f32.mrb[0].mxu0
  %v3669 = vadd.f32 %v3380, %v3668
  %v3670 = vpop.f32.mrb[0].mxu0
  %3671 = vmatprep.mubr.bf16.mxu0 %v2517
  %3672 = vmatmul.mubr.bf16.gmra.mrb[0].mxu0 %v2516
  %v3673 = vpop.f32.mrb[0].mxu0
  %v3674 = vadd.f32 %v3385, %v3673
  %v3675 = vpop.f32.mrb[0].mxu0
  %v3676 = vpop.f32.mrb[0].mxu0
  %v3677 = vadd.f32 %v3388, %v3676
  %v3678 = vpop.f32.mrb[0].mxu0
  %3679 = vmatprep.mubr.bf16.mxu0 %v2526
  %3680 = vmatmul.mubr.bf16.gmra.mrb[0].mxu0 %v2525
  %v3681 = vpop.f32.mrb[0].mxu0
  %v3682 = vadd.f32 %v3393, %v3681
  %v3683 = vpop.f32.mrb[0].mxu0
  %v3684 = vpop.f32.mrb[0].mxu0
  %v3685 = vadd.f32 %v3396, %v3684
  %v3686 = vpop.f32.mrb[0].mxu0
  %3687 = vmatprep.mubr.bf16.mxu0 %v2535
  %3688 = vmatmul.mubr.bf16.gmra.mrb[0].mxu0 %v2534
  %v3689 = vpop.f32.mrb[0].mxu0
  %v3690 = vadd.f32 %v3401, %v3689
  %v3691 = vpop.f32.mrb[0].mxu0
  %v3692 = vpop.f32.mrb[0].mxu0
  %v3693 = vadd.f32 %v3404, %v3692
  %v3694 = vpop.f32.mrb[0].mxu0
  %3695 = vmatprep.mubr.bf16.mxu0 %v2544
  %3696 = vmatmul.mubr.bf16.gmra.mrb[0].mxu0 %v2543
  %v3697 = vpop.f32.mrb[0].mxu0
  %v3698 = vadd.f32 %v3409, %v3697
  %v3699 = vpop.f32.mrb[0].mxu0
  %v3700 = vpop.f32.mrb[0].mxu0
  %v3701 = vadd.f32 %v3412, %v3700
  %v3702 = vpop.f32.mrb[0].mxu0
  %3703 = vdwg.mxu0
  %3704 = vmatprep.subr.bf16.mxu0 0
  %3705 = vmatpush1.bf16.msra.mxu0 %v3014
  %3706 = vmatprep.subr.bf16.mxu0 0
  %3707 = vmatpush1.bf16.msra.mxu0 %v3015
  %3708 = vmatprep.subr.bf16.mxu0 0
  %3709 = vmatpush1.bf16.msra.mxu0 %v3016
  %3710 = vmatprep.subr.bf16.mxu0 0
  %3711 = vmatpush1.bf16.msra.mxu0 %v3017
  %3712 = vmatprep.subr.bf16.mxu0 0
  %3713 = vmatpush1.bf16.msra.mxu0 %v3018
  %3714 = vmatprep.subr.bf16.mxu0 0
  %3715 = vmatpush1.bf16.msra.mxu0 %v3019
  %3716 = vmatprep.subr.bf16.mxu0 0
  %3717 = vmatpush1.bf16.msra.mxu0 %v3020
  %3718 = vmatprep.subr.bf16.mxu0 0
  %3719 = vmatpush1.bf16.msra.mxu0 %v3021
  %3720 = vmatprep.subr.bf16.mxu0 0
  %3721 = vmatpush1.bf16.msra.mxu0 %v3022
  %3722 = vmatprep.subr.bf16.mxu0 0
  %3723 = vmatpush1.bf16.msra.mxu0 %v3023
  %3724 = vmatprep.subr.bf16.mxu0 0
  %3725 = vmatpush1.bf16.msra.mxu0 %v3024
  %3726 = vmatprep.subr.bf16.mxu0 0
  %3727 = vmatpush1.bf16.msra.mxu0 %v3025
  %3728 = vmatprep.subr.bf16.mxu0 0
  %3729 = vmatpush1.bf16.msra.mxu0 %v3026
  %3730 = vmatprep.subr.bf16.mxu0 0
  %3731 = vmatpush1.bf16.msra.mxu0 %v3027
  %3732 = vmatprep.subr.bf16.mxu0 0
  %3733 = vmatpush1.bf16.msra.mxu0 %v3028
  %3734 = vmatprep.subr.bf16.mxu0 0
  %3735 = vmatpush1.bf16.msra.mxu0 %v3029
  %3736 = vmatprep.mubr.bf16.mxu0 %v2267
  %3737 = vmatmul.mubr.bf16.gmra.mrb[0].mxu0 %v2266
  %v3738 = vpop.f32.mrb[0].mxu0
  %v3739 = vadd.f32 %v3450, %v3738
  %v3740 = vpop.f32.mrb[0].mxu0
  %v3741 = vpop.f32.mrb[0].mxu0
  %v3742 = vadd.f32 %v3453, %v3741
  %v3743 = vpop.f32.mrb[0].mxu0
  %3744 = vmatprep.mubr.bf16.mxu0 %v2276
  %3745 = vmatmul.mubr.bf16.gmra.mrb[0].mxu0 %v2275
  %v3746 = vpop.f32.mrb[0].mxu0
  %v3747 = vadd.f32 %v3458, %v3746
  %v3748 = vpop.f32.mrb[0].mxu0
  %v3749 = vpop.f32.mrb[0].mxu0
  %v3750 = vadd.f32 %v3461, %v3749
  %v3751 = vpop.f32.mrb[0].mxu0
  %3752 = vmatprep.mubr.bf16.mxu0 %v2285
  %3753 = vmatmul.mubr.bf16.gmra.mrb[0].mxu0 %v2284
  %v3754 = vpop.f32.mrb[0].mxu0
  %v3755 = vadd.f32 %v3466, %v3754
  %v3756 = vpop.f32.mrb[0].mxu0
  %v3757 = vpop.f32.mrb[0].mxu0
  %v3758 = vadd.f32 %v3469, %v3757
  %v3759 = vpop.f32.mrb[0].mxu0
  %3760 = vmatprep.mubr.bf16.mxu0 %v2294
  %3761 = vmatmul.mubr.bf16.gmra.mrb[0].mxu0 %v2293
  %v3762 = vpop.f32.mrb[0].mxu0
  %v3763 = vadd.f32 %v3474, %v3762
  %v3764 = vpop.f32.mrb[0].mxu0
  %v3765 = vpop.f32.mrb[0].mxu0
  %v3766 = vadd.f32 %v3477, %v3765
  %v3767 = vpop.f32.mrb[0].mxu0
  %3768 = vmatprep.mubr.bf16.mxu0 %v2303
  %3769 = vmatmul.mubr.bf16.gmra.mrb[0].mxu0 %v2302
  %v3770 = vpop.f32.mrb[0].mxu0
  %v3771 = vadd.f32 %v3482, %v3770
  %v3772 = vpop.f32.mrb[0].mxu0
  %v3773 = vpop.f32.mrb[0].mxu0
  %v3774 = vadd.f32 %v3485, %v3773
  %v3775 = vpop.f32.mrb[0].mxu0
  %3776 = vmatprep.mubr.bf16.mxu0 %v2312
  %3777 = vmatmul.mubr.bf16.gmra.mrb[0].mxu0 %v2311
  %v3778 = vpop.f32.mrb[0].mxu0
  %v3779 = vadd.f32 %v3490, %v3778
  %v3780 = vpop.f32.mrb[0].mxu0
  %v3781 = vpop.f32.mrb[0].mxu0
  %v3782 = vadd.f32 %v3493, %v3781
  %v3783 = vpop.f32.mrb[0].mxu0
  %3784 = vmatprep.mubr.bf16.mxu0 %v2321
  %3785 = vmatmul.mubr.bf16.gmra.mrb[0].mxu0 %v2320
  %v3786 = vpop.f32.mrb[0].mxu0
  %v3787 = vadd.f32 %v3498, %v3786
  %v3788 = vpop.f32.mrb[0].mxu0
  %v3789 = vpop.f32.mrb[0].mxu0
  %v3790 = vadd.f32 %v3501, %v3789
  %v3791 = vpop.f32.mrb[0].mxu0
  %3792 = vmatprep.mubr.bf16.mxu0 %v2330
  %3793 = vmatmul.mubr.bf16.gmra.mrb[0].mxu0 %v2329
  %v3794 = vpop.f32.mrb[0].mxu0
  %v3795 = vadd.f32 %v3506, %v3794
  %v3796 = vpop.f32.mrb[0].mxu0
  %v3797 = vpop.f32.mrb[0].mxu0
  %v3798 = vadd.f32 %v3509, %v3797
  %v3799 = vpop.f32.mrb[0].mxu0
  %3800 = vmatprep.mubr.bf16.mxu0 %v2339
  %3801 = vmatmul.mubr.bf16.gmra.mrb[0].mxu0 %v2338
  %v3802 = vpop.f32.mrb[0].mxu0
  %v3803 = vadd.f32 %v3514, %v3802
  %v3804 = vpop.f32.mrb[0].mxu0
  %v3805 = vpop.f32.mrb[0].mxu0
  %v3806 = vadd.f32 %v3517, %v3805
  %v3807 = vpop.f32.mrb[0].mxu0
  %3808 = vmatprep.mubr.bf16.mxu0 %v2348
  %3809 = vmatmul.mubr.bf16.gmra.mrb[0].mxu0 %v2347
  %v3810 = vpop.f32.mrb[0].mxu0
  %v3811 = vadd.f32 %v3522, %v3810
  %v3812 = vpop.f32.mrb[0].mxu0
  %v3813 = vpop.f32.mrb[0].mxu0
  %v3814 = vadd.f32 %v3525, %v3813
  %v3815 = vpop.f32.mrb[0].mxu0
  %3816 = vmatprep.mubr.bf16.mxu0 %v2357
  %3817 = vmatmul.mubr.bf16.gmra.mrb[0].mxu0 %v2356
  %v3818 = vpop.f32.mrb[0].mxu0
  %v3819 = vadd.f32 %v3530, %v3818
  %v3820 = vpop.f32.mrb[0].mxu0
  %v3821 = vpop.f32.mrb[0].mxu0
  %v3822 = vadd.f32 %v3533, %v3821
  %v3823 = vpop.f32.mrb[0].mxu0
  %3824 = vmatprep.mubr.bf16.mxu0 %v2366
  %3825 = vmatmul.mubr.bf16.gmra.mrb[0].mxu0 %v2365
  %v3826 = vpop.f32.mrb[0].mxu0
  %v3827 = vadd.f32 %v3538, %v3826
  %v3828 = vpop.f32.mrb[0].mxu0
  %v3829 = vpop.f32.mrb[0].mxu0
  %v3830 = vadd.f32 %v3541, %v3829
  %v3831 = vpop.f32.mrb[0].mxu0
  %3832 = vmatprep.mubr.bf16.mxu0 %v2375
  %3833 = vmatmul.mubr.bf16.gmra.mrb[0].mxu0 %v2374
  %v3834 = vpop.f32.mrb[0].mxu0
  %v3835 = vadd.f32 %v3546, %v3834
  %v3836 = vpop.f32.mrb[0].mxu0
  %v3837 = vpop.f32.mrb[0].mxu0
  %v3838 = vadd.f32 %v3549, %v3837
  %v3839 = vpop.f32.mrb[0].mxu0
  %3840 = vmatprep.mubr.bf16.mxu0 %v2384
  %3841 = vmatmul.mubr.bf16.gmra.mrb[0].mxu0 %v2383
  %v3842 = vpop.f32.mrb[0].mxu0
  %v3843 = vadd.f32 %v3554, %v3842
  %v3844 = vpop.f32.mrb[0].mxu0
  %v3845 = vpop.f32.mrb[0].mxu0
  %v3846 = vadd.f32 %v3557, %v3845
  %v3847 = vpop.f32.mrb[0].mxu0
  %3848 = vmatprep.mubr.bf16.mxu0 %v2393
  %3849 = vmatmul.mubr.bf16.gmra.mrb[0].mxu0 %v2392
  %v3850 = vpop.f32.mrb[0].mxu0
  %v3851 = vadd.f32 %v3562, %v3850
  %v3852 = vpop.f32.mrb[0].mxu0
  %v3853 = vpop.f32.mrb[0].mxu0
  %v3854 = vadd.f32 %v3565, %v3853
  %v3855 = vpop.f32.mrb[0].mxu0
  %3856 = vmatprep.mubr.bf16.mxu0 %v2402
  %3857 = vmatmul.mubr.bf16.gmra.mrb[0].mxu0 %v2401
  %v3858 = vpop.f32.mrb[0].mxu0
  %v3859 = vadd.f32 %v3570, %v3858
  %v3860 = vpop.f32.mrb[0].mxu0
  %v3861 = vpop.f32.mrb[0].mxu0
  %v3862 = vadd.f32 %v3573, %v3861
  %v3863 = vpop.f32.mrb[0].mxu0
  %3864 = vmatprep.mubr.bf16.mxu0 %v2411
  %3865 = vmatmul.mubr.bf16.gmra.mrb[0].mxu0 %v2410
  %v3866 = vpop.f32.mrb[0].mxu0
  %v3867 = vadd.f32 %v3578, %v3866
  %v3868 = vpop.f32.mrb[0].mxu0
  %v3869 = vpop.f32.mrb[0].mxu0
  %v3870 = vadd.f32 %v3581, %v3869
  %v3871 = vpop.f32.mrb[0].mxu0
  %3872 = vmatprep.mubr.bf16.mxu0 %v2420
  %3873 = vmatmul.mubr.bf16.gmra.mrb[0].mxu0 %v2419
  %v3874 = vpop.f32.mrb[0].mxu0
  %v3875 = vadd.f32 %v3586, %v3874
  %v3876 = vpop.f32.mrb[0].mxu0
  %v3877 = vpop.f32.mrb[0].mxu0
  %v3878 = vadd.f32 %v3589, %v3877
  %v3879 = vpop.f32.mrb[0].mxu0
  %3880 = vmatprep.mubr.bf16.mxu0 %v2429
  %3881 = vmatmul.mubr.bf16.gmra.mrb[0].mxu0 %v2428
  %v3882 = vpop.f32.mrb[0].mxu0
  %v3883 = vadd.f32 %v3594, %v3882
  %v3884 = vpop.f32.mrb[0].mxu0
  %v3885 = vpop.f32.mrb[0].mxu0
  %v3886 = vadd.f32 %v3597, %v3885
  %v3887 = vpop.f32.mrb[0].mxu0
  %3888 = vmatprep.mubr.bf16.mxu0 %v2438
  %3889 = vmatmul.mubr.bf16.gmra.mrb[0].mxu0 %v2437
  %v3890 = vpop.f32.mrb[0].mxu0
  %v3891 = vadd.f32 %v3602, %v3890
  %v3892 = vpop.f32.mrb[0].mxu0
  %v3893 = vpop.f32.mrb[0].mxu0
  %v3894 = vadd.f32 %v3605, %v3893
  %v3895 = vpop.f32.mrb[0].mxu0
  %3896 = vmatprep.mubr.bf16.mxu0 %v2447
  %3897 = vmatmul.mubr.bf16.gmra.mrb[0].mxu0 %v2446
  %v3898 = vpop.f32.mrb[0].mxu0
  %v3899 = vadd.f32 %v3610, %v3898
  %v3900 = vpop.f32.mrb[0].mxu0
  %v3901 = vpop.f32.mrb[0].mxu0
  %v3902 = vadd.f32 %v3613, %v3901
  %v3903 = vpop.f32.mrb[0].mxu0
  %3904 = vmatprep.mubr.bf16.mxu0 %v2456
  %3905 = vmatmul.mubr.bf16.gmra.mrb[0].mxu0 %v2455
  %v3906 = vpop.f32.mrb[0].mxu0
  %v3907 = vadd.f32 %v3618, %v3906
  %v3908 = vpop.f32.mrb[0].mxu0
  %v3909 = vpop.f32.mrb[0].mxu0
  %v3910 = vadd.f32 %v3621, %v3909
  %v3911 = vpop.f32.mrb[0].mxu0
  %3912 = vmatprep.mubr.bf16.mxu0 %v2465
  %3913 = vmatmul.mubr.bf16.gmra.mrb[0].mxu0 %v2464
  %v3914 = vpop.f32.mrb[0].mxu0
  %v3915 = vadd.f32 %v3626, %v3914
  %v3916 = vpop.f32.mrb[0].mxu0
  %v3917 = vpop.f32.mrb[0].mxu0
  %v3918 = vadd.f32 %v3629, %v3917
  %v3919 = vpop.f32.mrb[0].mxu0
  %3920 = vmatprep.mubr.bf16.mxu0 %v2474
  %3921 = vmatmul.mubr.bf16.gmra.mrb[0].mxu0 %v2473
  %v3922 = vpop.f32.mrb[0].mxu0
  %v3923 = vadd.f32 %v3634, %v3922
  %v3924 = vpop.f32.mrb[0].mxu0
  %v3925 = vpop.f32.mrb[0].mxu0
  %v3926 = vadd.f32 %v3637, %v3925
  %v3927 = vpop.f32.mrb[0].mxu0
  %3928 = vmatprep.mubr.bf16.mxu0 %v2483
  %3929 = vmatmul.mubr.bf16.gmra.mrb[0].mxu0 %v2482
  %v3930 = vpop.f32.mrb[0].mxu0
  %v3931 = vadd.f32 %v3642, %v3930
  %v3932 = vpop.f32.mrb[0].mxu0
  %v3933 = vpop.f32.mrb[0].mxu0
  %v3934 = vadd.f32 %v3645, %v3933
  %v3935 = vpop.f32.mrb[0].mxu0
  %3936 = vmatprep.mubr.bf16.mxu0 %v2492
  %3937 = vmatmul.mubr.bf16.gmra.mrb[0].mxu0 %v2491
  %v3938 = vpop.f32.mrb[0].mxu0
  %v3939 = vadd.f32 %v3650, %v3938
  %v3940 = vpop.f32.mrb[0].mxu0
  %v3941 = vpop.f32.mrb[0].mxu0
  %v3942 = vadd.f32 %v3653, %v3941
  %v3943 = vpop.f32.mrb[0].mxu0
  %3944 = vmatprep.mubr.bf16.mxu0 %v2501
  %3945 = vmatmul.mubr.bf16.gmra.mrb[0].mxu0 %v2500
  %v3946 = vpop.f32.mrb[0].mxu0
  %v3947 = vadd.f32 %v3658, %v3946
  %v3948 = vpop.f32.mrb[0].mxu0
  %v3949 = vpop.f32.mrb[0].mxu0
  %v3950 = vadd.f32 %v3661, %v3949
  %v3951 = vpop.f32.mrb[0].mxu0
  %3952 = vmatprep.mubr.bf16.mxu0 %v2510
  %3953 = vmatmul.mubr.bf16.gmra.mrb[0].mxu0 %v2509
  %v3954 = vpop.f32.mrb[0].mxu0
  %v3955 = vadd.f32 %v3666, %v3954
  %v3956 = vpop.f32.mrb[0].mxu0
  %v3957 = vpop.f32.mrb[0].mxu0
  %v3958 = vadd.f32 %v3669, %v3957
  %v3959 = vpop.f32.mrb[0].mxu0
  %3960 = vmatprep.mubr.bf16.mxu0 %v2519
  %3961 = vmatmul.mubr.bf16.gmra.mrb[0].mxu0 %v2518
  %v3962 = vpop.f32.mrb[0].mxu0
  %v3963 = vadd.f32 %v3674, %v3962
  %v3964 = vpop.f32.mrb[0].mxu0
  %v3965 = vpop.f32.mrb[0].mxu0
  %v3966 = vadd.f32 %v3677, %v3965
  %v3967 = vpop.f32.mrb[0].mxu0
  %3968 = vmatprep.mubr.bf16.mxu0 %v2528
  %3969 = vmatmul.mubr.bf16.gmra.mrb[0].mxu0 %v2527
  %v3970 = vpop.f32.mrb[0].mxu0
  %v3971 = vadd.f32 %v3682, %v3970
  %v3972 = vpop.f32.mrb[0].mxu0
  %v3973 = vpop.f32.mrb[0].mxu0
  %v3974 = vadd.f32 %v3685, %v3973
  %v3975 = vpop.f32.mrb[0].mxu0
  %3976 = vmatprep.mubr.bf16.mxu0 %v2537
  %3977 = vmatmul.mubr.bf16.gmra.mrb[0].mxu0 %v2536
  %v3978 = vpop.f32.mrb[0].mxu0
  %v3979 = vadd.f32 %v3690, %v3978
  %v3980 = vpop.f32.mrb[0].mxu0
  %v3981 = vpop.f32.mrb[0].mxu0
  %v3982 = vadd.f32 %v3693, %v3981
  %v3983 = vpop.f32.mrb[0].mxu0
  %3984 = vmatprep.mubr.bf16.mxu0 %v2546
  %3985 = vmatmul.mubr.bf16.gmra.mrb[0].mxu0 %v2545
  %v3986 = vpop.f32.mrb[0].mxu0
  %v3987 = vadd.f32 %v3698, %v3986
  %v3988 = vpop.f32.mrb[0].mxu0
  %v3989 = vpop.f32.mrb[0].mxu0
  %v3990 = vadd.f32 %v3701, %v3989
  %v3991 = vpop.f32.mrb[0].mxu0
  %3992 = vdwg.mxu0
  %3993 = vmatprep.subr.bf16.mxu0 0
  %3994 = vmatpush1.bf16.msra.mxu0 %v3030
  %3995 = vmatprep.subr.bf16.mxu0 0
  %3996 = vmatpush1.bf16.msra.mxu0 %v3031
  %3997 = vmatprep.subr.bf16.mxu0 0
  %3998 = vmatpush1.bf16.msra.mxu0 %v3032
  %3999 = vmatprep.subr.bf16.mxu0 0
  %4000 = vmatpush1.bf16.msra.mxu0 %v3033
  %4001 = vmatprep.subr.bf16.mxu0 0
  %4002 = vmatpush1.bf16.msra.mxu0 %v3034
  %4003 = vmatprep.subr.bf16.mxu0 0
  %4004 = vmatpush1.bf16.msra.mxu0 %v3035
  %4005 = vmatprep.subr.bf16.mxu0 0
  %4006 = vmatpush1.bf16.msra.mxu0 %v3036
  %4007 = vmatprep.subr.bf16.mxu0 0
  %4008 = vmatpush1.bf16.msra.mxu0 %v3037
  %4009 = vmatprep.subr.bf16.mxu0 0
  %4010 = vmatpush1.bf16.msra.mxu0 %v3038
  %4011 = vmatprep.subr.bf16.mxu0 0
  %4012 = vmatpush1.bf16.msra.mxu0 %v3039
  %4013 = vmatprep.subr.bf16.mxu0 0
  %4014 = vmatpush1.bf16.msra.mxu0 %v3040
  %4015 = vmatprep.subr.bf16.mxu0 0
  %4016 = vmatpush1.bf16.msra.mxu0 %v3041
  %4017 = vmatprep.subr.bf16.mxu0 0
  %4018 = vmatpush1.bf16.msra.mxu0 %v3042
  %4019 = vmatprep.subr.bf16.mxu0 0
  %4020 = vmatpush1.bf16.msra.mxu0 %v3043
  %4021 = vmatprep.subr.bf16.mxu0 0
  %4022 = vmatpush1.bf16.msra.mxu0 %v3044
  %4023 = vmatprep.subr.bf16.mxu0 0
  %4024 = vmatpush1.bf16.msra.mxu0 %v3045
  %4025 = vmatprep.mubr.bf16.mxu0 %v2269
  %4026 = vmatmul.mubr.bf16.gmra.mrb[0].mxu0 %v2268
  %v4027 = vpop.f32.mrb[0].mxu0
  %v4028 = vadd.f32 %v3739, %v4027
  %v4029 = vpop.f32.mrb[0].mxu0
  %v4030 = vpop.f32.mrb[0].mxu0
  %v4031 = vadd.f32 %v3742, %v4030
  %v4032 = vpop.f32.mrb[0].mxu0
  %4033 = vmatprep.mubr.bf16.mxu0 %v2278
  %4034 = vmatmul.mubr.bf16.gmra.mrb[0].mxu0 %v2277
  %v4035 = vpop.f32.mrb[0].mxu0
  %v4036 = vadd.f32 %v3747, %v4035
  %v4037 = vpop.f32.mrb[0].mxu0
  %v4038 = vpop.f32.mrb[0].mxu0
  %v4039 = vadd.f32 %v3750, %v4038
  %v4040 = vpop.f32.mrb[0].mxu0
  %4041 = vmatprep.mubr.bf16.mxu0 %v2287
  %4042 = vmatmul.mubr.bf16.gmra.mrb[0].mxu0 %v2286
  %v4043 = vpop.f32.mrb[0].mxu0
  %v4044 = vadd.f32 %v3755, %v4043
  %v4045 = vpop.f32.mrb[0].mxu0
  %v4046 = vpop.f32.mrb[0].mxu0
  %v4047 = vadd.f32 %v3758, %v4046
  %v4048 = vpop.f32.mrb[0].mxu0
  %4049 = vmatprep.mubr.bf16.mxu0 %v2296
  %4050 = vmatmul.mubr.bf16.gmra.mrb[0].mxu0 %v2295
  %v4051 = vpop.f32.mrb[0].mxu0
  %v4052 = vadd.f32 %v3763, %v4051
  %v4053 = vpop.f32.mrb[0].mxu0
  %v4054 = vpop.f32.mrb[0].mxu0
  %v4055 = vadd.f32 %v3766, %v4054
  %v4056 = vpop.f32.mrb[0].mxu0
  %4057 = vmatprep.mubr.bf16.mxu0 %v2305
  %4058 = vmatmul.mubr.bf16.gmra.mrb[0].mxu0 %v2304
  %v4059 = vpop.f32.mrb[0].mxu0
  %v4060 = vadd.f32 %v3771, %v4059
  %v4061 = vpop.f32.mrb[0].mxu0
  %v4062 = vpop.f32.mrb[0].mxu0
  %v4063 = vadd.f32 %v3774, %v4062
  %v4064 = vpop.f32.mrb[0].mxu0
  %4065 = vmatprep.mubr.bf16.mxu0 %v2314
  %4066 = vmatmul.mubr.bf16.gmra.mrb[0].mxu0 %v2313
  %v4067 = vpop.f32.mrb[0].mxu0
  %v4068 = vadd.f32 %v3779, %v4067
  %v4069 = vpop.f32.mrb[0].mxu0
  %v4070 = vpop.f32.mrb[0].mxu0
  %v4071 = vadd.f32 %v3782, %v4070
  %v4072 = vpop.f32.mrb[0].mxu0
  %4073 = vmatprep.mubr.bf16.mxu0 %v2323
  %4074 = vmatmul.mubr.bf16.gmra.mrb[0].mxu0 %v2322
  %v4075 = vpop.f32.mrb[0].mxu0
  %v4076 = vadd.f32 %v3787, %v4075
  %v4077 = vpop.f32.mrb[0].mxu0
  %v4078 = vpop.f32.mrb[0].mxu0
  %v4079 = vadd.f32 %v3790, %v4078
  %v4080 = vpop.f32.mrb[0].mxu0
  %4081 = vmatprep.mubr.bf16.mxu0 %v2332
  %4082 = vmatmul.mubr.bf16.gmra.mrb[0].mxu0 %v2331
  %v4083 = vpop.f32.mrb[0].mxu0
  %v4084 = vadd.f32 %v3795, %v4083
  %v4085 = vpop.f32.mrb[0].mxu0
  %v4086 = vpop.f32.mrb[0].mxu0
  %v4087 = vadd.f32 %v3798, %v4086
  %v4088 = vpop.f32.mrb[0].mxu0
  %4089 = vmatprep.mubr.bf16.mxu0 %v2341
  %4090 = vmatmul.mubr.bf16.gmra.mrb[0].mxu0 %v2340
  %v4091 = vpop.f32.mrb[0].mxu0
  %v4092 = vadd.f32 %v3803, %v4091
  %v4093 = vpop.f32.mrb[0].mxu0
  %v4094 = vpop.f32.mrb[0].mxu0
  %v4095 = vadd.f32 %v3806, %v4094
  %v4096 = vpop.f32.mrb[0].mxu0
  %4097 = vmatprep.mubr.bf16.mxu0 %v2350
  %4098 = vmatmul.mubr.bf16.gmra.mrb[0].mxu0 %v2349
  %v4099 = vpop.f32.mrb[0].mxu0
  %v4100 = vadd.f32 %v3811, %v4099
  %v4101 = vpop.f32.mrb[0].mxu0
  %v4102 = vpop.f32.mrb[0].mxu0
  %v4103 = vadd.f32 %v3814, %v4102
  %v4104 = vpop.f32.mrb[0].mxu0
  %4105 = vmatprep.mubr.bf16.mxu0 %v2359
  %4106 = vmatmul.mubr.bf16.gmra.mrb[0].mxu0 %v2358
  %v4107 = vpop.f32.mrb[0].mxu0
  %v4108 = vadd.f32 %v3819, %v4107
  %v4109 = vpop.f32.mrb[0].mxu0
  %v4110 = vpop.f32.mrb[0].mxu0
  %v4111 = vadd.f32 %v3822, %v4110
  %v4112 = vpop.f32.mrb[0].mxu0
  %4113 = vmatprep.mubr.bf16.mxu0 %v2368
  %4114 = vmatmul.mubr.bf16.gmra.mrb[0].mxu0 %v2367
  %v4115 = vpop.f32.mrb[0].mxu0
  %v4116 = vadd.f32 %v3827, %v4115
  %v4117 = vpop.f32.mrb[0].mxu0
  %v4118 = vpop.f32.mrb[0].mxu0
  %v4119 = vadd.f32 %v3830, %v4118
  %v4120 = vpop.f32.mrb[0].mxu0
  %4121 = vmatprep.mubr.bf16.mxu0 %v2377
  %4122 = vmatmul.mubr.bf16.gmra.mrb[0].mxu0 %v2376
  %v4123 = vpop.f32.mrb[0].mxu0
  %v4124 = vadd.f32 %v3835, %v4123
  %v4125 = vpop.f32.mrb[0].mxu0
  %v4126 = vpop.f32.mrb[0].mxu0
  %v4127 = vadd.f32 %v3838, %v4126
  %v4128 = vpop.f32.mrb[0].mxu0
  %4129 = vmatprep.mubr.bf16.mxu0 %v2386
  %4130 = vmatmul.mubr.bf16.gmra.mrb[0].mxu0 %v2385
  %v4131 = vpop.f32.mrb[0].mxu0
  %v4132 = vadd.f32 %v3843, %v4131
  %v4133 = vpop.f32.mrb[0].mxu0
  %v4134 = vpop.f32.mrb[0].mxu0
  %v4135 = vadd.f32 %v3846, %v4134
  %v4136 = vpop.f32.mrb[0].mxu0
  %4137 = vmatprep.mubr.bf16.mxu0 %v2395
  %4138 = vmatmul.mubr.bf16.gmra.mrb[0].mxu0 %v2394
  %v4139 = vpop.f32.mrb[0].mxu0
  %v4140 = vadd.f32 %v3851, %v4139
  %v4141 = vpop.f32.mrb[0].mxu0
  %v4142 = vpop.f32.mrb[0].mxu0
  %v4143 = vadd.f32 %v3854, %v4142
  %v4144 = vpop.f32.mrb[0].mxu0
  %4145 = vmatprep.mubr.bf16.mxu0 %v2404
  %4146 = vmatmul.mubr.bf16.gmra.mrb[0].mxu0 %v2403
  %v4147 = vpop.f32.mrb[0].mxu0
  %v4148 = vadd.f32 %v3859, %v4147
  %v4149 = vpop.f32.mrb[0].mxu0
  %v4150 = vpop.f32.mrb[0].mxu0
  %v4151 = vadd.f32 %v3862, %v4150
  %v4152 = vpop.f32.mrb[0].mxu0
  %4153 = vmatprep.mubr.bf16.mxu0 %v2413
  %4154 = vmatmul.mubr.bf16.gmra.mrb[0].mxu0 %v2412
  %v4155 = vpop.f32.mrb[0].mxu0
  %v4156 = vadd.f32 %v3867, %v4155
  %v4157 = vpop.f32.mrb[0].mxu0
  %v4158 = vpop.f32.mrb[0].mxu0
  %v4159 = vadd.f32 %v3870, %v4158
  %v4160 = vpop.f32.mrb[0].mxu0
  %4161 = vmatprep.mubr.bf16.mxu0 %v2422
  %4162 = vmatmul.mubr.bf16.gmra.mrb[0].mxu0 %v2421
  %v4163 = vpop.f32.mrb[0].mxu0
  %v4164 = vadd.f32 %v3875, %v4163
  %v4165 = vpop.f32.mrb[0].mxu0
  %v4166 = vpop.f32.mrb[0].mxu0
  %v4167 = vadd.f32 %v3878, %v4166
  %v4168 = vpop.f32.mrb[0].mxu0
  %4169 = vmatprep.mubr.bf16.mxu0 %v2431
  %4170 = vmatmul.mubr.bf16.gmra.mrb[0].mxu0 %v2430
  %v4171 = vpop.f32.mrb[0].mxu0
  %v4172 = vadd.f32 %v3883, %v4171
  %v4173 = vpop.f32.mrb[0].mxu0
  %v4174 = vpop.f32.mrb[0].mxu0
  %v4175 = vadd.f32 %v3886, %v4174
  %v4176 = vpop.f32.mrb[0].mxu0
  %4177 = vmatprep.mubr.bf16.mxu0 %v2440
  %4178 = vmatmul.mubr.bf16.gmra.mrb[0].mxu0 %v2439
  %v4179 = vpop.f32.mrb[0].mxu0
  %v4180 = vadd.f32 %v3891, %v4179
  %v4181 = vpop.f32.mrb[0].mxu0
  %v4182 = vpop.f32.mrb[0].mxu0
  %v4183 = vadd.f32 %v3894, %v4182
  %v4184 = vpop.f32.mrb[0].mxu0
  %4185 = vmatprep.mubr.bf16.mxu0 %v2449
  %4186 = vmatmul.mubr.bf16.gmra.mrb[0].mxu0 %v2448
  %v4187 = vpop.f32.mrb[0].mxu0
  %v4188 = vadd.f32 %v3899, %v4187
  %v4189 = vpop.f32.mrb[0].mxu0
  %v4190 = vpop.f32.mrb[0].mxu0
  %v4191 = vadd.f32 %v3902, %v4190
  %v4192 = vpop.f32.mrb[0].mxu0
  %4193 = vmatprep.mubr.bf16.mxu0 %v2458
  %4194 = vmatmul.mubr.bf16.gmra.mrb[0].mxu0 %v2457
  %v4195 = vpop.f32.mrb[0].mxu0
  %v4196 = vadd.f32 %v3907, %v4195
  %v4197 = vpop.f32.mrb[0].mxu0
  %v4198 = vpop.f32.mrb[0].mxu0
  %v4199 = vadd.f32 %v3910, %v4198
  %v4200 = vpop.f32.mrb[0].mxu0
  %4201 = vmatprep.mubr.bf16.mxu0 %v2467
  %4202 = vmatmul.mubr.bf16.gmra.mrb[0].mxu0 %v2466
  %v4203 = vpop.f32.mrb[0].mxu0
  %v4204 = vadd.f32 %v3915, %v4203
  %v4205 = vpop.f32.mrb[0].mxu0
  %v4206 = vpop.f32.mrb[0].mxu0
  %v4207 = vadd.f32 %v3918, %v4206
  %v4208 = vpop.f32.mrb[0].mxu0
  %4209 = vmatprep.mubr.bf16.mxu0 %v2476
  %4210 = vmatmul.mubr.bf16.gmra.mrb[0].mxu0 %v2475
  %v4211 = vpop.f32.mrb[0].mxu0
  %v4212 = vadd.f32 %v3923, %v4211
  %v4213 = vpop.f32.mrb[0].mxu0
  %v4214 = vpop.f32.mrb[0].mxu0
  %v4215 = vadd.f32 %v3926, %v4214
  %v4216 = vpop.f32.mrb[0].mxu0
  %4217 = vmatprep.mubr.bf16.mxu0 %v2485
  %4218 = vmatmul.mubr.bf16.gmra.mrb[0].mxu0 %v2484
  %v4219 = vpop.f32.mrb[0].mxu0
  %v4220 = vadd.f32 %v3931, %v4219
  %v4221 = vpop.f32.mrb[0].mxu0
  %v4222 = vpop.f32.mrb[0].mxu0
  %v4223 = vadd.f32 %v3934, %v4222
  %v4224 = vpop.f32.mrb[0].mxu0
  %4225 = vmatprep.mubr.bf16.mxu0 %v2494
  %4226 = vmatmul.mubr.bf16.gmra.mrb[0].mxu0 %v2493
  %v4227 = vpop.f32.mrb[0].mxu0
  %v4228 = vadd.f32 %v3939, %v4227
  %v4229 = vpop.f32.mrb[0].mxu0
  %v4230 = vpop.f32.mrb[0].mxu0
  %v4231 = vadd.f32 %v3942, %v4230
  %v4232 = vpop.f32.mrb[0].mxu0
  %4233 = vmatprep.mubr.bf16.mxu0 %v2503
  %4234 = vmatmul.mubr.bf16.gmra.mrb[0].mxu0 %v2502
  %v4235 = vpop.f32.mrb[0].mxu0
  %v4236 = vadd.f32 %v3947, %v4235
  %v4237 = vpop.f32.mrb[0].mxu0
  %v4238 = vpop.f32.mrb[0].mxu0
  %v4239 = vadd.f32 %v3950, %v4238
  %v4240 = vpop.f32.mrb[0].mxu0
  %4241 = vmatprep.mubr.bf16.mxu0 %v2512
  %4242 = vmatmul.mubr.bf16.gmra.mrb[0].mxu0 %v2511
  %v4243 = vpop.f32.mrb[0].mxu0
  %v4244 = vadd.f32 %v3955, %v4243
  %v4245 = vpop.f32.mrb[0].mxu0
  %v4246 = vpop.f32.mrb[0].mxu0
  %v4247 = vadd.f32 %v3958, %v4246
  %v4248 = vpop.f32.mrb[0].mxu0
  %4249 = vmatprep.mubr.bf16.mxu0 %v2521
  %4250 = vmatmul.mubr.bf16.gmra.mrb[0].mxu0 %v2520
  %v4251 = vpop.f32.mrb[0].mxu0
  %v4252 = vadd.f32 %v3963, %v4251
  %v4253 = vpop.f32.mrb[0].mxu0
  %v4254 = vpop.f32.mrb[0].mxu0
  %v4255 = vadd.f32 %v3966, %v4254
  %v4256 = vpop.f32.mrb[0].mxu0
  %4257 = vmatprep.mubr.bf16.mxu0 %v2530
  %4258 = vmatmul.mubr.bf16.gmra.mrb[0].mxu0 %v2529
  %v4259 = vpop.f32.mrb[0].mxu0
  %v4260 = vadd.f32 %v3971, %v4259
  %v4261 = vpop.f32.mrb[0].mxu0
  %v4262 = vpop.f32.mrb[0].mxu0
  %v4263 = vadd.f32 %v3974, %v4262
  %v4264 = vpop.f32.mrb[0].mxu0
  %4265 = vmatprep.mubr.bf16.mxu0 %v2539
  %4266 = vmatmul.mubr.bf16.gmra.mrb[0].mxu0 %v2538
  %v4267 = vpop.f32.mrb[0].mxu0
  %v4268 = vadd.f32 %v3979, %v4267
  %v4269 = vpop.f32.mrb[0].mxu0
  %v4270 = vpop.f32.mrb[0].mxu0
  %v4271 = vadd.f32 %v3982, %v4270
  %v4272 = vpop.f32.mrb[0].mxu0
  %4273 = vmatprep.mubr.bf16.mxu0 %v2548
  %4274 = vmatmul.mubr.bf16.gmra.mrb[0].mxu0 %v2547
  %v4275 = vpop.f32.mrb[0].mxu0
  %v4276 = vadd.f32 %v3987, %v4275
  %v4277 = vpop.f32.mrb[0].mxu0
  %v4278 = vpop.f32.mrb[0].mxu0
  %v4279 = vadd.f32 %v3990, %v4278
  %v4280 = vpop.f32.mrb[0].mxu0
  %4281 = vdwg.mxu0
  %4282 = vmatprep.subr.bf16.mxu0 0
  %4283 = vmatpush1.bf16.msra.mxu0 %v3046
  %4284 = vmatprep.subr.bf16.mxu0 0
  %4285 = vmatpush1.bf16.msra.mxu0 %v3047
  %4286 = vmatprep.subr.bf16.mxu0 0
  %4287 = vmatpush1.bf16.msra.mxu0 %v3048
  %4288 = vmatprep.subr.bf16.mxu0 0
  %4289 = vmatpush1.bf16.msra.mxu0 %v3049
  %4290 = vmatprep.subr.bf16.mxu0 0
  %4291 = vmatpush1.bf16.msra.mxu0 %v3050
  %4292 = vmatprep.subr.bf16.mxu0 0
  %4293 = vmatpush1.bf16.msra.mxu0 %v3051
  %4294 = vmatprep.subr.bf16.mxu0 0
  %4295 = vmatpush1.bf16.msra.mxu0 %v3052
  %4296 = vmatprep.subr.bf16.mxu0 0
  %4297 = vmatpush1.bf16.msra.mxu0 %v3053
  %4298 = vmatprep.subr.bf16.mxu0 0
  %4299 = vmatpush1.bf16.msra.mxu0 0
  %4300 = vmatprep.subr.bf16.mxu0 0
  %4301 = vmatpush1.bf16.msra.mxu0 0
  %4302 = vmatprep.subr.bf16.mxu0 0
  %4303 = vmatpush1.bf16.msra.mxu0 0
  %4304 = vmatprep.subr.bf16.mxu0 0
  %4305 = vmatpush1.bf16.msra.mxu0 0
  %4306 = vmatprep.subr.bf16.mxu0 0
  %4307 = vmatpush1.bf16.msra.mxu0 0
  %4308 = vmatprep.subr.bf16.mxu0 0
  %4309 = vmatpush1.bf16.msra.mxu0 0
  %4310 = vmatprep.subr.bf16.mxu0 0
  %4311 = vmatpush1.bf16.msra.mxu0 0
  %4312 = vmatprep.subr.bf16.mxu0 0
  %4313 = vmatpush1.bf16.msra.mxu0 0
  %4314 = vmatprep.mubr.bf16.mxu0 0
  %4315 = vmatmul.mubr.bf16.gmra.mrb[0].mxu0 %v2270
  %v4316 = vpop.f32.mrb[0].mxu0
  %v4317 = vadd.f32 %v4028, %v4316
  %v4318 = vpop.f32.mrb[0].mxu0
  %v4319 = vpop.f32.mrb[0].mxu0
  %v4320 = vadd.f32 %v4031, %v4319
  %v4321 = vpop.f32.mrb[0].mxu0
  %4322 = vmatprep.mubr.bf16.mxu0 0
  %4323 = vmatmul.mubr.bf16.gmra.mrb[0].mxu0 %v2279
  %v4324 = vpop.f32.mrb[0].mxu0
  %v4325 = vadd.f32 %v4036, %v4324
  %v4326 = vpop.f32.mrb[0].mxu0
  %v4327 = vpop.f32.mrb[0].mxu0
  %v4328 = vadd.f32 %v4039, %v4327
  %v4329 = vpop.f32.mrb[0].mxu0
  %4330 = vmatprep.mubr.bf16.mxu0 0
  %4331 = vmatmul.mubr.bf16.gmra.mrb[0].mxu0 %v2288
  %v4332 = vpop.f32.mrb[0].mxu0
  %v4333 = vadd.f32 %v4044, %v4332
  %v4334 = vpop.f32.mrb[0].mxu0
  %v4335 = vpop.f32.mrb[0].mxu0
  %v4336 = vadd.f32 %v4047, %v4335
  %v4337 = vpop.f32.mrb[0].mxu0
  %4338 = vmatprep.mubr.bf16.mxu0 0
  %4339 = vmatmul.mubr.bf16.gmra.mrb[0].mxu0 %v2297
  %v4340 = vpop.f32.mrb[0].mxu0
  %v4341 = vadd.f32 %v4052, %v4340
  %v4342 = vpop.f32.mrb[0].mxu0
  %v4343 = vpop.f32.mrb[0].mxu0
  %v4344 = vadd.f32 %v4055, %v4343
  %v4345 = vpop.f32.mrb[0].mxu0
  %4346 = vmatprep.mubr.bf16.mxu0 0
  %4347 = vmatmul.mubr.bf16.gmra.mrb[0].mxu0 %v2306
  %v4348 = vpop.f32.mrb[0].mxu0
  %v4349 = vadd.f32 %v4060, %v4348
  %v4350 = vpop.f32.mrb[0].mxu0
  %v4351 = vpop.f32.mrb[0].mxu0
  %v4352 = vadd.f32 %v4063, %v4351
  %v4353 = vpop.f32.mrb[0].mxu0
  %4354 = vmatprep.mubr.bf16.mxu0 0
  %4355 = vmatmul.mubr.bf16.gmra.mrb[0].mxu0 %v2315
  %v4356 = vpop.f32.mrb[0].mxu0
  %v4357 = vadd.f32 %v4068, %v4356
  %v4358 = vpop.f32.mrb[0].mxu0
  %v4359 = vpop.f32.mrb[0].mxu0
  %v4360 = vadd.f32 %v4071, %v4359
  %v4361 = vpop.f32.mrb[0].mxu0
  %4362 = vmatprep.mubr.bf16.mxu0 0
  %4363 = vmatmul.mubr.bf16.gmra.mrb[0].mxu0 %v2324
  %v4364 = vpop.f32.mrb[0].mxu0
  %v4365 = vadd.f32 %v4076, %v4364
  %v4366 = vpop.f32.mrb[0].mxu0
  %v4367 = vpop.f32.mrb[0].mxu0
  %v4368 = vadd.f32 %v4079, %v4367
  %v4369 = vpop.f32.mrb[0].mxu0
  %4370 = vmatprep.mubr.bf16.mxu0 0
  %4371 = vmatmul.mubr.bf16.gmra.mrb[0].mxu0 %v2333
  %v4372 = vpop.f32.mrb[0].mxu0
  %v4373 = vadd.f32 %v4084, %v4372
  %v4374 = vpop.f32.mrb[0].mxu0
  %v4375 = vpop.f32.mrb[0].mxu0
  %v4376 = vadd.f32 %v4087, %v4375
  %v4377 = vpop.f32.mrb[0].mxu0
  %4378 = vmatprep.mubr.bf16.mxu0 0
  %4379 = vmatmul.mubr.bf16.gmra.mrb[0].mxu0 %v2342
  %v4380 = vpop.f32.mrb[0].mxu0
  %v4381 = vadd.f32 %v4092, %v4380
  %v4382 = vpop.f32.mrb[0].mxu0
  %v4383 = vpop.f32.mrb[0].mxu0
  %v4384 = vadd.f32 %v4095, %v4383
  %v4385 = vpop.f32.mrb[0].mxu0
  %4386 = vmatprep.mubr.bf16.mxu0 0
  %4387 = vmatmul.mubr.bf16.gmra.mrb[0].mxu0 %v2351
  %v4388 = vpop.f32.mrb[0].mxu0
  %v4389 = vadd.f32 %v4100, %v4388
  %v4390 = vpop.f32.mrb[0].mxu0
  %v4391 = vpop.f32.mrb[0].mxu0
  %v4392 = vadd.f32 %v4103, %v4391
  %v4393 = vpop.f32.mrb[0].mxu0
  %4394 = vmatprep.mubr.bf16.mxu0 0
  %4395 = vmatmul.mubr.bf16.gmra.mrb[0].mxu0 %v2360
  %v4396 = vpop.f32.mrb[0].mxu0
  %v4397 = vadd.f32 %v4108, %v4396
  %v4398 = vpop.f32.mrb[0].mxu0
  %v4399 = vpop.f32.mrb[0].mxu0
  %v4400 = vadd.f32 %v4111, %v4399
  %v4401 = vpop.f32.mrb[0].mxu0
  %4402 = vmatprep.mubr.bf16.mxu0 0
  %4403 = vmatmul.mubr.bf16.gmra.mrb[0].mxu0 %v2369
  %v4404 = vpop.f32.mrb[0].mxu0
  %v4405 = vadd.f32 %v4116, %v4404
  %v4406 = vpop.f32.mrb[0].mxu0
  %v4407 = vpop.f32.mrb[0].mxu0
  %v4408 = vadd.f32 %v4119, %v4407
  %v4409 = vpop.f32.mrb[0].mxu0
  %4410 = vmatprep.mubr.bf16.mxu0 0
  %4411 = vmatmul.mubr.bf16.gmra.mrb[0].mxu0 %v2378
  %v4412 = vpop.f32.mrb[0].mxu0
  %v4413 = vadd.f32 %v4124, %v4412
  %v4414 = vpop.f32.mrb[0].mxu0
  %v4415 = vpop.f32.mrb[0].mxu0
  %v4416 = vadd.f32 %v4127, %v4415
  %v4417 = vpop.f32.mrb[0].mxu0
  %4418 = vmatprep.mubr.bf16.mxu0 0
  %4419 = vmatmul.mubr.bf16.gmra.mrb[0].mxu0 %v2387
  %v4420 = vpop.f32.mrb[0].mxu0
  %v4421 = vadd.f32 %v4132, %v4420
  %v4422 = vpop.f32.mrb[0].mxu0
  %v4423 = vpop.f32.mrb[0].mxu0
  %v4424 = vadd.f32 %v4135, %v4423
  %v4425 = vpop.f32.mrb[0].mxu0
  %4426 = vmatprep.mubr.bf16.mxu0 0
  %4427 = vmatmul.mubr.bf16.gmra.mrb[0].mxu0 %v2396
  %v4428 = vpop.f32.mrb[0].mxu0
  %v4429 = vadd.f32 %v4140, %v4428
  %v4430 = vpop.f32.mrb[0].mxu0
  %v4431 = vpop.f32.mrb[0].mxu0
  %v4432 = vadd.f32 %v4143, %v4431
  %v4433 = vpop.f32.mrb[0].mxu0
  %4434 = vmatprep.mubr.bf16.mxu0 0
  %4435 = vmatmul.mubr.bf16.gmra.mrb[0].mxu0 %v2405
  %v4436 = vpop.f32.mrb[0].mxu0
  %v4437 = vadd.f32 %v4148, %v4436
  %v4438 = vpop.f32.mrb[0].mxu0
  %v4439 = vpop.f32.mrb[0].mxu0
  %v4440 = vadd.f32 %v4151, %v4439
  %v4441 = vpop.f32.mrb[0].mxu0
  %4442 = vmatprep.mubr.bf16.mxu0 0
  %4443 = vmatmul.mubr.bf16.gmra.mrb[0].mxu0 %v2414
  %v4444 = vpop.f32.mrb[0].mxu0
  %v4445 = vadd.f32 %v4156, %v4444
  %v4446 = vpop.f32.mrb[0].mxu0
  %v4447 = vpop.f32.mrb[0].mxu0
  %v4448 = vadd.f32 %v4159, %v4447
  %v4449 = vpop.f32.mrb[0].mxu0
  %4450 = vmatprep.mubr.bf16.mxu0 0
  %4451 = vmatmul.mubr.bf16.gmra.mrb[0].mxu0 %v2423
  %v4452 = vpop.f32.mrb[0].mxu0
  %v4453 = vadd.f32 %v4164, %v4452
  %v4454 = vpop.f32.mrb[0].mxu0
  %v4455 = vpop.f32.mrb[0].mxu0
  %v4456 = vadd.f32 %v4167, %v4455
  %v4457 = vpop.f32.mrb[0].mxu0
  %4458 = vmatprep.mubr.bf16.mxu0 0
  %4459 = vmatmul.mubr.bf16.gmra.mrb[0].mxu0 %v2432
  %v4460 = vpop.f32.mrb[0].mxu0
  %v4461 = vadd.f32 %v4172, %v4460
  %v4462 = vpop.f32.mrb[0].mxu0
  %v4463 = vpop.f32.mrb[0].mxu0
  %v4464 = vadd.f32 %v4175, %v4463
  %v4465 = vpop.f32.mrb[0].mxu0
  %4466 = vmatprep.mubr.bf16.mxu0 0
  %4467 = vmatmul.mubr.bf16.gmra.mrb[0].mxu0 %v2441
  %v4468 = vpop.f32.mrb[0].mxu0
  %v4469 = vadd.f32 %v4180, %v4468
  %v4470 = vpop.f32.mrb[0].mxu0
  %v4471 = vpop.f32.mrb[0].mxu0
  %v4472 = vadd.f32 %v4183, %v4471
  %v4473 = vpop.f32.mrb[0].mxu0
  %4474 = vmatprep.mubr.bf16.mxu0 0
  %4475 = vmatmul.mubr.bf16.gmra.mrb[0].mxu0 %v2450
  %v4476 = vpop.f32.mrb[0].mxu0
  %v4477 = vadd.f32 %v4188, %v4476
  %v4478 = vpop.f32.mrb[0].mxu0
  %v4479 = vpop.f32.mrb[0].mxu0
  %v4480 = vadd.f32 %v4191, %v4479
  %v4481 = vpop.f32.mrb[0].mxu0
  %4482 = vmatprep.mubr.bf16.mxu0 0
  %4483 = vmatmul.mubr.bf16.gmra.mrb[0].mxu0 %v2459
  %v4484 = vpop.f32.mrb[0].mxu0
  %v4485 = vadd.f32 %v4196, %v4484
  %v4486 = vpop.f32.mrb[0].mxu0
  %v4487 = vpop.f32.mrb[0].mxu0
  %v4488 = vadd.f32 %v4199, %v4487
  %v4489 = vpop.f32.mrb[0].mxu0
  %4490 = vmatprep.mubr.bf16.mxu0 0
  %4491 = vmatmul.mubr.bf16.gmra.mrb[0].mxu0 %v2468
  %v4492 = vpop.f32.mrb[0].mxu0
  %v4493 = vadd.f32 %v4204, %v4492
  %v4494 = vpop.f32.mrb[0].mxu0
  %v4495 = vpop.f32.mrb[0].mxu0
  %v4496 = vadd.f32 %v4207, %v4495
  %v4497 = vpop.f32.mrb[0].mxu0
  %4498 = vmatprep.mubr.bf16.mxu0 0
  %4499 = vmatmul.mubr.bf16.gmra.mrb[0].mxu0 %v2477
  %v4500 = vpop.f32.mrb[0].mxu0
  %v4501 = vadd.f32 %v4212, %v4500
  %v4502 = vpop.f32.mrb[0].mxu0
  %v4503 = vpop.f32.mrb[0].mxu0
  %v4504 = vadd.f32 %v4215, %v4503
  %v4505 = vpop.f32.mrb[0].mxu0
  %4506 = vmatprep.mubr.bf16.mxu0 0
  %4507 = vmatmul.mubr.bf16.gmra.mrb[0].mxu0 %v2486
  %v4508 = vpop.f32.mrb[0].mxu0
  %v4509 = vadd.f32 %v4220, %v4508
  %v4510 = vpop.f32.mrb[0].mxu0
  %v4511 = vpop.f32.mrb[0].mxu0
  %v4512 = vadd.f32 %v4223, %v4511
  %v4513 = vpop.f32.mrb[0].mxu0
  %4514 = vmatprep.mubr.bf16.mxu0 0
  %4515 = vmatmul.mubr.bf16.gmra.mrb[0].mxu0 %v2495
  %v4516 = vpop.f32.mrb[0].mxu0
  %v4517 = vadd.f32 %v4228, %v4516
  %v4518 = vpop.f32.mrb[0].mxu0
  %v4519 = vpop.f32.mrb[0].mxu0
  %v4520 = vadd.f32 %v4231, %v4519
  %v4521 = vpop.f32.mrb[0].mxu0
  %4522 = vmatprep.mubr.bf16.mxu0 0
  %4523 = vmatmul.mubr.bf16.gmra.mrb[0].mxu0 %v2504
  %v4524 = vpop.f32.mrb[0].mxu0
  %v4525 = vadd.f32 %v4236, %v4524
  %v4526 = vpop.f32.mrb[0].mxu0
  %v4527 = vpop.f32.mrb[0].mxu0
  %v4528 = vadd.f32 %v4239, %v4527
  %v4529 = vpop.f32.mrb[0].mxu0
  %4530 = vmatprep.mubr.bf16.mxu0 0
  %4531 = vmatmul.mubr.bf16.gmra.mrb[0].mxu0 %v2513
  %v4532 = vpop.f32.mrb[0].mxu0
  %v4533 = vadd.f32 %v4244, %v4532
  %v4534 = vpop.f32.mrb[0].mxu0
  %v4535 = vpop.f32.mrb[0].mxu0
  %v4536 = vadd.f32 %v4247, %v4535
  %v4537 = vpop.f32.mrb[0].mxu0
  %4538 = vmatprep.mubr.bf16.mxu0 0
  %4539 = vmatmul.mubr.bf16.gmra.mrb[0].mxu0 %v2522
  %v4540 = vpop.f32.mrb[0].mxu0
  %v4541 = vadd.f32 %v4252, %v4540
  %v4542 = vpop.f32.mrb[0].mxu0
  %v4543 = vpop.f32.mrb[0].mxu0
  %v4544 = vadd.f32 %v4255, %v4543
  %v4545 = vpop.f32.mrb[0].mxu0
  %4546 = vmatprep.mubr.bf16.mxu0 0
  %4547 = vmatmul.mubr.bf16.gmra.mrb[0].mxu0 %v2531
  %v4548 = vpop.f32.mrb[0].mxu0
  %v4549 = vadd.f32 %v4260, %v4548
  %v4550 = vpop.f32.mrb[0].mxu0
  %v4551 = vpop.f32.mrb[0].mxu0
  %v4552 = vadd.f32 %v4263, %v4551
  %v4553 = vpop.f32.mrb[0].mxu0
  %4554 = vmatprep.mubr.bf16.mxu0 0
  %4555 = vmatmul.mubr.bf16.gmra.mrb[0].mxu0 %v2540
  %v4556 = vpop.f32.mrb[0].mxu0
  %v4557 = vadd.f32 %v4268, %v4556
  %v4558 = vpop.f32.mrb[0].mxu0
  %v4559 = vpop.f32.mrb[0].mxu0
  %v4560 = vadd.f32 %v4271, %v4559
  %v4561 = vpop.f32.mrb[0].mxu0
  %4562 = vmatprep.mubr.bf16.mxu0 0
  %4563 = vmatmul.mubr.bf16.gmra.mrb[0].mxu0 %v2549
  %v4564 = vpop.f32.mrb[0].mxu0
  %v4565 = vadd.f32 %v4276, %v4564
  %v4566 = vpop.f32.mrb[0].mxu0
  %v4567 = vpop.f32.mrb[0].mxu0
  %v4568 = vadd.f32 %v4279, %v4567
  %v4569 = vpop.f32.mrb[0].mxu0
  %4570 = vdwg.mxu0
  %v4571 = vld [vmem:[%s5] sm:$0x1]
  %v4573 = vlaneseq
  %v4574 = vshrl.u32 %v4573, 7
  %v4575 = vsub.s32 0, %v4574
  %v4576 = vrot.slane %v4571, %v4575
  %v4578 = vmul.f32 %v4317, %v4576
  %v4579 = vmul.f32 %v4320, %v4576
  %v4580 = vmul.f32 %v4325, %v4576
  %v4581 = vmul.f32 %v4328, %v4576
  %v4582 = vmul.f32 %v4333, %v4576
  %v4583 = vmul.f32 %v4336, %v4576
  %v4584 = vmul.f32 %v4341, %v4576
  %v4585 = vmul.f32 %v4344, %v4576
  %v4586 = vmul.f32 %v4349, %v4576
  %v4587 = vmul.f32 %v4352, %v4576
  %v4588 = vmul.f32 %v4357, %v4576
  %v4589 = vmul.f32 %v4360, %v4576
  %v4590 = vmul.f32 %v4365, %v4576
  %v4591 = vmul.f32 %v4368, %v4576
  %v4592 = vmul.f32 %v4373, %v4576
  %v4593 = vmul.f32 %v4376, %v4576
  %v4594 = vmul.f32 %v4381, %v4576
  %v4595 = vmul.f32 %v4384, %v4576
  %v4596 = vmul.f32 %v4389, %v4576
  %v4597 = vmul.f32 %v4392, %v4576
  %v4598 = vmul.f32 %v4397, %v4576
  %v4599 = vmul.f32 %v4400, %v4576
  %v4600 = vmul.f32 %v4405, %v4576
  %v4601 = vmul.f32 %v4408, %v4576
  %v4602 = vmul.f32 %v4413, %v4576
  %v4603 = vmul.f32 %v4416, %v4576
  %v4604 = vmul.f32 %v4421, %v4576
  %v4605 = vmul.f32 %v4424, %v4576
  %v4606 = vmul.f32 %v4429, %v4576
  %v4607 = vmul.f32 %v4432, %v4576
  %v4608 = vmul.f32 %v4437, %v4576
  %v4609 = vmul.f32 %v4440, %v4576
  %v4610 = vmul.f32 %v4445, %v4576
  %v4611 = vmul.f32 %v4448, %v4576
  %v4612 = vmul.f32 %v4453, %v4576
  %v4613 = vmul.f32 %v4456, %v4576
  %v4614 = vmul.f32 %v4461, %v4576
  %v4615 = vmul.f32 %v4464, %v4576
  %v4616 = vmul.f32 %v4469, %v4576
  %v4617 = vmul.f32 %v4472, %v4576
  %v4618 = vmul.f32 %v4477, %v4576
  %v4619 = vmul.f32 %v4480, %v4576
  %v4620 = vmul.f32 %v4485, %v4576
  %v4621 = vmul.f32 %v4488, %v4576
  %v4622 = vmul.f32 %v4493, %v4576
  %v4623 = vmul.f32 %v4496, %v4576
  %v4624 = vmul.f32 %v4501, %v4576
  %v4625 = vmul.f32 %v4504, %v4576
  %v4626 = vmul.f32 %v4509, %v4576
  %v4627 = vmul.f32 %v4512, %v4576
  %v4628 = vmul.f32 %v4517, %v4576
  %v4629 = vmul.f32 %v4520, %v4576
  %v4630 = vmul.f32 %v4525, %v4576
  %v4631 = vmul.f32 %v4528, %v4576
  %v4632 = vmul.f32 %v4533, %v4576
  %v4633 = vmul.f32 %v4536, %v4576
  %v4634 = vmul.f32 %v4541, %v4576
  %v4635 = vmul.f32 %v4544, %v4576
  %v4636 = vmul.f32 %v4549, %v4576
  %v4637 = vmul.f32 %v4552, %v4576
  %v4638 = vmul.f32 %v4557, %v4576
  %v4639 = vmul.f32 %v4560, %v4576
  %v4640 = vmul.f32 %v4565, %v4576
  %v4641 = vmul.f32 %v4568, %v4576
  %v4642 = vld [vmem:[%s6] sm:$0x1]
  %v4644 = vlaneseq
  %v4645 = vshrl.u32 %v4644, 7
  %v4646 = vsub.s32 0, %v4645
  %v4647 = vrot.slane %v4642, %v4646
  %v4649 = vadd.f32 %v4578, %v4647
  %v4650 = vadd.f32 %v4579, %v4647
  %v4651 = vadd.f32 %v4580, %v4647
  %v4652 = vadd.f32 %v4581, %v4647
  %v4653 = vadd.f32 %v4582, %v4647
  %v4654 = vadd.f32 %v4583, %v4647
  %v4655 = vadd.f32 %v4584, %v4647
  %v4656 = vadd.f32 %v4585, %v4647
  %v4657 = vadd.f32 %v4586, %v4647
  %v4658 = vadd.f32 %v4587, %v4647
  %v4659 = vadd.f32 %v4588, %v4647
  %v4660 = vadd.f32 %v4589, %v4647
  %v4661 = vadd.f32 %v4590, %v4647
  %v4662 = vadd.f32 %v4591, %v4647
  %v4663 = vadd.f32 %v4592, %v4647
  %v4664 = vadd.f32 %v4593, %v4647
  %v4665 = vadd.f32 %v4594, %v4647
  %v4666 = vadd.f32 %v4595, %v4647
  %v4667 = vadd.f32 %v4596, %v4647
  %v4668 = vadd.f32 %v4597, %v4647
  %v4669 = vadd.f32 %v4598, %v4647
  %v4670 = vadd.f32 %v4599, %v4647
  %v4671 = vadd.f32 %v4600, %v4647
  %v4672 = vadd.f32 %v4601, %v4647
  %v4673 = vadd.f32 %v4602, %v4647
  %v4674 = vadd.f32 %v4603, %v4647
  %v4675 = vadd.f32 %v4604, %v4647
  %v4676 = vadd.f32 %v4605, %v4647
  %v4677 = vadd.f32 %v4606, %v4647
  %v4678 = vadd.f32 %v4607, %v4647
  %v4679 = vadd.f32 %v4608, %v4647
  %v4680 = vadd.f32 %v4609, %v4647
  %v4681 = vadd.f32 %v4610, %v4647
  %v4682 = vadd.f32 %v4611, %v4647
  %v4683 = vadd.f32 %v4612, %v4647
  %v4684 = vadd.f32 %v4613, %v4647
  %v4685 = vadd.f32 %v4614, %v4647
  %v4686 = vadd.f32 %v4615, %v4647
  %v4687 = vadd.f32 %v4616, %v4647
  %v4688 = vadd.f32 %v4617, %v4647
  %v4689 = vadd.f32 %v4618, %v4647
  %v4690 = vadd.f32 %v4619, %v4647
  %v4691 = vadd.f32 %v4620, %v4647
  %v4692 = vadd.f32 %v4621, %v4647
  %v4693 = vadd.f32 %v4622, %v4647
  %v4694 = vadd.f32 %v4623, %v4647
  %v4695 = vadd.f32 %v4624, %v4647
  %v4696 = vadd.f32 %v4625, %v4647
  %v4697 = vadd.f32 %v4626, %v4647
  %v4698 = vadd.f32 %v4627, %v4647
  %v4699 = vadd.f32 %v4628, %v4647
  %v4700 = vadd.f32 %v4629, %v4647
  %v4701 = vadd.f32 %v4630, %v4647
  %v4702 = vadd.f32 %v4631, %v4647
  %v4703 = vadd.f32 %v4632, %v4647
  %v4704 = vadd.f32 %v4633, %v4647
  %v4705 = vadd.f32 %v4634, %v4647
  %v4706 = vadd.f32 %v4635, %v4647
  %v4707 = vadd.f32 %v4636, %v4647
  %v4708 = vadd.f32 %v4637, %v4647
  %v4709 = vadd.f32 %v4638, %v4647
  %v4710 = vadd.f32 %v4639, %v4647
  %v4711 = vadd.f32 %v4640, %v4647
  %v4712 = vadd.f32 %v4641, %v4647
  %v4713 = vmax.f32 %v4649, 0.0
  %v4714 = vmax.f32 %v4650, 0.0
  %v4715 = vmax.f32 %v4651, 0.0
  %v4716 = vmax.f32 %v4652, 0.0
  %v4717 = vmax.f32 %v4653, 0.0
  %v4718 = vmax.f32 %v4654, 0.0
  %v4719 = vmax.f32 %v4655, 0.0
  %v4720 = vmax.f32 %v4656, 0.0
  %v4721 = vmax.f32 %v4657, 0.0
  %v4722 = vmax.f32 %v4658, 0.0
  %v4723 = vmax.f32 %v4659, 0.0
  %v4724 = vmax.f32 %v4660, 0.0
  %v4725 = vmax.f32 %v4661, 0.0
  %v4726 = vmax.f32 %v4662, 0.0
  %v4727 = vmax.f32 %v4663, 0.0
  %v4728 = vmax.f32 %v4664, 0.0
  %v4729 = vmax.f32 %v4665, 0.0
  %v4730 = vmax.f32 %v4666, 0.0
  %v4731 = vmax.f32 %v4667, 0.0
  %v4732 = vmax.f32 %v4668, 0.0
  %v4733 = vmax.f32 %v4669, 0.0
  %v4734 = vmax.f32 %v4670, 0.0
  %v4735 = vmax.f32 %v4671, 0.0
  %v4736 = vmax.f32 %v4672, 0.0
  %v4737 = vmax.f32 %v4673, 0.0
  %v4738 = vmax.f32 %v4674, 0.0
  %v4739 = vmax.f32 %v4675, 0.0
  %v4740 = vmax.f32 %v4676, 0.0
  %v4741 = vmax.f32 %v4677, 0.0
  %v4742 = vmax.f32 %v4678, 0.0
  %v4743 = vmax.f32 %v4679, 0.0
  %v4744 = vmax.f32 %v4680, 0.0
  %v4745 = vmax.f32 %v4681, 0.0
  %v4746 = vmax.f32 %v4682, 0.0
  %v4747 = vmax.f32 %v4683, 0.0
  %v4748 = vmax.f32 %v4684, 0.0
  %v4749 = vmax.f32 %v4685, 0.0
  %v4750 = vmax.f32 %v4686, 0.0
  %v4751 = vmax.f32 %v4687, 0.0
  %v4752 = vmax.f32 %v4688, 0.0
  %v4753 = vmax.f32 %v4689, 0.0
  %v4754 = vmax.f32 %v4690, 0.0
  %v4755 = vmax.f32 %v4691, 0.0
  %v4756 = vmax.f32 %v4692, 0.0
  %v4757 = vmax.f32 %v4693, 0.0
  %v4758 = vmax.f32 %v4694, 0.0
  %v4759 = vmax.f32 %v4695, 0.0
  %v4760 = vmax.f32 %v4696, 0.0
  %v4761 = vmax.f32 %v4697, 0.0
  %v4762 = vmax.f32 %v4698, 0.0
  %v4763 = vmax.f32 %v4699, 0.0
  %v4764 = vmax.f32 %v4700, 0.0
  %v4765 = vmax.f32 %v4701, 0.0
  %v4766 = vmax.f32 %v4702, 0.0
  %v4767 = vmax.f32 %v4703, 0.0
  %v4768 = vmax.f32 %v4704, 0.0
  %v4769 = vmax.f32 %v4705, 0.0
  %v4770 = vmax.f32 %v4706, 0.0
  %v4771 = vmax.f32 %v4707, 0.0
  %v4772 = vmax.f32 %v4708, 0.0
  %v4773 = vmax.f32 %v4709, 0.0
  %v4774 = vmax.f32 %v4710, 0.0
  %v4775 = vmax.f32 %v4711, 0.0
  %v4776 = vmax.f32 %v4712, 0.0
  %4777 = vst [vmem:[#allocation3] sm:$0xff] 0.0
  %4778 = vst [vmem:[#allocation3 + $0x8] sm:$0xff] 0.0
  %4779 = vst [vmem:[#allocation3 + $0x10] sm:$0xff] 0.0
  %4780 = vst [vmem:[#allocation3 + $0x18] sm:$0x1] 0.0
  %4781 = vst [vmem:[#allocation3 + $0x20] sm:$0xff] 0.0
  %4782 = vst [vmem:[#allocation3 + $0x28] sm:$0xff] 0.0
  %4783 = vst [vmem:[#allocation3 + $0x30] sm:$0xff] 0.0
  %4784 = vst [vmem:[#allocation3 + $0x38] sm:$0x1] 0.0
  %4785 = vst [vmem:[#allocation3 + $0x40] sm:$0xff] 0.0
  %4786 = vst [vmem:[#allocation3 + $0x48] sm:$0xff] 0.0
  %4787 = vst [vmem:[#allocation3 + $0x50] sm:$0xff] 0.0
  %4788 = vst [vmem:[#allocation3 + $0x58] sm:$0x1] 0.0
  %4789 = vst [vmem:[#allocation3 + $0x60] sm:$0xff] 0.0
  %4790 = vst [vmem:[#allocation3 + $0x68] sm:$0xff] 0.0
  %4791 = vst [vmem:[#allocation3 + $0x70] sm:$0xff] 0.0
  %4792 = vst [vmem:[#allocation3 + $0x78] sm:$0x1] 0.0
  %4793 = vst [vmem:[#allocation3 + $0x80] sm:$0xff] 0.0
  %4794 = vst [vmem:[#allocation3 + $0x88] sm:$0xff] 0.0
  %4795 = vst [vmem:[#allocation3 + $0x90] sm:$0xff] 0.0
  %4796 = vst [vmem:[#allocation3 + $0x98] sm:$0x1] 0.0
  %4797 = vst [vmem:[#allocation3 + $0xa0] sm:$0xff] 0.0
  %4798 = vst [vmem:[#allocation3 + $0xa8] sm:$0xff] 0.0
  %4799 = vst [vmem:[#allocation3 + $0xb0] sm:$0xff] 0.0
  %4800 = vst [vmem:[#allocation3 + $0xb8] sm:$0x1] 0.0
  %4801 = vst [vmem:[#allocation3 + $0xc0] sm:$0xff] 0.0
  %4802 = vst [vmem:[#allocation3 + $0xc8] sm:$0xff] 0.0
  %4803 = vst [vmem:[#allocation3 + $0xd0] sm:$0xff] 0.0
  %4804 = vst [vmem:[#allocation3 + $0xd8] sm:$0x1] 0.0
  %4805 = vst [vmem:[#allocation3 + $0xe0] sm:$0xff] 0.0
  %4806 = vst [vmem:[#allocation3 + $0xe8] sm:$0xff] 0.0
  %4807 = vst [vmem:[#allocation3 + $0xf0] sm:$0xff] 0.0
  %4808 = vst [vmem:[#allocation3 + $0xf8] sm:$0x1] 0.0
  %4809 = vst [vmem:[#allocation3 + $0x100] sm:$0xff] 0.0
  %4810 = vst [vmem:[#allocation3 + $0x108] sm:$0xff] 0.0
  %4811 = vst [vmem:[#allocation3 + $0x110] sm:$0xff] 0.0
  %4812 = vst [vmem:[#allocation3 + $0x118] sm:$0x1] 0.0
  %4813 = vst [vmem:[#allocation3 + $0x120] sm:$0xff] 0.0
  %4814 = vst [vmem:[#allocation3 + $0x128] sm:$0xff] 0.0
  %4815 = vst [vmem:[#allocation3 + $0x130] sm:$0xff] 0.0
  %4816 = vst [vmem:[#allocation3 + $0x138] sm:$0x1] 0.0
  %4817 = vst [vmem:[#allocation3 + $0x140] sm:$0xff] 0.0
  %4818 = vst [vmem:[#allocation3 + $0x148] sm:$0xff] 0.0
  %4819 = vst [vmem:[#allocation3 + $0x150] sm:$0xff] 0.0
  %4820 = vst [vmem:[#allocation3 + $0x158] sm:$0x1] 0.0
  %4821 = vst [vmem:[#allocation3 + $0x160] sm:$0xff] 0.0
  %4822 = vst [vmem:[#allocation3 + $0x168] sm:$0xff] 0.0
  %4823 = vst [vmem:[#allocation3 + $0x170] sm:$0xff] 0.0
  %4824 = vst [vmem:[#allocation3 + $0x178] sm:$0x1] 0.0
  %4825 = vst [vmem:[#allocation3 + $0x180] sm:$0xff] 0.0
  %4826 = vst [vmem:[#allocation3 + $0x188] sm:$0xff] 0.0
  %4827 = vst [vmem:[#allocation3 + $0x190] sm:$0xff] 0.0
  %4828 = vst [vmem:[#allocation3 + $0x198] sm:$0x1] 0.0
  %4829 = vst [vmem:[#allocation3 + $0x1a0] sm:$0xff] 0.0
  %4830 = vst [vmem:[#allocation3 + $0x1a8] sm:$0xff] 0.0
  %4831 = vst [vmem:[#allocation3 + $0x1b0] sm:$0xff] 0.0
  %4832 = vst [vmem:[#allocation3 + $0x1b8] sm:$0x1] 0.0
  %4833 = vst [vmem:[#allocation3 + $0x1c0] sm:$0xff] 0.0
  %4834 = vst [vmem:[#allocation3 + $0x1c8] sm:$0xff] 0.0
  %4835 = vst [vmem:[#allocation3 + $0x1d0] sm:$0xff] 0.0
  %4836 = vst [vmem:[#allocation3 + $0x1d8] sm:$0x1] 0.0
  %4837 = vst [vmem:[#allocation3 + $0x1e0] sm:$0xff] 0.0
  %4838 = vst [vmem:[#allocation3 + $0x1e8] sm:$0xff] 0.0
  %4839 = vst [vmem:[#allocation3 + $0x1f0] sm:$0xff] 0.0
  %4840 = vst [vmem:[#allocation3 + $0x1f8] sm:$0x1] 0.0
  %4841 = vst [vmem:[#allocation3 + $0x200] sm:$0xff] 0.0
  %4842 = vst [vmem:[#allocation3 + $0x208] sm:$0xff] 0.0
  %4843 = vst [vmem:[#allocation3 + $0x210] sm:$0xff] 0.0
  %4844 = vst [vmem:[#allocation3 + $0x218] sm:$0x1] 0.0
  %4845 = vst [vmem:[#allocation3 + $0x220] sm:$0xff] 0.0
  %4846 = vst [vmem:[#allocation3 + $0x228] sm:$0xff] 0.0
  %4847 = vst [vmem:[#allocation3 + $0x230] sm:$0xff] 0.0
  %4848 = vst [vmem:[#allocation3 + $0x238] sm:$0x1] 0.0
  %4849 = vst [vmem:[#allocation3 + $0x240] sm:$0xff] 0.0
  %4850 = vst [vmem:[#allocation3 + $0x248] sm:$0xff] 0.0
  %4851 = vst [vmem:[#allocation3 + $0x250] sm:$0xff] 0.0
  %4852 = vst [vmem:[#allocation3 + $0x258] sm:$0x1] 0.0
  %4853 = vst [vmem:[#allocation3 + $0x260] sm:$0xff] 0.0
  %4854 = vst [vmem:[#allocation3 + $0x268] sm:$0xff] 0.0
  %4855 = vst [vmem:[#allocation3 + $0x270] sm:$0xff] 0.0
  %4856 = vst [vmem:[#allocation3 + $0x278] sm:$0x1] 0.0
  %4857 = vst [vmem:[#allocation3 + $0x280] sm:$0xff] 0.0
  %4858 = vst [vmem:[#allocation3 + $0x288] sm:$0xff] 0.0
  %4859 = vst [vmem:[#allocation3 + $0x290] sm:$0xff] 0.0
  %4860 = vst [vmem:[#allocation3 + $0x298] sm:$0x1] 0.0
  %4861 = vst [vmem:[#allocation3 + $0x2a0] sm:$0xff] 0.0
  %4862 = vst [vmem:[#allocation3 + $0x2a8] sm:$0xff] 0.0
  %4863 = vst [vmem:[#allocation3 + $0x2b0] sm:$0xff] 0.0
  %4864 = vst [vmem:[#allocation3 + $0x2b8] sm:$0x1] 0.0
  %4865 = vst [vmem:[#allocation3 + $0x2c0] sm:$0xff] 0.0
  %4866 = vst [vmem:[#allocation3 + $0x2c8] sm:$0xff] 0.0
  %4867 = vst [vmem:[#allocation3 + $0x2d0] sm:$0xff] 0.0
  %4868 = vst [vmem:[#allocation3 + $0x2d8] sm:$0x1] 0.0
  %4869 = vst [vmem:[#allocation3 + $0x2e0] sm:$0xff] 0.0
  %4870 = vst [vmem:[#allocation3 + $0x2e8] sm:$0xff] 0.0
  %4871 = vst [vmem:[#allocation3 + $0x2f0] sm:$0xff] 0.0
  %4872 = vst [vmem:[#allocation3 + $0x2f8] sm:$0x1] 0.0
  %4873 = vst [vmem:[#allocation3 + $0x300] sm:$0xff] 0.0
  %4874 = vst [vmem:[#allocation3 + $0x308] sm:$0xff] 0.0
  %4875 = vst [vmem:[#allocation3 + $0x310] sm:$0xff] 0.0
  %4876 = vst [vmem:[#allocation3 + $0x318] sm:$0x1] 0.0
  %4877 = vst [vmem:[#allocation3 + $0x320] sm:$0xff] 0.0
  %4878 = vst [vmem:[#allocation3 + $0x328] sm:$0xff] 0.0
  %4879 = vst [vmem:[#allocation3 + $0x330] sm:$0xff] 0.0
  %4880 = vst [vmem:[#allocation3 + $0x338] sm:$0x1] 0.0
  %4881 = vst [vmem:[#allocation3 + $0x340] sm:$0xff] 0.0
  %4882 = vst [vmem:[#allocation3 + $0x348] sm:$0xff] 0.0
  %4883 = vst [vmem:[#allocation3 + $0x350] sm:$0xff] 0.0
  %4884 = vst [vmem:[#allocation3 + $0x358] sm:$0x1] 0.0
  %4885 = vst [vmem:[#allocation3 + $0x360] sm:$0xff] 0.0
  %4886 = vst [vmem:[#allocation3 + $0x368] sm:$0xff] 0.0
  %4887 = vst [vmem:[#allocation3 + $0x370] sm:$0xff] 0.0
  %4888 = vst [vmem:[#allocation3 + $0x378] sm:$0x1] 0.0
  %4889 = vst [vmem:[#allocation3 + $0x380] sm:$0xff] 0.0
  %4890 = vst [vmem:[#allocation3 + $0x388] sm:$0xff] 0.0
  %4891 = vst [vmem:[#allocation3 + $0x390] sm:$0xff] 0.0
  %4892 = vst [vmem:[#allocation3 + $0x398] sm:$0x1] 0.0
  %4893 = vst [vmem:[#allocation3 + $0x3a0] sm:$0xff] 0.0
  %4894 = vst [vmem:[#allocation3 + $0x3a8] sm:$0xff] 0.0
  %4895 = vst [vmem:[#allocation3 + $0x3b0] sm:$0xff] 0.0
  %4896 = vst [vmem:[#allocation3 + $0x3b8] sm:$0x1] 0.0
  %4897 = vst [vmem:[#allocation3 + $0x3c0] sm:$0xff] 0.0
  %4898 = vst [vmem:[#allocation3 + $0x3c8] sm:$0xff] 0.0
  %4899 = vst [vmem:[#allocation3 + $0x3d0] sm:$0xff] 0.0
  %4900 = vst [vmem:[#allocation3 + $0x3d8] sm:$0x1] 0.0
  %4901 = vst [vmem:[#allocation3 + $0x3e0] sm:$0xff] 0.0
  %4902 = vst [vmem:[#allocation3 + $0x3e8] sm:$0xff] 0.0
  %4903 = vst [vmem:[#allocation3 + $0x3f0] sm:$0xff] 0.0
  %4904 = vst [vmem:[#allocation3 + $0x3f8] sm:$0x1] 0.0
  %4905 = vst [vmem:[#allocation3 + $0x400] sm:$0xff] 0.0
  %4906 = vst [vmem:[#allocation3 + $0x408] sm:$0xff] 0.0
  %4907 = vst [vmem:[#allocation3 + $0x410] sm:$0xff] 0.0
  %4908 = vst [vmem:[#allocation3 + $0x418] sm:$0x1] 0.0
  %4909 = vst [vmem:[#allocation3 + $0x420] sm:$0xff] 0.0
  %4910 = vst [vmem:[#allocation3 + $0x428] sm:$0xff] 0.0
  %4911 = vst [vmem:[#allocation3 + $0x430] sm:$0xff] 0.0
  %4912 = vst [vmem:[#allocation3 + $0x438] sm:$0x1] 0.0
  %4913 = vst [vmem:[#allocation3 + $0x440] sm:$0xff] 0.0
  %4914 = vst [vmem:[#allocation3 + $0x448] sm:$0xff] 0.0
  %4915 = vst [vmem:[#allocation3 + $0x450] sm:$0xff] 0.0
  %4916 = vst [vmem:[#allocation3 + $0x458] sm:$0x1] 0.0
  %4917 = vst [vmem:[#allocation3 + $0x460] sm:$0xff] 0.0
  %4918 = vst [vmem:[#allocation3 + $0x468] sm:$0xff] 0.0
  %4919 = vst [vmem:[#allocation3 + $0x470] sm:$0xff] 0.0
  %4920 = vst [vmem:[#allocation3 + $0x478] sm:$0x1] 0.0
  %s4921 = scalar_lea.vmem [#allocation3], 32
  %4922 = vst [vmem:[%s4921 + $0x8] sm:$0xff] %v4713
  %4923 = vst [vmem:[%s4921 + $0x10] sm:$0xff] %v4714
  %4924 = vst [vmem:[%s4921 + $0x28] sm:$0xff] %v4715
  %4925 = vst [vmem:[%s4921 + $0x30] sm:$0xff] %v4716
  %4926 = vst [vmem:[%s4921 + $0x48] sm:$0xff] %v4717
  %4927 = vst [vmem:[%s4921 + $0x50] sm:$0xff] %v4718
  %4928 = vst [vmem:[%s4921 + $0x68] sm:$0xff] %v4719
  %4929 = vst [vmem:[%s4921 + $0x70] sm:$0xff] %v4720
  %4930 = vst [vmem:[%s4921 + $0x88] sm:$0xff] %v4721
  %4931 = vst [vmem:[%s4921 + $0x90] sm:$0xff] %v4722
  %4932 = vst [vmem:[%s4921 + $0xa8] sm:$0xff] %v4723
  %4933 = vst [vmem:[%s4921 + $0xb0] sm:$0xff] %v4724
  %4934 = vst [vmem:[%s4921 + $0xc8] sm:$0xff] %v4725
  %4935 = vst [vmem:[%s4921 + $0xd0] sm:$0xff] %v4726
  %4936 = vst [vmem:[%s4921 + $0xe8] sm:$0xff] %v4727
  %4937 = vst [vmem:[%s4921 + $0xf0] sm:$0xff] %v4728
  %4938 = vst [vmem:[%s4921 + $0x108] sm:$0xff] %v4729
  %4939 = vst [vmem:[%s4921 + $0x110] sm:$0xff] %v4730
  %4940 = vst [vmem:[%s4921 + $0x128] sm:$0xff] %v4731
  %4941 = vst [vmem:[%s4921 + $0x130] sm:$0xff] %v4732
  %4942 = vst [vmem:[%s4921 + $0x148] sm:$0xff] %v4733
  %4943 = vst [vmem:[%s4921 + $0x150] sm:$0xff] %v4734
  %4944 = vst [vmem:[%s4921 + $0x168] sm:$0xff] %v4735
  %4945 = vst [vmem:[%s4921 + $0x170] sm:$0xff] %v4736
  %4946 = vst [vmem:[%s4921 + $0x188] sm:$0xff] %v4737
  %4947 = vst [vmem:[%s4921 + $0x190] sm:$0xff] %v4738
  %4948 = vst [vmem:[%s4921 + $0x1a8] sm:$0xff] %v4739
  %4949 = vst [vmem:[%s4921 + $0x1b0] sm:$0xff] %v4740
  %4950 = vst [vmem:[%s4921 + $0x1c8] sm:$0xff] %v4741
  %4951 = vst [vmem:[%s4921 + $0x1d0] sm:$0xff] %v4742
  %4952 = vst [vmem:[%s4921 + $0x1e8] sm:$0xff] %v4743
  %4953 = vst [vmem:[%s4921 + $0x1f0] sm:$0xff] %v4744
  %4954 = vst [vmem:[%s4921 + $0x248] sm:$0xff] %v4745
  %4955 = vst [vmem:[%s4921 + $0x250] sm:$0xff] %v4746
  %4956 = vst [vmem:[%s4921 + $0x268] sm:$0xff] %v4747
  %4957 = vst [vmem:[%s4921 + $0x270] sm:$0xff] %v4748
  %4958 = vst [vmem:[%s4921 + $0x288] sm:$0xff] %v4749
  %4959 = vst [vmem:[%s4921 + $0x290] sm:$0xff] %v4750
  %4960 = vst [vmem:[%s4921 + $0x2a8] sm:$0xff] %v4751
  %4961 = vst [vmem:[%s4921 + $0x2b0] sm:$0xff] %v4752
  %4962 = vst [vmem:[%s4921 + $0x2c8] sm:$0xff] %v4753
  %4963 = vst [vmem:[%s4921 + $0x2d0] sm:$0xff] %v4754
  %4964 = vst [vmem:[%s4921 + $0x2e8] sm:$0xff] %v4755
  %4965 = vst [vmem:[%s4921 + $0x2f0] sm:$0xff] %v4756
  %4966 = vst [vmem:[%s4921 + $0x308] sm:$0xff] %v4757
  %4967 = vst [vmem:[%s4921 + $0x310] sm:$0xff] %v4758
  %4968 = vst [vmem:[%s4921 + $0x328] sm:$0xff] %v4759
  %4969 = vst [vmem:[%s4921 + $0x330] sm:$0xff] %v4760
  %4970 = vst [vmem:[%s4921 + $0x348] sm:$0xff] %v4761
  %4971 = vst [vmem:[%s4921 + $0x350] sm:$0xff] %v4762
  %4972 = vst [vmem:[%s4921 + $0x368] sm:$0xff] %v4763
  %4973 = vst [vmem:[%s4921 + $0x370] sm:$0xff] %v4764
  %4974 = vst [vmem:[%s4921 + $0x388] sm:$0xff] %v4765
  %4975 = vst [vmem:[%s4921 + $0x390] sm:$0xff] %v4766
  %4976 = vst [vmem:[%s4921 + $0x3a8] sm:$0xff] %v4767
  %4977 = vst [vmem:[%s4921 + $0x3b0] sm:$0xff] %v4768
  %4978 = vst [vmem:[%s4921 + $0x3c8] sm:$0xff] %v4769
  %4979 = vst [vmem:[%s4921 + $0x3d0] sm:$0xff] %v4770
  %4980 = vst [vmem:[%s4921 + $0x3e8] sm:$0xff] %v4771
  %4981 = vst [vmem:[%s4921 + $0x3f0] sm:$0xff] %v4772
  %4982 = vst [vmem:[%s4921 + $0x408] sm:$0xff] %v4773
  %4983 = vst [vmem:[%s4921 + $0x410] sm:$0xff] %v4774
  %4984 = vst [vmem:[%s4921 + $0x428] sm:$0xff] %v4775
  %4985 = vst [vmem:[%s4921 + $0x430] sm:$0xff] %v4776
  %v4986 = vld [vmem:[%s1044 + $0x8] sm:$0xff]
  %v4987 = vld [vmem:[%s1044 + $0x10] sm:$0xff]
  %v4988 = vld [vmem:[%s1044 + $0x28] sm:$0xff]
  %v4989 = vld [vmem:[%s1044 + $0x30] sm:$0xff]
  %v4990 = vld [vmem:[%s1044 + $0x48] sm:$0xff]
  %v4991 = vld [vmem:[%s1044 + $0x50] sm:$0xff]
  %v4992 = vld [vmem:[%s1044 + $0x68] sm:$0xff]
  %v4993 = vld [vmem:[%s1044 + $0x70] sm:$0xff]
  %v4994 = vld [vmem:[%s1044 + $0x88] sm:$0xff]
  %v4995 = vld [vmem:[%s1044 + $0x90] sm:$0xff]
  %v4996 = vld [vmem:[%s1044 + $0xa8] sm:$0xff]
  %v4997 = vld [vmem:[%s1044 + $0xb0] sm:$0xff]
  %v4998 = vld [vmem:[%s1044 + $0xc8] sm:$0xff]
  %v4999 = vld [vmem:[%s1044 + $0xd0] sm:$0xff]
  %v5000 = vld [vmem:[%s1044 + $0xe8] sm:$0xff]
  %v5001 = vld [vmem:[%s1044 + $0xf0] sm:$0xff]
  %v5002 = vld [vmem:[%s1044 + $0x108] sm:$0xff]
  %v5003 = vld [vmem:[%s1044 + $0x110] sm:$0xff]
  %v5004 = vld [vmem:[%s1044 + $0x128] sm:$0xff]
  %v5005 = vld [vmem:[%s1044 + $0x130] sm:$0xff]
  %v5006 = vld [vmem:[%s1044 + $0x148] sm:$0xff]
  %v5007 = vld [vmem:[%s1044 + $0x150] sm:$0xff]
  %v5008 = vld [vmem:[%s1044 + $0x168] sm:$0xff]
  %v5009 = vld [vmem:[%s1044 + $0x170] sm:$0xff]
  %v5010 = vld [vmem:[%s1044 + $0x188] sm:$0xff]
  %v5011 = vld [vmem:[%s1044 + $0x190] sm:$0xff]
  %v5012 = vld [vmem:[%s1044 + $0x1a8] sm:$0xff]
  %v5013 = vld [vmem:[%s1044 + $0x1b0] sm:$0xff]
  %v5014 = vld [vmem:[%s1044 + $0x1c8] sm:$0xff]
  %v5015 = vld [vmem:[%s1044 + $0x1d0] sm:$0xff]
  %v5016 = vld [vmem:[%s1044 + $0x1e8] sm:$0xff]
  %v5017 = vld [vmem:[%s1044 + $0x1f0] sm:$0xff]
  %v5018 = vld [vmem:[%s1044 + $0x248] sm:$0xff]
  %v5019 = vld [vmem:[%s1044 + $0x250] sm:$0xff]
  %v5020 = vld [vmem:[%s1044 + $0x268] sm:$0xff]
  %v5021 = vld [vmem:[%s1044 + $0x270] sm:$0xff]
  %v5022 = vld [vmem:[%s1044 + $0x288] sm:$0xff]
  %v5023 = vld [vmem:[%s1044 + $0x290] sm:$0xff]
  %v5024 = vld [vmem:[%s1044 + $0x2a8] sm:$0xff]
  %v5025 = vld [vmem:[%s1044 + $0x2b0] sm:$0xff]
  %v5026 = vld [vmem:[%s1044 + $0x2c8] sm:$0xff]
  %v5027 = vld [vmem:[%s1044 + $0x2d0] sm:$0xff]
  %v5028 = vld [vmem:[%s1044 + $0x2e8] sm:$0xff]
  %v5029 = vld [vmem:[%s1044 + $0x2f0] sm:$0xff]
  %v5030 = vld [vmem:[%s1044 + $0x308] sm:$0xff]
  %v5031 = vld [vmem:[%s1044 + $0x310] sm:$0xff]
  %v5032 = vld [vmem:[%s1044 + $0x328] sm:$0xff]
  %v5033 = vld [vmem:[%s1044 + $0x330] sm:$0xff]
  %v5034 = vld [vmem:[%s1044 + $0x348] sm:$0xff]
  %v5035 = vld [vmem:[%s1044 + $0x350] sm:$0xff]
  %v5036 = vld [vmem:[%s1044 + $0x368] sm:$0xff]
  %v5037 = vld [vmem:[%s1044 + $0x370] sm:$0xff]
  %v5038 = vld [vmem:[%s1044 + $0x388] sm:$0xff]
  %v5039 = vld [vmem:[%s1044 + $0x390] sm:$0xff]
  %v5040 = vld [vmem:[%s1044 + $0x3a8] sm:$0xff]
  %v5041 = vld [vmem:[%s1044 + $0x3b0] sm:$0xff]
  %v5042 = vld [vmem:[%s1044 + $0x3c8] sm:$0xff]
  %v5043 = vld [vmem:[%s1044 + $0x3d0] sm:$0xff]
  %v5044 = vld [vmem:[%s1044 + $0x3e8] sm:$0xff]
  %v5045 = vld [vmem:[%s1044 + $0x3f0] sm:$0xff]
  %v5046 = vld [vmem:[%s1044 + $0x408] sm:$0xff]
  %v5047 = vld [vmem:[%s1044 + $0x410] sm:$0xff]
  %v5048 = vld [vmem:[%s1044 + $0x428] sm:$0xff]
  %v5049 = vld [vmem:[%s1044 + $0x430] sm:$0xff]
  %v5050 = vld [vmem:[#allocation3 + $0x7] sm:$0xff]
  %v5051 = vld [vmem:[#allocation3 + $0xf] sm:$0xff]
  %v5052 = vld [vmem:[#allocation3 + $0x27] sm:$0xff]
  %v5053 = vld [vmem:[#allocation3 + $0x2f] sm:$0xff]
  %v5054 = vld [vmem:[#allocation3 + $0x47] sm:$0xff]
  %v5055 = vld [vmem:[#allocation3 + $0x4f] sm:$0xff]
  %v5056 = vld [vmem:[#allocation3 + $0x67] sm:$0xff]
  %v5057 = vld [vmem:[#allocation3 + $0x6f] sm:$0xff]
  %v5058 = vld [vmem:[#allocation3 + $0x87] sm:$0xff]
  %v5059 = vld [vmem:[#allocation3 + $0x8f] sm:$0xff]
  %v5060 = vld [vmem:[#allocation3 + $0xa7] sm:$0xff]
  %v5061 = vld [vmem:[#allocation3 + $0xaf] sm:$0xff]
  %v5062 = vld [vmem:[#allocation3 + $0xc7] sm:$0xff]
  %v5063 = vld [vmem:[#allocation3 + $0xcf] sm:$0xff]
  %v5064 = vld [vmem:[#allocation3 + $0xe7] sm:$0xff]
  %v5065 = vld [vmem:[#allocation3 + $0xef] sm:$0xff]
  %v5066 = vld [vmem:[#allocation3 + $0x107] sm:$0xff]
  %v5067 = vld [vmem:[#allocation3 + $0x10f] sm:$0xff]
  %v5068 = vld [vmem:[#allocation3 + $0x127] sm:$0xff]
  %v5069 = vld [vmem:[#allocation3 + $0x12f] sm:$0xff]
  %v5070 = vld [vmem:[#allocation3 + $0x147] sm:$0xff]
  %v5071 = vld [vmem:[#allocation3 + $0x14f] sm:$0xff]
  %v5072 = vld [vmem:[#allocation3 + $0x167] sm:$0xff]
  %v5073 = vld [vmem:[#allocation3 + $0x16f] sm:$0xff]
  %v5074 = vld [vmem:[#allocation3 + $0x187] sm:$0xff]
  %v5075 = vld [vmem:[#allocation3 + $0x18f] sm:$0xff]
  %v5076 = vld [vmem:[#allocation3 + $0x1a7] sm:$0xff]
  %v5077 = vld [vmem:[#allocation3 + $0x1af] sm:$0xff]
  %v5078 = vld [vmem:[#allocation3 + $0x1c7] sm:$0xff]
  %v5079 = vld [vmem:[#allocation3 + $0x1cf] sm:$0xff]
  %v5080 = vld [vmem:[#allocation3 + $0x1e7] sm:$0xff]
  %v5081 = vld [vmem:[#allocation3 + $0x1ef] sm:$0xff]
  %v5082 = vld [vmem:[#allocation3 + $0x247] sm:$0xff]
  %v5083 = vld [vmem:[#allocation3 + $0x24f] sm:$0xff]
  %v5084 = vld [vmem:[#allocation3 + $0x267] sm:$0xff]
  %v5085 = vld [vmem:[#allocation3 + $0x26f] sm:$0xff]
  %v5086 = vld [vmem:[#allocation3 + $0x287] sm:$0xff]
  %v5087 = vld [vmem:[#allocation3 + $0x28f] sm:$0xff]
  %v5088 = vld [vmem:[#allocation3 + $0x2a7] sm:$0xff]
  %v5089 = vld [vmem:[#allocation3 + $0x2af] sm:$0xff]
  %v5090 = vld [vmem:[#allocation3 + $0x2c7] sm:$0xff]
  %v5091 = vld [vmem:[#allocation3 + $0x2cf] sm:$0xff]
  %v5092 = vld [vmem:[#allocation3 + $0x2e7] sm:$0xff]
  %v5093 = vld [vmem:[#allocation3 + $0x2ef] sm:$0xff]
  %v5094 = vld [vmem:[#allocation3 + $0x307] sm:$0xff]
  %v5095 = vld [vmem:[#allocation3 + $0x30f] sm:$0xff]
  %v5096 = vld [vmem:[#allocation3 + $0x327] sm:$0xff]
  %v5097 = vld [vmem:[#allocation3 + $0x32f] sm:$0xff]
  %v5098 = vld [vmem:[#allocation3 + $0x347] sm:$0xff]
  %v5099 = vld [vmem:[#allocation3 + $0x34f] sm:$0xff]
  %v5100 = vld [vmem:[#allocation3 + $0x367] sm:$0xff]
  %v5101 = vld [vmem:[#allocation3 + $0x36f] sm:$0xff]
  %v5102 = vld [vmem:[#allocation3 + $0x387] sm:$0xff]
  %v5103 = vld [vmem:[#allocation3 + $0x38f] sm:$0xff]
  %v5104 = vld [vmem:[#allocation3 + $0x3a7] sm:$0xff]
  %v5105 = vld [vmem:[#allocation3 + $0x3af] sm:$0xff]
  %v5106 = vld [vmem:[#allocation3 + $0x3c7] sm:$0xff]
  %v5107 = vld [vmem:[#allocation3 + $0x3cf] sm:$0xff]
  %v5108 = vld [vmem:[#allocation3 + $0x3e7] sm:$0xff]
  %v5109 = vld [vmem:[#allocation3 + $0x3ef] sm:$0xff]
  %v5110 = vld [vmem:[#allocation3 + $0x407] sm:$0xff]
  %v5111 = vld [vmem:[#allocation3 + $0x40f] sm:$0xff]
  %v5112 = vld [vmem:[#allocation3 + $0x427] sm:$0xff]
  %v5113 = vld [vmem:[#allocation3 + $0x42f] sm:$0xff]
  %v5114 = vpack.c.bf16 %v5051, %v5050
  %v5115 = vpack.c.bf16 %v5053, %v5052
  %v5116 = vpack.c.bf16 %v5055, %v5054
  %v5117 = vpack.c.bf16 %v5057, %v5056
  %v5118 = vpack.c.bf16 %v5059, %v5058
  %v5119 = vpack.c.bf16 %v5061, %v5060
  %v5120 = vpack.c.bf16 %v5063, %v5062
  %v5121 = vpack.c.bf16 %v5065, %v5064
  %v5122 = vpack.c.bf16 %v5067, %v5066
  %v5123 = vpack.c.bf16 %v5069, %v5068
  %v5124 = vpack.c.bf16 %v5071, %v5070
  %v5125 = vpack.c.bf16 %v5073, %v5072
  %v5126 = vpack.c.bf16 %v5075, %v5074
  %v5127 = vpack.c.bf16 %v5077, %v5076
  %v5128 = vpack.c.bf16 %v5079, %v5078
  %v5129 = vpack.c.bf16 %v5081, %v5080
  %v5130 = vpack.c.bf16 %v5083, %v5082
  %v5131 = vpack.c.bf16 %v5085, %v5084
  %v5132 = vpack.c.bf16 %v5087, %v5086
  %v5133 = vpack.c.bf16 %v5089, %v5088
  %v5134 = vpack.c.bf16 %v5091, %v5090
  %v5135 = vpack.c.bf16 %v5093, %v5092
  %v5136 = vpack.c.bf16 %v5095, %v5094
  %v5137 = vpack.c.bf16 %v5097, %v5096
  %v5138 = vpack.c.bf16 %v5099, %v5098
  %v5139 = vpack.c.bf16 %v5101, %v5100
  %v5140 = vpack.c.bf16 %v5103, %v5102
  %v5141 = vpack.c.bf16 %v5105, %v5104
  %v5142 = vpack.c.bf16 %v5107, %v5106
  %v5143 = vpack.c.bf16 %v5109, %v5108
  %v5144 = vpack.c.bf16 %v5111, %v5110
  %v5145 = vpack.c.bf16 %v5113, %v5112
  %5146 = vst [vmem:[#allocation4] sm:$0xff] %v5114
  %5147 = vst [vmem:[#allocation4 + $0x48] sm:$0xff] %v5115
  %5148 = vst [vmem:[#allocation4 + $0x90] sm:$0xff] %v5116
  %5149 = vst [vmem:[#allocation4 + $0xd8] sm:$0xff] %v5117
  %5150 = vst [vmem:[#allocation4 + $0x120] sm:$0xff] %v5118
  %5151 = vst [vmem:[#allocation4 + $0x168] sm:$0xff] %v5119
  %5152 = vst [vmem:[#allocation4 + $0x1b0] sm:$0xff] %v5120
  %5153 = vst [vmem:[#allocation4 + $0x1f8] sm:$0xff] %v5121
  %5154 = vst [vmem:[#allocation4 + $0x240] sm:$0xff] %v5122
  %5155 = vst [vmem:[#allocation4 + $0x288] sm:$0xff] %v5123
  %5156 = vst [vmem:[#allocation4 + $0x2d0] sm:$0xff] %v5124
  %5157 = vst [vmem:[#allocation4 + $0x318] sm:$0xff] %v5125
  %5158 = vst [vmem:[#allocation4 + $0x360] sm:$0xff] %v5126
  %5159 = vst [vmem:[#allocation4 + $0x3a8] sm:$0xff] %v5127
  %5160 = vst [vmem:[#allocation4 + $0x3f0] sm:$0xff] %v5128
  %5161 = vst [vmem:[#allocation4 + $0x438] sm:$0xff] %v5129
  %5162 = vst [vmem:[#allocation4 + $0x480] sm:$0xff] %v5130
  %5163 = vst [vmem:[#allocation4 + $0x4c8] sm:$0xff] %v5131
  %5164 = vst [vmem:[#allocation4 + $0x510] sm:$0xff] %v5132
  %5165 = vst [vmem:[#allocation4 + $0x558] sm:$0xff] %v5133
  %5166 = vst [vmem:[#allocation4 + $0x5a0] sm:$0xff] %v5134
  %5167 = vst [vmem:[#allocation4 + $0x5e8] sm:$0xff] %v5135
  %5168 = vst [vmem:[#allocation4 + $0x630] sm:$0xff] %v5136
  %5169 = vst [vmem:[#allocation4 + $0x678] sm:$0xff] %v5137
  %5170 = vst [vmem:[#allocation4 + $0x6c0] sm:$0xff] %v5138
  %5171 = vst [vmem:[#allocation4 + $0x708] sm:$0xff] %v5139
  %5172 = vst [vmem:[#allocation4 + $0x750] sm:$0xff] %v5140
  %5173 = vst [vmem:[#allocation4 + $0x798] sm:$0xff] %v5141
  %5174 = vst [vmem:[#allocation4 + $0x7e0] sm:$0xff] %v5142
  %5175 = vst [vmem:[#allocation4 + $0x828] sm:$0xff] %v5143
  %5176 = vst [vmem:[#allocation4 + $0x870] sm:$0xff] %v5144
  %5177 = vst [vmem:[#allocation4 + $0x8b8] sm:$0xff] %v5145
  %v5178 = vld [vmem:[#allocation3 + $0x8] sm:$0xff]
  %v5179 = vld [vmem:[#allocation3 + $0x10] sm:$0xff]
  %v5180 = vld [vmem:[#allocation3 + $0x28] sm:$0xff]
  %v5181 = vld [vmem:[#allocation3 + $0x30] sm:$0xff]
  %v5182 = vld [vmem:[#allocation3 + $0x48] sm:$0xff]
  %v5183 = vld [vmem:[#allocation3 + $0x50] sm:$0xff]
  %v5184 = vld [vmem:[#allocation3 + $0x68] sm:$0xff]
  %v5185 = vld [vmem:[#allocation3 + $0x70] sm:$0xff]
  %v5186 = vld [vmem:[#allocation3 + $0x88] sm:$0xff]
  %v5187 = vld [vmem:[#allocation3 + $0x90] sm:$0xff]
  %v5188 = vld [vmem:[#allocation3 + $0xa8] sm:$0xff]
  %v5189 = vld [vmem:[#allocation3 + $0xb0] sm:$0xff]
  %v5190 = vld [vmem:[#allocation3 + $0xc8] sm:$0xff]
  %v5191 = vld [vmem:[#allocation3 + $0xd0] sm:$0xff]
  %v5192 = vld [vmem:[#allocation3 + $0xe8] sm:$0xff]
  %v5193 = vld [vmem:[#allocation3 + $0xf0] sm:$0xff]
  %v5194 = vld [vmem:[#allocation3 + $0x108] sm:$0xff]
  %v5195 = vld [vmem:[#allocation3 + $0x110] sm:$0xff]
  %v5196 = vld [vmem:[#allocation3 + $0x128] sm:$0xff]
  %v5197 = vld [vmem:[#allocation3 + $0x130] sm:$0xff]
  %v5198 = vld [vmem:[#allocation3 + $0x148] sm:$0xff]
  %v5199 = vld [vmem:[#allocation3 + $0x150] sm:$0xff]
  %v5200 = vld [vmem:[#allocation3 + $0x168] sm:$0xff]
  %v5201 = vld [vmem:[#allocation3 + $0x170] sm:$0xff]
  %v5202 = vld [vmem:[#allocation3 + $0x188] sm:$0xff]
  %v5203 = vld [vmem:[#allocation3 + $0x190] sm:$0xff]
  %v5204 = vld [vmem:[#allocation3 + $0x1a8] sm:$0xff]
  %v5205 = vld [vmem:[#allocation3 + $0x1b0] sm:$0xff]
  %v5206 = vld [vmem:[#allocation3 + $0x1c8] sm:$0xff]
  %v5207 = vld [vmem:[#allocation3 + $0x1d0] sm:$0xff]
  %v5208 = vld [vmem:[#allocation3 + $0x1e8] sm:$0xff]
  %v5209 = vld [vmem:[#allocation3 + $0x1f0] sm:$0xff]
  %v5210 = vld [vmem:[#allocation3 + $0x248] sm:$0xff]
  %v5211 = vld [vmem:[#allocation3 + $0x250] sm:$0xff]
  %v5212 = vld [vmem:[#allocation3 + $0x268] sm:$0xff]
  %v5213 = vld [vmem:[#allocation3 + $0x270] sm:$0xff]
  %v5214 = vld [vmem:[#allocation3 + $0x288] sm:$0xff]
  %v5215 = vld [vmem:[#allocation3 + $0x290] sm:$0xff]
  %v5216 = vld [vmem:[#allocation3 + $0x2a8] sm:$0xff]
  %v5217 = vld [vmem:[#allocation3 + $0x2b0] sm:$0xff]
  %v5218 = vld [vmem:[#allocation3 + $0x2c8] sm:$0xff]
  %v5219 = vld [vmem:[#allocation3 + $0x2d0] sm:$0xff]
  %v5220 = vld [vmem:[#allocation3 + $0x2e8] sm:$0xff]
  %v5221 = vld [vmem:[#allocation3 + $0x2f0] sm:$0xff]
  %v5222 = vld [vmem:[#allocation3 + $0x308] sm:$0xff]
  %v5223 = vld [vmem:[#allocation3 + $0x310] sm:$0xff]
  %v5224 = vld [vmem:[#allocation3 + $0x328] sm:$0xff]
  %v5225 = vld [vmem:[#allocation3 + $0x330] sm:$0xff]
  %v5226 = vld [vmem:[#allocation3 + $0x348] sm:$0xff]
  %v5227 = vld [vmem:[#allocation3 + $0x350] sm:$0xff]
  %v5228 = vld [vmem:[#allocation3 + $0x368] sm:$0xff]
  %v5229 = vld [vmem:[#allocation3 + $0x370] sm:$0xff]
  %v5230 = vld [vmem:[#allocation3 + $0x388] sm:$0xff]
  %v5231 = vld [vmem:[#allocation3 + $0x390] sm:$0xff]
  %v5232 = vld [vmem:[#allocation3 + $0x3a8] sm:$0xff]
  %v5233 = vld [vmem:[#allocation3 + $0x3b0] sm:$0xff]
  %v5234 = vld [vmem:[#allocation3 + $0x3c8] sm:$0xff]
  %v5235 = vld [vmem:[#allocation3 + $0x3d0] sm:$0xff]
  %v5236 = vld [vmem:[#allocation3 + $0x3e8] sm:$0xff]
  %v5237 = vld [vmem:[#allocation3 + $0x3f0] sm:$0xff]
  %v5238 = vld [vmem:[#allocation3 + $0x408] sm:$0xff]
  %v5239 = vld [vmem:[#allocation3 + $0x410] sm:$0xff]
  %v5240 = vld [vmem:[#allocation3 + $0x428] sm:$0xff]
  %v5241 = vld [vmem:[#allocation3 + $0x430] sm:$0xff]
  %v5242 = vpack.c.bf16 %v5179, %v5178
  %v5243 = vpack.c.bf16 %v5181, %v5180
  %v5244 = vpack.c.bf16 %v5183, %v5182
  %v5245 = vpack.c.bf16 %v5185, %v5184
  %v5246 = vpack.c.bf16 %v5187, %v5186
  %v5247 = vpack.c.bf16 %v5189, %v5188
  %v5248 = vpack.c.bf16 %v5191, %v5190
  %v5249 = vpack.c.bf16 %v5193, %v5192
  %v5250 = vpack.c.bf16 %v5195, %v5194
  %v5251 = vpack.c.bf16 %v5197, %v5196
  %v5252 = vpack.c.bf16 %v5199, %v5198
  %v5253 = vpack.c.bf16 %v5201, %v5200
  %v5254 = vpack.c.bf16 %v5203, %v5202
  %v5255 = vpack.c.bf16 %v5205, %v5204
  %v5256 = vpack.c.bf16 %v5207, %v5206
  %v5257 = vpack.c.bf16 %v5209, %v5208
  %v5258 = vpack.c.bf16 %v5211, %v5210
  %v5259 = vpack.c.bf16 %v5213, %v5212
  %v5260 = vpack.c.bf16 %v5215, %v5214
  %v5261 = vpack.c.bf16 %v5217, %v5216
  %v5262 = vpack.c.bf16 %v5219, %v5218
  %v5263 = vpack.c.bf16 %v5221, %v5220
  %v5264 = vpack.c.bf16 %v5223, %v5222
  %v5265 = vpack.c.bf16 %v5225, %v5224
  %v5266 = vpack.c.bf16 %v5227, %v5226
  %v5267 = vpack.c.bf16 %v5229, %v5228
  %v5268 = vpack.c.bf16 %v5231, %v5230
  %v5269 = vpack.c.bf16 %v5233, %v5232
  %v5270 = vpack.c.bf16 %v5235, %v5234
  %v5271 = vpack.c.bf16 %v5237, %v5236
  %v5272 = vpack.c.bf16 %v5239, %v5238
  %v5273 = vpack.c.bf16 %v5241, %v5240
  %5274 = vst [vmem:[#allocation4 + $0x8] sm:$0xff] %v5242
  %5275 = vst [vmem:[#allocation4 + $0x50] sm:$0xff] %v5243
  %5276 = vst [vmem:[#allocation4 + $0x98] sm:$0xff] %v5244
  %5277 = vst [vmem:[#allocation4 + $0xe0] sm:$0xff] %v5245
  %5278 = vst [vmem:[#allocation4 + $0x128] sm:$0xff] %v5246
  %5279 = vst [vmem:[#allocation4 + $0x170] sm:$0xff] %v5247
  %5280 = vst [vmem:[#allocation4 + $0x1b8] sm:$0xff] %v5248
  %5281 = vst [vmem:[#allocation4 + $0x200] sm:$0xff] %v5249
  %5282 = vst [vmem:[#allocation4 + $0x248] sm:$0xff] %v5250
  %5283 = vst [vmem:[#allocation4 + $0x290] sm:$0xff] %v5251
  %5284 = vst [vmem:[#allocation4 + $0x2d8] sm:$0xff] %v5252
  %5285 = vst [vmem:[#allocation4 + $0x320] sm:$0xff] %v5253
  %5286 = vst [vmem:[#allocation4 + $0x368] sm:$0xff] %v5254
  %5287 = vst [vmem:[#allocation4 + $0x3b0] sm:$0xff] %v5255
  %5288 = vst [vmem:[#allocation4 + $0x3f8] sm:$0xff] %v5256
  %5289 = vst [vmem:[#allocation4 + $0x440] sm:$0xff] %v5257
  %5290 = vst [vmem:[#allocation4 + $0x488] sm:$0xff] %v5258
  %5291 = vst [vmem:[#allocation4 + $0x4d0] sm:$0xff] %v5259
  %5292 = vst [vmem:[#allocation4 + $0x518] sm:$0xff] %v5260
  %5293 = vst [vmem:[#allocation4 + $0x560] sm:$0xff] %v5261
  %5294 = vst [vmem:[#allocation4 + $0x5a8] sm:$0xff] %v5262
  %5295 = vst [vmem:[#allocation4 + $0x5f0] sm:$0xff] %v5263
  %5296 = vst [vmem:[#allocation4 + $0x638] sm:$0xff] %v5264
  %5297 = vst [vmem:[#allocation4 + $0x680] sm:$0xff] %v5265
  %5298 = vst [vmem:[#allocation4 + $0x6c8] sm:$0xff] %v5266
  %5299 = vst [vmem:[#allocation4 + $0x710] sm:$0xff] %v5267
  %5300 = vst [vmem:[#allocation4 + $0x758] sm:$0xff] %v5268
  %5301 = vst [vmem:[#allocation4 + $0x7a0] sm:$0xff] %v5269
  %5302 = vst [vmem:[#allocation4 + $0x7e8] sm:$0xff] %v5270
  %5303 = vst [vmem:[#allocation4 + $0x830] sm:$0xff] %v5271
  %5304 = vst [vmem:[#allocation4 + $0x878] sm:$0xff] %v5272
  %5305 = vst [vmem:[#allocation4 + $0x8c0] sm:$0xff] %v5273
  %v5306 = vld [vmem:[#allocation3 + $0x9] sm:$0xff]
  %v5307 = vld [vmem:[#allocation3 + $0x11] sm:$0xff]
  %v5308 = vld [vmem:[#allocation3 + $0x29] sm:$0xff]
  %v5309 = vld [vmem:[#allocation3 + $0x31] sm:$0xff]
  %v5310 = vld [vmem:[#allocation3 + $0x49] sm:$0xff]
  %v5311 = vld [vmem:[#allocation3 + $0x51] sm:$0xff]
  %v5312 = vld [vmem:[#allocation3 + $0x69] sm:$0xff]
  %v5313 = vld [vmem:[#allocation3 + $0x71] sm:$0xff]
  %v5314 = vld [vmem:[#allocation3 + $0x89] sm:$0xff]
  %v5315 = vld [vmem:[#allocation3 + $0x91] sm:$0xff]
  %v5316 = vld [vmem:[#allocation3 + $0xa9] sm:$0xff]
  %v5317 = vld [vmem:[#allocation3 + $0xb1] sm:$0xff]
  %v5318 = vld [vmem:[#allocation3 + $0xc9] sm:$0xff]
  %v5319 = vld [vmem:[#allocation3 + $0xd1] sm:$0xff]
  %v5320 = vld [vmem:[#allocation3 + $0xe9] sm:$0xff]
  %v5321 = vld [vmem:[#allocation3 + $0xf1] sm:$0xff]
  %v5322 = vld [vmem:[#allocation3 + $0x109] sm:$0xff]
  %v5323 = vld [vmem:[#allocation3 + $0x111] sm:$0xff]
  %v5324 = vld [vmem:[#allocation3 + $0x129] sm:$0xff]
  %v5325 = vld [vmem:[#allocation3 + $0x131] sm:$0xff]
  %v5326 = vld [vmem:[#allocation3 + $0x149] sm:$0xff]
  %v5327 = vld [vmem:[#allocation3 + $0x151] sm:$0xff]
  %v5328 = vld [vmem:[#allocation3 + $0x169] sm:$0xff]
  %v5329 = vld [vmem:[#allocation3 + $0x171] sm:$0xff]
  %v5330 = vld [vmem:[#allocation3 + $0x189] sm:$0xff]
  %v5331 = vld [vmem:[#allocation3 + $0x191] sm:$0xff]
  %v5332 = vld [vmem:[#allocation3 + $0x1a9] sm:$0xff]
  %v5333 = vld [vmem:[#allocation3 + $0x1b1] sm:$0xff]
  %v5334 = vld [vmem:[#allocation3 + $0x1c9] sm:$0xff]
  %v5335 = vld [vmem:[#allocation3 + $0x1d1] sm:$0xff]
  %v5336 = vld [vmem:[#allocation3 + $0x1e9] sm:$0xff]
  %v5337 = vld [vmem:[#allocation3 + $0x1f1] sm:$0xff]
  %v5338 = vld [vmem:[#allocation3 + $0x249] sm:$0xff]
  %v5339 = vld [vmem:[#allocation3 + $0x251] sm:$0xff]
  %v5340 = vld [vmem:[#allocation3 + $0x269] sm:$0xff]
  %v5341 = vld [vmem:[#allocation3 + $0x271] sm:$0xff]
  %v5342 = vld [vmem:[#allocation3 + $0x289] sm:$0xff]
  %v5343 = vld [vmem:[#allocation3 + $0x291] sm:$0xff]
  %v5344 = vld [vmem:[#allocation3 + $0x2a9] sm:$0xff]
  %v5345 = vld [vmem:[#allocation3 + $0x2b1] sm:$0xff]
  %v5346 = vld [vmem:[#allocation3 + $0x2c9] sm:$0xff]
  %v5347 = vld [vmem:[#allocation3 + $0x2d1] sm:$0xff]
  %v5348 = vld [vmem:[#allocation3 + $0x2e9] sm:$0xff]
  %v5349 = vld [vmem:[#allocation3 + $0x2f1] sm:$0xff]
  %v5350 = vld [vmem:[#allocation3 + $0x309] sm:$0xff]
  %v5351 = vld [vmem:[#allocation3 + $0x311] sm:$0xff]
  %v5352 = vld [vmem:[#allocation3 + $0x329] sm:$0xff]
  %v5353 = vld [vmem:[#allocation3 + $0x331] sm:$0xff]
  %v5354 = vld [vmem:[#allocation3 + $0x349] sm:$0xff]
  %v5355 = vld [vmem:[#allocation3 + $0x351] sm:$0xff]
  %v5356 = vld [vmem:[#allocation3 + $0x369] sm:$0xff]
  %v5357 = vld [vmem:[#allocation3 + $0x371] sm:$0xff]
  %v5358 = vld [vmem:[#allocation3 + $0x389] sm:$0xff]
  %v5359 = vld [vmem:[#allocation3 + $0x391] sm:$0xff]
  %v5360 = vld [vmem:[#allocation3 + $0x3a9] sm:$0xff]
  %v5361 = vld [vmem:[#allocation3 + $0x3b1] sm:$0xff]
  %v5362 = vld [vmem:[#allocation3 + $0x3c9] sm:$0xff]
  %v5363 = vld [vmem:[#allocation3 + $0x3d1] sm:$0xff]
  %v5364 = vld [vmem:[#allocation3 + $0x3e9] sm:$0xff]
  %v5365 = vld [vmem:[#allocation3 + $0x3f1] sm:$0xff]
  %v5366 = vld [vmem:[#allocation3 + $0x409] sm:$0xff]
  %v5367 = vld [vmem:[#allocation3 + $0x411] sm:$0xff]
  %v5368 = vld [vmem:[#allocation3 + $0x429] sm:$0xff]
  %v5369 = vld [vmem:[#allocation3 + $0x431] sm:$0xff]
  %v5370 = vpack.c.bf16 %v5307, %v5306
  %v5371 = vpack.c.bf16 %v5309, %v5308
  %v5372 = vpack.c.bf16 %v5311, %v5310
  %v5373 = vpack.c.bf16 %v5313, %v5312
  %v5374 = vpack.c.bf16 %v5315, %v5314
  %v5375 = vpack.c.bf16 %v5317, %v5316
  %v5376 = vpack.c.bf16 %v5319, %v5318
  %v5377 = vpack.c.bf16 %v5321, %v5320
  %v5378 = vpack.c.bf16 %v5323, %v5322
  %v5379 = vpack.c.bf16 %v5325, %v5324
  %v5380 = vpack.c.bf16 %v5327, %v5326
  %v5381 = vpack.c.bf16 %v5329, %v5328
  %v5382 = vpack.c.bf16 %v5331, %v5330
  %v5383 = vpack.c.bf16 %v5333, %v5332
  %v5384 = vpack.c.bf16 %v5335, %v5334
  %v5385 = vpack.c.bf16 %v5337, %v5336
  %v5386 = vpack.c.bf16 %v5339, %v5338
  %v5387 = vpack.c.bf16 %v5341, %v5340
  %v5388 = vpack.c.bf16 %v5343, %v5342
  %v5389 = vpack.c.bf16 %v5345, %v5344
  %v5390 = vpack.c.bf16 %v5347, %v5346
  %v5391 = vpack.c.bf16 %v5349, %v5348
  %v5392 = vpack.c.bf16 %v5351, %v5350
  %v5393 = vpack.c.bf16 %v5353, %v5352
  %v5394 = vpack.c.bf16 %v5355, %v5354
  %v5395 = vpack.c.bf16 %v5357, %v5356
  %v5396 = vpack.c.bf16 %v5359, %v5358
  %v5397 = vpack.c.bf16 %v5361, %v5360
  %v5398 = vpack.c.bf16 %v5363, %v5362
  %v5399 = vpack.c.bf16 %v5365, %v5364
  %v5400 = vpack.c.bf16 %v5367, %v5366
  %v5401 = vpack.c.bf16 %v5369, %v5368
  %5402 = vst [vmem:[#allocation4 + $0x10] sm:$0xff] %v5370
  %5403 = vst [vmem:[#allocation4 + $0x58] sm:$0xff] %v5371
  %5404 = vst [vmem:[#allocation4 + $0xa0] sm:$0xff] %v5372
  %5405 = vst [vmem:[#allocation4 + $0xe8] sm:$0xff] %v5373
  %5406 = vst [vmem:[#allocation4 + $0x130] sm:$0xff] %v5374
  %5407 = vst [vmem:[#allocation4 + $0x178] sm:$0xff] %v5375
  %5408 = vst [vmem:[#allocation4 + $0x1c0] sm:$0xff] %v5376
  %5409 = vst [vmem:[#allocation4 + $0x208] sm:$0xff] %v5377
  %5410 = vst [vmem:[#allocation4 + $0x250] sm:$0xff] %v5378
  %5411 = vst [vmem:[#allocation4 + $0x298] sm:$0xff] %v5379
  %5412 = vst [vmem:[#allocation4 + $0x2e0] sm:$0xff] %v5380
  %5413 = vst [vmem:[#allocation4 + $0x328] sm:$0xff] %v5381
  %5414 = vst [vmem:[#allocation4 + $0x370] sm:$0xff] %v5382
  %5415 = vst [vmem:[#allocation4 + $0x3b8] sm:$0xff] %v5383
  %5416 = vst [vmem:[#allocation4 + $0x400] sm:$0xff] %v5384
  %5417 = vst [vmem:[#allocation4 + $0x448] sm:$0xff] %v5385
  %5418 = vst [vmem:[#allocation4 + $0x490] sm:$0xff] %v5386
  %5419 = vst [vmem:[#allocation4 + $0x4d8] sm:$0xff] %v5387
  %5420 = vst [vmem:[#allocation4 + $0x520] sm:$0xff] %v5388
  %5421 = vst [vmem:[#allocation4 + $0x568] sm:$0xff] %v5389
  %5422 = vst [vmem:[#allocation4 + $0x5b0] sm:$0xff] %v5390
  %5423 = vst [vmem:[#allocation4 + $0x5f8] sm:$0xff] %v5391
  %5424 = vst [vmem:[#allocation4 + $0x640] sm:$0xff] %v5392
  %5425 = vst [vmem:[#allocation4 + $0x688] sm:$0xff] %v5393
  %5426 = vst [vmem:[#allocation4 + $0x6d0] sm:$0xff] %v5394
  %5427 = vst [vmem:[#allocation4 + $0x718] sm:$0xff] %v5395
  %5428 = vst [vmem:[#allocation4 + $0x760] sm:$0xff] %v5396
  %5429 = vst [vmem:[#allocation4 + $0x7a8] sm:$0xff] %v5397
  %5430 = vst [vmem:[#allocation4 + $0x7f0] sm:$0xff] %v5398
  %5431 = vst [vmem:[#allocation4 + $0x838] sm:$0xff] %v5399
  %5432 = vst [vmem:[#allocation4 + $0x880] sm:$0xff] %v5400
  %5433 = vst [vmem:[#allocation4 + $0x8c8] sm:$0xff] %v5401
  %v5434 = vld [vmem:[%s4921 + $0x7] sm:$0xff]
  %v5435 = vld [vmem:[%s4921 + $0xf] sm:$0xff]
  %v5436 = vld [vmem:[%s4921 + $0x27] sm:$0xff]
  %v5437 = vld [vmem:[%s4921 + $0x2f] sm:$0xff]
  %v5438 = vld [vmem:[%s4921 + $0x47] sm:$0xff]
  %v5439 = vld [vmem:[%s4921 + $0x4f] sm:$0xff]
  %v5440 = vld [vmem:[%s4921 + $0x67] sm:$0xff]
  %v5441 = vld [vmem:[%s4921 + $0x6f] sm:$0xff]
  %v5442 = vld [vmem:[%s4921 + $0x87] sm:$0xff]
  %v5443 = vld [vmem:[%s4921 + $0x8f] sm:$0xff]
  %v5444 = vld [vmem:[%s4921 + $0xa7] sm:$0xff]
  %v5445 = vld [vmem:[%s4921 + $0xaf] sm:$0xff]
  %v5446 = vld [vmem:[%s4921 + $0xc7] sm:$0xff]
  %v5447 = vld [vmem:[%s4921 + $0xcf] sm:$0xff]
  %v5448 = vld [vmem:[%s4921 + $0xe7] sm:$0xff]
  %v5449 = vld [vmem:[%s4921 + $0xef] sm:$0xff]
  %v5450 = vld [vmem:[%s4921 + $0x107] sm:$0xff]
  %v5451 = vld [vmem:[%s4921 + $0x10f] sm:$0xff]
  %v5452 = vld [vmem:[%s4921 + $0x127] sm:$0xff]
  %v5453 = vld [vmem:[%s4921 + $0x12f] sm:$0xff]
  %v5454 = vld [vmem:[%s4921 + $0x147] sm:$0xff]
  %v5455 = vld [vmem:[%s4921 + $0x14f] sm:$0xff]
  %v5456 = vld [vmem:[%s4921 + $0x167] sm:$0xff]
  %v5457 = vld [vmem:[%s4921 + $0x16f] sm:$0xff]
  %v5458 = vld [vmem:[%s4921 + $0x187] sm:$0xff]
  %v5459 = vld [vmem:[%s4921 + $0x18f] sm:$0xff]
  %v5460 = vld [vmem:[%s4921 + $0x1a7] sm:$0xff]
  %v5461 = vld [vmem:[%s4921 + $0x1af] sm:$0xff]
  %v5462 = vld [vmem:[%s4921 + $0x1c7] sm:$0xff]
  %v5463 = vld [vmem:[%s4921 + $0x1cf] sm:$0xff]
  %v5464 = vld [vmem:[%s4921 + $0x1e7] sm:$0xff]
  %v5465 = vld [vmem:[%s4921 + $0x1ef] sm:$0xff]
  %v5466 = vld [vmem:[%s4921 + $0x247] sm:$0xff]
  %v5467 = vld [vmem:[%s4921 + $0x24f] sm:$0xff]
  %v5468 = vld [vmem:[%s4921 + $0x267] sm:$0xff]
  %v5469 = vld [vmem:[%s4921 + $0x26f] sm:$0xff]
  %v5470 = vld [vmem:[%s4921 + $0x287] sm:$0xff]
  %v5471 = vld [vmem:[%s4921 + $0x28f] sm:$0xff]
  %v5472 = vld [vmem:[%s4921 + $0x2a7] sm:$0xff]
  %v5473 = vld [vmem:[%s4921 + $0x2af] sm:$0xff]
  %v5474 = vld [vmem:[%s4921 + $0x2c7] sm:$0xff]
  %v5475 = vld [vmem:[%s4921 + $0x2cf] sm:$0xff]
  %v5476 = vld [vmem:[%s4921 + $0x2e7] sm:$0xff]
  %v5477 = vld [vmem:[%s4921 + $0x2ef] sm:$0xff]
  %v5478 = vld [vmem:[%s4921 + $0x307] sm:$0xff]
  %v5479 = vld [vmem:[%s4921 + $0x30f] sm:$0xff]
  %v5480 = vld [vmem:[%s4921 + $0x327] sm:$0xff]
  %v5481 = vld [vmem:[%s4921 + $0x32f] sm:$0xff]
  %v5482 = vld [vmem:[%s4921 + $0x347] sm:$0xff]
  %v5483 = vld [vmem:[%s4921 + $0x34f] sm:$0xff]
  %v5484 = vld [vmem:[%s4921 + $0x367] sm:$0xff]
  %v5485 = vld [vmem:[%s4921 + $0x36f] sm:$0xff]
  %v5486 = vld [vmem:[%s4921 + $0x387] sm:$0xff]
  %v5487 = vld [vmem:[%s4921 + $0x38f] sm:$0xff]
  %v5488 = vld [vmem:[%s4921 + $0x3a7] sm:$0xff]
  %v5489 = vld [vmem:[%s4921 + $0x3af] sm:$0xff]
  %v5490 = vld [vmem:[%s4921 + $0x3c7] sm:$0xff]
  %v5491 = vld [vmem:[%s4921 + $0x3cf] sm:$0xff]
  %v5492 = vld [vmem:[%s4921 + $0x3e7] sm:$0xff]
  %v5493 = vld [vmem:[%s4921 + $0x3ef] sm:$0xff]
  %v5494 = vld [vmem:[%s4921 + $0x407] sm:$0xff]
  %v5495 = vld [vmem:[%s4921 + $0x40f] sm:$0xff]
  %v5496 = vld [vmem:[%s4921 + $0x427] sm:$0xff]
  %v5497 = vld [vmem:[%s4921 + $0x42f] sm:$0xff]
  %v5498 = vpack.c.bf16 %v5435, %v5434
  %v5499 = vpack.c.bf16 %v5437, %v5436
  %v5500 = vpack.c.bf16 %v5439, %v5438
  %v5501 = vpack.c.bf16 %v5441, %v5440
  %v5502 = vpack.c.bf16 %v5443, %v5442
  %v5503 = vpack.c.bf16 %v5445, %v5444
  %v5504 = vpack.c.bf16 %v5447, %v5446
  %v5505 = vpack.c.bf16 %v5449, %v5448
  %v5506 = vpack.c.bf16 %v5451, %v5450
  %v5507 = vpack.c.bf16 %v5453, %v5452
  %v5508 = vpack.c.bf16 %v5455, %v5454
  %v5509 = vpack.c.bf16 %v5457, %v5456
  %v5510 = vpack.c.bf16 %v5459, %v5458
  %v5511 = vpack.c.bf16 %v5461, %v5460
  %v5512 = vpack.c.bf16 %v5463, %v5462
  %v5513 = vpack.c.bf16 %v5465, %v5464
  %v5514 = vpack.c.bf16 %v5467, %v5466
  %v5515 = vpack.c.bf16 %v5469, %v5468
  %v5516 = vpack.c.bf16 %v5471, %v5470
  %v5517 = vpack.c.bf16 %v5473, %v5472
  %v5518 = vpack.c.bf16 %v5475, %v5474
  %v5519 = vpack.c.bf16 %v5477, %v5476
  %v5520 = vpack.c.bf16 %v5479, %v5478
  %v5521 = vpack.c.bf16 %v5481, %v5480
  %v5522 = vpack.c.bf16 %v5483, %v5482
  %v5523 = vpack.c.bf16 %v5485, %v5484
  %v5524 = vpack.c.bf16 %v5487, %v5486
  %v5525 = vpack.c.bf16 %v5489, %v5488
  %v5526 = vpack.c.bf16 %v5491, %v5490
  %v5527 = vpack.c.bf16 %v5493, %v5492
  %v5528 = vpack.c.bf16 %v5495, %v5494
  %v5529 = vpack.c.bf16 %v5497, %v5496
  %5530 = vst [vmem:[#allocation4 + $0x18] sm:$0xff] %v5498
  %5531 = vst [vmem:[#allocation4 + $0x60] sm:$0xff] %v5499
  %5532 = vst [vmem:[#allocation4 + $0xa8] sm:$0xff] %v5500
  %5533 = vst [vmem:[#allocation4 + $0xf0] sm:$0xff] %v5501
  %5534 = vst [vmem:[#allocation4 + $0x138] sm:$0xff] %v5502
  %5535 = vst [vmem:[#allocation4 + $0x180] sm:$0xff] %v5503
  %5536 = vst [vmem:[#allocation4 + $0x1c8] sm:$0xff] %v5504
  %5537 = vst [vmem:[#allocation4 + $0x210] sm:$0xff] %v5505
  %5538 = vst [vmem:[#allocation4 + $0x258] sm:$0xff] %v5506
  %5539 = vst [vmem:[#allocation4 + $0x2a0] sm:$0xff] %v5507
  %5540 = vst [vmem:[#allocation4 + $0x2e8] sm:$0xff] %v5508
  %5541 = vst [vmem:[#allocation4 + $0x330] sm:$0xff] %v5509
  %5542 = vst [vmem:[#allocation4 + $0x378] sm:$0xff] %v5510
  %5543 = vst [vmem:[#allocation4 + $0x3c0] sm:$0xff] %v5511
  %5544 = vst [vmem:[#allocation4 + $0x408] sm:$0xff] %v5512
  %5545 = vst [vmem:[#allocation4 + $0x450] sm:$0xff] %v5513
  %5546 = vst [vmem:[#allocation4 + $0x498] sm:$0xff] %v5514
  %5547 = vst [vmem:[#allocation4 + $0x4e0] sm:$0xff] %v5515
  %5548 = vst [vmem:[#allocation4 + $0x528] sm:$0xff] %v5516
  %5549 = vst [vmem:[#allocation4 + $0x570] sm:$0xff] %v5517
  %5550 = vst [vmem:[#allocation4 + $0x5b8] sm:$0xff] %v5518
  %5551 = vst [vmem:[#allocation4 + $0x600] sm:$0xff] %v5519
  %5552 = vst [vmem:[#allocation4 + $0x648] sm:$0xff] %v5520
  %5553 = vst [vmem:[#allocation4 + $0x690] sm:$0xff] %v5521
  %5554 = vst [vmem:[#allocation4 + $0x6d8] sm:$0xff] %v5522
  %5555 = vst [vmem:[#allocation4 + $0x720] sm:$0xff] %v5523
  %5556 = vst [vmem:[#allocation4 + $0x768] sm:$0xff] %v5524
  %5557 = vst [vmem:[#allocation4 + $0x7b0] sm:$0xff] %v5525
  %5558 = vst [vmem:[#allocation4 + $0x7f8] sm:$0xff] %v5526
  %5559 = vst [vmem:[#allocation4 + $0x840] sm:$0xff] %v5527
  %5560 = vst [vmem:[#allocation4 + $0x888] sm:$0xff] %v5528
  %5561 = vst [vmem:[#allocation4 + $0x8d0] sm:$0xff] %v5529
  %v5562 = vld [vmem:[%s4921 + $0x8] sm:$0xff]
  %v5563 = vld [vmem:[%s4921 + $0x10] sm:$0xff]
  %v5564 = vld [vmem:[%s4921 + $0x28] sm:$0xff]
  %v5565 = vld [vmem:[%s4921 + $0x30] sm:$0xff]
  %v5566 = vld [vmem:[%s4921 + $0x48] sm:$0xff]
  %v5567 = vld [vmem:[%s4921 + $0x50] sm:$0xff]
  %v5568 = vld [vmem:[%s4921 + $0x68] sm:$0xff]
  %v5569 = vld [vmem:[%s4921 + $0x70] sm:$0xff]
  %v5570 = vld [vmem:[%s4921 + $0x88] sm:$0xff]
  %v5571 = vld [vmem:[%s4921 + $0x90] sm:$0xff]
  %v5572 = vld [vmem:[%s4921 + $0xa8] sm:$0xff]
  %v5573 = vld [vmem:[%s4921 + $0xb0] sm:$0xff]
  %v5574 = vld [vmem:[%s4921 + $0xc8] sm:$0xff]
  %v5575 = vld [vmem:[%s4921 + $0xd0] sm:$0xff]
  %v5576 = vld [vmem:[%s4921 + $0xe8] sm:$0xff]
  %v5577 = vld [vmem:[%s4921 + $0xf0] sm:$0xff]
  %v5578 = vld [vmem:[%s4921 + $0x108] sm:$0xff]
  %v5579 = vld [vmem:[%s4921 + $0x110] sm:$0xff]
  %v5580 = vld [vmem:[%s4921 + $0x128] sm:$0xff]
  %v5581 = vld [vmem:[%s4921 + $0x130] sm:$0xff]
  %v5582 = vld [vmem:[%s4921 + $0x148] sm:$0xff]
  %v5583 = vld [vmem:[%s4921 + $0x150] sm:$0xff]
  %v5584 = vld [vmem:[%s4921 + $0x168] sm:$0xff]
  %v5585 = vld [vmem:[%s4921 + $0x170] sm:$0xff]
  %v5586 = vld [vmem:[%s4921 + $0x188] sm:$0xff]
  %v5587 = vld [vmem:[%s4921 + $0x190] sm:$0xff]
  %v5588 = vld [vmem:[%s4921 + $0x1a8] sm:$0xff]
  %v5589 = vld [vmem:[%s4921 + $0x1b0] sm:$0xff]
  %v5590 = vld [vmem:[%s4921 + $0x1c8] sm:$0xff]
  %v5591 = vld [vmem:[%s4921 + $0x1d0] sm:$0xff]
  %v5592 = vld [vmem:[%s4921 + $0x1e8] sm:$0xff]
  %v5593 = vld [vmem:[%s4921 + $0x1f0] sm:$0xff]
  %v5594 = vld [vmem:[%s4921 + $0x248] sm:$0xff]
  %v5595 = vld [vmem:[%s4921 + $0x250] sm:$0xff]
  %v5596 = vld [vmem:[%s4921 + $0x268] sm:$0xff]
  %v5597 = vld [vmem:[%s4921 + $0x270] sm:$0xff]
  %v5598 = vld [vmem:[%s4921 + $0x288] sm:$0xff]
  %v5599 = vld [vmem:[%s4921 + $0x290] sm:$0xff]
  %v5600 = vld [vmem:[%s4921 + $0x2a8] sm:$0xff]
  %v5601 = vld [vmem:[%s4921 + $0x2b0] sm:$0xff]
  %v5602 = vld [vmem:[%s4921 + $0x2c8] sm:$0xff]
  %v5603 = vld [vmem:[%s4921 + $0x2d0] sm:$0xff]
  %v5604 = vld [vmem:[%s4921 + $0x2e8] sm:$0xff]
  %v5605 = vld [vmem:[%s4921 + $0x2f0] sm:$0xff]
  %v5606 = vld [vmem:[%s4921 + $0x308] sm:$0xff]
  %v5607 = vld [vmem:[%s4921 + $0x310] sm:$0xff]
  %v5608 = vld [vmem:[%s4921 + $0x328] sm:$0xff]
  %v5609 = vld [vmem:[%s4921 + $0x330] sm:$0xff]
  %v5610 = vld [vmem:[%s4921 + $0x348] sm:$0xff]
  %v5611 = vld [vmem:[%s4921 + $0x350] sm:$0xff]
  %v5612 = vld [vmem:[%s4921 + $0x368] sm:$0xff]
  %v5613 = vld [vmem:[%s4921 + $0x370] sm:$0xff]
  %v5614 = vld [vmem:[%s4921 + $0x388] sm:$0xff]
  %v5615 = vld [vmem:[%s4921 + $0x390] sm:$0xff]
  %v5616 = vld [vmem:[%s4921 + $0x3a8] sm:$0xff]
  %v5617 = vld [vmem:[%s4921 + $0x3b0] sm:$0xff]
  %v5618 = vld [vmem:[%s4921 + $0x3c8] sm:$0xff]
  %v5619 = vld [vmem:[%s4921 + $0x3d0] sm:$0xff]
  %v5620 = vld [vmem:[%s4921 + $0x3e8] sm:$0xff]
  %v5621 = vld [vmem:[%s4921 + $0x3f0] sm:$0xff]
  %v5622 = vld [vmem:[%s4921 + $0x408] sm:$0xff]
  %v5623 = vld [vmem:[%s4921 + $0x410] sm:$0xff]
  %v5624 = vld [vmem:[%s4921 + $0x428] sm:$0xff]
  %v5625 = vld [vmem:[%s4921 + $0x430] sm:$0xff]
  %v5626 = vpack.c.bf16 %v5563, %v5562
  %v5627 = vpack.c.bf16 %v5565, %v5564
  %v5628 = vpack.c.bf16 %v5567, %v5566
  %v5629 = vpack.c.bf16 %v5569, %v5568
  %v5630 = vpack.c.bf16 %v5571, %v5570
  %v5631 = vpack.c.bf16 %v5573, %v5572
  %v5632 = vpack.c.bf16 %v5575, %v5574
  %v5633 = vpack.c.bf16 %v5577, %v5576
  %v5634 = vpack.c.bf16 %v5579, %v5578
  %v5635 = vpack.c.bf16 %v5581, %v5580
  %v5636 = vpack.c.bf16 %v5583, %v5582
  %v5637 = vpack.c.bf16 %v5585, %v5584
  %v5638 = vpack.c.bf16 %v5587, %v5586
  %v5639 = vpack.c.bf16 %v5589, %v5588
  %v5640 = vpack.c.bf16 %v5591, %v5590
  %v5641 = vpack.c.bf16 %v5593, %v5592
  %v5642 = vpack.c.bf16 %v5595, %v5594
  %v5643 = vpack.c.bf16 %v5597, %v5596
  %v5644 = vpack.c.bf16 %v5599, %v5598
  %v5645 = vpack.c.bf16 %v5601, %v5600
  %v5646 = vpack.c.bf16 %v5603, %v5602
  %v5647 = vpack.c.bf16 %v5605, %v5604
  %v5648 = vpack.c.bf16 %v5607, %v5606
  %v5649 = vpack.c.bf16 %v5609, %v5608
  %v5650 = vpack.c.bf16 %v5611, %v5610
  %v5651 = vpack.c.bf16 %v5613, %v5612
  %v5652 = vpack.c.bf16 %v5615, %v5614
  %v5653 = vpack.c.bf16 %v5617, %v5616
  %v5654 = vpack.c.bf16 %v5619, %v5618
  %v5655 = vpack.c.bf16 %v5621, %v5620
  %v5656 = vpack.c.bf16 %v5623, %v5622
  %v5657 = vpack.c.bf16 %v5625, %v5624
  %5658 = vst [vmem:[#allocation4 + $0x20] sm:$0xff] %v5626
  %5659 = vst [vmem:[#allocation4 + $0x68] sm:$0xff] %v5627
  %5660 = vst [vmem:[#allocation4 + $0xb0] sm:$0xff] %v5628
  %5661 = vst [vmem:[#allocation4 + $0xf8] sm:$0xff] %v5629
  %5662 = vst [vmem:[#allocation4 + $0x140] sm:$0xff] %v5630
  %5663 = vst [vmem:[#allocation4 + $0x188] sm:$0xff] %v5631
  %5664 = vst [vmem:[#allocation4 + $0x1d0] sm:$0xff] %v5632
  %5665 = vst [vmem:[#allocation4 + $0x218] sm:$0xff] %v5633
  %5666 = vst [vmem:[#allocation4 + $0x260] sm:$0xff] %v5634
  %5667 = vst [vmem:[#allocation4 + $0x2a8] sm:$0xff] %v5635
  %5668 = vst [vmem:[#allocation4 + $0x2f0] sm:$0xff] %v5636
  %5669 = vst [vmem:[#allocation4 + $0x338] sm:$0xff] %v5637
  %5670 = vst [vmem:[#allocation4 + $0x380] sm:$0xff] %v5638
  %5671 = vst [vmem:[#allocation4 + $0x3c8] sm:$0xff] %v5639
  %5672 = vst [vmem:[#allocation4 + $0x410] sm:$0xff] %v5640
  %5673 = vst [vmem:[#allocation4 + $0x458] sm:$0xff] %v5641
  %5674 = vst [vmem:[#allocation4 + $0x4a0] sm:$0xff] %v5642
  %5675 = vst [vmem:[#allocation4 + $0x4e8] sm:$0xff] %v5643
  %5676 = vst [vmem:[#allocation4 + $0x530] sm:$0xff] %v5644
  %5677 = vst [vmem:[#allocation4 + $0x578] sm:$0xff] %v5645
  %5678 = vst [vmem:[#allocation4 + $0x5c0] sm:$0xff] %v5646
  %5679 = vst [vmem:[#allocation4 + $0x608] sm:$0xff] %v5647
  %5680 = vst [vmem:[#allocation4 + $0x650] sm:$0xff] %v5648
  %5681 = vst [vmem:[#allocation4 + $0x698] sm:$0xff] %v5649
  %5682 = vst [vmem:[#allocation4 + $0x6e0] sm:$0xff] %v5650
  %5683 = vst [vmem:[#allocation4 + $0x728] sm:$0xff] %v5651
  %5684 = vst [vmem:[#allocation4 + $0x770] sm:$0xff] %v5652
  %5685 = vst [vmem:[#allocation4 + $0x7b8] sm:$0xff] %v5653
  %5686 = vst [vmem:[#allocation4 + $0x800] sm:$0xff] %v5654
  %5687 = vst [vmem:[#allocation4 + $0x848] sm:$0xff] %v5655
  %5688 = vst [vmem:[#allocation4 + $0x890] sm:$0xff] %v5656
  %5689 = vst [vmem:[#allocation4 + $0x8d8] sm:$0xff] %v5657
  %v5690 = vld [vmem:[%s4921 + $0x9] sm:$0xff]
  %v5691 = vld [vmem:[%s4921 + $0x11] sm:$0xff]
  %v5692 = vld [vmem:[%s4921 + $0x29] sm:$0xff]
  %v5693 = vld [vmem:[%s4921 + $0x31] sm:$0xff]
  %v5694 = vld [vmem:[%s4921 + $0x49] sm:$0xff]
  %v5695 = vld [vmem:[%s4921 + $0x51] sm:$0xff]
  %v5696 = vld [vmem:[%s4921 + $0x69] sm:$0xff]
  %v5697 = vld [vmem:[%s4921 + $0x71] sm:$0xff]
  %v5698 = vld [vmem:[%s4921 + $0x89] sm:$0xff]
  %v5699 = vld [vmem:[%s4921 + $0x91] sm:$0xff]
  %v5700 = vld [vmem:[%s4921 + $0xa9] sm:$0xff]
  %v5701 = vld [vmem:[%s4921 + $0xb1] sm:$0xff]
  %v5702 = vld [vmem:[%s4921 + $0xc9] sm:$0xff]
  %v5703 = vld [vmem:[%s4921 + $0xd1] sm:$0xff]
  %v5704 = vld [vmem:[%s4921 + $0xe9] sm:$0xff]
  %v5705 = vld [vmem:[%s4921 + $0xf1] sm:$0xff]
  %v5706 = vld [vmem:[%s4921 + $0x109] sm:$0xff]
  %v5707 = vld [vmem:[%s4921 + $0x111] sm:$0xff]
  %v5708 = vld [vmem:[%s4921 + $0x129] sm:$0xff]
  %v5709 = vld [vmem:[%s4921 + $0x131] sm:$0xff]
  %v5710 = vld [vmem:[%s4921 + $0x149] sm:$0xff]
  %v5711 = vld [vmem:[%s4921 + $0x151] sm:$0xff]
  %v5712 = vld [vmem:[%s4921 + $0x169] sm:$0xff]
  %v5713 = vld [vmem:[%s4921 + $0x171] sm:$0xff]
  %v5714 = vld [vmem:[%s4921 + $0x189] sm:$0xff]
  %v5715 = vld [vmem:[%s4921 + $0x191] sm:$0xff]
  %v5716 = vld [vmem:[%s4921 + $0x1a9] sm:$0xff]
  %v5717 = vld [vmem:[%s4921 + $0x1b1] sm:$0xff]
  %v5718 = vld [vmem:[%s4921 + $0x1c9] sm:$0xff]
  %v5719 = vld [vmem:[%s4921 + $0x1d1] sm:$0xff]
  %v5720 = vld [vmem:[%s4921 + $0x1e9] sm:$0xff]
  %v5721 = vld [vmem:[%s4921 + $0x1f1] sm:$0xff]
  %v5722 = vld [vmem:[%s4921 + $0x249] sm:$0xff]
  %v5723 = vld [vmem:[%s4921 + $0x251] sm:$0xff]
  %v5724 = vld [vmem:[%s4921 + $0x269] sm:$0xff]
  %v5725 = vld [vmem:[%s4921 + $0x271] sm:$0xff]
  %v5726 = vld [vmem:[%s4921 + $0x289] sm:$0xff]
  %v5727 = vld [vmem:[%s4921 + $0x291] sm:$0xff]
  %v5728 = vld [vmem:[%s4921 + $0x2a9] sm:$0xff]
  %v5729 = vld [vmem:[%s4921 + $0x2b1] sm:$0xff]
  %v5730 = vld [vmem:[%s4921 + $0x2c9] sm:$0xff]
  %v5731 = vld [vmem:[%s4921 + $0x2d1] sm:$0xff]
  %v5732 = vld [vmem:[%s4921 + $0x2e9] sm:$0xff]
  %v5733 = vld [vmem:[%s4921 + $0x2f1] sm:$0xff]
  %v5734 = vld [vmem:[%s4921 + $0x309] sm:$0xff]
  %v5735 = vld [vmem:[%s4921 + $0x311] sm:$0xff]
  %v5736 = vld [vmem:[%s4921 + $0x329] sm:$0xff]
  %v5737 = vld [vmem:[%s4921 + $0x331] sm:$0xff]
  %v5738 = vld [vmem:[%s4921 + $0x349] sm:$0xff]
  %v5739 = vld [vmem:[%s4921 + $0x351] sm:$0xff]
  %v5740 = vld [vmem:[%s4921 + $0x369] sm:$0xff]
  %v5741 = vld [vmem:[%s4921 + $0x371] sm:$0xff]
  %v5742 = vld [vmem:[%s4921 + $0x389] sm:$0xff]
  %v5743 = vld [vmem:[%s4921 + $0x391] sm:$0xff]
  %v5744 = vld [vmem:[%s4921 + $0x3a9] sm:$0xff]
  %v5745 = vld [vmem:[%s4921 + $0x3b1] sm:$0xff]
  %v5746 = vld [vmem:[%s4921 + $0x3c9] sm:$0xff]
  %v5747 = vld [vmem:[%s4921 + $0x3d1] sm:$0xff]
  %v5748 = vld [vmem:[%s4921 + $0x3e9] sm:$0xff]
  %v5749 = vld [vmem:[%s4921 + $0x3f1] sm:$0xff]
  %v5750 = vld [vmem:[%s4921 + $0x409] sm:$0xff]
  %v5751 = vld [vmem:[%s4921 + $0x411] sm:$0xff]
  %v5752 = vld [vmem:[%s4921 + $0x429] sm:$0xff]
  %v5753 = vld [vmem:[%s4921 + $0x431] sm:$0xff]
  %v5754 = vpack.c.bf16 %v5691, %v5690
  %v5755 = vpack.c.bf16 %v5693, %v5692
  %v5756 = vpack.c.bf16 %v5695, %v5694
  %v5757 = vpack.c.bf16 %v5697, %v5696
  %v5758 = vpack.c.bf16 %v5699, %v5698
  %v5759 = vpack.c.bf16 %v5701, %v5700
  %v5760 = vpack.c.bf16 %v5703, %v5702
  %v5761 = vpack.c.bf16 %v5705, %v5704
  %v5762 = vpack.c.bf16 %v5707, %v5706
  %v5763 = vpack.c.bf16 %v5709, %v5708
  %v5764 = vpack.c.bf16 %v5711, %v5710
  %v5765 = vpack.c.bf16 %v5713, %v5712
  %v5766 = vpack.c.bf16 %v5715, %v5714
  %v5767 = vpack.c.bf16 %v5717, %v5716
  %v5768 = vpack.c.bf16 %v5719, %v5718
  %v5769 = vpack.c.bf16 %v5721, %v5720
  %v5770 = vpack.c.bf16 %v5723, %v5722
  %v5771 = vpack.c.bf16 %v5725, %v5724
  %v5772 = vpack.c.bf16 %v5727, %v5726
  %v5773 = vpack.c.bf16 %v5729, %v5728
  %v5774 = vpack.c.bf16 %v5731, %v5730
  %v5775 = vpack.c.bf16 %v5733, %v5732
  %v5776 = vpack.c.bf16 %v5735, %v5734
  %v5777 = vpack.c.bf16 %v5737, %v5736
  %v5778 = vpack.c.bf16 %v5739, %v5738
  %v5779 = vpack.c.bf16 %v5741, %v5740
  %v5780 = vpack.c.bf16 %v5743, %v5742
  %v5781 = vpack.c.bf16 %v5745, %v5744
  %v5782 = vpack.c.bf16 %v5747, %v5746
  %v5783 = vpack.c.bf16 %v5749, %v5748
  %v5784 = vpack.c.bf16 %v5751, %v5750
  %v5785 = vpack.c.bf16 %v5753, %v5752
  %5786 = vst [vmem:[#allocation4 + $0x28] sm:$0xff] %v5754
  %5787 = vst [vmem:[#allocation4 + $0x70] sm:$0xff] %v5755
  %5788 = vst [vmem:[#allocation4 + $0xb8] sm:$0xff] %v5756
  %5789 = vst [vmem:[#allocation4 + $0x100] sm:$0xff] %v5757
  %5790 = vst [vmem:[#allocation4 + $0x148] sm:$0xff] %v5758
  %5791 = vst [vmem:[#allocation4 + $0x190] sm:$0xff] %v5759
  %5792 = vst [vmem:[#allocation4 + $0x1d8] sm:$0xff] %v5760
  %5793 = vst [vmem:[#allocation4 + $0x220] sm:$0xff] %v5761
  %5794 = vst [vmem:[#allocation4 + $0x268] sm:$0xff] %v5762
  %5795 = vst [vmem:[#allocation4 + $0x2b0] sm:$0xff] %v5763
  %5796 = vst [vmem:[#allocation4 + $0x2f8] sm:$0xff] %v5764
  %5797 = vst [vmem:[#allocation4 + $0x340] sm:$0xff] %v5765
  %5798 = vst [vmem:[#allocation4 + $0x388] sm:$0xff] %v5766
  %5799 = vst [vmem:[#allocation4 + $0x3d0] sm:$0xff] %v5767
  %5800 = vst [vmem:[#allocation4 + $0x418] sm:$0xff] %v5768
  %5801 = vst [vmem:[#allocation4 + $0x460] sm:$0xff] %v5769
  %5802 = vst [vmem:[#allocation4 + $0x4a8] sm:$0xff] %v5770
  %5803 = vst [vmem:[#allocation4 + $0x4f0] sm:$0xff] %v5771
  %5804 = vst [vmem:[#allocation4 + $0x538] sm:$0xff] %v5772
  %5805 = vst [vmem:[#allocation4 + $0x580] sm:$0xff] %v5773
  %5806 = vst [vmem:[#allocation4 + $0x5c8] sm:$0xff] %v5774
  %5807 = vst [vmem:[#allocation4 + $0x610] sm:$0xff] %v5775
  %5808 = vst [vmem:[#allocation4 + $0x658] sm:$0xff] %v5776
  %5809 = vst [vmem:[#allocation4 + $0x6a0] sm:$0xff] %v5777
  %5810 = vst [vmem:[#allocation4 + $0x6e8] sm:$0xff] %v5778
  %5811 = vst [vmem:[#allocation4 + $0x730] sm:$0xff] %v5779
  %5812 = vst [vmem:[#allocation4 + $0x778] sm:$0xff] %v5780
  %5813 = vst [vmem:[#allocation4 + $0x7c0] sm:$0xff] %v5781
  %5814 = vst [vmem:[#allocation4 + $0x808] sm:$0xff] %v5782
  %5815 = vst [vmem:[#allocation4 + $0x850] sm:$0xff] %v5783
  %5816 = vst [vmem:[#allocation4 + $0x898] sm:$0xff] %v5784
  %5817 = vst [vmem:[#allocation4 + $0x8e0] sm:$0xff] %v5785
  %s5818 = scalar_lea.vmem [#allocation3], 64
  %v5819 = vld [vmem:[%s5818 + $0x7] sm:$0xff]
  %v5820 = vld [vmem:[%s5818 + $0xf] sm:$0xff]
  %v5821 = vld [vmem:[%s5818 + $0x27] sm:$0xff]
  %v5822 = vld [vmem:[%s5818 + $0x2f] sm:$0xff]
  %v5823 = vld [vmem:[%s5818 + $0x47] sm:$0xff]
  %v5824 = vld [vmem:[%s5818 + $0x4f] sm:$0xff]
  %v5825 = vld [vmem:[%s5818 + $0x67] sm:$0xff]
  %v5826 = vld [vmem:[%s5818 + $0x6f] sm:$0xff]
  %v5827 = vld [vmem:[%s5818 + $0x87] sm:$0xff]
  %v5828 = vld [vmem:[%s5818 + $0x8f] sm:$0xff]
  %v5829 = vld [vmem:[%s5818 + $0xa7] sm:$0xff]
  %v5830 = vld [vmem:[%s5818 + $0xaf] sm:$0xff]
  %v5831 = vld [vmem:[%s5818 + $0xc7] sm:$0xff]
  %v5832 = vld [vmem:[%s5818 + $0xcf] sm:$0xff]
  %v5833 = vld [vmem:[%s5818 + $0xe7] sm:$0xff]
  %v5834 = vld [vmem:[%s5818 + $0xef] sm:$0xff]
  %v5835 = vld [vmem:[%s5818 + $0x107] sm:$0xff]
  %v5836 = vld [vmem:[%s5818 + $0x10f] sm:$0xff]
  %v5837 = vld [vmem:[%s5818 + $0x127] sm:$0xff]
  %v5838 = vld [vmem:[%s5818 + $0x12f] sm:$0xff]
  %v5839 = vld [vmem:[%s5818 + $0x147] sm:$0xff]
  %v5840 = vld [vmem:[%s5818 + $0x14f] sm:$0xff]
  %v5841 = vld [vmem:[%s5818 + $0x167] sm:$0xff]
  %v5842 = vld [vmem:[%s5818 + $0x16f] sm:$0xff]
  %v5843 = vld [vmem:[%s5818 + $0x187] sm:$0xff]
  %v5844 = vld [vmem:[%s5818 + $0x18f] sm:$0xff]
  %v5845 = vld [vmem:[%s5818 + $0x1a7] sm:$0xff]
  %v5846 = vld [vmem:[%s5818 + $0x1af] sm:$0xff]
  %v5847 = vld [vmem:[%s5818 + $0x1c7] sm:$0xff]
  %v5848 = vld [vmem:[%s5818 + $0x1cf] sm:$0xff]
  %v5849 = vld [vmem:[%s5818 + $0x1e7] sm:$0xff]
  %v5850 = vld [vmem:[%s5818 + $0x1ef] sm:$0xff]
  %v5851 = vld [vmem:[%s5818 + $0x247] sm:$0xff]
  %v5852 = vld [vmem:[%s5818 + $0x24f] sm:$0xff]
  %v5853 = vld [vmem:[%s5818 + $0x267] sm:$0xff]
  %v5854 = vld [vmem:[%s5818 + $0x26f] sm:$0xff]
  %v5855 = vld [vmem:[%s5818 + $0x287] sm:$0xff]
  %v5856 = vld [vmem:[%s5818 + $0x28f] sm:$0xff]
  %v5857 = vld [vmem:[%s5818 + $0x2a7] sm:$0xff]
  %v5858 = vld [vmem:[%s5818 + $0x2af] sm:$0xff]
  %v5859 = vld [vmem:[%s5818 + $0x2c7] sm:$0xff]
  %v5860 = vld [vmem:[%s5818 + $0x2cf] sm:$0xff]
  %v5861 = vld [vmem:[%s5818 + $0x2e7] sm:$0xff]
  %v5862 = vld [vmem:[%s5818 + $0x2ef] sm:$0xff]
  %v5863 = vld [vmem:[%s5818 + $0x307] sm:$0xff]
  %v5864 = vld [vmem:[%s5818 + $0x30f] sm:$0xff]
  %v5865 = vld [vmem:[%s5818 + $0x327] sm:$0xff]
  %v5866 = vld [vmem:[%s5818 + $0x32f] sm:$0xff]
  %v5867 = vld [vmem:[%s5818 + $0x347] sm:$0xff]
  %v5868 = vld [vmem:[%s5818 + $0x34f] sm:$0xff]
  %v5869 = vld [vmem:[%s5818 + $0x367] sm:$0xff]
  %v5870 = vld [vmem:[%s5818 + $0x36f] sm:$0xff]
  %v5871 = vld [vmem:[%s5818 + $0x387] sm:$0xff]
  %v5872 = vld [vmem:[%s5818 + $0x38f] sm:$0xff]
  %v5873 = vld [vmem:[%s5818 + $0x3a7] sm:$0xff]
  %v5874 = vld [vmem:[%s5818 + $0x3af] sm:$0xff]
  %v5875 = vld [vmem:[%s5818 + $0x3c7] sm:$0xff]
  %v5876 = vld [vmem:[%s5818 + $0x3cf] sm:$0xff]
  %v5877 = vld [vmem:[%s5818 + $0x3e7] sm:$0xff]
  %v5878 = vld [vmem:[%s5818 + $0x3ef] sm:$0xff]
  %v5879 = vld [vmem:[%s5818 + $0x407] sm:$0xff]
  %v5880 = vld [vmem:[%s5818 + $0x40f] sm:$0xff]
  %v5881 = vld [vmem:[%s5818 + $0x427] sm:$0xff]
  %v5882 = vld [vmem:[%s5818 + $0x42f] sm:$0xff]
  %v5883 = vpack.c.bf16 %v5820, %v5819
  %v5884 = vpack.c.bf16 %v5822, %v5821
  %v5885 = vpack.c.bf16 %v5824, %v5823
  %v5886 = vpack.c.bf16 %v5826, %v5825
  %v5887 = vpack.c.bf16 %v5828, %v5827
  %v5888 = vpack.c.bf16 %v5830, %v5829
  %v5889 = vpack.c.bf16 %v5832, %v5831
  %v5890 = vpack.c.bf16 %v5834, %v5833
  %v5891 = vpack.c.bf16 %v5836, %v5835
  %v5892 = vpack.c.bf16 %v5838, %v5837
  %v5893 = vpack.c.bf16 %v5840, %v5839
  %v5894 = vpack.c.bf16 %v5842, %v5841
  %v5895 = vpack.c.bf16 %v5844, %v5843
  %v5896 = vpack.c.bf16 %v5846, %v5845
  %v5897 = vpack.c.bf16 %v5848, %v5847
  %v5898 = vpack.c.bf16 %v5850, %v5849
  %v5899 = vpack.c.bf16 %v5852, %v5851
  %v5900 = vpack.c.bf16 %v5854, %v5853
  %v5901 = vpack.c.bf16 %v5856, %v5855
  %v5902 = vpack.c.bf16 %v5858, %v5857
  %v5903 = vpack.c.bf16 %v5860, %v5859
  %v5904 = vpack.c.bf16 %v5862, %v5861
  %v5905 = vpack.c.bf16 %v5864, %v5863
  %v5906 = vpack.c.bf16 %v5866, %v5865
  %v5907 = vpack.c.bf16 %v5868, %v5867
  %v5908 = vpack.c.bf16 %v5870, %v5869
  %v5909 = vpack.c.bf16 %v5872, %v5871
  %v5910 = vpack.c.bf16 %v5874, %v5873
  %v5911 = vpack.c.bf16 %v5876, %v5875
  %v5912 = vpack.c.bf16 %v5878, %v5877
  %v5913 = vpack.c.bf16 %v5880, %v5879
  %v5914 = vpack.c.bf16 %v5882, %v5881
  %5915 = vst [vmem:[#allocation4 + $0x30] sm:$0xff] %v5883
  %5916 = vst [vmem:[#allocation4 + $0x78] sm:$0xff] %v5884
  %5917 = vst [vmem:[#allocation4 + $0xc0] sm:$0xff] %v5885
  %5918 = vst [vmem:[#allocation4 + $0x108] sm:$0xff] %v5886
  %5919 = vst [vmem:[#allocation4 + $0x150] sm:$0xff] %v5887
  %5920 = vst [vmem:[#allocation4 + $0x198] sm:$0xff] %v5888
  %5921 = vst [vmem:[#allocation4 + $0x1e0] sm:$0xff] %v5889
  %5922 = vst [vmem:[#allocation4 + $0x228] sm:$0xff] %v5890
  %5923 = vst [vmem:[#allocation4 + $0x270] sm:$0xff] %v5891
  %5924 = vst [vmem:[#allocation4 + $0x2b8] sm:$0xff] %v5892
  %5925 = vst [vmem:[#allocation4 + $0x300] sm:$0xff] %v5893
  %5926 = vst [vmem:[#allocation4 + $0x348] sm:$0xff] %v5894
  %5927 = vst [vmem:[#allocation4 + $0x390] sm:$0xff] %v5895
  %5928 = vst [vmem:[#allocation4 + $0x3d8] sm:$0xff] %v5896
  %5929 = vst [vmem:[#allocation4 + $0x420] sm:$0xff] %v5897
  %5930 = vst [vmem:[#allocation4 + $0x468] sm:$0xff] %v5898
  %5931 = vst [vmem:[#allocation4 + $0x4b0] sm:$0xff] %v5899
  %5932 = vst [vmem:[#allocation4 + $0x4f8] sm:$0xff] %v5900
  %5933 = vst [vmem:[#allocation4 + $0x540] sm:$0xff] %v5901
  %5934 = vst [vmem:[#allocation4 + $0x588] sm:$0xff] %v5902
  %5935 = vst [vmem:[#allocation4 + $0x5d0] sm:$0xff] %v5903
  %5936 = vst [vmem:[#allocation4 + $0x618] sm:$0xff] %v5904
  %5937 = vst [vmem:[#allocation4 + $0x660] sm:$0xff] %v5905
  %5938 = vst [vmem:[#allocation4 + $0x6a8] sm:$0xff] %v5906
  %5939 = vst [vmem:[#allocation4 + $0x6f0] sm:$0xff] %v5907
  %5940 = vst [vmem:[#allocation4 + $0x738] sm:$0xff] %v5908
  %5941 = vst [vmem:[#allocation4 + $0x780] sm:$0xff] %v5909
  %5942 = vst [vmem:[#allocation4 + $0x7c8] sm:$0xff] %v5910
  %5943 = vst [vmem:[#allocation4 + $0x810] sm:$0xff] %v5911
  %5944 = vst [vmem:[#allocation4 + $0x858] sm:$0xff] %v5912
  %5945 = vst [vmem:[#allocation4 + $0x8a0] sm:$0xff] %v5913
  %5946 = vst [vmem:[#allocation4 + $0x8e8] sm:$0xff] %v5914
  %v5947 = vld [vmem:[%s5818 + $0x8] sm:$0xff]
  %v5948 = vld [vmem:[%s5818 + $0x10] sm:$0xff]
  %v5949 = vld [vmem:[%s5818 + $0x28] sm:$0xff]
  %v5950 = vld [vmem:[%s5818 + $0x30] sm:$0xff]
  %v5951 = vld [vmem:[%s5818 + $0x48] sm:$0xff]
  %v5952 = vld [vmem:[%s5818 + $0x50] sm:$0xff]
  %v5953 = vld [vmem:[%s5818 + $0x68] sm:$0xff]
  %v5954 = vld [vmem:[%s5818 + $0x70] sm:$0xff]
  %v5955 = vld [vmem:[%s5818 + $0x88] sm:$0xff]
  %v5956 = vld [vmem:[%s5818 + $0x90] sm:$0xff]
  %v5957 = vld [vmem:[%s5818 + $0xa8] sm:$0xff]
  %v5958 = vld [vmem:[%s5818 + $0xb0] sm:$0xff]
  %v5959 = vld [vmem:[%s5818 + $0xc8] sm:$0xff]
  %v5960 = vld [vmem:[%s5818 + $0xd0] sm:$0xff]
  %v5961 = vld [vmem:[%s5818 + $0xe8] sm:$0xff]
  %v5962 = vld [vmem:[%s5818 + $0xf0] sm:$0xff]
  %v5963 = vld [vmem:[%s5818 + $0x108] sm:$0xff]
  %v5964 = vld [vmem:[%s5818 + $0x110] sm:$0xff]
  %v5965 = vld [vmem:[%s5818 + $0x128] sm:$0xff]
  %v5966 = vld [vmem:[%s5818 + $0x130] sm:$0xff]
  %v5967 = vld [vmem:[%s5818 + $0x148] sm:$0xff]
  %v5968 = vld [vmem:[%s5818 + $0x150] sm:$0xff]
  %v5969 = vld [vmem:[%s5818 + $0x168] sm:$0xff]
  %v5970 = vld [vmem:[%s5818 + $0x170] sm:$0xff]
  %v5971 = vld [vmem:[%s5818 + $0x188] sm:$0xff]
  %v5972 = vld [vmem:[%s5818 + $0x190] sm:$0xff]
  %v5973 = vld [vmem:[%s5818 + $0x1a8] sm:$0xff]
  %v5974 = vld [vmem:[%s5818 + $0x1b0] sm:$0xff]
  %v5975 = vld [vmem:[%s5818 + $0x1c8] sm:$0xff]
  %v5976 = vld [vmem:[%s5818 + $0x1d0] sm:$0xff]
  %v5977 = vld [vmem:[%s5818 + $0x1e8] sm:$0xff]
  %v5978 = vld [vmem:[%s5818 + $0x1f0] sm:$0xff]
  %v5979 = vld [vmem:[%s5818 + $0x248] sm:$0xff]
  %v5980 = vld [vmem:[%s5818 + $0x250] sm:$0xff]
  %v5981 = vld [vmem:[%s5818 + $0x268] sm:$0xff]
  %v5982 = vld [vmem:[%s5818 + $0x270] sm:$0xff]
  %v5983 = vld [vmem:[%s5818 + $0x288] sm:$0xff]
  %v5984 = vld [vmem:[%s5818 + $0x290] sm:$0xff]
  %v5985 = vld [vmem:[%s5818 + $0x2a8] sm:$0xff]
  %v5986 = vld [vmem:[%s5818 + $0x2b0] sm:$0xff]
  %v5987 = vld [vmem:[%s5818 + $0x2c8] sm:$0xff]
  %v5988 = vld [vmem:[%s5818 + $0x2d0] sm:$0xff]
  %v5989 = vld [vmem:[%s5818 + $0x2e8] sm:$0xff]
  %v5990 = vld [vmem:[%s5818 + $0x2f0] sm:$0xff]
  %v5991 = vld [vmem:[%s5818 + $0x308] sm:$0xff]
  %v5992 = vld [vmem:[%s5818 + $0x310] sm:$0xff]
  %v5993 = vld [vmem:[%s5818 + $0x328] sm:$0xff]
  %v5994 = vld [vmem:[%s5818 + $0x330] sm:$0xff]
  %v5995 = vld [vmem:[%s5818 + $0x348] sm:$0xff]
  %v5996 = vld [vmem:[%s5818 + $0x350] sm:$0xff]
  %v5997 = vld [vmem:[%s5818 + $0x368] sm:$0xff]
  %v5998 = vld [vmem:[%s5818 + $0x370] sm:$0xff]
  %v5999 = vld [vmem:[%s5818 + $0x388] sm:$0xff]
  %v6000 = vld [vmem:[%s5818 + $0x390] sm:$0xff]
  %v6001 = vld [vmem:[%s5818 + $0x3a8] sm:$0xff]
  %v6002 = vld [vmem:[%s5818 + $0x3b0] sm:$0xff]
  %v6003 = vld [vmem:[%s5818 + $0x3c8] sm:$0xff]
  %v6004 = vld [vmem:[%s5818 + $0x3d0] sm:$0xff]
  %v6005 = vld [vmem:[%s5818 + $0x3e8] sm:$0xff]
  %v6006 = vld [vmem:[%s5818 + $0x3f0] sm:$0xff]
  %v6007 = vld [vmem:[%s5818 + $0x408] sm:$0xff]
  %v6008 = vld [vmem:[%s5818 + $0x410] sm:$0xff]
  %v6009 = vld [vmem:[%s5818 + $0x428] sm:$0xff]
  %v6010 = vld [vmem:[%s5818 + $0x430] sm:$0xff]
  %v6011 = vpack.c.bf16 %v5948, %v5947
  %v6012 = vpack.c.bf16 %v5950, %v5949
  %v6013 = vpack.c.bf16 %v5952, %v5951
  %v6014 = vpack.c.bf16 %v5954, %v5953
  %v6015 = vpack.c.bf16 %v5956, %v5955
  %v6016 = vpack.c.bf16 %v5958, %v5957
  %v6017 = vpack.c.bf16 %v5960, %v5959
  %v6018 = vpack.c.bf16 %v5962, %v5961
  %v6019 = vpack.c.bf16 %v5964, %v5963
  %v6020 = vpack.c.bf16 %v5966, %v5965
  %v6021 = vpack.c.bf16 %v5968, %v5967
  %v6022 = vpack.c.bf16 %v5970, %v5969
  %v6023 = vpack.c.bf16 %v5972, %v5971
  %v6024 = vpack.c.bf16 %v5974, %v5973
  %v6025 = vpack.c.bf16 %v5976, %v5975
  %v6026 = vpack.c.bf16 %v5978, %v5977
  %v6027 = vpack.c.bf16 %v5980, %v5979
  %v6028 = vpack.c.bf16 %v5982, %v5981
  %v6029 = vpack.c.bf16 %v5984, %v5983
  %v6030 = vpack.c.bf16 %v5986, %v5985
  %v6031 = vpack.c.bf16 %v5988, %v5987
  %v6032 = vpack.c.bf16 %v5990, %v5989
  %v6033 = vpack.c.bf16 %v5992, %v5991
  %v6034 = vpack.c.bf16 %v5994, %v5993
  %v6035 = vpack.c.bf16 %v5996, %v5995
  %v6036 = vpack.c.bf16 %v5998, %v5997
  %v6037 = vpack.c.bf16 %v6000, %v5999
  %v6038 = vpack.c.bf16 %v6002, %v6001
  %v6039 = vpack.c.bf16 %v6004, %v6003
  %v6040 = vpack.c.bf16 %v6006, %v6005
  %v6041 = vpack.c.bf16 %v6008, %v6007
  %v6042 = vpack.c.bf16 %v6010, %v6009
  %6043 = vst [vmem:[#allocation4 + $0x38] sm:$0xff] %v6011
  %6044 = vst [vmem:[#allocation4 + $0x80] sm:$0xff] %v6012
  %6045 = vst [vmem:[#allocation4 + $0xc8] sm:$0xff] %v6013
  %6046 = vst [vmem:[#allocation4 + $0x110] sm:$0xff] %v6014
  %6047 = vst [vmem:[#allocation4 + $0x158] sm:$0xff] %v6015
  %6048 = vst [vmem:[#allocation4 + $0x1a0] sm:$0xff] %v6016
  %6049 = vst [vmem:[#allocation4 + $0x1e8] sm:$0xff] %v6017
  %6050 = vst [vmem:[#allocation4 + $0x230] sm:$0xff] %v6018
  %6051 = vst [vmem:[#allocation4 + $0x278] sm:$0xff] %v6019
  %6052 = vst [vmem:[#allocation4 + $0x2c0] sm:$0xff] %v6020
  %6053 = vst [vmem:[#allocation4 + $0x308] sm:$0xff] %v6021
  %6054 = vst [vmem:[#allocation4 + $0x350] sm:$0xff] %v6022
  %6055 = vst [vmem:[#allocation4 + $0x398] sm:$0xff] %v6023
  %6056 = vst [vmem:[#allocation4 + $0x3e0] sm:$0xff] %v6024
  %6057 = vst [vmem:[#allocation4 + $0x428] sm:$0xff] %v6025
  %6058 = vst [vmem:[#allocation4 + $0x470] sm:$0xff] %v6026
  %6059 = vst [vmem:[#allocation4 + $0x4b8] sm:$0xff] %v6027
  %6060 = vst [vmem:[#allocation4 + $0x500] sm:$0xff] %v6028
  %6061 = vst [vmem:[#allocation4 + $0x548] sm:$0xff] %v6029
  %6062 = vst [vmem:[#allocation4 + $0x590] sm:$0xff] %v6030
  %6063 = vst [vmem:[#allocation4 + $0x5d8] sm:$0xff] %v6031
  %6064 = vst [vmem:[#allocation4 + $0x620] sm:$0xff] %v6032
  %6065 = vst [vmem:[#allocation4 + $0x668] sm:$0xff] %v6033
  %6066 = vst [vmem:[#allocation4 + $0x6b0] sm:$0xff] %v6034
  %6067 = vst [vmem:[#allocation4 + $0x6f8] sm:$0xff] %v6035
  %6068 = vst [vmem:[#allocation4 + $0x740] sm:$0xff] %v6036
  %6069 = vst [vmem:[#allocation4 + $0x788] sm:$0xff] %v6037
  %6070 = vst [vmem:[#allocation4 + $0x7d0] sm:$0xff] %v6038
  %6071 = vst [vmem:[#allocation4 + $0x818] sm:$0xff] %v6039
  %6072 = vst [vmem:[#allocation4 + $0x860] sm:$0xff] %v6040
  %6073 = vst [vmem:[#allocation4 + $0x8a8] sm:$0xff] %v6041
  %6074 = vst [vmem:[#allocation4 + $0x8f0] sm:$0xff] %v6042
  %v6075 = vld [vmem:[%s5818 + $0x9] sm:$0xff]
  %v6076 = vld [vmem:[%s5818 + $0x11] sm:$0xff]
  %v6077 = vld [vmem:[%s5818 + $0x29] sm:$0xff]
  %v6078 = vld [vmem:[%s5818 + $0x31] sm:$0xff]
  %v6079 = vld [vmem:[%s5818 + $0x49] sm:$0xff]
  %v6080 = vld [vmem:[%s5818 + $0x51] sm:$0xff]
  %v6081 = vld [vmem:[%s5818 + $0x69] sm:$0xff]
  %v6082 = vld [vmem:[%s5818 + $0x71] sm:$0xff]
  %v6083 = vld [vmem:[%s5818 + $0x89] sm:$0xff]
  %v6084 = vld [vmem:[%s5818 + $0x91] sm:$0xff]
  %v6085 = vld [vmem:[%s5818 + $0xa9] sm:$0xff]
  %v6086 = vld [vmem:[%s5818 + $0xb1] sm:$0xff]
  %v6087 = vld [vmem:[%s5818 + $0xc9] sm:$0xff]
  %v6088 = vld [vmem:[%s5818 + $0xd1] sm:$0xff]
  %v6089 = vld [vmem:[%s5818 + $0xe9] sm:$0xff]
  %v6090 = vld [vmem:[%s5818 + $0xf1] sm:$0xff]
  %v6091 = vld [vmem:[%s5818 + $0x109] sm:$0xff]
  %v6092 = vld [vmem:[%s5818 + $0x111] sm:$0xff]
  %v6093 = vld [vmem:[%s5818 + $0x129] sm:$0xff]
  %v6094 = vld [vmem:[%s5818 + $0x131] sm:$0xff]
  %v6095 = vld [vmem:[%s5818 + $0x149] sm:$0xff]
  %v6096 = vld [vmem:[%s5818 + $0x151] sm:$0xff]
  %v6097 = vld [vmem:[%s5818 + $0x169] sm:$0xff]
  %v6098 = vld [vmem:[%s5818 + $0x171] sm:$0xff]
  %v6099 = vld [vmem:[%s5818 + $0x189] sm:$0xff]
  %v6100 = vld [vmem:[%s5818 + $0x191] sm:$0xff]
  %v6101 = vld [vmem:[%s5818 + $0x1a9] sm:$0xff]
  %v6102 = vld [vmem:[%s5818 + $0x1b1] sm:$0xff]
  %v6103 = vld [vmem:[%s5818 + $0x1c9] sm:$0xff]
  %v6104 = vld [vmem:[%s5818 + $0x1d1] sm:$0xff]
  %v6105 = vld [vmem:[%s5818 + $0x1e9] sm:$0xff]
  %v6106 = vld [vmem:[%s5818 + $0x1f1] sm:$0xff]
  %v6107 = vld [vmem:[%s5818 + $0x249] sm:$0xff]
  %v6108 = vld [vmem:[%s5818 + $0x251] sm:$0xff]
  %v6109 = vld [vmem:[%s5818 + $0x269] sm:$0xff]
  %v6110 = vld [vmem:[%s5818 + $0x271] sm:$0xff]
  %v6111 = vld [vmem:[%s5818 + $0x289] sm:$0xff]
  %v6112 = vld [vmem:[%s5818 + $0x291] sm:$0xff]
  %v6113 = vld [vmem:[%s5818 + $0x2a9] sm:$0xff]
  %v6114 = vld [vmem:[%s5818 + $0x2b1] sm:$0xff]
  %v6115 = vld [vmem:[%s5818 + $0x2c9] sm:$0xff]
  %v6116 = vld [vmem:[%s5818 + $0x2d1] sm:$0xff]
  %v6117 = vld [vmem:[%s5818 + $0x2e9] sm:$0xff]
  %v6118 = vld [vmem:[%s5818 + $0x2f1] sm:$0xff]
  %v6119 = vld [vmem:[%s5818 + $0x309] sm:$0xff]
  %v6120 = vld [vmem:[%s5818 + $0x311] sm:$0xff]
  %v6121 = vld [vmem:[%s5818 + $0x329] sm:$0xff]
  %v6122 = vld [vmem:[%s5818 + $0x331] sm:$0xff]
  %v6123 = vld [vmem:[%s5818 + $0x349] sm:$0xff]
  %v6124 = vld [vmem:[%s5818 + $0x351] sm:$0xff]
  %v6125 = vld [vmem:[%s5818 + $0x369] sm:$0xff]
  %v6126 = vld [vmem:[%s5818 + $0x371] sm:$0xff]
  %v6127 = vld [vmem:[%s5818 + $0x389] sm:$0xff]
  %v6128 = vld [vmem:[%s5818 + $0x391] sm:$0xff]
  %v6129 = vld [vmem:[%s5818 + $0x3a9] sm:$0xff]
  %v6130 = vld [vmem:[%s5818 + $0x3b1] sm:$0xff]
  %v6131 = vld [vmem:[%s5818 + $0x3c9] sm:$0xff]
  %v6132 = vld [vmem:[%s5818 + $0x3d1] sm:$0xff]
  %v6133 = vld [vmem:[%s5818 + $0x3e9] sm:$0xff]
  %v6134 = vld [vmem:[%s5818 + $0x3f1] sm:$0xff]
  %v6135 = vld [vmem:[%s5818 + $0x409] sm:$0xff]
  %v6136 = vld [vmem:[%s5818 + $0x411] sm:$0xff]
  %v6137 = vld [vmem:[%s5818 + $0x429] sm:$0xff]
  %v6138 = vld [vmem:[%s5818 + $0x431] sm:$0xff]
  %v6139 = vpack.c.bf16 %v6076, %v6075
  %v6140 = vpack.c.bf16 %v6078, %v6077
  %v6141 = vpack.c.bf16 %v6080, %v6079
  %v6142 = vpack.c.bf16 %v6082, %v6081
  %v6143 = vpack.c.bf16 %v6084, %v6083
  %v6144 = vpack.c.bf16 %v6086, %v6085
  %v6145 = vpack.c.bf16 %v6088, %v6087
  %v6146 = vpack.c.bf16 %v6090, %v6089
  %v6147 = vpack.c.bf16 %v6092, %v6091
  %v6148 = vpack.c.bf16 %v6094, %v6093
  %v6149 = vpack.c.bf16 %v6096, %v6095
  %v6150 = vpack.c.bf16 %v6098, %v6097
  %v6151 = vpack.c.bf16 %v6100, %v6099
  %v6152 = vpack.c.bf16 %v6102, %v6101
  %v6153 = vpack.c.bf16 %v6104, %v6103
  %v6154 = vpack.c.bf16 %v6106, %v6105
  %v6155 = vpack.c.bf16 %v6108, %v6107
  %v6156 = vpack.c.bf16 %v6110, %v6109
  %v6157 = vpack.c.bf16 %v6112, %v6111
  %v6158 = vpack.c.bf16 %v6114, %v6113
  %v6159 = vpack.c.bf16 %v6116, %v6115
  %v6160 = vpack.c.bf16 %v6118, %v6117
  %v6161 = vpack.c.bf16 %v6120, %v6119
  %v6162 = vpack.c.bf16 %v6122, %v6121
  %v6163 = vpack.c.bf16 %v6124, %v6123
  %v6164 = vpack.c.bf16 %v6126, %v6125
  %v6165 = vpack.c.bf16 %v6128, %v6127
  %v6166 = vpack.c.bf16 %v6130, %v6129
  %v6167 = vpack.c.bf16 %v6132, %v6131
  %v6168 = vpack.c.bf16 %v6134, %v6133
  %v6169 = vpack.c.bf16 %v6136, %v6135
  %v6170 = vpack.c.bf16 %v6138, %v6137
  %6171 = vst [vmem:[#allocation4 + $0x40] sm:$0xff] %v6139
  %6172 = vst [vmem:[#allocation4 + $0x88] sm:$0xff] %v6140
  %6173 = vst [vmem:[#allocation4 + $0xd0] sm:$0xff] %v6141
  %6174 = vst [vmem:[#allocation4 + $0x118] sm:$0xff] %v6142
  %6175 = vst [vmem:[#allocation4 + $0x160] sm:$0xff] %v6143
  %6176 = vst [vmem:[#allocation4 + $0x1a8] sm:$0xff] %v6144
  %6177 = vst [vmem:[#allocation4 + $0x1f0] sm:$0xff] %v6145
  %6178 = vst [vmem:[#allocation4 + $0x238] sm:$0xff] %v6146
  %6179 = vst [vmem:[#allocation4 + $0x280] sm:$0xff] %v6147
  %6180 = vst [vmem:[#allocation4 + $0x2c8] sm:$0xff] %v6148
  %6181 = vst [vmem:[#allocation4 + $0x310] sm:$0xff] %v6149
  %6182 = vst [vmem:[#allocation4 + $0x358] sm:$0xff] %v6150
  %6183 = vst [vmem:[#allocation4 + $0x3a0] sm:$0xff] %v6151
  %6184 = vst [vmem:[#allocation4 + $0x3e8] sm:$0xff] %v6152
  %6185 = vst [vmem:[#allocation4 + $0x430] sm:$0xff] %v6153
  %6186 = vst [vmem:[#allocation4 + $0x478] sm:$0xff] %v6154
  %6187 = vst [vmem:[#allocation4 + $0x4c0] sm:$0xff] %v6155
  %6188 = vst [vmem:[#allocation4 + $0x508] sm:$0xff] %v6156
  %6189 = vst [vmem:[#allocation4 + $0x550] sm:$0xff] %v6157
  %6190 = vst [vmem:[#allocation4 + $0x598] sm:$0xff] %v6158
  %6191 = vst [vmem:[#allocation4 + $0x5e0] sm:$0xff] %v6159
  %6192 = vst [vmem:[#allocation4 + $0x628] sm:$0xff] %v6160
  %6193 = vst [vmem:[#allocation4 + $0x670] sm:$0xff] %v6161
  %6194 = vst [vmem:[#allocation4 + $0x6b8] sm:$0xff] %v6162
  %6195 = vst [vmem:[#allocation4 + $0x700] sm:$0xff] %v6163
  %6196 = vst [vmem:[#allocation4 + $0x748] sm:$0xff] %v6164
  %6197 = vst [vmem:[#allocation4 + $0x790] sm:$0xff] %v6165
  %6198 = vst [vmem:[#allocation4 + $0x7d8] sm:$0xff] %v6166
  %6199 = vst [vmem:[#allocation4 + $0x820] sm:$0xff] %v6167
  %6200 = vst [vmem:[#allocation4 + $0x868] sm:$0xff] %v6168
  %6201 = vst [vmem:[#allocation4 + $0x8b0] sm:$0xff] %v6169
  %6202 = vst [vmem:[#allocation4 + $0x8f8] sm:$0xff] %v6170
  %v6203 = vld [vmem:[#allocation4] sm:$0xff]
  %v6204 = vld [vmem:[#allocation4 + $0x8] sm:$0xff]
  %v6205 = vld [vmem:[#allocation4 + $0x10] sm:$0xff]
  %v6206 = vld [vmem:[#allocation4 + $0x18] sm:$0xff]
  %v6207 = vld [vmem:[#allocation4 + $0x20] sm:$0xff]
  %v6208 = vld [vmem:[#allocation4 + $0x28] sm:$0xff]
  %v6209 = vld [vmem:[#allocation4 + $0x30] sm:$0xff]
  %v6210 = vld [vmem:[#allocation4 + $0x38] sm:$0xff]
  %v6211 = vld [vmem:[#allocation4 + $0x40] sm:$0xff]
  %v6212 = vld [vmem:[#allocation4 + $0x48] sm:$0xff]
  %v6213 = vld [vmem:[#allocation4 + $0x50] sm:$0xff]
  %v6214 = vld [vmem:[#allocation4 + $0x58] sm:$0xff]
  %v6215 = vld [vmem:[#allocation4 + $0x60] sm:$0xff]
  %v6216 = vld [vmem:[#allocation4 + $0x68] sm:$0xff]
  %v6217 = vld [vmem:[#allocation4 + $0x70] sm:$0xff]
  %v6218 = vld [vmem:[#allocation4 + $0x78] sm:$0xff]
  %v6219 = vld [vmem:[#allocation4 + $0x80] sm:$0xff]
  %v6220 = vld [vmem:[#allocation4 + $0x88] sm:$0xff]
  %v6221 = vld [vmem:[#allocation4 + $0x90] sm:$0xff]
  %v6222 = vld [vmem:[#allocation4 + $0x98] sm:$0xff]
  %v6223 = vld [vmem:[#allocation4 + $0xa0] sm:$0xff]
  %v6224 = vld [vmem:[#allocation4 + $0xa8] sm:$0xff]
  %v6225 = vld [vmem:[#allocation4 + $0xb0] sm:$0xff]
  %v6226 = vld [vmem:[#allocation4 + $0xb8] sm:$0xff]
  %v6227 = vld [vmem:[#allocation4 + $0xc0] sm:$0xff]
  %v6228 = vld [vmem:[#allocation4 + $0xc8] sm:$0xff]
  %v6229 = vld [vmem:[#allocation4 + $0xd0] sm:$0xff]
  %v6230 = vld [vmem:[#allocation4 + $0xd8] sm:$0xff]
  %v6231 = vld [vmem:[#allocation4 + $0xe0] sm:$0xff]
  %v6232 = vld [vmem:[#allocation4 + $0xe8] sm:$0xff]
  %v6233 = vld [vmem:[#allocation4 + $0xf0] sm:$0xff]
  %v6234 = vld [vmem:[#allocation4 + $0xf8] sm:$0xff]
  %v6235 = vld [vmem:[#allocation4 + $0x100] sm:$0xff]
  %v6236 = vld [vmem:[#allocation4 + $0x108] sm:$0xff]
  %v6237 = vld [vmem:[#allocation4 + $0x110] sm:$0xff]
  %v6238 = vld [vmem:[#allocation4 + $0x118] sm:$0xff]
  %v6239 = vld [vmem:[#allocation4 + $0x120] sm:$0xff]
  %v6240 = vld [vmem:[#allocation4 + $0x128] sm:$0xff]
  %v6241 = vld [vmem:[#allocation4 + $0x130] sm:$0xff]
  %v6242 = vld [vmem:[#allocation4 + $0x138] sm:$0xff]
  %v6243 = vld [vmem:[#allocation4 + $0x140] sm:$0xff]
  %v6244 = vld [vmem:[#allocation4 + $0x148] sm:$0xff]
  %v6245 = vld [vmem:[#allocation4 + $0x150] sm:$0xff]
  %v6246 = vld [vmem:[#allocation4 + $0x158] sm:$0xff]
  %v6247 = vld [vmem:[#allocation4 + $0x160] sm:$0xff]
  %v6248 = vld [vmem:[#allocation4 + $0x168] sm:$0xff]
  %v6249 = vld [vmem:[#allocation4 + $0x170] sm:$0xff]
  %v6250 = vld [vmem:[#allocation4 + $0x178] sm:$0xff]
  %v6251 = vld [vmem:[#allocation4 + $0x180] sm:$0xff]
  %v6252 = vld [vmem:[#allocation4 + $0x188] sm:$0xff]
  %v6253 = vld [vmem:[#allocation4 + $0x190] sm:$0xff]
  %v6254 = vld [vmem:[#allocation4 + $0x198] sm:$0xff]
  %v6255 = vld [vmem:[#allocation4 + $0x1a0] sm:$0xff]
  %v6256 = vld [vmem:[#allocation4 + $0x1a8] sm:$0xff]
  %v6257 = vld [vmem:[#allocation4 + $0x1b0] sm:$0xff]
  %v6258 = vld [vmem:[#allocation4 + $0x1b8] sm:$0xff]
  %v6259 = vld [vmem:[#allocation4 + $0x1c0] sm:$0xff]
  %v6260 = vld [vmem:[#allocation4 + $0x1c8] sm:$0xff]
  %v6261 = vld [vmem:[#allocation4 + $0x1d0] sm:$0xff]
  %v6262 = vld [vmem:[#allocation4 + $0x1d8] sm:$0xff]
  %v6263 = vld [vmem:[#allocation4 + $0x1e0] sm:$0xff]
  %v6264 = vld [vmem:[#allocation4 + $0x1e8] sm:$0xff]
  %v6265 = vld [vmem:[#allocation4 + $0x1f0] sm:$0xff]
  %v6266 = vld [vmem:[#allocation4 + $0x1f8] sm:$0xff]
  %v6267 = vld [vmem:[#allocation4 + $0x200] sm:$0xff]
  %v6268 = vld [vmem:[#allocation4 + $0x208] sm:$0xff]
  %v6269 = vld [vmem:[#allocation4 + $0x210] sm:$0xff]
  %v6270 = vld [vmem:[#allocation4 + $0x218] sm:$0xff]
  %v6271 = vld [vmem:[#allocation4 + $0x220] sm:$0xff]
  %v6272 = vld [vmem:[#allocation4 + $0x228] sm:$0xff]
  %v6273 = vld [vmem:[#allocation4 + $0x230] sm:$0xff]
  %v6274 = vld [vmem:[#allocation4 + $0x238] sm:$0xff]
  %v6275 = vld [vmem:[#allocation4 + $0x240] sm:$0xff]
  %v6276 = vld [vmem:[#allocation4 + $0x248] sm:$0xff]
  %v6277 = vld [vmem:[#allocation4 + $0x250] sm:$0xff]
  %v6278 = vld [vmem:[#allocation4 + $0x258] sm:$0xff]
  %v6279 = vld [vmem:[#allocation4 + $0x260] sm:$0xff]
  %v6280 = vld [vmem:[#allocation4 + $0x268] sm:$0xff]
  %v6281 = vld [vmem:[#allocation4 + $0x270] sm:$0xff]
  %v6282 = vld [vmem:[#allocation4 + $0x278] sm:$0xff]
  %v6283 = vld [vmem:[#allocation4 + $0x280] sm:$0xff]
  %v6284 = vld [vmem:[#allocation4 + $0x288] sm:$0xff]
  %v6285 = vld [vmem:[#allocation4 + $0x290] sm:$0xff]
  %v6286 = vld [vmem:[#allocation4 + $0x298] sm:$0xff]
  %v6287 = vld [vmem:[#allocation4 + $0x2a0] sm:$0xff]
  %v6288 = vld [vmem:[#allocation4 + $0x2a8] sm:$0xff]
  %v6289 = vld [vmem:[#allocation4 + $0x2b0] sm:$0xff]
  %v6290 = vld [vmem:[#allocation4 + $0x2b8] sm:$0xff]
  %v6291 = vld [vmem:[#allocation4 + $0x2c0] sm:$0xff]
  %v6292 = vld [vmem:[#allocation4 + $0x2c8] sm:$0xff]
  %v6293 = vld [vmem:[#allocation4 + $0x2d0] sm:$0xff]
  %v6294 = vld [vmem:[#allocation4 + $0x2d8] sm:$0xff]
  %v6295 = vld [vmem:[#allocation4 + $0x2e0] sm:$0xff]
  %v6296 = vld [vmem:[#allocation4 + $0x2e8] sm:$0xff]
  %v6297 = vld [vmem:[#allocation4 + $0x2f0] sm:$0xff]
  %v6298 = vld [vmem:[#allocation4 + $0x2f8] sm:$0xff]
  %v6299 = vld [vmem:[#allocation4 + $0x300] sm:$0xff]
  %v6300 = vld [vmem:[#allocation4 + $0x308] sm:$0xff]
  %v6301 = vld [vmem:[#allocation4 + $0x310] sm:$0xff]
  %v6302 = vld [vmem:[#allocation4 + $0x318] sm:$0xff]
  %v6303 = vld [vmem:[#allocation4 + $0x320] sm:$0xff]
  %v6304 = vld [vmem:[#allocation4 + $0x328] sm:$0xff]
  %v6305 = vld [vmem:[#allocation4 + $0x330] sm:$0xff]
  %v6306 = vld [vmem:[#allocation4 + $0x338] sm:$0xff]
  %v6307 = vld [vmem:[#allocation4 + $0x340] sm:$0xff]
  %v6308 = vld [vmem:[#allocation4 + $0x348] sm:$0xff]
  %v6309 = vld [vmem:[#allocation4 + $0x350] sm:$0xff]
  %v6310 = vld [vmem:[#allocation4 + $0x358] sm:$0xff]
  %v6311 = vld [vmem:[#allocation4 + $0x360] sm:$0xff]
  %v6312 = vld [vmem:[#allocation4 + $0x368] sm:$0xff]
  %v6313 = vld [vmem:[#allocation4 + $0x370] sm:$0xff]
  %v6314 = vld [vmem:[#allocation4 + $0x378] sm:$0xff]
  %v6315 = vld [vmem:[#allocation4 + $0x380] sm:$0xff]
  %v6316 = vld [vmem:[#allocation4 + $0x388] sm:$0xff]
  %v6317 = vld [vmem:[#allocation4 + $0x390] sm:$0xff]
  %v6318 = vld [vmem:[#allocation4 + $0x398] sm:$0xff]
  %v6319 = vld [vmem:[#allocation4 + $0x3a0] sm:$0xff]
  %v6320 = vld [vmem:[#allocation4 + $0x3a8] sm:$0xff]
  %v6321 = vld [vmem:[#allocation4 + $0x3b0] sm:$0xff]
  %v6322 = vld [vmem:[#allocation4 + $0x3b8] sm:$0xff]
  %v6323 = vld [vmem:[#allocation4 + $0x3c0] sm:$0xff]
  %v6324 = vld [vmem:[#allocation4 + $0x3c8] sm:$0xff]
  %v6325 = vld [vmem:[#allocation4 + $0x3d0] sm:$0xff]
  %v6326 = vld [vmem:[#allocation4 + $0x3d8] sm:$0xff]
  %v6327 = vld [vmem:[#allocation4 + $0x3e0] sm:$0xff]
  %v6328 = vld [vmem:[#allocation4 + $0x3e8] sm:$0xff]
  %v6329 = vld [vmem:[#allocation4 + $0x3f0] sm:$0xff]
  %v6330 = vld [vmem:[#allocation4 + $0x3f8] sm:$0xff]
  %v6331 = vld [vmem:[#allocation4 + $0x400] sm:$0xff]
  %v6332 = vld [vmem:[#allocation4 + $0x408] sm:$0xff]
  %v6333 = vld [vmem:[#allocation4 + $0x410] sm:$0xff]
  %v6334 = vld [vmem:[#allocation4 + $0x418] sm:$0xff]
  %v6335 = vld [vmem:[#allocation4 + $0x420] sm:$0xff]
  %v6336 = vld [vmem:[#allocation4 + $0x428] sm:$0xff]
  %v6337 = vld [vmem:[#allocation4 + $0x430] sm:$0xff]
  %v6338 = vld [vmem:[#allocation4 + $0x438] sm:$0xff]
  %v6339 = vld [vmem:[#allocation4 + $0x440] sm:$0xff]
  %v6340 = vld [vmem:[#allocation4 + $0x448] sm:$0xff]
  %v6341 = vld [vmem:[#allocation4 + $0x450] sm:$0xff]
  %v6342 = vld [vmem:[#allocation4 + $0x458] sm:$0xff]
  %v6343 = vld [vmem:[#allocation4 + $0x460] sm:$0xff]
  %v6344 = vld [vmem:[#allocation4 + $0x468] sm:$0xff]
  %v6345 = vld [vmem:[#allocation4 + $0x470] sm:$0xff]
  %v6346 = vld [vmem:[#allocation4 + $0x478] sm:$0xff]
  %v6347 = vld [vmem:[#allocation4 + $0x480] sm:$0xff]
  %v6348 = vld [vmem:[#allocation4 + $0x488] sm:$0xff]
  %v6349 = vld [vmem:[#allocation4 + $0x490] sm:$0xff]
  %v6350 = vld [vmem:[#allocation4 + $0x498] sm:$0xff]
  %v6351 = vld [vmem:[#allocation4 + $0x4a0] sm:$0xff]
  %v6352 = vld [vmem:[#allocation4 + $0x4a8] sm:$0xff]
  %v6353 = vld [vmem:[#allocation4 + $0x4b0] sm:$0xff]
  %v6354 = vld [vmem:[#allocation4 + $0x4b8] sm:$0xff]
  %v6355 = vld [vmem:[#allocation4 + $0x4c0] sm:$0xff]
  %v6356 = vld [vmem:[#allocation4 + $0x4c8] sm:$0xff]
  %v6357 = vld [vmem:[#allocation4 + $0x4d0] sm:$0xff]
  %v6358 = vld [vmem:[#allocation4 + $0x4d8] sm:$0xff]
  %v6359 = vld [vmem:[#allocation4 + $0x4e0] sm:$0xff]
  %v6360 = vld [vmem:[#allocation4 + $0x4e8] sm:$0xff]
  %v6361 = vld [vmem:[#allocation4 + $0x4f0] sm:$0xff]
  %v6362 = vld [vmem:[#allocation4 + $0x4f8] sm:$0xff]
  %v6363 = vld [vmem:[#allocation4 + $0x500] sm:$0xff]
  %v6364 = vld [vmem:[#allocation4 + $0x508] sm:$0xff]
  %v6365 = vld [vmem:[#allocation4 + $0x510] sm:$0xff]
  %v6366 = vld [vmem:[#allocation4 + $0x518] sm:$0xff]
  %v6367 = vld [vmem:[#allocation4 + $0x520] sm:$0xff]
  %v6368 = vld [vmem:[#allocation4 + $0x528] sm:$0xff]
  %v6369 = vld [vmem:[#allocation4 + $0x530] sm:$0xff]
  %v6370 = vld [vmem:[#allocation4 + $0x538] sm:$0xff]
  %v6371 = vld [vmem:[#allocation4 + $0x540] sm:$0xff]
  %v6372 = vld [vmem:[#allocation4 + $0x548] sm:$0xff]
  %v6373 = vld [vmem:[#allocation4 + $0x550] sm:$0xff]
  %v6374 = vld [vmem:[#allocation4 + $0x558] sm:$0xff]
  %v6375 = vld [vmem:[#allocation4 + $0x560] sm:$0xff]
  %v6376 = vld [vmem:[#allocation4 + $0x568] sm:$0xff]
  %v6377 = vld [vmem:[#allocation4 + $0x570] sm:$0xff]
  %v6378 = vld [vmem:[#allocation4 + $0x578] sm:$0xff]
  %v6379 = vld [vmem:[#allocation4 + $0x580] sm:$0xff]
  %v6380 = vld [vmem:[#allocation4 + $0x588] sm:$0xff]
  %v6381 = vld [vmem:[#allocation4 + $0x590] sm:$0xff]
  %v6382 = vld [vmem:[#allocation4 + $0x598] sm:$0xff]
  %v6383 = vld [vmem:[#allocation4 + $0x5a0] sm:$0xff]
  %v6384 = vld [vmem:[#allocation4 + $0x5a8] sm:$0xff]
  %v6385 = vld [vmem:[#allocation4 + $0x5b0] sm:$0xff]
  %v6386 = vld [vmem:[#allocation4 + $0x5b8] sm:$0xff]
  %v6387 = vld [vmem:[#allocation4 + $0x5c0] sm:$0xff]
  %v6388 = vld [vmem:[#allocation4 + $0x5c8] sm:$0xff]
  %v6389 = vld [vmem:[#allocation4 + $0x5d0] sm:$0xff]
  %v6390 = vld [vmem:[#allocation4 + $0x5d8] sm:$0xff]
  %v6391 = vld [vmem:[#allocation4 + $0x5e0] sm:$0xff]
  %v6392 = vld [vmem:[#allocation4 + $0x5e8] sm:$0xff]
  %v6393 = vld [vmem:[#allocation4 + $0x5f0] sm:$0xff]
  %v6394 = vld [vmem:[#allocation4 + $0x5f8] sm:$0xff]
  %v6395 = vld [vmem:[#allocation4 + $0x600] sm:$0xff]
  %v6396 = vld [vmem:[#allocation4 + $0x608] sm:$0xff]
  %v6397 = vld [vmem:[#allocation4 + $0x610] sm:$0xff]
  %v6398 = vld [vmem:[#allocation4 + $0x618] sm:$0xff]
  %v6399 = vld [vmem:[#allocation4 + $0x620] sm:$0xff]
  %v6400 = vld [vmem:[#allocation4 + $0x628] sm:$0xff]
  %v6401 = vld [vmem:[#allocation4 + $0x630] sm:$0xff]
  %v6402 = vld [vmem:[#allocation4 + $0x638] sm:$0xff]
  %v6403 = vld [vmem:[#allocation4 + $0x640] sm:$0xff]
  %v6404 = vld [vmem:[#allocation4 + $0x648] sm:$0xff]
  %v6405 = vld [vmem:[#allocation4 + $0x650] sm:$0xff]
  %v6406 = vld [vmem:[#allocation4 + $0x658] sm:$0xff]
  %v6407 = vld [vmem:[#allocation4 + $0x660] sm:$0xff]
  %v6408 = vld [vmem:[#allocation4 + $0x668] sm:$0xff]
  %v6409 = vld [vmem:[#allocation4 + $0x670] sm:$0xff]
  %v6410 = vld [vmem:[#allocation4 + $0x678] sm:$0xff]
  %v6411 = vld [vmem:[#allocation4 + $0x680] sm:$0xff]
  %v6412 = vld [vmem:[#allocation4 + $0x688] sm:$0xff]
  %v6413 = vld [vmem:[#allocation4 + $0x690] sm:$0xff]
  %v6414 = vld [vmem:[#allocation4 + $0x698] sm:$0xff]
  %v6415 = vld [vmem:[#allocation4 + $0x6a0] sm:$0xff]
  %v6416 = vld [vmem:[#allocation4 + $0x6a8] sm:$0xff]
  %v6417 = vld [vmem:[#allocation4 + $0x6b0] sm:$0xff]
  %v6418 = vld [vmem:[#allocation4 + $0x6b8] sm:$0xff]
  %v6419 = vld [vmem:[#allocation4 + $0x6c0] sm:$0xff]
  %v6420 = vld [vmem:[#allocation4 + $0x6c8] sm:$0xff]
  %v6421 = vld [vmem:[#allocation4 + $0x6d0] sm:$0xff]
  %v6422 = vld [vmem:[#allocation4 + $0x6d8] sm:$0xff]
  %v6423 = vld [vmem:[#allocation4 + $0x6e0] sm:$0xff]
  %v6424 = vld [vmem:[#allocation4 + $0x6e8] sm:$0xff]
  %v6425 = vld [vmem:[#allocation4 + $0x6f0] sm:$0xff]
  %v6426 = vld [vmem:[#allocation4 + $0x6f8] sm:$0xff]
  %v6427 = vld [vmem:[#allocation4 + $0x700] sm:$0xff]
  %v6428 = vld [vmem:[#allocation4 + $0x708] sm:$0xff]
  %v6429 = vld [vmem:[#allocation4 + $0x710] sm:$0xff]
  %v6430 = vld [vmem:[#allocation4 + $0x718] sm:$0xff]
  %v6431 = vld [vmem:[#allocation4 + $0x720] sm:$0xff]
  %v6432 = vld [vmem:[#allocation4 + $0x728] sm:$0xff]
  %v6433 = vld [vmem:[#allocation4 + $0x730] sm:$0xff]
  %v6434 = vld [vmem:[#allocation4 + $0x738] sm:$0xff]
  %v6435 = vld [vmem:[#allocation4 + $0x740] sm:$0xff]
  %v6436 = vld [vmem:[#allocation4 + $0x748] sm:$0xff]
  %v6437 = vld [vmem:[#allocation4 + $0x750] sm:$0xff]
  %v6438 = vld [vmem:[#allocation4 + $0x758] sm:$0xff]
  %v6439 = vld [vmem:[#allocation4 + $0x760] sm:$0xff]
  %v6440 = vld [vmem:[#allocation4 + $0x768] sm:$0xff]
  %v6441 = vld [vmem:[#allocation4 + $0x770] sm:$0xff]
  %v6442 = vld [vmem:[#allocation4 + $0x778] sm:$0xff]
  %v6443 = vld [vmem:[#allocation4 + $0x780] sm:$0xff]
  %v6444 = vld [vmem:[#allocation4 + $0x788] sm:$0xff]
  %v6445 = vld [vmem:[#allocation4 + $0x790] sm:$0xff]
  %v6446 = vld [vmem:[#allocation4 + $0x798] sm:$0xff]
  %v6447 = vld [vmem:[#allocation4 + $0x7a0] sm:$0xff]
  %v6448 = vld [vmem:[#allocation4 + $0x7a8] sm:$0xff]
  %v6449 = vld [vmem:[#allocation4 + $0x7b0] sm:$0xff]
  %v6450 = vld [vmem:[#allocation4 + $0x7b8] sm:$0xff]
  %v6451 = vld [vmem:[#allocation4 + $0x7c0] sm:$0xff]
  %v6452 = vld [vmem:[#allocation4 + $0x7c8] sm:$0xff]
  %v6453 = vld [vmem:[#allocation4 + $0x7d0] sm:$0xff]
  %v6454 = vld [vmem:[#allocation4 + $0x7d8] sm:$0xff]
  %v6455 = vld [vmem:[#allocation4 + $0x7e0] sm:$0xff]
  %v6456 = vld [vmem:[#allocation4 + $0x7e8] sm:$0xff]
  %v6457 = vld [vmem:[#allocation4 + $0x7f0] sm:$0xff]
  %v6458 = vld [vmem:[#allocation4 + $0x7f8] sm:$0xff]
  %v6459 = vld [vmem:[#allocation4 + $0x800] sm:$0xff]
  %v6460 = vld [vmem:[#allocation4 + $0x808] sm:$0xff]
  %v6461 = vld [vmem:[#allocation4 + $0x810] sm:$0xff]
  %v6462 = vld [vmem:[#allocation4 + $0x818] sm:$0xff]
  %v6463 = vld [vmem:[#allocation4 + $0x820] sm:$0xff]
  %v6464 = vld [vmem:[#allocation4 + $0x828] sm:$0xff]
  %v6465 = vld [vmem:[#allocation4 + $0x830] sm:$0xff]
  %v6466 = vld [vmem:[#allocation4 + $0x838] sm:$0xff]
  %v6467 = vld [vmem:[#allocation4 + $0x840] sm:$0xff]
  %v6468 = vld [vmem:[#allocation4 + $0x848] sm:$0xff]
  %v6469 = vld [vmem:[#allocation4 + $0x850] sm:$0xff]
  %v6470 = vld [vmem:[#allocation4 + $0x858] sm:$0xff]
  %v6471 = vld [vmem:[#allocation4 + $0x860] sm:$0xff]
  %v6472 = vld [vmem:[#allocation4 + $0x868] sm:$0xff]
  %v6473 = vld [vmem:[#allocation4 + $0x870] sm:$0xff]
  %v6474 = vld [vmem:[#allocation4 + $0x878] sm:$0xff]
  %v6475 = vld [vmem:[#allocation4 + $0x880] sm:$0xff]
  %v6476 = vld [vmem:[#allocation4 + $0x888] sm:$0xff]
  %v6477 = vld [vmem:[#allocation4 + $0x890] sm:$0xff]
  %v6478 = vld [vmem:[#allocation4 + $0x898] sm:$0xff]
  %v6479 = vld [vmem:[#allocation4 + $0x8a0] sm:$0xff]
  %v6480 = vld [vmem:[#allocation4 + $0x8a8] sm:$0xff]
  %v6481 = vld [vmem:[#allocation4 + $0x8b0] sm:$0xff]
  %v6482 = vld [vmem:[#allocation4 + $0x8b8] sm:$0xff]
  %v6483 = vld [vmem:[#allocation4 + $0x8c0] sm:$0xff]
  %v6484 = vld [vmem:[#allocation4 + $0x8c8] sm:$0xff]
  %v6485 = vld [vmem:[#allocation4 + $0x8d0] sm:$0xff]
  %v6486 = vld [vmem:[#allocation4 + $0x8d8] sm:$0xff]
  %v6487 = vld [vmem:[#allocation4 + $0x8e0] sm:$0xff]
  %v6488 = vld [vmem:[#allocation4 + $0x8e8] sm:$0xff]
  %v6489 = vld [vmem:[#allocation4 + $0x8f0] sm:$0xff]
  %v6490 = vld [vmem:[#allocation4 + $0x8f8] sm:$0xff]
  %v6491 = vld [vmem:[%s7] sm:$0xf]
  %v6492 = vld [vmem:[%s7 + $0x4] sm:$0xf]
  %v6493 = vld [vmem:[%s7 + $0x8] sm:$0xf]
  %v6494 = vld [vmem:[%s7 + $0xc] sm:$0xf]
  %v6495 = vld [vmem:[%s7 + $0x10] sm:$0xf]
  %v6496 = vld [vmem:[%s7 + $0x14] sm:$0xf]
  %v6497 = vld [vmem:[%s7 + $0x18] sm:$0xf]
  %v6498 = vld [vmem:[%s7 + $0x1c] sm:$0xf]
  %v6499 = vld [vmem:[%s7 + $0x20] sm:$0xf]
  %v6500 = vld [vmem:[%s7 + $0x24] sm:$0xf]
  %v6501 = vld [vmem:[%s7 + $0x28] sm:$0xf]
  %v6502 = vld [vmem:[%s7 + $0x2c] sm:$0xf]
  %v6503 = vld [vmem:[%s7 + $0x30] sm:$0xf]
  %v6504 = vld [vmem:[%s7 + $0x34] sm:$0xf]
  %v6505 = vld [vmem:[%s7 + $0x38] sm:$0xf]
  %v6506 = vld [vmem:[%s7 + $0x3c] sm:$0xf]
  %v6507 = vld [vmem:[%s7 + $0x40] sm:$0xf]
  %v6508 = vld [vmem:[%s7 + $0x44] sm:$0xf]
  %v6509 = vld [vmem:[%s7 + $0x48] sm:$0xf]
  %v6510 = vld [vmem:[%s7 + $0x4c] sm:$0xf]
  %v6511 = vld [vmem:[%s7 + $0x50] sm:$0xf]
  %v6512 = vld [vmem:[%s7 + $0x54] sm:$0xf]
  %v6513 = vld [vmem:[%s7 + $0x58] sm:$0xf]
  %v6514 = vld [vmem:[%s7 + $0x5c] sm:$0xf]
  %v6515 = vld [vmem:[%s7 + $0x60] sm:$0xf]
  %v6516 = vld [vmem:[%s7 + $0x64] sm:$0xf]
  %v6517 = vld [vmem:[%s7 + $0x68] sm:$0xf]
  %v6518 = vld [vmem:[%s7 + $0x6c] sm:$0xf]
  %v6519 = vld [vmem:[%s7 + $0x70] sm:$0xf]
  %v6520 = vld [vmem:[%s7 + $0x74] sm:$0xf]
  %v6521 = vld [vmem:[%s7 + $0x78] sm:$0xf]
  %v6522 = vld [vmem:[%s7 + $0x7c] sm:$0xf]
  %v6523 = vld [vmem:[%s7 + $0x80] sm:$0xf]
  %v6524 = vld [vmem:[%s7 + $0x84] sm:$0xf]
  %v6525 = vld [vmem:[%s7 + $0x88] sm:$0xf]
  %v6526 = vld [vmem:[%s7 + $0x8c] sm:$0xf]
  %v6527 = vld [vmem:[%s7 + $0x90] sm:$0xf]
  %v6528 = vld [vmem:[%s7 + $0x94] sm:$0xf]
  %v6529 = vld [vmem:[%s7 + $0x98] sm:$0xf]
  %v6530 = vld [vmem:[%s7 + $0x9c] sm:$0xf]
  %v6531 = vld [vmem:[%s7 + $0xa0] sm:$0xf]
  %v6532 = vld [vmem:[%s7 + $0xa4] sm:$0xf]
  %v6533 = vld [vmem:[%s7 + $0xa8] sm:$0xf]
  %v6534 = vld [vmem:[%s7 + $0xac] sm:$0xf]
  %v6535 = vld [vmem:[%s7 + $0xb0] sm:$0xf]
  %v6536 = vld [vmem:[%s7 + $0xb4] sm:$0xf]
  %v6537 = vld [vmem:[%s7 + $0xb8] sm:$0xf]
  %v6538 = vld [vmem:[%s7 + $0xbc] sm:$0xf]
  %v6539 = vld [vmem:[%s7 + $0xc0] sm:$0xf]
  %v6540 = vld [vmem:[%s7 + $0xc4] sm:$0xf]
  %v6541 = vld [vmem:[%s7 + $0xc8] sm:$0xf]
  %v6542 = vld [vmem:[%s7 + $0xcc] sm:$0xf]
  %v6543 = vld [vmem:[%s7 + $0xd0] sm:$0xf]
  %v6544 = vld [vmem:[%s7 + $0xd4] sm:$0xf]
  %v6545 = vld [vmem:[%s7 + $0xd8] sm:$0xf]
  %v6546 = vld [vmem:[%s7 + $0xdc] sm:$0xf]
  %v6547 = vld [vmem:[%s7 + $0xe0] sm:$0xf]
  %v6548 = vld [vmem:[%s7 + $0xe4] sm:$0xf]
  %v6549 = vld [vmem:[%s7 + $0xe8] sm:$0xf]
  %v6550 = vld [vmem:[%s7 + $0xec] sm:$0xf]
  %v6551 = vld [vmem:[%s7 + $0xf0] sm:$0xf]
  %v6552 = vld [vmem:[%s7 + $0xf4] sm:$0xf]
  %v6553 = vld [vmem:[%s7 + $0xf8] sm:$0xf]
  %v6554 = vld [vmem:[%s7 + $0xfc] sm:$0xf]
  %v6555 = vld [vmem:[%s7 + $0x100] sm:$0xf]
  %v6556 = vld [vmem:[%s7 + $0x104] sm:$0xf]
  %v6557 = vld [vmem:[%s7 + $0x108] sm:$0xf]
  %v6558 = vld [vmem:[%s7 + $0x10c] sm:$0xf]
  %v6559 = vld [vmem:[%s7 + $0x110] sm:$0xf]
  %v6560 = vld [vmem:[%s7 + $0x114] sm:$0xf]
  %v6561 = vld [vmem:[%s7 + $0x118] sm:$0xf]
  %v6562 = vld [vmem:[%s7 + $0x11c] sm:$0xf]
  %v6563 = vld [vmem:[%s7 + $0x120] sm:$0xf]
  %v6564 = vld [vmem:[%s7 + $0x124] sm:$0xf]
  %v6565 = vld [vmem:[%s7 + $0x128] sm:$0xf]
  %v6566 = vld [vmem:[%s7 + $0x12c] sm:$0xf]
  %v6567 = vld [vmem:[%s7 + $0x130] sm:$0xf]
  %v6568 = vld [vmem:[%s7 + $0x134] sm:$0xf]
  %v6569 = vld [vmem:[%s7 + $0x138] sm:$0xf]
  %v6570 = vld [vmem:[%s7 + $0x13c] sm:$0xf]
  %v6571 = vld [vmem:[%s7 + $0x140] sm:$0xf]
  %v6572 = vld [vmem:[%s7 + $0x144] sm:$0xf]
  %v6573 = vld [vmem:[%s7 + $0x148] sm:$0xf]
  %v6574 = vld [vmem:[%s7 + $0x14c] sm:$0xf]
  %v6575 = vld [vmem:[%s7 + $0x150] sm:$0xf]
  %v6576 = vld [vmem:[%s7 + $0x154] sm:$0xf]
  %v6577 = vld [vmem:[%s7 + $0x158] sm:$0xf]
  %v6578 = vld [vmem:[%s7 + $0x15c] sm:$0xf]
  %v6579 = vld [vmem:[%s7 + $0x160] sm:$0xf]
  %v6580 = vld [vmem:[%s7 + $0x164] sm:$0xf]
  %v6581 = vld [vmem:[%s7 + $0x168] sm:$0xf]
  %v6582 = vld [vmem:[%s7 + $0x16c] sm:$0xf]
  %v6583 = vld [vmem:[%s7 + $0x170] sm:$0xf]
  %v6584 = vld [vmem:[%s7 + $0x174] sm:$0xf]
  %v6585 = vld [vmem:[%s7 + $0x178] sm:$0xf]
  %v6586 = vld [vmem:[%s7 + $0x17c] sm:$0xf]
  %v6587 = vld [vmem:[%s7 + $0x180] sm:$0xf]
  %v6588 = vld [vmem:[%s7 + $0x184] sm:$0xf]
  %v6589 = vld [vmem:[%s7 + $0x188] sm:$0xf]
  %v6590 = vld [vmem:[%s7 + $0x18c] sm:$0xf]
  %v6591 = vld [vmem:[%s7 + $0x190] sm:$0xf]
  %v6592 = vld [vmem:[%s7 + $0x194] sm:$0xf]
  %v6593 = vld [vmem:[%s7 + $0x198] sm:$0xf]
  %v6594 = vld [vmem:[%s7 + $0x19c] sm:$0xf]
  %v6595 = vld [vmem:[%s7 + $0x1a0] sm:$0xf]
  %v6596 = vld [vmem:[%s7 + $0x1a4] sm:$0xf]
  %v6597 = vld [vmem:[%s7 + $0x1a8] sm:$0xf]
  %v6598 = vld [vmem:[%s7 + $0x1ac] sm:$0xf]
  %v6599 = vld [vmem:[%s7 + $0x1b0] sm:$0xf]
  %v6600 = vld [vmem:[%s7 + $0x1b4] sm:$0xf]
  %v6601 = vld [vmem:[%s7 + $0x1b8] sm:$0xf]
  %v6602 = vld [vmem:[%s7 + $0x1bc] sm:$0xf]
  %v6603 = vld [vmem:[%s7 + $0x1c0] sm:$0xf]
  %v6604 = vld [vmem:[%s7 + $0x1c4] sm:$0xf]
  %v6605 = vld [vmem:[%s7 + $0x1c8] sm:$0xf]
  %v6606 = vld [vmem:[%s7 + $0x1cc] sm:$0xf]
  %v6607 = vld [vmem:[%s7 + $0x1d0] sm:$0xf]
  %v6608 = vld [vmem:[%s7 + $0x1d4] sm:$0xf]
  %v6609 = vld [vmem:[%s7 + $0x1d8] sm:$0xf]
  %v6610 = vld [vmem:[%s7 + $0x1dc] sm:$0xf]
  %v6611 = vld [vmem:[%s7 + $0x1e0] sm:$0xf]
  %v6612 = vld [vmem:[%s7 + $0x1e4] sm:$0xf]
  %v6613 = vld [vmem:[%s7 + $0x1e8] sm:$0xf]
  %v6614 = vld [vmem:[%s7 + $0x1ec] sm:$0xf]
  %v6615 = vld [vmem:[%s7 + $0x1f0] sm:$0xf]
  %v6616 = vld [vmem:[%s7 + $0x1f4] sm:$0xf]
  %v6617 = vld [vmem:[%s7 + $0x1f8] sm:$0xf]
  %v6618 = vld [vmem:[%s7 + $0x1fc] sm:$0xf]
  %v6619 = vld [vmem:[%s7 + $0x200] sm:$0xf]
  %v6620 = vld [vmem:[%s7 + $0x204] sm:$0xf]
  %v6621 = vld [vmem:[%s7 + $0x208] sm:$0xf]
  %v6622 = vld [vmem:[%s7 + $0x20c] sm:$0xf]
  %v6623 = vld [vmem:[%s7 + $0x210] sm:$0xf]
  %v6624 = vld [vmem:[%s7 + $0x214] sm:$0xf]
  %v6625 = vld [vmem:[%s7 + $0x218] sm:$0xf]
  %v6626 = vld [vmem:[%s7 + $0x21c] sm:$0xf]
  %v6627 = vld [vmem:[%s7 + $0x220] sm:$0xf]
  %v6628 = vld [vmem:[%s7 + $0x224] sm:$0xf]
  %v6629 = vld [vmem:[%s7 + $0x228] sm:$0xf]
  %v6630 = vld [vmem:[%s7 + $0x22c] sm:$0xf]
  %v6631 = vld [vmem:[%s7 + $0x230] sm:$0xf]
  %v6632 = vld [vmem:[%s7 + $0x234] sm:$0xf]
  %v6633 = vld [vmem:[%s7 + $0x238] sm:$0xf]
  %v6634 = vld [vmem:[%s7 + $0x23c] sm:$0xf]
  %v6779 = vunpack.c.l.b16 %v6491
  %v6780 = vunpack.c.l.b16 %v6492
  %v6781 = vunpack.c.l.b16 %v6493
  %v6782 = vunpack.c.l.b16 %v6494
  %v6783 = vunpack.c.l.b16 %v6495
  %v6784 = vunpack.c.l.b16 %v6496
  %v6785 = vunpack.c.l.b16 %v6497
  %v6786 = vunpack.c.l.b16 %v6498
  %v6787 = vunpack.c.l.b16 %v6499
  %v6788 = vunpack.c.l.b16 %v6500
  %v6789 = vunpack.c.l.b16 %v6501
  %v6790 = vunpack.c.l.b16 %v6502
  %v6791 = vunpack.c.l.b16 %v6503
  %v6792 = vunpack.c.l.b16 %v6504
  %v6793 = vunpack.c.l.b16 %v6505
  %v6794 = vunpack.c.l.b16 %v6506
  %v6795 = vunpack.c.l.b16 %v6507
  %v6796 = vunpack.c.l.b16 %v6508
  %v6797 = vunpack.c.l.b16 %v6509
  %v6798 = vunpack.c.l.b16 %v6510
  %v6799 = vunpack.c.l.b16 %v6511
  %v6800 = vunpack.c.l.b16 %v6512
  %v6801 = vunpack.c.l.b16 %v6513
  %v6802 = vunpack.c.l.b16 %v6514
  %v6803 = vunpack.c.l.b16 %v6515
  %v6804 = vunpack.c.l.b16 %v6516
  %v6805 = vunpack.c.l.b16 %v6517
  %v6806 = vunpack.c.l.b16 %v6518
  %v6807 = vunpack.c.l.b16 %v6519
  %v6808 = vunpack.c.l.b16 %v6520
  %v6809 = vunpack.c.l.b16 %v6521
  %v6810 = vunpack.c.l.b16 %v6522
  %v6811 = vunpack.c.l.b16 %v6523
  %v6812 = vunpack.c.l.b16 %v6524
  %v6813 = vunpack.c.l.b16 %v6525
  %v6814 = vunpack.c.l.b16 %v6526
  %v6815 = vunpack.c.l.b16 %v6527
  %v6816 = vunpack.c.l.b16 %v6528
  %v6817 = vunpack.c.l.b16 %v6529
  %v6818 = vunpack.c.l.b16 %v6530
  %v6819 = vunpack.c.l.b16 %v6531
  %v6820 = vunpack.c.l.b16 %v6532
  %v6821 = vunpack.c.l.b16 %v6533
  %v6822 = vunpack.c.l.b16 %v6534
  %v6823 = vunpack.c.l.b16 %v6535
  %v6824 = vunpack.c.l.b16 %v6536
  %v6825 = vunpack.c.l.b16 %v6537
  %v6826 = vunpack.c.l.b16 %v6538
  %v6827 = vunpack.c.l.b16 %v6539
  %v6828 = vunpack.c.l.b16 %v6540
  %v6829 = vunpack.c.l.b16 %v6541
  %v6830 = vunpack.c.l.b16 %v6542
  %v6831 = vunpack.c.l.b16 %v6543
  %v6832 = vunpack.c.l.b16 %v6544
  %v6833 = vunpack.c.l.b16 %v6545
  %v6834 = vunpack.c.l.b16 %v6546
  %v6835 = vunpack.c.l.b16 %v6547
  %v6836 = vunpack.c.l.b16 %v6548
  %v6837 = vunpack.c.l.b16 %v6549
  %v6838 = vunpack.c.l.b16 %v6550
  %v6839 = vunpack.c.l.b16 %v6551
  %v6840 = vunpack.c.l.b16 %v6552
  %v6841 = vunpack.c.l.b16 %v6553
  %v6842 = vunpack.c.l.b16 %v6554
  %v6843 = vunpack.c.l.b16 %v6555
  %v6844 = vunpack.c.l.b16 %v6556
  %v6845 = vunpack.c.l.b16 %v6557
  %v6846 = vunpack.c.l.b16 %v6558
  %v6847 = vunpack.c.l.b16 %v6559
  %v6848 = vunpack.c.l.b16 %v6560
  %v6849 = vunpack.c.l.b16 %v6561
  %v6850 = vunpack.c.l.b16 %v6562
  %v6851 = vunpack.c.l.b16 %v6563
  %v6852 = vunpack.c.l.b16 %v6564
  %v6853 = vunpack.c.l.b16 %v6565
  %v6854 = vunpack.c.l.b16 %v6566
  %v6855 = vunpack.c.l.b16 %v6567
  %v6856 = vunpack.c.l.b16 %v6568
  %v6857 = vunpack.c.l.b16 %v6569
  %v6858 = vunpack.c.l.b16 %v6570
  %v6859 = vunpack.c.l.b16 %v6571
  %v6860 = vunpack.c.l.b16 %v6572
  %v6861 = vunpack.c.l.b16 %v6573
  %v6862 = vunpack.c.l.b16 %v6574
  %v6863 = vunpack.c.l.b16 %v6575
  %v6864 = vunpack.c.l.b16 %v6576
  %v6865 = vunpack.c.l.b16 %v6577
  %v6866 = vunpack.c.l.b16 %v6578
  %v6867 = vunpack.c.l.b16 %v6579
  %v6868 = vunpack.c.l.b16 %v6580
  %v6869 = vunpack.c.l.b16 %v6581
  %v6870 = vunpack.c.l.b16 %v6582
  %v6871 = vunpack.c.l.b16 %v6583
  %v6872 = vunpack.c.l.b16 %v6584
  %v6873 = vunpack.c.l.b16 %v6585
  %v6874 = vunpack.c.l.b16 %v6586
  %v6875 = vunpack.c.l.b16 %v6587
  %v6876 = vunpack.c.l.b16 %v6588
  %v6877 = vunpack.c.l.b16 %v6589
  %v6878 = vunpack.c.l.b16 %v6590
  %v6879 = vunpack.c.l.b16 %v6591
  %v6880 = vunpack.c.l.b16 %v6592
  %v6881 = vunpack.c.l.b16 %v6593
  %v6882 = vunpack.c.l.b16 %v6594
  %v6883 = vunpack.c.l.b16 %v6595
  %v6884 = vunpack.c.l.b16 %v6596
  %v6885 = vunpack.c.l.b16 %v6597
  %v6886 = vunpack.c.l.b16 %v6598
  %v6887 = vunpack.c.l.b16 %v6599
  %v6888 = vunpack.c.l.b16 %v6600
  %v6889 = vunpack.c.l.b16 %v6601
  %v6890 = vunpack.c.l.b16 %v6602
  %v6891 = vunpack.c.l.b16 %v6603
  %v6892 = vunpack.c.l.b16 %v6604
  %v6893 = vunpack.c.l.b16 %v6605
  %v6894 = vunpack.c.l.b16 %v6606
  %v6895 = vunpack.c.l.b16 %v6607
  %v6896 = vunpack.c.l.b16 %v6608
  %v6897 = vunpack.c.l.b16 %v6609
  %v6898 = vunpack.c.l.b16 %v6610
  %v6899 = vunpack.c.l.b16 %v6611
  %v6900 = vunpack.c.l.b16 %v6612
  %v6901 = vunpack.c.l.b16 %v6613
  %v6902 = vunpack.c.l.b16 %v6614
  %v6903 = vunpack.c.l.b16 %v6615
  %v6904 = vunpack.c.l.b16 %v6616
  %v6905 = vunpack.c.l.b16 %v6617
  %v6906 = vunpack.c.l.b16 %v6618
  %v6907 = vunpack.c.l.b16 %v6619
  %v6908 = vunpack.c.l.b16 %v6620
  %v6909 = vunpack.c.l.b16 %v6621
  %v6910 = vunpack.c.l.b16 %v6622
  %v6911 = vunpack.c.l.b16 %v6623
  %v6912 = vunpack.c.l.b16 %v6624
  %v6913 = vunpack.c.l.b16 %v6625
  %v6914 = vunpack.c.l.b16 %v6626
  %v6915 = vunpack.c.l.b16 %v6627
  %v6916 = vunpack.c.l.b16 %v6628
  %v6917 = vunpack.c.l.b16 %v6629
  %v6918 = vunpack.c.l.b16 %v6630
  %v6919 = vunpack.c.l.b16 %v6631
  %v6920 = vunpack.c.l.b16 %v6632
  %v6921 = vunpack.c.l.b16 %v6633
  %v6922 = vunpack.c.l.b16 %v6634
  %v6923 = vpack.c.b16 %v6780, %v6779
  %v6924 = vpack.c.b16 %v6782, %v6781
  %v6925 = vpack.c.b16 %v6784, %v6783
  %v6926 = vpack.c.b16 %v6786, %v6785
  %v6927 = vpack.c.b16 %v6788, %v6787
  %v6928 = vpack.c.b16 %v6790, %v6789
  %v6929 = vpack.c.b16 %v6792, %v6791
  %v6930 = vpack.c.b16 %v6794, %v6793
  %v6931 = vpack.c.b16 %v6796, %v6795
  %v6932 = vpack.c.b16 %v6798, %v6797
  %v6933 = vpack.c.b16 %v6800, %v6799
  %v6934 = vpack.c.b16 %v6802, %v6801
  %v6935 = vpack.c.b16 %v6804, %v6803
  %v6936 = vpack.c.b16 %v6806, %v6805
  %v6937 = vpack.c.b16 %v6808, %v6807
  %v6938 = vpack.c.b16 %v6810, %v6809
  %v6939 = vpack.c.b16 %v6812, %v6811
  %v6940 = vpack.c.b16 %v6814, %v6813
  %v6941 = vpack.c.b16 %v6816, %v6815
  %v6942 = vpack.c.b16 %v6818, %v6817
  %v6943 = vpack.c.b16 %v6820, %v6819
  %v6944 = vpack.c.b16 %v6822, %v6821
  %v6945 = vpack.c.b16 %v6824, %v6823
  %v6946 = vpack.c.b16 %v6826, %v6825
  %v6947 = vpack.c.b16 %v6828, %v6827
  %v6948 = vpack.c.b16 %v6830, %v6829
  %v6949 = vpack.c.b16 %v6832, %v6831
  %v6950 = vpack.c.b16 %v6834, %v6833
  %v6951 = vpack.c.b16 %v6836, %v6835
  %v6952 = vpack.c.b16 %v6838, %v6837
  %v6953 = vpack.c.b16 %v6840, %v6839
  %v6954 = vpack.c.b16 %v6842, %v6841
  %v6955 = vpack.c.b16 %v6844, %v6843
  %v6956 = vpack.c.b16 %v6846, %v6845
  %v6957 = vpack.c.b16 %v6848, %v6847
  %v6958 = vpack.c.b16 %v6850, %v6849
  %v6959 = vpack.c.b16 %v6852, %v6851
  %v6960 = vpack.c.b16 %v6854, %v6853
  %v6961 = vpack.c.b16 %v6856, %v6855
  %v6962 = vpack.c.b16 %v6858, %v6857
  %v6963 = vpack.c.b16 %v6860, %v6859
  %v6964 = vpack.c.b16 %v6862, %v6861
  %v6965 = vpack.c.b16 %v6864, %v6863
  %v6966 = vpack.c.b16 %v6866, %v6865
  %v6967 = vpack.c.b16 %v6868, %v6867
  %v6968 = vpack.c.b16 %v6870, %v6869
  %v6969 = vpack.c.b16 %v6872, %v6871
  %v6970 = vpack.c.b16 %v6874, %v6873
  %v6971 = vpack.c.b16 %v6876, %v6875
  %v6972 = vpack.c.b16 %v6878, %v6877
  %v6973 = vpack.c.b16 %v6880, %v6879
  %v6974 = vpack.c.b16 %v6882, %v6881
  %v6975 = vpack.c.b16 %v6884, %v6883
  %v6976 = vpack.c.b16 %v6886, %v6885
  %v6977 = vpack.c.b16 %v6888, %v6887
  %v6978 = vpack.c.b16 %v6890, %v6889
  %v6979 = vpack.c.b16 %v6892, %v6891
  %v6980 = vpack.c.b16 %v6894, %v6893
  %v6981 = vpack.c.b16 %v6896, %v6895
  %v6982 = vpack.c.b16 %v6898, %v6897
  %v6983 = vpack.c.b16 %v6900, %v6899
  %v6984 = vpack.c.b16 %v6902, %v6901
  %v6985 = vpack.c.b16 %v6904, %v6903
  %v6986 = vpack.c.b16 %v6906, %v6905
  %v6987 = vpack.c.b16 %v6908, %v6907
  %v6988 = vpack.c.b16 %v6910, %v6909
  %v6989 = vpack.c.b16 %v6912, %v6911
  %v6990 = vpack.c.b16 %v6914, %v6913
  %v6991 = vpack.c.b16 %v6916, %v6915
  %v6992 = vpack.c.b16 %v6918, %v6917
  %v6993 = vpack.c.b16 %v6920, %v6919
  %v6994 = vpack.c.b16 %v6922, %v6921
  %7067 = vmatprep.subr.bf16.mxu0 0
  %7068 = vmatpush1.bf16.msra.mxu0 %v6923
  %7069 = vmatprep.subr.bf16.mxu0 0
  %7070 = vmatpush1.bf16.msra.mxu0 %v6924
  %7071 = vmatprep.subr.bf16.mxu0 0
  %7072 = vmatpush1.bf16.msra.mxu0 %v6925
  %7073 = vmatprep.subr.bf16.mxu0 0
  %7074 = vmatpush1.bf16.msra.mxu0 %v6926
  %7075 = vmatprep.subr.bf16.mxu0 0
  %7076 = vmatpush1.bf16.msra.mxu0 %v6927
  %7077 = vmatprep.subr.bf16.mxu0 0
  %7078 = vmatpush1.bf16.msra.mxu0 %v6928
  %7079 = vmatprep.subr.bf16.mxu0 0
  %7080 = vmatpush1.bf16.msra.mxu0 %v6929
  %7081 = vmatprep.subr.bf16.mxu0 0
  %7082 = vmatpush1.bf16.msra.mxu0 %v6930
  %7083 = vmatprep.subr.bf16.mxu0 0
  %7084 = vmatpush1.bf16.msra.mxu0 %v6931
  %7085 = vmatprep.subr.bf16.mxu0 0
  %7086 = vmatpush1.bf16.msra.mxu0 %v6932
  %7087 = vmatprep.subr.bf16.mxu0 0
  %7088 = vmatpush1.bf16.msra.mxu0 %v6933
  %7089 = vmatprep.subr.bf16.mxu0 0
  %7090 = vmatpush1.bf16.msra.mxu0 %v6934
  %7091 = vmatprep.subr.bf16.mxu0 0
  %7092 = vmatpush1.bf16.msra.mxu0 %v6935
  %7093 = vmatprep.subr.bf16.mxu0 0
  %7094 = vmatpush1.bf16.msra.mxu0 %v6936
  %7095 = vmatprep.subr.bf16.mxu0 0
  %7096 = vmatpush1.bf16.msra.mxu0 %v6937
  %7097 = vmatprep.subr.bf16.mxu0 0
  %7098 = vmatpush1.bf16.msra.mxu0 %v6938
  %7099 = vmatprep.mubr.bf16.mxu0 %v6204
  %7100 = vmatmul.mubr.bf16.gmra.mrb[0].mxu0 %v6203
  %v7101 = vpop.f32.mrb[0].mxu0
  %v7102 = vadd.f32 0.0, %v7101
  %v7103 = vpop.f32.mrb[0].mxu0
  %v7104 = vpop.f32.mrb[0].mxu0
  %v7105 = vadd.f32 0.0, %v7104
  %v7106 = vpop.f32.mrb[0].mxu0
  %7107 = vmatprep.mubr.bf16.mxu0 %v6213
  %7108 = vmatmul.mubr.bf16.gmra.mrb[0].mxu0 %v6212
  %v7109 = vpop.f32.mrb[0].mxu0
  %v7110 = vadd.f32 0.0, %v7109
  %v7111 = vpop.f32.mrb[0].mxu0
  %v7112 = vpop.f32.mrb[0].mxu0
  %v7113 = vadd.f32 0.0, %v7112
  %v7114 = vpop.f32.mrb[0].mxu0
  %7115 = vmatprep.mubr.bf16.mxu0 %v6222
  %7116 = vmatmul.mubr.bf16.gmra.mrb[0].mxu0 %v6221
  %v7117 = vpop.f32.mrb[0].mxu0
  %v7118 = vadd.f32 0.0, %v7117
  %v7119 = vpop.f32.mrb[0].mxu0
  %v7120 = vpop.f32.mrb[0].mxu0
  %v7121 = vadd.f32 0.0, %v7120
  %v7122 = vpop.f32.mrb[0].mxu0
  %7123 = vmatprep.mubr.bf16.mxu0 %v6231
  %7124 = vmatmul.mubr.bf16.gmra.mrb[0].mxu0 %v6230
  %v7125 = vpop.f32.mrb[0].mxu0
  %v7126 = vadd.f32 0.0, %v7125
  %v7127 = vpop.f32.mrb[0].mxu0
  %v7128 = vpop.f32.mrb[0].mxu0
  %v7129 = vadd.f32 0.0, %v7128
  %v7130 = vpop.f32.mrb[0].mxu0
  %7131 = vmatprep.mubr.bf16.mxu0 %v6240
  %7132 = vmatmul.mubr.bf16.gmra.mrb[0].mxu0 %v6239
  %v7133 = vpop.f32.mrb[0].mxu0
  %v7134 = vadd.f32 0.0, %v7133
  %v7135 = vpop.f32.mrb[0].mxu0
  %v7136 = vpop.f32.mrb[0].mxu0
  %v7137 = vadd.f32 0.0, %v7136
  %v7138 = vpop.f32.mrb[0].mxu0
  %7139 = vmatprep.mubr.bf16.mxu0 %v6249
  %7140 = vmatmul.mubr.bf16.gmra.mrb[0].mxu0 %v6248
  %v7141 = vpop.f32.mrb[0].mxu0
  %v7142 = vadd.f32 0.0, %v7141
  %v7143 = vpop.f32.mrb[0].mxu0
  %v7144 = vpop.f32.mrb[0].mxu0
  %v7145 = vadd.f32 0.0, %v7144
  %v7146 = vpop.f32.mrb[0].mxu0
  %7147 = vmatprep.mubr.bf16.mxu0 %v6258
  %7148 = vmatmul.mubr.bf16.gmra.mrb[0].mxu0 %v6257
  %v7149 = vpop.f32.mrb[0].mxu0
  %v7150 = vadd.f32 0.0, %v7149
  %v7151 = vpop.f32.mrb[0].mxu0
  %v7152 = vpop.f32.mrb[0].mxu0
  %v7153 = vadd.f32 0.0, %v7152
  %v7154 = vpop.f32.mrb[0].mxu0
  %7155 = vmatprep.mubr.bf16.mxu0 %v6267
  %7156 = vmatmul.mubr.bf16.gmra.mrb[0].mxu0 %v6266
  %v7157 = vpop.f32.mrb[0].mxu0
  %v7158 = vadd.f32 0.0, %v7157
  %v7159 = vpop.f32.mrb[0].mxu0
  %v7160 = vpop.f32.mrb[0].mxu0
  %v7161 = vadd.f32 0.0, %v7160
  %v7162 = vpop.f32.mrb[0].mxu0
  %7163 = vmatprep.mubr.bf16.mxu0 %v6276
  %7164 = vmatmul.mubr.bf16.gmra.mrb[0].mxu0 %v6275
  %v7165 = vpop.f32.mrb[0].mxu0
  %v7166 = vadd.f32 0.0, %v7165
  %v7167 = vpop.f32.mrb[0].mxu0
  %v7168 = vpop.f32.mrb[0].mxu0
  %v7169 = vadd.f32 0.0, %v7168
  %v7170 = vpop.f32.mrb[0].mxu0
  %7171 = vmatprep.mubr.bf16.mxu0 %v6285
  %7172 = vmatmul.mubr.bf16.gmra.mrb[0].mxu0 %v6284
  %v7173 = vpop.f32.mrb[0].mxu0
  %v7174 = vadd.f32 0.0, %v7173
  %v7175 = vpop.f32.mrb[0].mxu0
  %v7176 = vpop.f32.mrb[0].mxu0
  %v7177 = vadd.f32 0.0, %v7176
  %v7178 = vpop.f32.mrb[0].mxu0
  %7179 = vmatprep.mubr.bf16.mxu0 %v6294
  %7180 = vmatmul.mubr.bf16.gmra.mrb[0].mxu0 %v6293
  %v7181 = vpop.f32.mrb[0].mxu0
  %v7182 = vadd.f32 0.0, %v7181
  %v7183 = vpop.f32.mrb[0].mxu0
  %v7184 = vpop.f32.mrb[0].mxu0
  %v7185 = vadd.f32 0.0, %v7184
  %v7186 = vpop.f32.mrb[0].mxu0
  %7187 = vmatprep.mubr.bf16.mxu0 %v6303
  %7188 = vmatmul.mubr.bf16.gmra.mrb[0].mxu0 %v6302
  %v7189 = vpop.f32.mrb[0].mxu0
  %v7190 = vadd.f32 0.0, %v7189
  %v7191 = vpop.f32.mrb[0].mxu0
  %v7192 = vpop.f32.mrb[0].mxu0
  %v7193 = vadd.f32 0.0, %v7192
  %v7194 = vpop.f32.mrb[0].mxu0
  %7195 = vmatprep.mubr.bf16.mxu0 %v6312
  %7196 = vmatmul.mubr.bf16.gmra.mrb[0].mxu0 %v6311
  %v7197 = vpop.f32.mrb[0].mxu0
  %v7198 = vadd.f32 0.0, %v7197
  %v7199 = vpop.f32.mrb[0].mxu0
  %v7200 = vpop.f32.mrb[0].mxu0
  %v7201 = vadd.f32 0.0, %v7200
  %v7202 = vpop.f32.mrb[0].mxu0
  %7203 = vmatprep.mubr.bf16.mxu0 %v6321
  %7204 = vmatmul.mubr.bf16.gmra.mrb[0].mxu0 %v6320
  %v7205 = vpop.f32.mrb[0].mxu0
  %v7206 = vadd.f32 0.0, %v7205
  %v7207 = vpop.f32.mrb[0].mxu0
  %v7208 = vpop.f32.mrb[0].mxu0
  %v7209 = vadd.f32 0.0, %v7208
  %v7210 = vpop.f32.mrb[0].mxu0
  %7211 = vmatprep.mubr.bf16.mxu0 %v6330
  %7212 = vmatmul.mubr.bf16.gmra.mrb[0].mxu0 %v6329
  %v7213 = vpop.f32.mrb[0].mxu0
  %v7214 = vadd.f32 0.0, %v7213
  %v7215 = vpop.f32.mrb[0].mxu0
  %v7216 = vpop.f32.mrb[0].mxu0
  %v7217 = vadd.f32 0.0, %v7216
  %v7218 = vpop.f32.mrb[0].mxu0
  %7219 = vmatprep.mubr.bf16.mxu0 %v6339
  %7220 = vmatmul.mubr.bf16.gmra.mrb[0].mxu0 %v6338
  %v7221 = vpop.f32.mrb[0].mxu0
  %v7222 = vadd.f32 0.0, %v7221
  %v7223 = vpop.f32.mrb[0].mxu0
  %v7224 = vpop.f32.mrb[0].mxu0
  %v7225 = vadd.f32 0.0, %v7224
  %v7226 = vpop.f32.mrb[0].mxu0
  %7227 = vmatprep.mubr.bf16.mxu0 %v6348
  %7228 = vmatmul.mubr.bf16.gmra.mrb[0].mxu0 %v6347
  %v7229 = vpop.f32.mrb[0].mxu0
  %v7230 = vadd.f32 0.0, %v7229
  %v7231 = vpop.f32.mrb[0].mxu0
  %v7232 = vpop.f32.mrb[0].mxu0
  %v7233 = vadd.f32 0.0, %v7232
  %v7234 = vpop.f32.mrb[0].mxu0
  %7235 = vmatprep.mubr.bf16.mxu0 %v6357
  %7236 = vmatmul.mubr.bf16.gmra.mrb[0].mxu0 %v6356
  %v7237 = vpop.f32.mrb[0].mxu0
  %v7238 = vadd.f32 0.0, %v7237
  %v7239 = vpop.f32.mrb[0].mxu0
  %v7240 = vpop.f32.mrb[0].mxu0
  %v7241 = vadd.f32 0.0, %v7240
  %v7242 = vpop.f32.mrb[0].mxu0
  %7243 = vmatprep.mubr.bf16.mxu0 %v6366
  %7244 = vmatmul.mubr.bf16.gmra.mrb[0].mxu0 %v6365
  %v7245 = vpop.f32.mrb[0].mxu0
  %v7246 = vadd.f32 0.0, %v7245
  %v7247 = vpop.f32.mrb[0].mxu0
  %v7248 = vpop.f32.mrb[0].mxu0
  %v7249 = vadd.f32 0.0, %v7248
  %v7250 = vpop.f32.mrb[0].mxu0
  %7251 = vmatprep.mubr.bf16.mxu0 %v6375
  %7252 = vmatmul.mubr.bf16.gmra.mrb[0].mxu0 %v6374
  %v7253 = vpop.f32.mrb[0].mxu0
  %v7254 = vadd.f32 0.0, %v7253
  %v7255 = vpop.f32.mrb[0].mxu0
  %v7256 = vpop.f32.mrb[0].mxu0
  %v7257 = vadd.f32 0.0, %v7256
  %v7258 = vpop.f32.mrb[0].mxu0
  %7259 = vmatprep.mubr.bf16.mxu0 %v6384
  %7260 = vmatmul.mubr.bf16.gmra.mrb[0].mxu0 %v6383
  %v7261 = vpop.f32.mrb[0].mxu0
  %v7262 = vadd.f32 0.0, %v7261
  %v7263 = vpop.f32.mrb[0].mxu0
  %v7264 = vpop.f32.mrb[0].mxu0
  %v7265 = vadd.f32 0.0, %v7264
  %v7266 = vpop.f32.mrb[0].mxu0
  %7267 = vmatprep.mubr.bf16.mxu0 %v6393
  %7268 = vmatmul.mubr.bf16.gmra.mrb[0].mxu0 %v6392
  %v7269 = vpop.f32.mrb[0].mxu0
  %v7270 = vadd.f32 0.0, %v7269
  %v7271 = vpop.f32.mrb[0].mxu0
  %v7272 = vpop.f32.mrb[0].mxu0
  %v7273 = vadd.f32 0.0, %v7272
  %v7274 = vpop.f32.mrb[0].mxu0
  %7275 = vmatprep.mubr.bf16.mxu0 %v6402
  %7276 = vmatmul.mubr.bf16.gmra.mrb[0].mxu0 %v6401
  %v7277 = vpop.f32.mrb[0].mxu0
  %v7278 = vadd.f32 0.0, %v7277
  %v7279 = vpop.f32.mrb[0].mxu0
  %v7280 = vpop.f32.mrb[0].mxu0
  %v7281 = vadd.f32 0.0, %v7280
  %v7282 = vpop.f32.mrb[0].mxu0
  %7283 = vmatprep.mubr.bf16.mxu0 %v6411
  %7284 = vmatmul.mubr.bf16.gmra.mrb[0].mxu0 %v6410
  %v7285 = vpop.f32.mrb[0].mxu0
  %v7286 = vadd.f32 0.0, %v7285
  %v7287 = vpop.f32.mrb[0].mxu0
  %v7288 = vpop.f32.mrb[0].mxu0
  %v7289 = vadd.f32 0.0, %v7288
  %v7290 = vpop.f32.mrb[0].mxu0
  %7291 = vmatprep.mubr.bf16.mxu0 %v6420
  %7292 = vmatmul.mubr.bf16.gmra.mrb[0].mxu0 %v6419
  %v7293 = vpop.f32.mrb[0].mxu0
  %v7294 = vadd.f32 0.0, %v7293
  %v7295 = vpop.f32.mrb[0].mxu0
  %v7296 = vpop.f32.mrb[0].mxu0
  %v7297 = vadd.f32 0.0, %v7296
  %v7298 = vpop.f32.mrb[0].mxu0
  %7299 = vmatprep.mubr.bf16.mxu0 %v6429
  %7300 = vmatmul.mubr.bf16.gmra.mrb[0].mxu0 %v6428
  %v7301 = vpop.f32.mrb[0].mxu0
  %v7302 = vadd.f32 0.0, %v7301
  %v7303 = vpop.f32.mrb[0].mxu0
  %v7304 = vpop.f32.mrb[0].mxu0
  %v7305 = vadd.f32 0.0, %v7304
  %v7306 = vpop.f32.mrb[0].mxu0
  %7307 = vmatprep.mubr.bf16.mxu0 %v6438
  %7308 = vmatmul.mubr.bf16.gmra.mrb[0].mxu0 %v6437
  %v7309 = vpop.f32.mrb[0].mxu0
  %v7310 = vadd.f32 0.0, %v7309
  %v7311 = vpop.f32.mrb[0].mxu0
  %v7312 = vpop.f32.mrb[0].mxu0
  %v7313 = vadd.f32 0.0, %v7312
  %v7314 = vpop.f32.mrb[0].mxu0
  %7315 = vmatprep.mubr.bf16.mxu0 %v6447
  %7316 = vmatmul.mubr.bf16.gmra.mrb[0].mxu0 %v6446
  %v7317 = vpop.f32.mrb[0].mxu0
  %v7318 = vadd.f32 0.0, %v7317
  %v7319 = vpop.f32.mrb[0].mxu0
  %v7320 = vpop.f32.mrb[0].mxu0
  %v7321 = vadd.f32 0.0, %v7320
  %v7322 = vpop.f32.mrb[0].mxu0
  %7323 = vmatprep.mubr.bf16.mxu0 %v6456
  %7324 = vmatmul.mubr.bf16.gmra.mrb[0].mxu0 %v6455
  %v7325 = vpop.f32.mrb[0].mxu0
  %v7326 = vadd.f32 0.0, %v7325
  %v7327 = vpop.f32.mrb[0].mxu0
  %v7328 = vpop.f32.mrb[0].mxu0
  %v7329 = vadd.f32 0.0, %v7328
  %v7330 = vpop.f32.mrb[0].mxu0
  %7331 = vmatprep.mubr.bf16.mxu0 %v6465
  %7332 = vmatmul.mubr.bf16.gmra.mrb[0].mxu0 %v6464
  %v7333 = vpop.f32.mrb[0].mxu0
  %v7334 = vadd.f32 0.0, %v7333
  %v7335 = vpop.f32.mrb[0].mxu0
  %v7336 = vpop.f32.mrb[0].mxu0
  %v7337 = vadd.f32 0.0, %v7336
  %v7338 = vpop.f32.mrb[0].mxu0
  %7339 = vmatprep.mubr.bf16.mxu0 %v6474
  %7340 = vmatmul.mubr.bf16.gmra.mrb[0].mxu0 %v6473
  %v7341 = vpop.f32.mrb[0].mxu0
  %v7342 = vadd.f32 0.0, %v7341
  %v7343 = vpop.f32.mrb[0].mxu0
  %v7344 = vpop.f32.mrb[0].mxu0
  %v7345 = vadd.f32 0.0, %v7344
  %v7346 = vpop.f32.mrb[0].mxu0
  %7347 = vmatprep.mubr.bf16.mxu0 %v6483
  %7348 = vmatmul.mubr.bf16.gmra.mrb[0].mxu0 %v6482
  %v7349 = vpop.f32.mrb[0].mxu0
  %v7350 = vadd.f32 0.0, %v7349
  %v7351 = vpop.f32.mrb[0].mxu0
  %v7352 = vpop.f32.mrb[0].mxu0
  %v7353 = vadd.f32 0.0, %v7352
  %v7354 = vpop.f32.mrb[0].mxu0
  %7355 = vdwg.mxu0
  %7356 = vmatprep.subr.bf16.mxu0 0
  %7357 = vmatpush1.bf16.msra.mxu0 %v6939
  %7358 = vmatprep.subr.bf16.mxu0 0
  %7359 = vmatpush1.bf16.msra.mxu0 %v6940
  %7360 = vmatprep.subr.bf16.mxu0 0
  %7361 = vmatpush1.bf16.msra.mxu0 %v6941
  %7362 = vmatprep.subr.bf16.mxu0 0
  %7363 = vmatpush1.bf16.msra.mxu0 %v6942
  %7364 = vmatprep.subr.bf16.mxu0 0
  %7365 = vmatpush1.bf16.msra.mxu0 %v6943
  %7366 = vmatprep.subr.bf16.mxu0 0
  %7367 = vmatpush1.bf16.msra.mxu0 %v6944
  %7368 = vmatprep.subr.bf16.mxu0 0
  %7369 = vmatpush1.bf16.msra.mxu0 %v6945
  %7370 = vmatprep.subr.bf16.mxu0 0
  %7371 = vmatpush1.bf16.msra.mxu0 %v6946
  %7372 = vmatprep.subr.bf16.mxu0 0
  %7373 = vmatpush1.bf16.msra.mxu0 %v6947
  %7374 = vmatprep.subr.bf16.mxu0 0
  %7375 = vmatpush1.bf16.msra.mxu0 %v6948
  %7376 = vmatprep.subr.bf16.mxu0 0
  %7377 = vmatpush1.bf16.msra.mxu0 %v6949
  %7378 = vmatprep.subr.bf16.mxu0 0
  %7379 = vmatpush1.bf16.msra.mxu0 %v6950
  %7380 = vmatprep.subr.bf16.mxu0 0
  %7381 = vmatpush1.bf16.msra.mxu0 %v6951
  %7382 = vmatprep.subr.bf16.mxu0 0
  %7383 = vmatpush1.bf16.msra.mxu0 %v6952
  %7384 = vmatprep.subr.bf16.mxu0 0
  %7385 = vmatpush1.bf16.msra.mxu0 %v6953
  %7386 = vmatprep.subr.bf16.mxu0 0
  %7387 = vmatpush1.bf16.msra.mxu0 %v6954
  %7388 = vmatprep.mubr.bf16.mxu0 %v6206
  %7389 = vmatmul.mubr.bf16.gmra.mrb[0].mxu0 %v6205
  %v7390 = vpop.f32.mrb[0].mxu0
  %v7391 = vadd.f32 %v7102, %v7390
  %v7392 = vpop.f32.mrb[0].mxu0
  %v7393 = vpop.f32.mrb[0].mxu0
  %v7394 = vadd.f32 %v7105, %v7393
  %v7395 = vpop.f32.mrb[0].mxu0
  %7396 = vmatprep.mubr.bf16.mxu0 %v6215
  %7397 = vmatmul.mubr.bf16.gmra.mrb[0].mxu0 %v6214
  %v7398 = vpop.f32.mrb[0].mxu0
  %v7399 = vadd.f32 %v7110, %v7398
  %v7400 = vpop.f32.mrb[0].mxu0
  %v7401 = vpop.f32.mrb[0].mxu0
  %v7402 = vadd.f32 %v7113, %v7401
  %v7403 = vpop.f32.mrb[0].mxu0
  %7404 = vmatprep.mubr.bf16.mxu0 %v6224
  %7405 = vmatmul.mubr.bf16.gmra.mrb[0].mxu0 %v6223
  %v7406 = vpop.f32.mrb[0].mxu0
  %v7407 = vadd.f32 %v7118, %v7406
  %v7408 = vpop.f32.mrb[0].mxu0
  %v7409 = vpop.f32.mrb[0].mxu0
  %v7410 = vadd.f32 %v7121, %v7409
  %v7411 = vpop.f32.mrb[0].mxu0
  %7412 = vmatprep.mubr.bf16.mxu0 %v6233
  %7413 = vmatmul.mubr.bf16.gmra.mrb[0].mxu0 %v6232
  %v7414 = vpop.f32.mrb[0].mxu0
  %v7415 = vadd.f32 %v7126, %v7414
  %v7416 = vpop.f32.mrb[0].mxu0
  %v7417 = vpop.f32.mrb[0].mxu0
  %v7418 = vadd.f32 %v7129, %v7417
  %v7419 = vpop.f32.mrb[0].mxu0
  %7420 = vmatprep.mubr.bf16.mxu0 %v6242
  %7421 = vmatmul.mubr.bf16.gmra.mrb[0].mxu0 %v6241
  %v7422 = vpop.f32.mrb[0].mxu0
  %v7423 = vadd.f32 %v7134, %v7422
  %v7424 = vpop.f32.mrb[0].mxu0
  %v7425 = vpop.f32.mrb[0].mxu0
  %v7426 = vadd.f32 %v7137, %v7425
  %v7427 = vpop.f32.mrb[0].mxu0
  %7428 = vmatprep.mubr.bf16.mxu0 %v6251
  %7429 = vmatmul.mubr.bf16.gmra.mrb[0].mxu0 %v6250
  %v7430 = vpop.f32.mrb[0].mxu0
  %v7431 = vadd.f32 %v7142, %v7430
  %v7432 = vpop.f32.mrb[0].mxu0
  %v7433 = vpop.f32.mrb[0].mxu0
  %v7434 = vadd.f32 %v7145, %v7433
  %v7435 = vpop.f32.mrb[0].mxu0
  %7436 = vmatprep.mubr.bf16.mxu0 %v6260
  %7437 = vmatmul.mubr.bf16.gmra.mrb[0].mxu0 %v6259
  %v7438 = vpop.f32.mrb[0].mxu0
  %v7439 = vadd.f32 %v7150, %v7438
  %v7440 = vpop.f32.mrb[0].mxu0
  %v7441 = vpop.f32.mrb[0].mxu0
  %v7442 = vadd.f32 %v7153, %v7441
  %v7443 = vpop.f32.mrb[0].mxu0
  %7444 = vmatprep.mubr.bf16.mxu0 %v6269
  %7445 = vmatmul.mubr.bf16.gmra.mrb[0].mxu0 %v6268
  %v7446 = vpop.f32.mrb[0].mxu0
  %v7447 = vadd.f32 %v7158, %v7446
  %v7448 = vpop.f32.mrb[0].mxu0
  %v7449 = vpop.f32.mrb[0].mxu0
  %v7450 = vadd.f32 %v7161, %v7449
  %v7451 = vpop.f32.mrb[0].mxu0
  %7452 = vmatprep.mubr.bf16.mxu0 %v6278
  %7453 = vmatmul.mubr.bf16.gmra.mrb[0].mxu0 %v6277
  %v7454 = vpop.f32.mrb[0].mxu0
  %v7455 = vadd.f32 %v7166, %v7454
  %v7456 = vpop.f32.mrb[0].mxu0
  %v7457 = vpop.f32.mrb[0].mxu0
  %v7458 = vadd.f32 %v7169, %v7457
  %v7459 = vpop.f32.mrb[0].mxu0
  %7460 = vmatprep.mubr.bf16.mxu0 %v6287
  %7461 = vmatmul.mubr.bf16.gmra.mrb[0].mxu0 %v6286
  %v7462 = vpop.f32.mrb[0].mxu0
  %v7463 = vadd.f32 %v7174, %v7462
  %v7464 = vpop.f32.mrb[0].mxu0
  %v7465 = vpop.f32.mrb[0].mxu0
  %v7466 = vadd.f32 %v7177, %v7465
  %v7467 = vpop.f32.mrb[0].mxu0
  %7468 = vmatprep.mubr.bf16.mxu0 %v6296
  %7469 = vmatmul.mubr.bf16.gmra.mrb[0].mxu0 %v6295
  %v7470 = vpop.f32.mrb[0].mxu0
  %v7471 = vadd.f32 %v7182, %v7470
  %v7472 = vpop.f32.mrb[0].mxu0
  %v7473 = vpop.f32.mrb[0].mxu0
  %v7474 = vadd.f32 %v7185, %v7473
  %v7475 = vpop.f32.mrb[0].mxu0
  %7476 = vmatprep.mubr.bf16.mxu0 %v6305
  %7477 = vmatmul.mubr.bf16.gmra.mrb[0].mxu0 %v6304
  %v7478 = vpop.f32.mrb[0].mxu0
  %v7479 = vadd.f32 %v7190, %v7478
  %v7480 = vpop.f32.mrb[0].mxu0
  %v7481 = vpop.f32.mrb[0].mxu0
  %v7482 = vadd.f32 %v7193, %v7481
  %v7483 = vpop.f32.mrb[0].mxu0
  %7484 = vmatprep.mubr.bf16.mxu0 %v6314
  %7485 = vmatmul.mubr.bf16.gmra.mrb[0].mxu0 %v6313
  %v7486 = vpop.f32.mrb[0].mxu0
  %v7487 = vadd.f32 %v7198, %v7486
  %v7488 = vpop.f32.mrb[0].mxu0
  %v7489 = vpop.f32.mrb[0].mxu0
  %v7490 = vadd.f32 %v7201, %v7489
  %v7491 = vpop.f32.mrb[0].mxu0
  %7492 = vmatprep.mubr.bf16.mxu0 %v6323
  %7493 = vmatmul.mubr.bf16.gmra.mrb[0].mxu0 %v6322
  %v7494 = vpop.f32.mrb[0].mxu0
  %v7495 = vadd.f32 %v7206, %v7494
  %v7496 = vpop.f32.mrb[0].mxu0
  %v7497 = vpop.f32.mrb[0].mxu0
  %v7498 = vadd.f32 %v7209, %v7497
  %v7499 = vpop.f32.mrb[0].mxu0
  %7500 = vmatprep.mubr.bf16.mxu0 %v6332
  %7501 = vmatmul.mubr.bf16.gmra.mrb[0].mxu0 %v6331
  %v7502 = vpop.f32.mrb[0].mxu0
  %v7503 = vadd.f32 %v7214, %v7502
  %v7504 = vpop.f32.mrb[0].mxu0
  %v7505 = vpop.f32.mrb[0].mxu0
  %v7506 = vadd.f32 %v7217, %v7505
  %v7507 = vpop.f32.mrb[0].mxu0
  %7508 = vmatprep.mubr.bf16.mxu0 %v6341
  %7509 = vmatmul.mubr.bf16.gmra.mrb[0].mxu0 %v6340
  %v7510 = vpop.f32.mrb[0].mxu0
  %v7511 = vadd.f32 %v7222, %v7510
  %v7512 = vpop.f32.mrb[0].mxu0
  %v7513 = vpop.f32.mrb[0].mxu0
  %v7514 = vadd.f32 %v7225, %v7513
  %v7515 = vpop.f32.mrb[0].mxu0
  %7516 = vmatprep.mubr.bf16.mxu0 %v6350
  %7517 = vmatmul.mubr.bf16.gmra.mrb[0].mxu0 %v6349
  %v7518 = vpop.f32.mrb[0].mxu0
  %v7519 = vadd.f32 %v7230, %v7518
  %v7520 = vpop.f32.mrb[0].mxu0
  %v7521 = vpop.f32.mrb[0].mxu0
  %v7522 = vadd.f32 %v7233, %v7521
  %v7523 = vpop.f32.mrb[0].mxu0
  %7524 = vmatprep.mubr.bf16.mxu0 %v6359
  %7525 = vmatmul.mubr.bf16.gmra.mrb[0].mxu0 %v6358
  %v7526 = vpop.f32.mrb[0].mxu0
  %v7527 = vadd.f32 %v7238, %v7526
  %v7528 = vpop.f32.mrb[0].mxu0
  %v7529 = vpop.f32.mrb[0].mxu0
  %v7530 = vadd.f32 %v7241, %v7529
  %v7531 = vpop.f32.mrb[0].mxu0
  %7532 = vmatprep.mubr.bf16.mxu0 %v6368
  %7533 = vmatmul.mubr.bf16.gmra.mrb[0].mxu0 %v6367
  %v7534 = vpop.f32.mrb[0].mxu0
  %v7535 = vadd.f32 %v7246, %v7534
  %v7536 = vpop.f32.mrb[0].mxu0
  %v7537 = vpop.f32.mrb[0].mxu0
  %v7538 = vadd.f32 %v7249, %v7537
  %v7539 = vpop.f32.mrb[0].mxu0
  %7540 = vmatprep.mubr.bf16.mxu0 %v6377
  %7541 = vmatmul.mubr.bf16.gmra.mrb[0].mxu0 %v6376
  %v7542 = vpop.f32.mrb[0].mxu0
  %v7543 = vadd.f32 %v7254, %v7542
  %v7544 = vpop.f32.mrb[0].mxu0
  %v7545 = vpop.f32.mrb[0].mxu0
  %v7546 = vadd.f32 %v7257, %v7545
  %v7547 = vpop.f32.mrb[0].mxu0
  %7548 = vmatprep.mubr.bf16.mxu0 %v6386
  %7549 = vmatmul.mubr.bf16.gmra.mrb[0].mxu0 %v6385
  %v7550 = vpop.f32.mrb[0].mxu0
  %v7551 = vadd.f32 %v7262, %v7550
  %v7552 = vpop.f32.mrb[0].mxu0
  %v7553 = vpop.f32.mrb[0].mxu0
  %v7554 = vadd.f32 %v7265, %v7553
  %v7555 = vpop.f32.mrb[0].mxu0
  %7556 = vmatprep.mubr.bf16.mxu0 %v6395
  %7557 = vmatmul.mubr.bf16.gmra.mrb[0].mxu0 %v6394
  %v7558 = vpop.f32.mrb[0].mxu0
  %v7559 = vadd.f32 %v7270, %v7558
  %v7560 = vpop.f32.mrb[0].mxu0
  %v7561 = vpop.f32.mrb[0].mxu0
  %v7562 = vadd.f32 %v7273, %v7561
  %v7563 = vpop.f32.mrb[0].mxu0
  %7564 = vmatprep.mubr.bf16.mxu0 %v6404
  %7565 = vmatmul.mubr.bf16.gmra.mrb[0].mxu0 %v6403
  %v7566 = vpop.f32.mrb[0].mxu0
  %v7567 = vadd.f32 %v7278, %v7566
  %v7568 = vpop.f32.mrb[0].mxu0
  %v7569 = vpop.f32.mrb[0].mxu0
  %v7570 = vadd.f32 %v7281, %v7569
  %v7571 = vpop.f32.mrb[0].mxu0
  %7572 = vmatprep.mubr.bf16.mxu0 %v6413
  %7573 = vmatmul.mubr.bf16.gmra.mrb[0].mxu0 %v6412
  %v7574 = vpop.f32.mrb[0].mxu0
  %v7575 = vadd.f32 %v7286, %v7574
  %v7576 = vpop.f32.mrb[0].mxu0
  %v7577 = vpop.f32.mrb[0].mxu0
  %v7578 = vadd.f32 %v7289, %v7577
  %v7579 = vpop.f32.mrb[0].mxu0
  %7580 = vmatprep.mubr.bf16.mxu0 %v6422
  %7581 = vmatmul.mubr.bf16.gmra.mrb[0].mxu0 %v6421
  %v7582 = vpop.f32.mrb[0].mxu0
  %v7583 = vadd.f32 %v7294, %v7582
  %v7584 = vpop.f32.mrb[0].mxu0
  %v7585 = vpop.f32.mrb[0].mxu0
  %v7586 = vadd.f32 %v7297, %v7585
  %v7587 = vpop.f32.mrb[0].mxu0
  %7588 = vmatprep.mubr.bf16.mxu0 %v6431
  %7589 = vmatmul.mubr.bf16.gmra.mrb[0].mxu0 %v6430
  %v7590 = vpop.f32.mrb[0].mxu0
  %v7591 = vadd.f32 %v7302, %v7590
  %v7592 = vpop.f32.mrb[0].mxu0
  %v7593 = vpop.f32.mrb[0].mxu0
  %v7594 = vadd.f32 %v7305, %v7593
  %v7595 = vpop.f32.mrb[0].mxu0
  %7596 = vmatprep.mubr.bf16.mxu0 %v6440
  %7597 = vmatmul.mubr.bf16.gmra.mrb[0].mxu0 %v6439
  %v7598 = vpop.f32.mrb[0].mxu0
  %v7599 = vadd.f32 %v7310, %v7598
  %v7600 = vpop.f32.mrb[0].mxu0
  %v7601 = vpop.f32.mrb[0].mxu0
  %v7602 = vadd.f32 %v7313, %v7601
  %v7603 = vpop.f32.mrb[0].mxu0
  %7604 = vmatprep.mubr.bf16.mxu0 %v6449
  %7605 = vmatmul.mubr.bf16.gmra.mrb[0].mxu0 %v6448
  %v7606 = vpop.f32.mrb[0].mxu0
  %v7607 = vadd.f32 %v7318, %v7606
  %v7608 = vpop.f32.mrb[0].mxu0
  %v7609 = vpop.f32.mrb[0].mxu0
  %v7610 = vadd.f32 %v7321, %v7609
  %v7611 = vpop.f32.mrb[0].mxu0
  %7612 = vmatprep.mubr.bf16.mxu0 %v6458
  %7613 = vmatmul.mubr.bf16.gmra.mrb[0].mxu0 %v6457
  %v7614 = vpop.f32.mrb[0].mxu0
  %v7615 = vadd.f32 %v7326, %v7614
  %v7616 = vpop.f32.mrb[0].mxu0
  %v7617 = vpop.f32.mrb[0].mxu0
  %v7618 = vadd.f32 %v7329, %v7617
  %v7619 = vpop.f32.mrb[0].mxu0
  %7620 = vmatprep.mubr.bf16.mxu0 %v6467
  %7621 = vmatmul.mubr.bf16.gmra.mrb[0].mxu0 %v6466
  %v7622 = vpop.f32.mrb[0].mxu0
  %v7623 = vadd.f32 %v7334, %v7622
  %v7624 = vpop.f32.mrb[0].mxu0
  %v7625 = vpop.f32.mrb[0].mxu0
  %v7626 = vadd.f32 %v7337, %v7625
  %v7627 = vpop.f32.mrb[0].mxu0
  %7628 = vmatprep.mubr.bf16.mxu0 %v6476
  %7629 = vmatmul.mubr.bf16.gmra.mrb[0].mxu0 %v6475
  %v7630 = vpop.f32.mrb[0].mxu0
  %v7631 = vadd.f32 %v7342, %v7630
  %v7632 = vpop.f32.mrb[0].mxu0
  %v7633 = vpop.f32.mrb[0].mxu0
  %v7634 = vadd.f32 %v7345, %v7633
  %v7635 = vpop.f32.mrb[0].mxu0
  %7636 = vmatprep.mubr.bf16.mxu0 %v6485
  %7637 = vmatmul.mubr.bf16.gmra.mrb[0].mxu0 %v6484
  %v7638 = vpop.f32.mrb[0].mxu0
  %v7639 = vadd.f32 %v7350, %v7638
  %v7640 = vpop.f32.mrb[0].mxu0
  %v7641 = vpop.f32.mrb[0].mxu0
  %v7642 = vadd.f32 %v7353, %v7641
  %v7643 = vpop.f32.mrb[0].mxu0
  %7644 = vdwg.mxu0
  %7645 = vmatprep.subr.bf16.mxu0 0
  %7646 = vmatpush1.bf16.msra.mxu0 %v6955
  %7647 = vmatprep.subr.bf16.mxu0 0
  %7648 = vmatpush1.bf16.msra.mxu0 %v6956
  %7649 = vmatprep.subr.bf16.mxu0 0
  %7650 = vmatpush1.bf16.msra.mxu0 %v6957
  %7651 = vmatprep.subr.bf16.mxu0 0
  %7652 = vmatpush1.bf16.msra.mxu0 %v6958
  %7653 = vmatprep.subr.bf16.mxu0 0
  %7654 = vmatpush1.bf16.msra.mxu0 %v6959
  %7655 = vmatprep.subr.bf16.mxu0 0
  %7656 = vmatpush1.bf16.msra.mxu0 %v6960
  %7657 = vmatprep.subr.bf16.mxu0 0
  %7658 = vmatpush1.bf16.msra.mxu0 %v6961
  %7659 = vmatprep.subr.bf16.mxu0 0
  %7660 = vmatpush1.bf16.msra.mxu0 %v6962
  %7661 = vmatprep.subr.bf16.mxu0 0
  %7662 = vmatpush1.bf16.msra.mxu0 %v6963
  %7663 = vmatprep.subr.bf16.mxu0 0
  %7664 = vmatpush1.bf16.msra.mxu0 %v6964
  %7665 = vmatprep.subr.bf16.mxu0 0
  %7666 = vmatpush1.bf16.msra.mxu0 %v6965
  %7667 = vmatprep.subr.bf16.mxu0 0
  %7668 = vmatpush1.bf16.msra.mxu0 %v6966
  %7669 = vmatprep.subr.bf16.mxu0 0
  %7670 = vmatpush1.bf16.msra.mxu0 %v6967
  %7671 = vmatprep.subr.bf16.mxu0 0
  %7672 = vmatpush1.bf16.msra.mxu0 %v6968
  %7673 = vmatprep.subr.bf16.mxu0 0
  %7674 = vmatpush1.bf16.msra.mxu0 %v6969
  %7675 = vmatprep.subr.bf16.mxu0 0
  %7676 = vmatpush1.bf16.msra.mxu0 %v6970
  %7677 = vmatprep.mubr.bf16.mxu0 %v6208
  %7678 = vmatmul.mubr.bf16.gmra.mrb[0].mxu0 %v6207
  %v7679 = vpop.f32.mrb[0].mxu0
  %v7680 = vadd.f32 %v7391, %v7679
  %v7681 = vpop.f32.mrb[0].mxu0
  %v7682 = vpop.f32.mrb[0].mxu0
  %v7683 = vadd.f32 %v7394, %v7682
  %v7684 = vpop.f32.mrb[0].mxu0
  %7685 = vmatprep.mubr.bf16.mxu0 %v6217
  %7686 = vmatmul.mubr.bf16.gmra.mrb[0].mxu0 %v6216
  %v7687 = vpop.f32.mrb[0].mxu0
  %v7688 = vadd.f32 %v7399, %v7687
  %v7689 = vpop.f32.mrb[0].mxu0
  %v7690 = vpop.f32.mrb[0].mxu0
  %v7691 = vadd.f32 %v7402, %v7690
  %v7692 = vpop.f32.mrb[0].mxu0
  %7693 = vmatprep.mubr.bf16.mxu0 %v6226
  %7694 = vmatmul.mubr.bf16.gmra.mrb[0].mxu0 %v6225
  %v7695 = vpop.f32.mrb[0].mxu0
  %v7696 = vadd.f32 %v7407, %v7695
  %v7697 = vpop.f32.mrb[0].mxu0
  %v7698 = vpop.f32.mrb[0].mxu0
  %v7699 = vadd.f32 %v7410, %v7698
  %v7700 = vpop.f32.mrb[0].mxu0
  %7701 = vmatprep.mubr.bf16.mxu0 %v6235
  %7702 = vmatmul.mubr.bf16.gmra.mrb[0].mxu0 %v6234
  %v7703 = vpop.f32.mrb[0].mxu0
  %v7704 = vadd.f32 %v7415, %v7703
  %v7705 = vpop.f32.mrb[0].mxu0
  %v7706 = vpop.f32.mrb[0].mxu0
  %v7707 = vadd.f32 %v7418, %v7706
  %v7708 = vpop.f32.mrb[0].mxu0
  %7709 = vmatprep.mubr.bf16.mxu0 %v6244
  %7710 = vmatmul.mubr.bf16.gmra.mrb[0].mxu0 %v6243
  %v7711 = vpop.f32.mrb[0].mxu0
  %v7712 = vadd.f32 %v7423, %v7711
  %v7713 = vpop.f32.mrb[0].mxu0
  %v7714 = vpop.f32.mrb[0].mxu0
  %v7715 = vadd.f32 %v7426, %v7714
  %v7716 = vpop.f32.mrb[0].mxu0
  %7717 = vmatprep.mubr.bf16.mxu0 %v6253
  %7718 = vmatmul.mubr.bf16.gmra.mrb[0].mxu0 %v6252
  %v7719 = vpop.f32.mrb[0].mxu0
  %v7720 = vadd.f32 %v7431, %v7719
  %v7721 = vpop.f32.mrb[0].mxu0
  %v7722 = vpop.f32.mrb[0].mxu0
  %v7723 = vadd.f32 %v7434, %v7722
  %v7724 = vpop.f32.mrb[0].mxu0
  %7725 = vmatprep.mubr.bf16.mxu0 %v6262
  %7726 = vmatmul.mubr.bf16.gmra.mrb[0].mxu0 %v6261
  %v7727 = vpop.f32.mrb[0].mxu0
  %v7728 = vadd.f32 %v7439, %v7727
  %v7729 = vpop.f32.mrb[0].mxu0
  %v7730 = vpop.f32.mrb[0].mxu0
  %v7731 = vadd.f32 %v7442, %v7730
  %v7732 = vpop.f32.mrb[0].mxu0
  %7733 = vmatprep.mubr.bf16.mxu0 %v6271
  %7734 = vmatmul.mubr.bf16.gmra.mrb[0].mxu0 %v6270
  %v7735 = vpop.f32.mrb[0].mxu0
  %v7736 = vadd.f32 %v7447, %v7735
  %v7737 = vpop.f32.mrb[0].mxu0
  %v7738 = vpop.f32.mrb[0].mxu0
  %v7739 = vadd.f32 %v7450, %v7738
  %v7740 = vpop.f32.mrb[0].mxu0
  %7741 = vmatprep.mubr.bf16.mxu0 %v6280
  %7742 = vmatmul.mubr.bf16.gmra.mrb[0].mxu0 %v6279
  %v7743 = vpop.f32.mrb[0].mxu0
  %v7744 = vadd.f32 %v7455, %v7743
  %v7745 = vpop.f32.mrb[0].mxu0
  %v7746 = vpop.f32.mrb[0].mxu0
  %v7747 = vadd.f32 %v7458, %v7746
  %v7748 = vpop.f32.mrb[0].mxu0
  %7749 = vmatprep.mubr.bf16.mxu0 %v6289
  %7750 = vmatmul.mubr.bf16.gmra.mrb[0].mxu0 %v6288
  %v7751 = vpop.f32.mrb[0].mxu0
  %v7752 = vadd.f32 %v7463, %v7751
  %v7753 = vpop.f32.mrb[0].mxu0
  %v7754 = vpop.f32.mrb[0].mxu0
  %v7755 = vadd.f32 %v7466, %v7754
  %v7756 = vpop.f32.mrb[0].mxu0
  %7757 = vmatprep.mubr.bf16.mxu0 %v6298
  %7758 = vmatmul.mubr.bf16.gmra.mrb[0].mxu0 %v6297
  %v7759 = vpop.f32.mrb[0].mxu0
  %v7760 = vadd.f32 %v7471, %v7759
  %v7761 = vpop.f32.mrb[0].mxu0
  %v7762 = vpop.f32.mrb[0].mxu0
  %v7763 = vadd.f32 %v7474, %v7762
  %v7764 = vpop.f32.mrb[0].mxu0
  %7765 = vmatprep.mubr.bf16.mxu0 %v6307
  %7766 = vmatmul.mubr.bf16.gmra.mrb[0].mxu0 %v6306
  %v7767 = vpop.f32.mrb[0].mxu0
  %v7768 = vadd.f32 %v7479, %v7767
  %v7769 = vpop.f32.mrb[0].mxu0
  %v7770 = vpop.f32.mrb[0].mxu0
  %v7771 = vadd.f32 %v7482, %v7770
  %v7772 = vpop.f32.mrb[0].mxu0
  %7773 = vmatprep.mubr.bf16.mxu0 %v6316
  %7774 = vmatmul.mubr.bf16.gmra.mrb[0].mxu0 %v6315
  %v7775 = vpop.f32.mrb[0].mxu0
  %v7776 = vadd.f32 %v7487, %v7775
  %v7777 = vpop.f32.mrb[0].mxu0
  %v7778 = vpop.f32.mrb[0].mxu0
  %v7779 = vadd.f32 %v7490, %v7778
  %v7780 = vpop.f32.mrb[0].mxu0
  %7781 = vmatprep.mubr.bf16.mxu0 %v6325
  %7782 = vmatmul.mubr.bf16.gmra.mrb[0].mxu0 %v6324
  %v7783 = vpop.f32.mrb[0].mxu0
  %v7784 = vadd.f32 %v7495, %v7783
  %v7785 = vpop.f32.mrb[0].mxu0
  %v7786 = vpop.f32.mrb[0].mxu0
  %v7787 = vadd.f32 %v7498, %v7786
  %v7788 = vpop.f32.mrb[0].mxu0
  %7789 = vmatprep.mubr.bf16.mxu0 %v6334
  %7790 = vmatmul.mubr.bf16.gmra.mrb[0].mxu0 %v6333
  %v7791 = vpop.f32.mrb[0].mxu0
  %v7792 = vadd.f32 %v7503, %v7791
  %v7793 = vpop.f32.mrb[0].mxu0
  %v7794 = vpop.f32.mrb[0].mxu0
  %v7795 = vadd.f32 %v7506, %v7794
  %v7796 = vpop.f32.mrb[0].mxu0
  %7797 = vmatprep.mubr.bf16.mxu0 %v6343
  %7798 = vmatmul.mubr.bf16.gmra.mrb[0].mxu0 %v6342
  %v7799 = vpop.f32.mrb[0].mxu0
  %v7800 = vadd.f32 %v7511, %v7799
  %v7801 = vpop.f32.mrb[0].mxu0
  %v7802 = vpop.f32.mrb[0].mxu0
  %v7803 = vadd.f32 %v7514, %v7802
  %v7804 = vpop.f32.mrb[0].mxu0
  %7805 = vmatprep.mubr.bf16.mxu0 %v6352
  %7806 = vmatmul.mubr.bf16.gmra.mrb[0].mxu0 %v6351
  %v7807 = vpop.f32.mrb[0].mxu0
  %v7808 = vadd.f32 %v7519, %v7807
  %v7809 = vpop.f32.mrb[0].mxu0
  %v7810 = vpop.f32.mrb[0].mxu0
  %v7811 = vadd.f32 %v7522, %v7810
  %v7812 = vpop.f32.mrb[0].mxu0
  %7813 = vmatprep.mubr.bf16.mxu0 %v6361
  %7814 = vmatmul.mubr.bf16.gmra.mrb[0].mxu0 %v6360
  %v7815 = vpop.f32.mrb[0].mxu0
  %v7816 = vadd.f32 %v7527, %v7815
  %v7817 = vpop.f32.mrb[0].mxu0
  %v7818 = vpop.f32.mrb[0].mxu0
  %v7819 = vadd.f32 %v7530, %v7818
  %v7820 = vpop.f32.mrb[0].mxu0
  %7821 = vmatprep.mubr.bf16.mxu0 %v6370
  %7822 = vmatmul.mubr.bf16.gmra.mrb[0].mxu0 %v6369
  %v7823 = vpop.f32.mrb[0].mxu0
  %v7824 = vadd.f32 %v7535, %v7823
  %v7825 = vpop.f32.mrb[0].mxu0
  %v7826 = vpop.f32.mrb[0].mxu0
  %v7827 = vadd.f32 %v7538, %v7826
  %v7828 = vpop.f32.mrb[0].mxu0
  %7829 = vmatprep.mubr.bf16.mxu0 %v6379
  %7830 = vmatmul.mubr.bf16.gmra.mrb[0].mxu0 %v6378
  %v7831 = vpop.f32.mrb[0].mxu0
  %v7832 = vadd.f32 %v7543, %v7831
  %v7833 = vpop.f32.mrb[0].mxu0
  %v7834 = vpop.f32.mrb[0].mxu0
  %v7835 = vadd.f32 %v7546, %v7834
  %v7836 = vpop.f32.mrb[0].mxu0
  %7837 = vmatprep.mubr.bf16.mxu0 %v6388
  %7838 = vmatmul.mubr.bf16.gmra.mrb[0].mxu0 %v6387
  %v7839 = vpop.f32.mrb[0].mxu0
  %v7840 = vadd.f32 %v7551, %v7839
  %v7841 = vpop.f32.mrb[0].mxu0
  %v7842 = vpop.f32.mrb[0].mxu0
  %v7843 = vadd.f32 %v7554, %v7842
  %v7844 = vpop.f32.mrb[0].mxu0
  %7845 = vmatprep.mubr.bf16.mxu0 %v6397
  %7846 = vmatmul.mubr.bf16.gmra.mrb[0].mxu0 %v6396
  %v7847 = vpop.f32.mrb[0].mxu0
  %v7848 = vadd.f32 %v7559, %v7847
  %v7849 = vpop.f32.mrb[0].mxu0
  %v7850 = vpop.f32.mrb[0].mxu0
  %v7851 = vadd.f32 %v7562, %v7850
  %v7852 = vpop.f32.mrb[0].mxu0
  %7853 = vmatprep.mubr.bf16.mxu0 %v6406
  %7854 = vmatmul.mubr.bf16.gmra.mrb[0].mxu0 %v6405
  %v7855 = vpop.f32.mrb[0].mxu0
  %v7856 = vadd.f32 %v7567, %v7855
  %v7857 = vpop.f32.mrb[0].mxu0
  %v7858 = vpop.f32.mrb[0].mxu0
  %v7859 = vadd.f32 %v7570, %v7858
  %v7860 = vpop.f32.mrb[0].mxu0
  %7861 = vmatprep.mubr.bf16.mxu0 %v6415
  %7862 = vmatmul.mubr.bf16.gmra.mrb[0].mxu0 %v6414
  %v7863 = vpop.f32.mrb[0].mxu0
  %v7864 = vadd.f32 %v7575, %v7863
  %v7865 = vpop.f32.mrb[0].mxu0
  %v7866 = vpop.f32.mrb[0].mxu0
  %v7867 = vadd.f32 %v7578, %v7866
  %v7868 = vpop.f32.mrb[0].mxu0
  %7869 = vmatprep.mubr.bf16.mxu0 %v6424
  %7870 = vmatmul.mubr.bf16.gmra.mrb[0].mxu0 %v6423
  %v7871 = vpop.f32.mrb[0].mxu0
  %v7872 = vadd.f32 %v7583, %v7871
  %v7873 = vpop.f32.mrb[0].mxu0
  %v7874 = vpop.f32.mrb[0].mxu0
  %v7875 = vadd.f32 %v7586, %v7874
  %v7876 = vpop.f32.mrb[0].mxu0
  %7877 = vmatprep.mubr.bf16.mxu0 %v6433
  %7878 = vmatmul.mubr.bf16.gmra.mrb[0].mxu0 %v6432
  %v7879 = vpop.f32.mrb[0].mxu0
  %v7880 = vadd.f32 %v7591, %v7879
  %v7881 = vpop.f32.mrb[0].mxu0
  %v7882 = vpop.f32.mrb[0].mxu0
  %v7883 = vadd.f32 %v7594, %v7882
  %v7884 = vpop.f32.mrb[0].mxu0
  %7885 = vmatprep.mubr.bf16.mxu0 %v6442
  %7886 = vmatmul.mubr.bf16.gmra.mrb[0].mxu0 %v6441
  %v7887 = vpop.f32.mrb[0].mxu0
  %v7888 = vadd.f32 %v7599, %v7887
  %v7889 = vpop.f32.mrb[0].mxu0
  %v7890 = vpop.f32.mrb[0].mxu0
  %v7891 = vadd.f32 %v7602, %v7890
  %v7892 = vpop.f32.mrb[0].mxu0
  %7893 = vmatprep.mubr.bf16.mxu0 %v6451
  %7894 = vmatmul.mubr.bf16.gmra.mrb[0].mxu0 %v6450
  %v7895 = vpop.f32.mrb[0].mxu0
  %v7896 = vadd.f32 %v7607, %v7895
  %v7897 = vpop.f32.mrb[0].mxu0
  %v7898 = vpop.f32.mrb[0].mxu0
  %v7899 = vadd.f32 %v7610, %v7898
  %v7900 = vpop.f32.mrb[0].mxu0
  %7901 = vmatprep.mubr.bf16.mxu0 %v6460
  %7902 = vmatmul.mubr.bf16.gmra.mrb[0].mxu0 %v6459
  %v7903 = vpop.f32.mrb[0].mxu0
  %v7904 = vadd.f32 %v7615, %v7903
  %v7905 = vpop.f32.mrb[0].mxu0
  %v7906 = vpop.f32.mrb[0].mxu0
  %v7907 = vadd.f32 %v7618, %v7906
  %v7908 = vpop.f32.mrb[0].mxu0
  %7909 = vmatprep.mubr.bf16.mxu0 %v6469
  %7910 = vmatmul.mubr.bf16.gmra.mrb[0].mxu0 %v6468
  %v7911 = vpop.f32.mrb[0].mxu0
  %v7912 = vadd.f32 %v7623, %v7911
  %v7913 = vpop.f32.mrb[0].mxu0
  %v7914 = vpop.f32.mrb[0].mxu0
  %v7915 = vadd.f32 %v7626, %v7914
  %v7916 = vpop.f32.mrb[0].mxu0
  %7917 = vmatprep.mubr.bf16.mxu0 %v6478
  %7918 = vmatmul.mubr.bf16.gmra.mrb[0].mxu0 %v6477
  %v7919 = vpop.f32.mrb[0].mxu0
  %v7920 = vadd.f32 %v7631, %v7919
  %v7921 = vpop.f32.mrb[0].mxu0
  %v7922 = vpop.f32.mrb[0].mxu0
  %v7923 = vadd.f32 %v7634, %v7922
  %v7924 = vpop.f32.mrb[0].mxu0
  %7925 = vmatprep.mubr.bf16.mxu0 %v6487
  %7926 = vmatmul.mubr.bf16.gmra.mrb[0].mxu0 %v6486
  %v7927 = vpop.f32.mrb[0].mxu0
  %v7928 = vadd.f32 %v7639, %v7927
  %v7929 = vpop.f32.mrb[0].mxu0
  %v7930 = vpop.f32.mrb[0].mxu0
  %v7931 = vadd.f32 %v7642, %v7930
  %v7932 = vpop.f32.mrb[0].mxu0
  %7933 = vdwg.mxu0
  %7934 = vmatprep.subr.bf16.mxu0 0
  %7935 = vmatpush1.bf16.msra.mxu0 %v6971
  %7936 = vmatprep.subr.bf16.mxu0 0
  %7937 = vmatpush1.bf16.msra.mxu0 %v6972
  %7938 = vmatprep.subr.bf16.mxu0 0
  %7939 = vmatpush1.bf16.msra.mxu0 %v6973
  %7940 = vmatprep.subr.bf16.mxu0 0
  %7941 = vmatpush1.bf16.msra.mxu0 %v6974
  %7942 = vmatprep.subr.bf16.mxu0 0
  %7943 = vmatpush1.bf16.msra.mxu0 %v6975
  %7944 = vmatprep.subr.bf16.mxu0 0
  %7945 = vmatpush1.bf16.msra.mxu0 %v6976
  %7946 = vmatprep.subr.bf16.mxu0 0
  %7947 = vmatpush1.bf16.msra.mxu0 %v6977
  %7948 = vmatprep.subr.bf16.mxu0 0
  %7949 = vmatpush1.bf16.msra.mxu0 %v6978
  %7950 = vmatprep.subr.bf16.mxu0 0
  %7951 = vmatpush1.bf16.msra.mxu0 %v6979
  %7952 = vmatprep.subr.bf16.mxu0 0
  %7953 = vmatpush1.bf16.msra.mxu0 %v6980
  %7954 = vmatprep.subr.bf16.mxu0 0
  %7955 = vmatpush1.bf16.msra.mxu0 %v6981
  %7956 = vmatprep.subr.bf16.mxu0 0
  %7957 = vmatpush1.bf16.msra.mxu0 %v6982
  %7958 = vmatprep.subr.bf16.mxu0 0
  %7959 = vmatpush1.bf16.msra.mxu0 %v6983
  %7960 = vmatprep.subr.bf16.mxu0 0
  %7961 = vmatpush1.bf16.msra.mxu0 %v6984
  %7962 = vmatprep.subr.bf16.mxu0 0
  %7963 = vmatpush1.bf16.msra.mxu0 %v6985
  %7964 = vmatprep.subr.bf16.mxu0 0
  %7965 = vmatpush1.bf16.msra.mxu0 %v6986
  %7966 = vmatprep.mubr.bf16.mxu0 %v6210
  %7967 = vmatmul.mubr.bf16.gmra.mrb[0].mxu0 %v6209
  %v7968 = vpop.f32.mrb[0].mxu0
  %v7969 = vadd.f32 %v7680, %v7968
  %v7970 = vpop.f32.mrb[0].mxu0
  %v7971 = vpop.f32.mrb[0].mxu0
  %v7972 = vadd.f32 %v7683, %v7971
  %v7973 = vpop.f32.mrb[0].mxu0
  %7974 = vmatprep.mubr.bf16.mxu0 %v6219
  %7975 = vmatmul.mubr.bf16.gmra.mrb[0].mxu0 %v6218
  %v7976 = vpop.f32.mrb[0].mxu0
  %v7977 = vadd.f32 %v7688, %v7976
  %v7978 = vpop.f32.mrb[0].mxu0
  %v7979 = vpop.f32.mrb[0].mxu0
  %v7980 = vadd.f32 %v7691, %v7979
  %v7981 = vpop.f32.mrb[0].mxu0
  %7982 = vmatprep.mubr.bf16.mxu0 %v6228
  %7983 = vmatmul.mubr.bf16.gmra.mrb[0].mxu0 %v6227
  %v7984 = vpop.f32.mrb[0].mxu0
  %v7985 = vadd.f32 %v7696, %v7984
  %v7986 = vpop.f32.mrb[0].mxu0
  %v7987 = vpop.f32.mrb[0].mxu0
  %v7988 = vadd.f32 %v7699, %v7987
  %v7989 = vpop.f32.mrb[0].mxu0
  %7990 = vmatprep.mubr.bf16.mxu0 %v6237
  %7991 = vmatmul.mubr.bf16.gmra.mrb[0].mxu0 %v6236
  %v7992 = vpop.f32.mrb[0].mxu0
  %v7993 = vadd.f32 %v7704, %v7992
  %v7994 = vpop.f32.mrb[0].mxu0
  %v7995 = vpop.f32.mrb[0].mxu0
  %v7996 = vadd.f32 %v7707, %v7995
  %v7997 = vpop.f32.mrb[0].mxu0
  %7998 = vmatprep.mubr.bf16.mxu0 %v6246
  %7999 = vmatmul.mubr.bf16.gmra.mrb[0].mxu0 %v6245
  %v8000 = vpop.f32.mrb[0].mxu0
  %v8001 = vadd.f32 %v7712, %v8000
  %v8002 = vpop.f32.mrb[0].mxu0
  %v8003 = vpop.f32.mrb[0].mxu0
  %v8004 = vadd.f32 %v7715, %v8003
  %v8005 = vpop.f32.mrb[0].mxu0
  %8006 = vmatprep.mubr.bf16.mxu0 %v6255
  %8007 = vmatmul.mubr.bf16.gmra.mrb[0].mxu0 %v6254
  %v8008 = vpop.f32.mrb[0].mxu0
  %v8009 = vadd.f32 %v7720, %v8008
  %v8010 = vpop.f32.mrb[0].mxu0
  %v8011 = vpop.f32.mrb[0].mxu0
  %v8012 = vadd.f32 %v7723, %v8011
  %v8013 = vpop.f32.mrb[0].mxu0
  %8014 = vmatprep.mubr.bf16.mxu0 %v6264
  %8015 = vmatmul.mubr.bf16.gmra.mrb[0].mxu0 %v6263
  %v8016 = vpop.f32.mrb[0].mxu0
  %v8017 = vadd.f32 %v7728, %v8016
  %v8018 = vpop.f32.mrb[0].mxu0
  %v8019 = vpop.f32.mrb[0].mxu0
  %v8020 = vadd.f32 %v7731, %v8019
  %v8021 = vpop.f32.mrb[0].mxu0
  %8022 = vmatprep.mubr.bf16.mxu0 %v6273
  %8023 = vmatmul.mubr.bf16.gmra.mrb[0].mxu0 %v6272
  %v8024 = vpop.f32.mrb[0].mxu0
  %v8025 = vadd.f32 %v7736, %v8024
  %v8026 = vpop.f32.mrb[0].mxu0
  %v8027 = vpop.f32.mrb[0].mxu0
  %v8028 = vadd.f32 %v7739, %v8027
  %v8029 = vpop.f32.mrb[0].mxu0
  %8030 = vmatprep.mubr.bf16.mxu0 %v6282
  %8031 = vmatmul.mubr.bf16.gmra.mrb[0].mxu0 %v6281
  %v8032 = vpop.f32.mrb[0].mxu0
  %v8033 = vadd.f32 %v7744, %v8032
  %v8034 = vpop.f32.mrb[0].mxu0
  %v8035 = vpop.f32.mrb[0].mxu0
  %v8036 = vadd.f32 %v7747, %v8035
  %v8037 = vpop.f32.mrb[0].mxu0
  %8038 = vmatprep.mubr.bf16.mxu0 %v6291
  %8039 = vmatmul.mubr.bf16.gmra.mrb[0].mxu0 %v6290
  %v8040 = vpop.f32.mrb[0].mxu0
  %v8041 = vadd.f32 %v7752, %v8040
  %v8042 = vpop.f32.mrb[0].mxu0
  %v8043 = vpop.f32.mrb[0].mxu0
  %v8044 = vadd.f32 %v7755, %v8043
  %v8045 = vpop.f32.mrb[0].mxu0
  %8046 = vmatprep.mubr.bf16.mxu0 %v6300
  %8047 = vmatmul.mubr.bf16.gmra.mrb[0].mxu0 %v6299
  %v8048 = vpop.f32.mrb[0].mxu0
  %v8049 = vadd.f32 %v7760, %v8048
  %v8050 = vpop.f32.mrb[0].mxu0
  %v8051 = vpop.f32.mrb[0].mxu0
  %v8052 = vadd.f32 %v7763, %v8051
  %v8053 = vpop.f32.mrb[0].mxu0
  %8054 = vmatprep.mubr.bf16.mxu0 %v6309
  %8055 = vmatmul.mubr.bf16.gmra.mrb[0].mxu0 %v6308
  %v8056 = vpop.f32.mrb[0].mxu0
  %v8057 = vadd.f32 %v7768, %v8056
  %v8058 = vpop.f32.mrb[0].mxu0
  %v8059 = vpop.f32.mrb[0].mxu0
  %v8060 = vadd.f32 %v7771, %v8059
  %v8061 = vpop.f32.mrb[0].mxu0
  %8062 = vmatprep.mubr.bf16.mxu0 %v6318
  %8063 = vmatmul.mubr.bf16.gmra.mrb[0].mxu0 %v6317
  %v8064 = vpop.f32.mrb[0].mxu0
  %v8065 = vadd.f32 %v7776, %v8064
  %v8066 = vpop.f32.mrb[0].mxu0
  %v8067 = vpop.f32.mrb[0].mxu0
  %v8068 = vadd.f32 %v7779, %v8067
  %v8069 = vpop.f32.mrb[0].mxu0
  %8070 = vmatprep.mubr.bf16.mxu0 %v6327
  %8071 = vmatmul.mubr.bf16.gmra.mrb[0].mxu0 %v6326
  %v8072 = vpop.f32.mrb[0].mxu0
  %v8073 = vadd.f32 %v7784, %v8072
  %v8074 = vpop.f32.mrb[0].mxu0
  %v8075 = vpop.f32.mrb[0].mxu0
  %v8076 = vadd.f32 %v7787, %v8075
  %v8077 = vpop.f32.mrb[0].mxu0
  %8078 = vmatprep.mubr.bf16.mxu0 %v6336
  %8079 = vmatmul.mubr.bf16.gmra.mrb[0].mxu0 %v6335
  %v8080 = vpop.f32.mrb[0].mxu0
  %v8081 = vadd.f32 %v7792, %v8080
  %v8082 = vpop.f32.mrb[0].mxu0
  %v8083 = vpop.f32.mrb[0].mxu0
  %v8084 = vadd.f32 %v7795, %v8083
  %v8085 = vpop.f32.mrb[0].mxu0
  %8086 = vmatprep.mubr.bf16.mxu0 %v6345
  %8087 = vmatmul.mubr.bf16.gmra.mrb[0].mxu0 %v6344
  %v8088 = vpop.f32.mrb[0].mxu0
  %v8089 = vadd.f32 %v7800, %v8088
  %v8090 = vpop.f32.mrb[0].mxu0
  %v8091 = vpop.f32.mrb[0].mxu0
  %v8092 = vadd.f32 %v7803, %v8091
  %v8093 = vpop.f32.mrb[0].mxu0
  %8094 = vmatprep.mubr.bf16.mxu0 %v6354
  %8095 = vmatmul.mubr.bf16.gmra.mrb[0].mxu0 %v6353
  %v8096 = vpop.f32.mrb[0].mxu0
  %v8097 = vadd.f32 %v7808, %v8096
  %v8098 = vpop.f32.mrb[0].mxu0
  %v8099 = vpop.f32.mrb[0].mxu0
  %v8100 = vadd.f32 %v7811, %v8099
  %v8101 = vpop.f32.mrb[0].mxu0
  %8102 = vmatprep.mubr.bf16.mxu0 %v6363
  %8103 = vmatmul.mubr.bf16.gmra.mrb[0].mxu0 %v6362
  %v8104 = vpop.f32.mrb[0].mxu0
  %v8105 = vadd.f32 %v7816, %v8104
  %v8106 = vpop.f32.mrb[0].mxu0
  %v8107 = vpop.f32.mrb[0].mxu0
  %v8108 = vadd.f32 %v7819, %v8107
  %v8109 = vpop.f32.mrb[0].mxu0
  %8110 = vmatprep.mubr.bf16.mxu0 %v6372
  %8111 = vmatmul.mubr.bf16.gmra.mrb[0].mxu0 %v6371
  %v8112 = vpop.f32.mrb[0].mxu0
  %v8113 = vadd.f32 %v7824, %v8112
  %v8114 = vpop.f32.mrb[0].mxu0
  %v8115 = vpop.f32.mrb[0].mxu0
  %v8116 = vadd.f32 %v7827, %v8115
  %v8117 = vpop.f32.mrb[0].mxu0
  %8118 = vmatprep.mubr.bf16.mxu0 %v6381
  %8119 = vmatmul.mubr.bf16.gmra.mrb[0].mxu0 %v6380
  %v8120 = vpop.f32.mrb[0].mxu0
  %v8121 = vadd.f32 %v7832, %v8120
  %v8122 = vpop.f32.mrb[0].mxu0
  %v8123 = vpop.f32.mrb[0].mxu0
  %v8124 = vadd.f32 %v7835, %v8123
  %v8125 = vpop.f32.mrb[0].mxu0
  %8126 = vmatprep.mubr.bf16.mxu0 %v6390
  %8127 = vmatmul.mubr.bf16.gmra.mrb[0].mxu0 %v6389
  %v8128 = vpop.f32.mrb[0].mxu0
  %v8129 = vadd.f32 %v7840, %v8128
  %v8130 = vpop.f32.mrb[0].mxu0
  %v8131 = vpop.f32.mrb[0].mxu0
  %v8132 = vadd.f32 %v7843, %v8131
  %v8133 = vpop.f32.mrb[0].mxu0
  %8134 = vmatprep.mubr.bf16.mxu0 %v6399
  %8135 = vmatmul.mubr.bf16.gmra.mrb[0].mxu0 %v6398
  %v8136 = vpop.f32.mrb[0].mxu0
  %v8137 = vadd.f32 %v7848, %v8136
  %v8138 = vpop.f32.mrb[0].mxu0
  %v8139 = vpop.f32.mrb[0].mxu0
  %v8140 = vadd.f32 %v7851, %v8139
  %v8141 = vpop.f32.mrb[0].mxu0
  %8142 = vmatprep.mubr.bf16.mxu0 %v6408
  %8143 = vmatmul.mubr.bf16.gmra.mrb[0].mxu0 %v6407
  %v8144 = vpop.f32.mrb[0].mxu0
  %v8145 = vadd.f32 %v7856, %v8144
  %v8146 = vpop.f32.mrb[0].mxu0
  %v8147 = vpop.f32.mrb[0].mxu0
  %v8148 = vadd.f32 %v7859, %v8147
  %v8149 = vpop.f32.mrb[0].mxu0
  %8150 = vmatprep.mubr.bf16.mxu0 %v6417
  %8151 = vmatmul.mubr.bf16.gmra.mrb[0].mxu0 %v6416
  %v8152 = vpop.f32.mrb[0].mxu0
  %v8153 = vadd.f32 %v7864, %v8152
  %v8154 = vpop.f32.mrb[0].mxu0
  %v8155 = vpop.f32.mrb[0].mxu0
  %v8156 = vadd.f32 %v7867, %v8155
  %v8157 = vpop.f32.mrb[0].mxu0
  %8158 = vmatprep.mubr.bf16.mxu0 %v6426
  %8159 = vmatmul.mubr.bf16.gmra.mrb[0].mxu0 %v6425
  %v8160 = vpop.f32.mrb[0].mxu0
  %v8161 = vadd.f32 %v7872, %v8160
  %v8162 = vpop.f32.mrb[0].mxu0
  %v8163 = vpop.f32.mrb[0].mxu0
  %v8164 = vadd.f32 %v7875, %v8163
  %v8165 = vpop.f32.mrb[0].mxu0
  %8166 = vmatprep.mubr.bf16.mxu0 %v6435
  %8167 = vmatmul.mubr.bf16.gmra.mrb[0].mxu0 %v6434
  %v8168 = vpop.f32.mrb[0].mxu0
  %v8169 = vadd.f32 %v7880, %v8168
  %v8170 = vpop.f32.mrb[0].mxu0
  %v8171 = vpop.f32.mrb[0].mxu0
  %v8172 = vadd.f32 %v7883, %v8171
  %v8173 = vpop.f32.mrb[0].mxu0
  %8174 = vmatprep.mubr.bf16.mxu0 %v6444
  %8175 = vmatmul.mubr.bf16.gmra.mrb[0].mxu0 %v6443
  %v8176 = vpop.f32.mrb[0].mxu0
  %v8177 = vadd.f32 %v7888, %v8176
  %v8178 = vpop.f32.mrb[0].mxu0
  %v8179 = vpop.f32.mrb[0].mxu0
  %v8180 = vadd.f32 %v7891, %v8179
  %v8181 = vpop.f32.mrb[0].mxu0
  %8182 = vmatprep.mubr.bf16.mxu0 %v6453
  %8183 = vmatmul.mubr.bf16.gmra.mrb[0].mxu0 %v6452
  %v8184 = vpop.f32.mrb[0].mxu0
  %v8185 = vadd.f32 %v7896, %v8184
  %v8186 = vpop.f32.mrb[0].mxu0
  %v8187 = vpop.f32.mrb[0].mxu0
  %v8188 = vadd.f32 %v7899, %v8187
  %v8189 = vpop.f32.mrb[0].mxu0
  %8190 = vmatprep.mubr.bf16.mxu0 %v6462
  %8191 = vmatmul.mubr.bf16.gmra.mrb[0].mxu0 %v6461
  %v8192 = vpop.f32.mrb[0].mxu0
  %v8193 = vadd.f32 %v7904, %v8192
  %v8194 = vpop.f32.mrb[0].mxu0
  %v8195 = vpop.f32.mrb[0].mxu0
  %v8196 = vadd.f32 %v7907, %v8195
  %v8197 = vpop.f32.mrb[0].mxu0
  %8198 = vmatprep.mubr.bf16.mxu0 %v6471
  %8199 = vmatmul.mubr.bf16.gmra.mrb[0].mxu0 %v6470
  %v8200 = vpop.f32.mrb[0].mxu0
  %v8201 = vadd.f32 %v7912, %v8200
  %v8202 = vpop.f32.mrb[0].mxu0
  %v8203 = vpop.f32.mrb[0].mxu0
  %v8204 = vadd.f32 %v7915, %v8203
  %v8205 = vpop.f32.mrb[0].mxu0
  %8206 = vmatprep.mubr.bf16.mxu0 %v6480
  %8207 = vmatmul.mubr.bf16.gmra.mrb[0].mxu0 %v6479
  %v8208 = vpop.f32.mrb[0].mxu0
  %v8209 = vadd.f32 %v7920, %v8208
  %v8210 = vpop.f32.mrb[0].mxu0
  %v8211 = vpop.f32.mrb[0].mxu0
  %v8212 = vadd.f32 %v7923, %v8211
  %v8213 = vpop.f32.mrb[0].mxu0
  %8214 = vmatprep.mubr.bf16.mxu0 %v6489
  %8215 = vmatmul.mubr.bf16.gmra.mrb[0].mxu0 %v6488
  %v8216 = vpop.f32.mrb[0].mxu0
  %v8217 = vadd.f32 %v7928, %v8216
  %v8218 = vpop.f32.mrb[0].mxu0
  %v8219 = vpop.f32.mrb[0].mxu0
  %v8220 = vadd.f32 %v7931, %v8219
  %v8221 = vpop.f32.mrb[0].mxu0
  %8222 = vdwg.mxu0
  %8223 = vmatprep.subr.bf16.mxu0 0
  %8224 = vmatpush1.bf16.msra.mxu0 %v6987
  %8225 = vmatprep.subr.bf16.mxu0 0
  %8226 = vmatpush1.bf16.msra.mxu0 %v6988
  %8227 = vmatprep.subr.bf16.mxu0 0
  %8228 = vmatpush1.bf16.msra.mxu0 %v6989
  %8229 = vmatprep.subr.bf16.mxu0 0
  %8230 = vmatpush1.bf16.msra.mxu0 %v6990
  %8231 = vmatprep.subr.bf16.mxu0 0
  %8232 = vmatpush1.bf16.msra.mxu0 %v6991
  %8233 = vmatprep.subr.bf16.mxu0 0
  %8234 = vmatpush1.bf16.msra.mxu0 %v6992
  %8235 = vmatprep.subr.bf16.mxu0 0
  %8236 = vmatpush1.bf16.msra.mxu0 %v6993
  %8237 = vmatprep.subr.bf16.mxu0 0
  %8238 = vmatpush1.bf16.msra.mxu0 %v6994
  %8239 = vmatprep.subr.bf16.mxu0 0
  %8240 = vmatpush1.bf16.msra.mxu0 0
  %8241 = vmatprep.subr.bf16.mxu0 0
  %8242 = vmatpush1.bf16.msra.mxu0 0
  %8243 = vmatprep.subr.bf16.mxu0 0
  %8244 = vmatpush1.bf16.msra.mxu0 0
  %8245 = vmatprep.subr.bf16.mxu0 0
  %8246 = vmatpush1.bf16.msra.mxu0 0
  %8247 = vmatprep.subr.bf16.mxu0 0
  %8248 = vmatpush1.bf16.msra.mxu0 0
  %8249 = vmatprep.subr.bf16.mxu0 0
  %8250 = vmatpush1.bf16.msra.mxu0 0
  %8251 = vmatprep.subr.bf16.mxu0 0
  %8252 = vmatpush1.bf16.msra.mxu0 0
  %8253 = vmatprep.subr.bf16.mxu0 0
  %8254 = vmatpush1.bf16.msra.mxu0 0
  %8255 = vmatprep.mubr.bf16.mxu0 0
  %8256 = vmatmul.mubr.bf16.gmra.mrb[0].mxu0 %v6211
  %v8257 = vpop.f32.mrb[0].mxu0
  %v8258 = vadd.f32 %v7969, %v8257
  %v8259 = vpop.f32.mrb[0].mxu0
  %v8260 = vpop.f32.mrb[0].mxu0
  %v8261 = vadd.f32 %v7972, %v8260
  %v8262 = vpop.f32.mrb[0].mxu0
  %8263 = vmatprep.mubr.bf16.mxu0 0
  %8264 = vmatmul.mubr.bf16.gmra.mrb[0].mxu0 %v6220
  %v8265 = vpop.f32.mrb[0].mxu0
  %v8266 = vadd.f32 %v7977, %v8265
  %v8267 = vpop.f32.mrb[0].mxu0
  %v8268 = vpop.f32.mrb[0].mxu0
  %v8269 = vadd.f32 %v7980, %v8268
  %v8270 = vpop.f32.mrb[0].mxu0
  %8271 = vmatprep.mubr.bf16.mxu0 0
  %8272 = vmatmul.mubr.bf16.gmra.mrb[0].mxu0 %v6229
  %v8273 = vpop.f32.mrb[0].mxu0
  %v8274 = vadd.f32 %v7985, %v8273
  %v8275 = vpop.f32.mrb[0].mxu0
  %v8276 = vpop.f32.mrb[0].mxu0
  %v8277 = vadd.f32 %v7988, %v8276
  %v8278 = vpop.f32.mrb[0].mxu0
  %8279 = vmatprep.mubr.bf16.mxu0 0
  %8280 = vmatmul.mubr.bf16.gmra.mrb[0].mxu0 %v6238
  %v8281 = vpop.f32.mrb[0].mxu0
  %v8282 = vadd.f32 %v7993, %v8281
  %v8283 = vpop.f32.mrb[0].mxu0
  %v8284 = vpop.f32.mrb[0].mxu0
  %v8285 = vadd.f32 %v7996, %v8284
  %v8286 = vpop.f32.mrb[0].mxu0
  %8287 = vmatprep.mubr.bf16.mxu0 0
  %8288 = vmatmul.mubr.bf16.gmra.mrb[0].mxu0 %v6247
  %v8289 = vpop.f32.mrb[0].mxu0
  %v8290 = vadd.f32 %v8001, %v8289
  %v8291 = vpop.f32.mrb[0].mxu0
  %v8292 = vpop.f32.mrb[0].mxu0
  %v8293 = vadd.f32 %v8004, %v8292
  %v8294 = vpop.f32.mrb[0].mxu0
  %8295 = vmatprep.mubr.bf16.mxu0 0
  %8296 = vmatmul.mubr.bf16.gmra.mrb[0].mxu0 %v6256
  %v8297 = vpop.f32.mrb[0].mxu0
  %v8298 = vadd.f32 %v8009, %v8297
  %v8299 = vpop.f32.mrb[0].mxu0
  %v8300 = vpop.f32.mrb[0].mxu0
  %v8301 = vadd.f32 %v8012, %v8300
  %v8302 = vpop.f32.mrb[0].mxu0
  %8303 = vmatprep.mubr.bf16.mxu0 0
  %8304 = vmatmul.mubr.bf16.gmra.mrb[0].mxu0 %v6265
  %v8305 = vpop.f32.mrb[0].mxu0
  %v8306 = vadd.f32 %v8017, %v8305
  %v8307 = vpop.f32.mrb[0].mxu0
  %v8308 = vpop.f32.mrb[0].mxu0
  %v8309 = vadd.f32 %v8020, %v8308
  %v8310 = vpop.f32.mrb[0].mxu0
  %8311 = vmatprep.mubr.bf16.mxu0 0
  %8312 = vmatmul.mubr.bf16.gmra.mrb[0].mxu0 %v6274
  %v8313 = vpop.f32.mrb[0].mxu0
  %v8314 = vadd.f32 %v8025, %v8313
  %v8315 = vpop.f32.mrb[0].mxu0
  %v8316 = vpop.f32.mrb[0].mxu0
  %v8317 = vadd.f32 %v8028, %v8316
  %v8318 = vpop.f32.mrb[0].mxu0
  %8319 = vmatprep.mubr.bf16.mxu0 0
  %8320 = vmatmul.mubr.bf16.gmra.mrb[0].mxu0 %v6283
  %v8321 = vpop.f32.mrb[0].mxu0
  %v8322 = vadd.f32 %v8033, %v8321
  %v8323 = vpop.f32.mrb[0].mxu0
  %v8324 = vpop.f32.mrb[0].mxu0
  %v8325 = vadd.f32 %v8036, %v8324
  %v8326 = vpop.f32.mrb[0].mxu0
  %8327 = vmatprep.mubr.bf16.mxu0 0
  %8328 = vmatmul.mubr.bf16.gmra.mrb[0].mxu0 %v6292
  %v8329 = vpop.f32.mrb[0].mxu0
  %v8330 = vadd.f32 %v8041, %v8329
  %v8331 = vpop.f32.mrb[0].mxu0
  %v8332 = vpop.f32.mrb[0].mxu0
  %v8333 = vadd.f32 %v8044, %v8332
  %v8334 = vpop.f32.mrb[0].mxu0
  %8335 = vmatprep.mubr.bf16.mxu0 0
  %8336 = vmatmul.mubr.bf16.gmra.mrb[0].mxu0 %v6301
  %v8337 = vpop.f32.mrb[0].mxu0
  %v8338 = vadd.f32 %v8049, %v8337
  %v8339 = vpop.f32.mrb[0].mxu0
  %v8340 = vpop.f32.mrb[0].mxu0
  %v8341 = vadd.f32 %v8052, %v8340
  %v8342 = vpop.f32.mrb[0].mxu0
  %8343 = vmatprep.mubr.bf16.mxu0 0
  %8344 = vmatmul.mubr.bf16.gmra.mrb[0].mxu0 %v6310
  %v8345 = vpop.f32.mrb[0].mxu0
  %v8346 = vadd.f32 %v8057, %v8345
  %v8347 = vpop.f32.mrb[0].mxu0
  %v8348 = vpop.f32.mrb[0].mxu0
  %v8349 = vadd.f32 %v8060, %v8348
  %v8350 = vpop.f32.mrb[0].mxu0
  %8351 = vmatprep.mubr.bf16.mxu0 0
  %8352 = vmatmul.mubr.bf16.gmra.mrb[0].mxu0 %v6319
  %v8353 = vpop.f32.mrb[0].mxu0
  %v8354 = vadd.f32 %v8065, %v8353
  %v8355 = vpop.f32.mrb[0].mxu0
  %v8356 = vpop.f32.mrb[0].mxu0
  %v8357 = vadd.f32 %v8068, %v8356
  %v8358 = vpop.f32.mrb[0].mxu0
  %8359 = vmatprep.mubr.bf16.mxu0 0
  %8360 = vmatmul.mubr.bf16.gmra.mrb[0].mxu0 %v6328
  %v8361 = vpop.f32.mrb[0].mxu0
  %v8362 = vadd.f32 %v8073, %v8361
  %v8363 = vpop.f32.mrb[0].mxu0
  %v8364 = vpop.f32.mrb[0].mxu0
  %v8365 = vadd.f32 %v8076, %v8364
  %v8366 = vpop.f32.mrb[0].mxu0
  %8367 = vmatprep.mubr.bf16.mxu0 0
  %8368 = vmatmul.mubr.bf16.gmra.mrb[0].mxu0 %v6337
  %v8369 = vpop.f32.mrb[0].mxu0
  %v8370 = vadd.f32 %v8081, %v8369
  %v8371 = vpop.f32.mrb[0].mxu0
  %v8372 = vpop.f32.mrb[0].mxu0
  %v8373 = vadd.f32 %v8084, %v8372
  %v8374 = vpop.f32.mrb[0].mxu0
  %8375 = vmatprep.mubr.bf16.mxu0 0
  %8376 = vmatmul.mubr.bf16.gmra.mrb[0].mxu0 %v6346
  %v8377 = vpop.f32.mrb[0].mxu0
  %v8378 = vadd.f32 %v8089, %v8377
  %v8379 = vpop.f32.mrb[0].mxu0
  %v8380 = vpop.f32.mrb[0].mxu0
  %v8381 = vadd.f32 %v8092, %v8380
  %v8382 = vpop.f32.mrb[0].mxu0
  %8383 = vmatprep.mubr.bf16.mxu0 0
  %8384 = vmatmul.mubr.bf16.gmra.mrb[0].mxu0 %v6355
  %v8385 = vpop.f32.mrb[0].mxu0
  %v8386 = vadd.f32 %v8097, %v8385
  %v8387 = vpop.f32.mrb[0].mxu0
  %v8388 = vpop.f32.mrb[0].mxu0
  %v8389 = vadd.f32 %v8100, %v8388
  %v8390 = vpop.f32.mrb[0].mxu0
  %8391 = vmatprep.mubr.bf16.mxu0 0
  %8392 = vmatmul.mubr.bf16.gmra.mrb[0].mxu0 %v6364
  %v8393 = vpop.f32.mrb[0].mxu0
  %v8394 = vadd.f32 %v8105, %v8393
  %v8395 = vpop.f32.mrb[0].mxu0
  %v8396 = vpop.f32.mrb[0].mxu0
  %v8397 = vadd.f32 %v8108, %v8396
  %v8398 = vpop.f32.mrb[0].mxu0
  %8399 = vmatprep.mubr.bf16.mxu0 0
  %8400 = vmatmul.mubr.bf16.gmra.mrb[0].mxu0 %v6373
  %v8401 = vpop.f32.mrb[0].mxu0
  %v8402 = vadd.f32 %v8113, %v8401
  %v8403 = vpop.f32.mrb[0].mxu0
  %v8404 = vpop.f32.mrb[0].mxu0
  %v8405 = vadd.f32 %v8116, %v8404
  %v8406 = vpop.f32.mrb[0].mxu0
  %8407 = vmatprep.mubr.bf16.mxu0 0
  %8408 = vmatmul.mubr.bf16.gmra.mrb[0].mxu0 %v6382
  %v8409 = vpop.f32.mrb[0].mxu0
  %v8410 = vadd.f32 %v8121, %v8409
  %v8411 = vpop.f32.mrb[0].mxu0
  %v8412 = vpop.f32.mrb[0].mxu0
  %v8413 = vadd.f32 %v8124, %v8412
  %v8414 = vpop.f32.mrb[0].mxu0
  %8415 = vmatprep.mubr.bf16.mxu0 0
  %8416 = vmatmul.mubr.bf16.gmra.mrb[0].mxu0 %v6391
  %v8417 = vpop.f32.mrb[0].mxu0
  %v8418 = vadd.f32 %v8129, %v8417
  %v8419 = vpop.f32.mrb[0].mxu0
  %v8420 = vpop.f32.mrb[0].mxu0
  %v8421 = vadd.f32 %v8132, %v8420
  %v8422 = vpop.f32.mrb[0].mxu0
  %8423 = vmatprep.mubr.bf16.mxu0 0
  %8424 = vmatmul.mubr.bf16.gmra.mrb[0].mxu0 %v6400
  %v8425 = vpop.f32.mrb[0].mxu0
  %v8426 = vadd.f32 %v8137, %v8425
  %v8427 = vpop.f32.mrb[0].mxu0
  %v8428 = vpop.f32.mrb[0].mxu0
  %v8429 = vadd.f32 %v8140, %v8428
  %v8430 = vpop.f32.mrb[0].mxu0
  %8431 = vmatprep.mubr.bf16.mxu0 0
  %8432 = vmatmul.mubr.bf16.gmra.mrb[0].mxu0 %v6409
  %v8433 = vpop.f32.mrb[0].mxu0
  %v8434 = vadd.f32 %v8145, %v8433
  %v8435 = vpop.f32.mrb[0].mxu0
  %v8436 = vpop.f32.mrb[0].mxu0
  %v8437 = vadd.f32 %v8148, %v8436
  %v8438 = vpop.f32.mrb[0].mxu0
  %8439 = vmatprep.mubr.bf16.mxu0 0
  %8440 = vmatmul.mubr.bf16.gmra.mrb[0].mxu0 %v6418
  %v8441 = vpop.f32.mrb[0].mxu0
  %v8442 = vadd.f32 %v8153, %v8441
  %v8443 = vpop.f32.mrb[0].mxu0
  %v8444 = vpop.f32.mrb[0].mxu0
  %v8445 = vadd.f32 %v8156, %v8444
  %v8446 = vpop.f32.mrb[0].mxu0
  %8447 = vmatprep.mubr.bf16.mxu0 0
  %8448 = vmatmul.mubr.bf16.gmra.mrb[0].mxu0 %v6427
  %v8449 = vpop.f32.mrb[0].mxu0
  %v8450 = vadd.f32 %v8161, %v8449
  %v8451 = vpop.f32.mrb[0].mxu0
  %v8452 = vpop.f32.mrb[0].mxu0
  %v8453 = vadd.f32 %v8164, %v8452
  %v8454 = vpop.f32.mrb[0].mxu0
  %8455 = vmatprep.mubr.bf16.mxu0 0
  %8456 = vmatmul.mubr.bf16.gmra.mrb[0].mxu0 %v6436
  %v8457 = vpop.f32.mrb[0].mxu0
  %v8458 = vadd.f32 %v8169, %v8457
  %v8459 = vpop.f32.mrb[0].mxu0
  %v8460 = vpop.f32.mrb[0].mxu0
  %v8461 = vadd.f32 %v8172, %v8460
  %v8462 = vpop.f32.mrb[0].mxu0
  %8463 = vmatprep.mubr.bf16.mxu0 0
  %8464 = vmatmul.mubr.bf16.gmra.mrb[0].mxu0 %v6445
  %v8465 = vpop.f32.mrb[0].mxu0
  %v8466 = vadd.f32 %v8177, %v8465
  %v8467 = vpop.f32.mrb[0].mxu0
  %v8468 = vpop.f32.mrb[0].mxu0
  %v8469 = vadd.f32 %v8180, %v8468
  %v8470 = vpop.f32.mrb[0].mxu0
  %8471 = vmatprep.mubr.bf16.mxu0 0
  %8472 = vmatmul.mubr.bf16.gmra.mrb[0].mxu0 %v6454
  %v8473 = vpop.f32.mrb[0].mxu0
  %v8474 = vadd.f32 %v8185, %v8473
  %v8475 = vpop.f32.mrb[0].mxu0
  %v8476 = vpop.f32.mrb[0].mxu0
  %v8477 = vadd.f32 %v8188, %v8476
  %v8478 = vpop.f32.mrb[0].mxu0
  %8479 = vmatprep.mubr.bf16.mxu0 0
  %8480 = vmatmul.mubr.bf16.gmra.mrb[0].mxu0 %v6463
  %v8481 = vpop.f32.mrb[0].mxu0
  %v8482 = vadd.f32 %v8193, %v8481
  %v8483 = vpop.f32.mrb[0].mxu0
  %v8484 = vpop.f32.mrb[0].mxu0
  %v8485 = vadd.f32 %v8196, %v8484
  %v8486 = vpop.f32.mrb[0].mxu0
  %8487 = vmatprep.mubr.bf16.mxu0 0
  %8488 = vmatmul.mubr.bf16.gmra.mrb[0].mxu0 %v6472
  %v8489 = vpop.f32.mrb[0].mxu0
  %v8490 = vadd.f32 %v8201, %v8489
  %v8491 = vpop.f32.mrb[0].mxu0
  %v8492 = vpop.f32.mrb[0].mxu0
  %v8493 = vadd.f32 %v8204, %v8492
  %v8494 = vpop.f32.mrb[0].mxu0
  %8495 = vmatprep.mubr.bf16.mxu0 0
  %8496 = vmatmul.mubr.bf16.gmra.mrb[0].mxu0 %v6481
  %v8497 = vpop.f32.mrb[0].mxu0
  %v8498 = vadd.f32 %v8209, %v8497
  %v8499 = vpop.f32.mrb[0].mxu0
  %v8500 = vpop.f32.mrb[0].mxu0
  %v8501 = vadd.f32 %v8212, %v8500
  %v8502 = vpop.f32.mrb[0].mxu0
  %8503 = vmatprep.mubr.bf16.mxu0 0
  %8504 = vmatmul.mubr.bf16.gmra.mrb[0].mxu0 %v6490
  %v8505 = vpop.f32.mrb[0].mxu0
  %v8506 = vadd.f32 %v8217, %v8505
  %v8507 = vpop.f32.mrb[0].mxu0
  %v8508 = vpop.f32.mrb[0].mxu0
  %v8509 = vadd.f32 %v8220, %v8508
  %v8510 = vpop.f32.mrb[0].mxu0
  %8511 = vdwg.mxu0
  %v8512 = vld [vmem:[%s8] sm:$0x1]
  %v8514 = vlaneseq
  %v8515 = vshrl.u32 %v8514, 7
  %v8516 = vsub.s32 0, %v8515
  %v8517 = vrot.slane %v8512, %v8516
  %v8519 = vmul.f32 %v8258, %v8517
  %v8520 = vmul.f32 %v8261, %v8517
  %v8521 = vmul.f32 %v8266, %v8517
  %v8522 = vmul.f32 %v8269, %v8517
  %v8523 = vmul.f32 %v8274, %v8517
  %v8524 = vmul.f32 %v8277, %v8517
  %v8525 = vmul.f32 %v8282, %v8517
  %v8526 = vmul.f32 %v8285, %v8517
  %v8527 = vmul.f32 %v8290, %v8517
  %v8528 = vmul.f32 %v8293, %v8517
  %v8529 = vmul.f32 %v8298, %v8517
  %v8530 = vmul.f32 %v8301, %v8517
  %v8531 = vmul.f32 %v8306, %v8517
  %v8532 = vmul.f32 %v8309, %v8517
  %v8533 = vmul.f32 %v8314, %v8517
  %v8534 = vmul.f32 %v8317, %v8517
  %v8535 = vmul.f32 %v8322, %v8517
  %v8536 = vmul.f32 %v8325, %v8517
  %v8537 = vmul.f32 %v8330, %v8517
  %v8538 = vmul.f32 %v8333, %v8517
  %v8539 = vmul.f32 %v8338, %v8517
  %v8540 = vmul.f32 %v8341, %v8517
  %v8541 = vmul.f32 %v8346, %v8517
  %v8542 = vmul.f32 %v8349, %v8517
  %v8543 = vmul.f32 %v8354, %v8517
  %v8544 = vmul.f32 %v8357, %v8517
  %v8545 = vmul.f32 %v8362, %v8517
  %v8546 = vmul.f32 %v8365, %v8517
  %v8547 = vmul.f32 %v8370, %v8517
  %v8548 = vmul.f32 %v8373, %v8517
  %v8549 = vmul.f32 %v8378, %v8517
  %v8550 = vmul.f32 %v8381, %v8517
  %v8551 = vmul.f32 %v8386, %v8517
  %v8552 = vmul.f32 %v8389, %v8517
  %v8553 = vmul.f32 %v8394, %v8517
  %v8554 = vmul.f32 %v8397, %v8517
  %v8555 = vmul.f32 %v8402, %v8517
  %v8556 = vmul.f32 %v8405, %v8517
  %v8557 = vmul.f32 %v8410, %v8517
  %v8558 = vmul.f32 %v8413, %v8517
  %v8559 = vmul.f32 %v8418, %v8517
  %v8560 = vmul.f32 %v8421, %v8517
  %v8561 = vmul.f32 %v8426, %v8517
  %v8562 = vmul.f32 %v8429, %v8517
  %v8563 = vmul.f32 %v8434, %v8517
  %v8564 = vmul.f32 %v8437, %v8517
  %v8565 = vmul.f32 %v8442, %v8517
  %v8566 = vmul.f32 %v8445, %v8517
  %v8567 = vmul.f32 %v8450, %v8517
  %v8568 = vmul.f32 %v8453, %v8517
  %v8569 = vmul.f32 %v8458, %v8517
  %v8570 = vmul.f32 %v8461, %v8517
  %v8571 = vmul.f32 %v8466, %v8517
  %v8572 = vmul.f32 %v8469, %v8517
  %v8573 = vmul.f32 %v8474, %v8517
  %v8574 = vmul.f32 %v8477, %v8517
  %v8575 = vmul.f32 %v8482, %v8517
  %v8576 = vmul.f32 %v8485, %v8517
  %v8577 = vmul.f32 %v8490, %v8517
  %v8578 = vmul.f32 %v8493, %v8517
  %v8579 = vmul.f32 %v8498, %v8517
  %v8580 = vmul.f32 %v8501, %v8517
  %v8581 = vmul.f32 %v8506, %v8517
  %v8582 = vmul.f32 %v8509, %v8517
  %v8583 = vld [vmem:[%s9] sm:$0x1]
  %v8585 = vlaneseq
  %v8586 = vshrl.u32 %v8585, 7
  %v8587 = vsub.s32 0, %v8586
  %v8588 = vrot.slane %v8583, %v8587
  %v8590 = vadd.f32 %v8519, %v8588
  %v8591 = vadd.f32 %v8520, %v8588
  %v8592 = vadd.f32 %v8521, %v8588
  %v8593 = vadd.f32 %v8522, %v8588
  %v8594 = vadd.f32 %v8523, %v8588
  %v8595 = vadd.f32 %v8524, %v8588
  %v8596 = vadd.f32 %v8525, %v8588
  %v8597 = vadd.f32 %v8526, %v8588
  %v8598 = vadd.f32 %v8527, %v8588
  %v8599 = vadd.f32 %v8528, %v8588
  %v8600 = vadd.f32 %v8529, %v8588
  %v8601 = vadd.f32 %v8530, %v8588
  %v8602 = vadd.f32 %v8531, %v8588
  %v8603 = vadd.f32 %v8532, %v8588
  %v8604 = vadd.f32 %v8533, %v8588
  %v8605 = vadd.f32 %v8534, %v8588
  %v8606 = vadd.f32 %v8535, %v8588
  %v8607 = vadd.f32 %v8536, %v8588
  %v8608 = vadd.f32 %v8537, %v8588
  %v8609 = vadd.f32 %v8538, %v8588
  %v8610 = vadd.f32 %v8539, %v8588
  %v8611 = vadd.f32 %v8540, %v8588
  %v8612 = vadd.f32 %v8541, %v8588
  %v8613 = vadd.f32 %v8542, %v8588
  %v8614 = vadd.f32 %v8543, %v8588
  %v8615 = vadd.f32 %v8544, %v8588
  %v8616 = vadd.f32 %v8545, %v8588
  %v8617 = vadd.f32 %v8546, %v8588
  %v8618 = vadd.f32 %v8547, %v8588
  %v8619 = vadd.f32 %v8548, %v8588
  %v8620 = vadd.f32 %v8549, %v8588
  %v8621 = vadd.f32 %v8550, %v8588
  %v8622 = vadd.f32 %v8551, %v8588
  %v8623 = vadd.f32 %v8552, %v8588
  %v8624 = vadd.f32 %v8553, %v8588
  %v8625 = vadd.f32 %v8554, %v8588
  %v8626 = vadd.f32 %v8555, %v8588
  %v8627 = vadd.f32 %v8556, %v8588
  %v8628 = vadd.f32 %v8557, %v8588
  %v8629 = vadd.f32 %v8558, %v8588
  %v8630 = vadd.f32 %v8559, %v8588
  %v8631 = vadd.f32 %v8560, %v8588
  %v8632 = vadd.f32 %v8561, %v8588
  %v8633 = vadd.f32 %v8562, %v8588
  %v8634 = vadd.f32 %v8563, %v8588
  %v8635 = vadd.f32 %v8564, %v8588
  %v8636 = vadd.f32 %v8565, %v8588
  %v8637 = vadd.f32 %v8566, %v8588
  %v8638 = vadd.f32 %v8567, %v8588
  %v8639 = vadd.f32 %v8568, %v8588
  %v8640 = vadd.f32 %v8569, %v8588
  %v8641 = vadd.f32 %v8570, %v8588
  %v8642 = vadd.f32 %v8571, %v8588
  %v8643 = vadd.f32 %v8572, %v8588
  %v8644 = vadd.f32 %v8573, %v8588
  %v8645 = vadd.f32 %v8574, %v8588
  %v8646 = vadd.f32 %v8575, %v8588
  %v8647 = vadd.f32 %v8576, %v8588
  %v8648 = vadd.f32 %v8577, %v8588
  %v8649 = vadd.f32 %v8578, %v8588
  %v8650 = vadd.f32 %v8579, %v8588
  %v8651 = vadd.f32 %v8580, %v8588
  %v8652 = vadd.f32 %v8581, %v8588
  %v8653 = vadd.f32 %v8582, %v8588
  %v8654 = vadd.f32 %v8590, %v4986
  %v8655 = vadd.f32 %v8591, %v4987
  %v8656 = vadd.f32 %v8592, %v4988
  %v8657 = vadd.f32 %v8593, %v4989
  %v8658 = vadd.f32 %v8594, %v4990
  %v8659 = vadd.f32 %v8595, %v4991
  %v8660 = vadd.f32 %v8596, %v4992
  %v8661 = vadd.f32 %v8597, %v4993
  %v8662 = vadd.f32 %v8598, %v4994
  %v8663 = vadd.f32 %v8599, %v4995
  %v8664 = vadd.f32 %v8600, %v4996
  %v8665 = vadd.f32 %v8601, %v4997
  %v8666 = vadd.f32 %v8602, %v4998
  %v8667 = vadd.f32 %v8603, %v4999
  %v8668 = vadd.f32 %v8604, %v5000
  %v8669 = vadd.f32 %v8605, %v5001
  %v8670 = vadd.f32 %v8606, %v5002
  %v8671 = vadd.f32 %v8607, %v5003
  %v8672 = vadd.f32 %v8608, %v5004
  %v8673 = vadd.f32 %v8609, %v5005
  %v8674 = vadd.f32 %v8610, %v5006
  %v8675 = vadd.f32 %v8611, %v5007
  %v8676 = vadd.f32 %v8612, %v5008
  %v8677 = vadd.f32 %v8613, %v5009
  %v8678 = vadd.f32 %v8614, %v5010
  %v8679 = vadd.f32 %v8615, %v5011
  %v8680 = vadd.f32 %v8616, %v5012
  %v8681 = vadd.f32 %v8617, %v5013
  %v8682 = vadd.f32 %v8618, %v5014
  %v8683 = vadd.f32 %v8619, %v5015
  %v8684 = vadd.f32 %v8620, %v5016
  %v8685 = vadd.f32 %v8621, %v5017
  %v8686 = vadd.f32 %v8622, %v5018
  %v8687 = vadd.f32 %v8623, %v5019
  %v8688 = vadd.f32 %v8624, %v5020
  %v8689 = vadd.f32 %v8625, %v5021
  %v8690 = vadd.f32 %v8626, %v5022
  %v8691 = vadd.f32 %v8627, %v5023
  %v8692 = vadd.f32 %v8628, %v5024
  %v8693 = vadd.f32 %v8629, %v5025
  %v8694 = vadd.f32 %v8630, %v5026
  %v8695 = vadd.f32 %v8631, %v5027
  %v8696 = vadd.f32 %v8632, %v5028
  %v8697 = vadd.f32 %v8633, %v5029
  %v8698 = vadd.f32 %v8634, %v5030
  %v8699 = vadd.f32 %v8635, %v5031
  %v8700 = vadd.f32 %v8636, %v5032
  %v8701 = vadd.f32 %v8637, %v5033
  %v8702 = vadd.f32 %v8638, %v5034
  %v8703 = vadd.f32 %v8639, %v5035
  %v8704 = vadd.f32 %v8640, %v5036
  %v8705 = vadd.f32 %v8641, %v5037
  %v8706 = vadd.f32 %v8642, %v5038
  %v8707 = vadd.f32 %v8643, %v5039
  %v8708 = vadd.f32 %v8644, %v5040
  %v8709 = vadd.f32 %v8645, %v5041
  %v8710 = vadd.f32 %v8646, %v5042
  %v8711 = vadd.f32 %v8647, %v5043
  %v8712 = vadd.f32 %v8648, %v5044
  %v8713 = vadd.f32 %v8649, %v5045
  %v8714 = vadd.f32 %v8650, %v5046
  %v8715 = vadd.f32 %v8651, %v5047
  %v8716 = vadd.f32 %v8652, %v5048
  %v8717 = vadd.f32 %v8653, %v5049
  %v8718 = vmax.f32 %v8654, 0.0
  %v8719 = vmax.f32 %v8655, 0.0
  %v8720 = vmax.f32 %v8656, 0.0
  %v8721 = vmax.f32 %v8657, 0.0
  %v8722 = vmax.f32 %v8658, 0.0
  %v8723 = vmax.f32 %v8659, 0.0
  %v8724 = vmax.f32 %v8660, 0.0
  %v8725 = vmax.f32 %v8661, 0.0
  %v8726 = vmax.f32 %v8662, 0.0
  %v8727 = vmax.f32 %v8663, 0.0
  %v8728 = vmax.f32 %v8664, 0.0
  %v8729 = vmax.f32 %v8665, 0.0
  %v8730 = vmax.f32 %v8666, 0.0
  %v8731 = vmax.f32 %v8667, 0.0
  %v8732 = vmax.f32 %v8668, 0.0
  %v8733 = vmax.f32 %v8669, 0.0
  %v8734 = vmax.f32 %v8670, 0.0
  %v8735 = vmax.f32 %v8671, 0.0
  %v8736 = vmax.f32 %v8672, 0.0
  %v8737 = vmax.f32 %v8673, 0.0
  %v8738 = vmax.f32 %v8674, 0.0
  %v8739 = vmax.f32 %v8675, 0.0
  %v8740 = vmax.f32 %v8676, 0.0
  %v8741 = vmax.f32 %v8677, 0.0
  %v8742 = vmax.f32 %v8678, 0.0
  %v8743 = vmax.f32 %v8679, 0.0
  %v8744 = vmax.f32 %v8680, 0.0
  %v8745 = vmax.f32 %v8681, 0.0
  %v8746 = vmax.f32 %v8682, 0.0
  %v8747 = vmax.f32 %v8683, 0.0
  %v8748 = vmax.f32 %v8684, 0.0
  %v8749 = vmax.f32 %v8685, 0.0
  %v8750 = vmax.f32 %v8686, 0.0
  %v8751 = vmax.f32 %v8687, 0.0
  %v8752 = vmax.f32 %v8688, 0.0
  %v8753 = vmax.f32 %v8689, 0.0
  %v8754 = vmax.f32 %v8690, 0.0
  %v8755 = vmax.f32 %v8691, 0.0
  %v8756 = vmax.f32 %v8692, 0.0
  %v8757 = vmax.f32 %v8693, 0.0
  %v8758 = vmax.f32 %v8694, 0.0
  %v8759 = vmax.f32 %v8695, 0.0
  %v8760 = vmax.f32 %v8696, 0.0
  %v8761 = vmax.f32 %v8697, 0.0
  %v8762 = vmax.f32 %v8698, 0.0
  %v8763 = vmax.f32 %v8699, 0.0
  %v8764 = vmax.f32 %v8700, 0.0
  %v8765 = vmax.f32 %v8701, 0.0
  %v8766 = vmax.f32 %v8702, 0.0
  %v8767 = vmax.f32 %v8703, 0.0
  %v8768 = vmax.f32 %v8704, 0.0
  %v8769 = vmax.f32 %v8705, 0.0
  %v8770 = vmax.f32 %v8706, 0.0
  %v8771 = vmax.f32 %v8707, 0.0
  %v8772 = vmax.f32 %v8708, 0.0
  %v8773 = vmax.f32 %v8709, 0.0
  %v8774 = vmax.f32 %v8710, 0.0
  %v8775 = vmax.f32 %v8711, 0.0
  %v8776 = vmax.f32 %v8712, 0.0
  %v8777 = vmax.f32 %v8713, 0.0
  %v8778 = vmax.f32 %v8714, 0.0
  %v8779 = vmax.f32 %v8715, 0.0
  %v8780 = vmax.f32 %v8716, 0.0
  %v8781 = vmax.f32 %v8717, 0.0
  %v8782 = vadd.f32 %v8718, %v8719
  %v8783 = vadd.f32 %v8782, %v8720
  %v8784 = vadd.f32 %v8783, %v8721
  %v8785 = vadd.f32 %v8784, %v8722
  %v8786 = vadd.f32 %v8785, %v8723
  %v8787 = vadd.f32 %v8786, %v8724
  %v8788 = vadd.f32 %v8787, %v8725
  %v8789 = vadd.f32 %v8788, %v8726
  %v8790 = vadd.f32 %v8789, %v8727
  %v8791 = vadd.f32 %v8790, %v8728
  %v8792 = vadd.f32 %v8791, %v8729
  %v8793 = vadd.f32 %v8792, %v8730
  %v8794 = vadd.f32 %v8793, %v8731
  %v8795 = vadd.f32 %v8794, %v8732
  %v8796 = vadd.f32 %v8795, %v8733
  %v8797 = vadd.f32 %v8796, %v8734
  %v8798 = vadd.f32 %v8797, %v8735
  %v8799 = vadd.f32 %v8798, %v8736
  %v8800 = vadd.f32 %v8799, %v8737
  %v8801 = vadd.f32 %v8800, %v8738
  %v8802 = vadd.f32 %v8801, %v8739
  %v8803 = vadd.f32 %v8802, %v8740
  %v8804 = vadd.f32 %v8803, %v8741
  %v8805 = vadd.f32 %v8804, %v8742
  %v8806 = vadd.f32 %v8805, %v8743
  %v8807 = vadd.f32 %v8806, %v8744
  %v8808 = vadd.f32 %v8807, %v8745
  %v8809 = vadd.f32 %v8808, %v8746
  %v8810 = vadd.f32 %v8809, %v8747
  %v8811 = vadd.f32 %v8810, %v8748
  %v8812 = vadd.f32 %v8811, %v8749
  %v8813 = vrot.slane %v8812, 4
  %v8814 = vadd.f32 %v8812, %v8813
  %v8815 = vrot.slane %v8814, 2
  %v8816 = vadd.f32 %v8814, %v8815
  %v8817 = vrot.slane %v8816, 1
  %v8818 = vadd.f32 %v8816, %v8817
  %v8819 = vadd.f32 %v8750, %v8751
  %v8820 = vadd.f32 %v8819, %v8752
  %v8821 = vadd.f32 %v8820, %v8753
  %v8822 = vadd.f32 %v8821, %v8754
  %v8823 = vadd.f32 %v8822, %v8755
  %v8824 = vadd.f32 %v8823, %v8756
  %v8825 = vadd.f32 %v8824, %v8757
  %v8826 = vadd.f32 %v8825, %v8758
  %v8827 = vadd.f32 %v8826, %v8759
  %v8828 = vadd.f32 %v8827, %v8760
  %v8829 = vadd.f32 %v8828, %v8761
  %v8830 = vadd.f32 %v8829, %v8762
  %v8831 = vadd.f32 %v8830, %v8763
  %v8832 = vadd.f32 %v8831, %v8764
  %v8833 = vadd.f32 %v8832, %v8765
  %v8834 = vadd.f32 %v8833, %v8766
  %v8835 = vadd.f32 %v8834, %v8767
  %v8836 = vadd.f32 %v8835, %v8768
  %v8837 = vadd.f32 %v8836, %v8769
  %v8838 = vadd.f32 %v8837, %v8770
  %v8839 = vadd.f32 %v8838, %v8771
  %v8840 = vadd.f32 %v8839, %v8772
  %v8841 = vadd.f32 %v8840, %v8773
  %v8842 = vadd.f32 %v8841, %v8774
  %v8843 = vadd.f32 %v8842, %v8775
  %v8844 = vadd.f32 %v8843, %v8776
  %v8845 = vadd.f32 %v8844, %v8777
  %v8846 = vadd.f32 %v8845, %v8778
  %v8847 = vadd.f32 %v8846, %v8779
  %v8848 = vadd.f32 %v8847, %v8780
  %v8849 = vadd.f32 %v8848, %v8781
  %v8850 = vrot.slane %v8849, 4
  %v8851 = vadd.f32 %v8849, %v8850
  %v8852 = vrot.slane %v8851, 2
  %v8853 = vadd.f32 %v8851, %v8852
  %v8854 = vrot.slane %v8853, 1
  %v8855 = vadd.f32 %v8853, %v8854
  %v8856 = vrcp.pop 256.0
  %v8857 = vmul.f32 %v8818, %v8856
  %v8858 = vmul.f32 %v8855, %v8856
  %v8859 = vld [vmem:[%s10] sm:$0x1]
  %v8861 = vlaneseq
  %v8862 = vshrl.u32 %v8861, 7
  %v8863 = vsub.s32 0, %v8862
  %v8864 = vrot.slane %v8859, %v8863
  %v8866 = vmul.f32 %v8857, %v8864
  %v8867 = vmul.f32 %v8858, %v8864
  %v8870 = vrot.slane %v8867, 7
  %vm8871 = vcmask 1041409
  %v8872 = vsel %vm8871, %v8870, %v8866
  %vm8874 = vcmask 1041408
  %v8875 = vsel %vm8874, %v8872, 0.0
  %8876 = vadd.xlane.f32.xlu0 %v8875
  %v8877 = vpop.xlane.xlu0 %8876
  %v8878 = vld [vmem:[#allocation5] sm:$0x1]
  %v8880 = vlaneseq
  %v8881 = vshrl.u32 %v8880, 7
  %v8882 = vsub.s32 0, %v8881
  %v8883 = vrot.slane %v8878, %v8882
  %v8885 = vadd.f32 %v8877, %v8883
  %vm8886 = vcmask 1024
  %8887 = vst.msk [vmem:[%s12] sm:$0x3] %vm8886, %v8885
  // Predicated region
  $region50: #{model_forward.1} parent=0 // pred_check
    _
  $region51: #{model_forward.1} parent=0 // pred_check_branch
    %8889 = sbr.rel (0) target = $region53
  $region52: #{model_forward.1} parent=0 // pred_region
    _
  $region53: #{model_forward.1} parent=0 // pred_fallthru
    _
  // Predicated region
  $region54: #{model_forward.1} parent=0 // pred_check
    _
  $region55: #{model_forward.1} parent=0 // pred_check_branch
    %8891 = sbr.rel (0) target = $region57
  $region56: #{model_forward.1} parent=0 // pred_region
    _
  $region57: #{model_forward.1} parent=0 // pred_fallthru
    _

</llo_original>
